<compile_context>
chip_gen: v7x
topology: tpu7x:2x2x1
jax: 0.10.0
libtpu: 0.0.40
codegen_flags: <defaults>
</compile_context>

<pallas_src>
import functools

import jax
import jax.numpy as jnp
from jax.experimental import pallas as pl
from jax.experimental.pallas import tpu as pltpu


def _round_up(x, m):
    return (x + m - 1) // m * m


# ----------------------------- Pallas kernels -----------------------------

def _dense_kernel(*refs, relu, has_resid):
    if has_resid:
        x_ref, w_ref, b_ref, r_ref, o_ref = refs
    else:
        x_ref, w_ref, b_ref, o_ref = refs
        r_ref = None
    # bf16 MXU operands, f32 accumulation.
    y = jnp.dot(x_ref[...], w_ref[...], preferred_element_type=jnp.float32)
    y = y + b_ref[...]
    if r_ref is not None:
        y = y + r_ref[...]
    if relu:
        y = jnp.maximum(y, 0.0)
    o_ref[...] = y.astype(o_ref.dtype)


def pallas_dense(x, w, b, residual=None, *, relu=False, tile_m=256):
    """y = x @ w + b (+ residual) (+ ReLU).  x: (M, K), w: (K, N), b: (N,).

    All dims are zero-padded to lane multiples (128) so loads/stores are
    unmasked and lane-dense; the true (M, N) result is sliced back out.
    """
    M, K = x.shape
    Kw, N = w.shape
    assert K == Kw
    Kp = _round_up(K, 128)
    Np = _round_up(N, 128)
    tile = min(tile_m, _round_up(M, 128))
    Mp = _round_up(M, tile)

    xp = jnp.pad(x.astype(jnp.bfloat16), ((0, Mp - M), (0, Kp - K)))
    wp = jnp.pad(w.astype(jnp.bfloat16), ((0, Kp - K), (0, Np - N)))
    bp = jnp.pad(b.reshape(1, -1).astype(jnp.float32), ((0, 0), (0, Np - N)))

    in_specs = [
        pl.BlockSpec((tile, Kp), lambda i: (i, 0)),
        pl.BlockSpec((Kp, Np), lambda i: (0, 0)),
        pl.BlockSpec((1, Np), lambda i: (0, 0)),
    ]
    args = [xp, wp, bp]
    if residual is not None:
        rp = jnp.pad(residual.astype(jnp.float32), ((0, Mp - M), (0, Np - N)))
        in_specs.append(pl.BlockSpec((tile, Np), lambda i: (i, 0)))
        args.append(rp)

    out = pl.pallas_call(
        functools.partial(_dense_kernel, relu=relu,
                          has_resid=residual is not None),
        out_shape=jax.ShapeDtypeStruct((Mp, Np), jnp.float32),
        grid=(Mp // tile,),
        in_specs=in_specs,
        out_specs=pl.BlockSpec((tile, Np), lambda i: (i, 0)),
        compiler_params=pltpu.CompilerParams(dimension_semantics=("parallel",)),
    )(*args)
    return out[:M, :N]


def _liif_ensemble_mlp_kernel(x_ref, wt_ref, *rest):
    """Fused imnet MLP over the 4 local-ensemble branches + weighted sum.

    x_ref:  (4, T, Din_pad) bf16   MLP inputs (q_feat ++ rel_coord ++ rel_cell)
    wt_ref: (T, 4) f32             pre-normalized (diag-swapped / tot) weights
    rest:   w1, b1, ..., wL, bL (weights bf16, biases f32), out_ref
    """
    o_ref = rest[-1]
    params = rest[:-1]
    n_layers = len(params) // 2

    v, t, d = x_ref.shape
    # All 4 branches share the MLP weights: flatten to a single (4T, D) LHS so
    # each layer is one MXU matmul.
    h = x_ref[...].reshape(v * t, d)
    for l in range(n_layers):
        w = params[2 * l][...]
        b = params[2 * l + 1][...]
        h = jnp.dot(h.astype(jnp.bfloat16), w,
                    preferred_element_type=jnp.float32) + b
        if l < n_layers - 1:
            h = jnp.maximum(h, 0.0)                      # ReLU (not on last)

    preds = h.reshape(v, t, o_ref.shape[-1])             # (4, T, out_pad) f32
    wts = wt_ref[...]                                    # (T, 4) f32
    out = (preds[0] * wts[:, 0:1] + preds[1] * wts[:, 1:2]
           + preds[2] * wts[:, 2:3] + preds[3] * wts[:, 3:4])
    o_ref[...] = out.astype(o_ref.dtype)


def pallas_liif_ensemble_mlp(xs, wts, mlp_params, out_dim, *, tile=256):
    """xs: (4, N, Din) f32, wts: (N, 4) pre-normalized weights -> (N, out_dim)."""
    V, Npts, Din = xs.shape
    assert V == 4

    dims = [Din] + [w.shape[1] for (w, _) in mlp_params]
    pdims = [_round_up(d, 128) for d in dims]
    Dinp, outp = pdims[0], pdims[-1]

    t = min(tile, _round_up(Npts, 128))
    Np = _round_up(Npts, t)

    xs_p = jnp.pad(xs.astype(jnp.bfloat16),
                   ((0, 0), (0, Np - Npts), (0, Dinp - Din)))
    wts_p = jnp.pad(wts.astype(jnp.float32), ((0, Np - Npts), (0, 0)))

    flat_params, param_specs = [], []
    for l, (w, b) in enumerate(mlp_params):
        di, do = w.shape
        dip, dop = pdims[l], pdims[l + 1]
        wp = jnp.pad(w.astype(jnp.bfloat16), ((0, dip - di), (0, dop - do)))
        bp = jnp.pad(b.reshape(1, -1).astype(jnp.float32),
                     ((0, 0), (0, dop - do)))
        flat_params += [wp, bp]
        param_specs += [pl.BlockSpec((dip, dop), lambda i: (0, 0)),
                        pl.BlockSpec((1, dop), lambda i: (0, 0))]

    out = pl.pallas_call(
        _liif_ensemble_mlp_kernel,
        out_shape=jax.ShapeDtypeStruct((Np, outp), jnp.float32),
        grid=(Np // t,),
        in_specs=[pl.BlockSpec((4, t, Dinp), lambda i: (0, i, 0)),
                  pl.BlockSpec((t, 4), lambda i: (i, 0))] + param_specs,
        out_specs=pl.BlockSpec((t, outp), lambda i: (i, 0)),
        compiler_params=pltpu.CompilerParams(dimension_semantics=("parallel",)),
    )(xs_p, wts_p, *flat_params)
    return out[:Npts, :out_dim]


# ------------------------------- JAX glue ----------------------------------

def _im2col3x3(x):
    """x: (B, C, H, W) -> (B*H*W, C*9), column order = c*9 + ki*3 + kj."""
    B, C, H, W = x.shape
    xp = jnp.pad(x, ((0, 0), (0, 0), (1, 1), (1, 1)))
    patches = [xp[:, :, i:i + H, j:j + W] for i in range(3) for j in range(3)]
    col = jnp.stack(patches, axis=2)                     # (B, C, 9, H, W)
    return col.transpose(0, 3, 4, 1, 2).reshape(B * H * W, C * 9)


def unfold3x3(x):
    """F.unfold(x, 3, padding=1).view(B, C*9, H, W) equivalent."""
    B, C, H, W = x.shape
    xp = jnp.pad(x, ((0, 0), (0, 0), (1, 1), (1, 1)))
    patches = [xp[:, :, i:i + H, j:j + W] for i in range(3) for j in range(3)]
    col = jnp.stack(patches, axis=2)                     # (B, C, 9, H, W)
    return col.reshape(B, C * 9, H, W)


def conv3x3(x, w, b, *, relu=False, residual=None):
    """3x3 same-pad conv; w in PyTorch layout (Cout, Cin, 3, 3).

    `residual` (NCHW, Cout channels) is added inside the Pallas kernel.
    """
    B, Cin, H, W = x.shape
    Cout = w.shape[0]
    cols = _im2col3x3(x)                                 # (B*H*W, Cin*9)
    wmat = w.reshape(Cout, Cin * 9).T                    # (Cin*9, Cout)
    r_rows = None
    if residual is not None:
        r_rows = residual.transpose(0, 2, 3, 1).reshape(B * H * W, Cout)
    y = pallas_dense(cols, wmat, b, residual=r_rows, relu=relu)
    return y.reshape(B, H, W, Cout).transpose(0, 3, 1, 2)


def make_coord(shape):
    """LIIF make_coord(flatten=False): (H, W, 2) pixel-center coords in [-1, 1]."""
    seqs = []
    for n in shape:
        r = 1.0 / n
        seqs.append(-1.0 + r + (2.0 * r) * jnp.arange(n, dtype=jnp.float32))
    yy, xx = jnp.meshgrid(seqs[0], seqs[1], indexing="ij")
    return jnp.stack([yy, xx], axis=-1)


def grid_sample_nearest(feat, coord):
    """F.grid_sample(feat, coord.flip(-1)[:,None], 'nearest', align_corners=False)
    followed by [:, :, 0, :].permute(0, 2, 1).  feat: (B, C, H, W),
    coord: (B, Q, 2) with [..., 0] on the H axis, [..., 1] on the W axis."""
    B, C, H, W = feat.shape
    iy = jnp.round(((coord[..., 0] + 1.0) * H - 1.0) / 2.0)
    ix = jnp.round(((coord[..., 1] + 1.0) * W - 1.0) / 2.0)
    iy = jnp.clip(iy, 0, H - 1).astype(jnp.int32)
    ix = jnp.clip(ix, 0, W - 1).astype(jnp.int32)
    idx = iy * W + ix                                    # (B, Q)
    flat = feat.reshape(B, C, H * W)
    g = jnp.take_along_axis(flat, idx[:, None, :], axis=2)   # (B, C, Q)
    return g.transpose(0, 2, 1)                          # (B, Q, C)


# ------------------------------- parameters --------------------------------

def init_conv(key, cin, cout):
    kw, kb = jax.random.split(key)
    w = jax.random.normal(kw, (cout, cin, 3, 3), jnp.float32) * 0.05
    b = jax.random.normal(kb, (cout,), jnp.float32) * 0.01
    return w, b


def init_encoder(key, in_ch, n_feats, n_resblocks=2):
    keys = jax.random.split(key, 2 + 2 * n_resblocks)
    head = init_conv(keys[0], in_ch, n_feats)
    blocks = []
    for i in range(n_resblocks):
        blocks.append((init_conv(keys[1 + 2 * i], n_feats, n_feats),
                       init_conv(keys[2 + 2 * i], n_feats, n_feats)))
    tail = init_conv(keys[-1], n_feats, n_feats)
    return {"head": head, "blocks": blocks, "tail": tail}


def init_mlp(key, in_dim, hidden_list, out_dim):
    dims = [in_dim] + list(hidden_list) + [out_dim]
    keys = jax.random.split(key, len(dims) - 1)
    params = []
    for k, di, do in zip(keys, dims[:-1], dims[1:]):
        kw, kb = jax.random.split(k)
        w = jax.random.normal(kw, (di, do), jnp.float32) / jnp.sqrt(float(di))
        b = jax.random.normal(kb, (do,), jnp.float32) * 0.01
        params.append((w, b))
    return params


# ------------------------------- LIIF model ---------------------------------

def encoder_forward(params, x):
    # TODO(synk): the exact EDSR/IMDN/RCAN/RDN encoder bodies are external to
    # this module; a small EDSR-baseline (head conv + resblocks + tail conv
    # with global skip, no upsampling) is used as the feature encoder here.
    x = conv3x3(x, *params["head"])
    res = x
    for (w1, b1), (w2, b2) in params["blocks"]:
        h = conv3x3(res, w1, b1, relu=True)
        res = conv3x3(h, w2, b2, residual=res)           # fused skip add
    return conv3x3(res, *params["tail"], residual=x)     # fused global skip


def liif_query_rgb(feat, coord, cell, imnet_params, out_dim):
    """LIIF.query_rgb with feat_unfold=True, local_ensemble=True, cell_decode=True."""
    B, C, H, W = feat.shape
    _, Q, _ = coord.shape

    feat_u = unfold3x3(feat)                              # (B, C*9, H, W)
    feat_coord = make_coord((H, W)).transpose(2, 0, 1)    # (2, H, W)
    feat_coord = jnp.broadcast_to(feat_coord[None], (B, 2, H, W))

    rx = 2.0 / H / 2.0
    ry = 2.0 / W / 2.0
    eps_shift = 1e-6
    scale_hw = jnp.array([H, W], jnp.float32)

    rel_cell = cell * scale_hw                            # (B, Q, 2)

    # TODO(synk): the 4-branch nearest-neighbor gather could be fused into the
    # MLP kernel via PrefetchScalarGridSpec (prefetch iy*W+ix indices) to avoid
    # materializing xs in HBM; kept as XLA gather glue here.
    xs, areas = [], []
    for vx in (-1, 1):
        for vy in (-1, 1):
            shift = jnp.array([vx * rx + eps_shift, vy * ry + eps_shift],
                              jnp.float32)
            coord_ = jnp.clip(coord + shift, -1.0 + 1e-6, 1.0 - 1e-6)
            q_feat = grid_sample_nearest(feat_u, coord_)        # (B, Q, C*9)
            q_coord = grid_sample_nearest(feat_coord, coord_)   # (B, Q, 2)
            rel_coord = (coord - q_coord) * scale_hw            # (B, Q, 2)
            inp = jnp.concatenate([q_feat, rel_coord, rel_cell], axis=-1)
            xs.append(inp.reshape(B * Q, -1))
            area = jnp.abs(rel_coord[..., 0] * rel_coord[..., 1]) + 1e-9
            areas.append(area.reshape(B * Q))

    # local-ensemble diagonal swap: areas[0]<->areas[3], areas[1]<->areas[2]
    tot = areas[0] + areas[1] + areas[2] + areas[3]
    areas_sw = [areas[3], areas[2], areas[1], areas[0]]
    wts = jnp.stack(areas_sw, axis=-1) / tot[:, None]     # (B*Q, 4) normalized

    xs = jnp.stack(xs, axis=0)                            # (4, B*Q, Din)
    ret = pallas_liif_ensemble_mlp(xs, wts, imnet_params, out_dim)
    return ret.reshape(B, Q, out_dim)


def liif_forward(enc_params, imnet_params, inp, coord, cell, out_dim):
    feat = encoder_forward(enc_params, inp)
    return liif_query_rgb(feat, coord, cell, imnet_params, out_dim)


# --------------------------------- main --------------------------------------

if __name__ == "__main__":
    B, Cin, H, W = 2, 3, 16, 16            # encoder input (NCHW)
    Q = 256                                # query points per image
    n_feats = 8                            # encoder out_dim
    hidden_list = [32, 32]                 # imnet hidden layers
    out_dim = 3                            # RGB
    imnet_in_dim = n_feats * 9 + 2 + 2     # feat_unfold + rel_coord + rel_cell

    key = jax.random.PRNGKey(0)
    k_enc, k_mlp, k_inp, k_coord = jax.random.split(key, 4)

    enc_params = init_encoder(k_enc, Cin, n_feats, n_resblocks=2)
    imnet_params = init_mlp(k_mlp, imnet_in_dim, hidden_list, out_dim)

    inp = jax.random.normal(k_inp, (B, Cin, H, W), jnp.float32)
    coord = jax.random.uniform(k_coord, (B, Q, 2), jnp.float32,
                               minval=-1.0, maxval=1.0)
    cell = jnp.full((B, Q, 2), 2.0 / 32.0, jnp.float32)   # target 32x32 cells

    fwd = jax.jit(functools.partial(liif_forward, out_dim=out_dim))
    out = fwd(enc_params, imnet_params, inp, coord, cell)
    out = jax.block_until_ready(out)
    assert out.shape == (B, Q, out_dim) and out.dtype == jnp.float32
    assert bool(jnp.all(jnp.isfinite(out)))
    print("KERNEL_OK")
</pallas_src>

<mosaic_0001>
module attributes {stable_mosaic.version = 11 : i64} {
  func.func @_dense_kernel(%arg0: i32, %arg1: memref<256x128xbf16, #tpu.memory_space<vmem>>, %arg2: memref<128x128xbf16, #tpu.memory_space<vmem>>, %arg3: memref<1x128xf32, #tpu.memory_space<vmem>>, %arg4: memref<256x128xf32, #tpu.memory_space<vmem>>) attributes {dimension_semantics = [#tpu.dimension_semantics<parallel>], iteration_bounds = array<i64: 2>, scalar_prefetch = 0 : i64, scratch_operands = 0 : i64, tpu.core_type = #tpu.core_type<tc>, window_params = [{transform_indices = @transform_0, window_bounds = array<i64: 256, 128>}, {pipeline_mode = #tpu.pipeline_mode<synchronous>, transform_indices = @transform_1, window_bounds = array<i64: 128, 128>}, {pipeline_mode = #tpu.pipeline_mode<synchronous>, transform_indices = @transform_2, window_bounds = array<i64: 1, 128>}, {transform_indices = @transform_3, window_bounds = array<i64: 256, 128>}]} {
    %c0 = arith.constant 0 : index
    %c0_0 = arith.constant 0 : index
    %0 = vector.load %arg1[%c0, %c0_0] : memref<256x128xbf16, #tpu.memory_space<vmem>>, vector<256x128xbf16>
    %c0_1 = arith.constant 0 : index
    %c0_2 = arith.constant 0 : index
    %1 = vector.load %arg2[%c0_1, %c0_2] : memref<128x128xbf16, #tpu.memory_space<vmem>>, vector<128x128xbf16>
    %cst = arith.constant dense<0.000000e+00> : vector<256x128xf32>
    %2 = tpu.matmul %0, %1, %cst {dimension_numbers = #tpu.dot_dimension_numbers<[1], [0], [0], [1], [0, 0, 1, 1], [], []>} : vector<256x128xbf16>, vector<128x128xbf16>, vector<256x128xf32> -> vector<256x128xf32>
    %c0_3 = arith.constant 0 : index
    %c0_4 = arith.constant 0 : index
    %3 = vector.load %arg3[%c0_3, %c0_4] : memref<1x128xf32, #tpu.memory_space<vmem>>, vector<1x128xf32>
    %4 = vector.broadcast %3 : vector<1x128xf32> to vector<256x128xf32>
    %5 = arith.addf %2, %4 : vector<256x128xf32>
    %c0_5 = arith.constant 0 : index
    %c0_6 = arith.constant 0 : index
    %6 = vector.load %arg4[%c0_5, %c0_6] : memref<256x128xf32, #tpu.memory_space<vmem>>, vector<256x128xf32>
    tpu.vector_store %arg4[%c0_5, %c0_6], %5 {strides = array<i32>} : memref<256x128xf32, #tpu.memory_space<vmem>>, vector<256x128xf32>,
    return
  }
  func.func @transform_0(%arg0: i32) -> (i32, i32) {
    %c0_i32 = arith.constant 0 : i32
    %c0_i32_0 = arith.constant 0 : i32
    return %arg0, %c0_i32 : i32, i32
  }
  func.func @transform_1(%arg0: i32) -> (i32, i32) {
    %c0_i32 = arith.constant 0 : i32
    %c0_i32_0 = arith.constant 0 : i32
    %c0_i32_1 = arith.constant 0 : i32
    return %c0_i32, %c0_i32_0 : i32, i32
  }
  func.func @transform_2(%arg0: i32) -> (i32, i32) {
    %c0_i32 = arith.constant 0 : i32
    %c0_i32_0 = arith.constant 0 : i32
    %c0_i32_1 = arith.constant 0 : i32
    return %c0_i32, %c0_i32_0 : i32, i32
  }
  func.func @transform_3(%arg0: i32) -> (i32, i32) {
    %c0_i32 = arith.constant 0 : i32
    %c0_i32_0 = arith.constant 0 : i32
    return %arg0, %c0_i32 : i32, i32
  }
}

module attributes {stable_mosaic.version = 11 : i64} {
  func.func @_dense_kernel(%arg0: i32, %arg1: memref<256x128xbf16, #tpu.memory_space<vmem>>, %arg2: memref<128x128xbf16, #tpu.memory_space<vmem>>, %arg3: memref<1x128xf32, #tpu.memory_space<vmem>>, %arg4: memref<256x128xf32, #tpu.memory_space<vmem>>, %arg5: memref<256x128xf32, #tpu.memory_space<vmem>>) attributes {dimension_semantics = [#tpu.dimension_semantics<parallel>], iteration_bounds = array<i64: 2>, scalar_prefetch = 0 : i64, scratch_operands = 0 : i64, tpu.core_type = #tpu.core_type<tc>, window_params = [{transform_indices = @transform_0, window_bounds = array<i64: 256, 128>}, {pipeline_mode = #tpu.pipeline_mode<synchronous>, transform_indices = @transform_1, window_bounds = array<i64: 128, 128>}, {pipeline_mode = #tpu.pipeline_mode<synchronous>, transform_indices = @transform_2, window_bounds = array<i64: 1, 128>}, {transform_indices = @transform_3, window_bounds = array<i64: 256, 128>}, {transform_indices = @transform_4, window_bounds = array<i64: 256, 128>}]} {
    %c0 = arith.constant 0 : index
    %c0_0 = arith.constant 0 : index
    %0 = vector.load %arg1[%c0, %c0_0] : memref<256x128xbf16, #tpu.memory_space<vmem>>, vector<256x128xbf16>
    %c0_1 = arith.constant 0 : index
    %c0_2 = arith.constant 0 : index
    %1 = vector.load %arg2[%c0_1, %c0_2] : memref<128x128xbf16, #tpu.memory_space<vmem>>, vector<128x128xbf16>
    %cst = arith.constant dense<0.000000e+00> : vector<256x128xf32>
    %2 = tpu.matmul %0, %1, %cst {dimension_numbers = #tpu.dot_dimension_numbers<[1], [0], [0], [1], [0, 0, 1, 1], [], []>} : vector<256x128xbf16>, vector<128x128xbf16>, vector<256x128xf32> -> vector<256x128xf32>
    %c0_3 = arith.constant 0 : index
    %c0_4 = arith.constant 0 : index
    %3 = vector.load %arg3[%c0_3, %c0_4] : memref<1x128xf32, #tpu.memory_space<vmem>>, vector<1x128xf32>
    %4 = vector.broadcast %3 : vector<1x128xf32> to vector<256x128xf32>
    %5 = arith.addf %2, %4 : vector<256x128xf32>
    %c0_5 = arith.constant 0 : index
    %c0_6 = arith.constant 0 : index
    %6 = vector.load %arg4[%c0_5, %c0_6] : memref<256x128xf32, #tpu.memory_space<vmem>>, vector<256x128xf32>
    %7 = arith.addf %5, %6 : vector<256x128xf32>
    %c0_7 = arith.constant 0 : index
    %c0_8 = arith.constant 0 : index
    %8 = vector.load %arg5[%c0_7, %c0_8] : memref<256x128xf32, #tpu.memory_space<vmem>>, vector<256x128xf32>
    tpu.vector_store %arg5[%c0_7, %c0_8], %7 {strides = array<i32>} : memref<256x128xf32, #tpu.memory_space<vmem>>, vector<256x128xf32>,
    return
  }
  func.func @transform_0(%arg0: i32) -> (i32, i32) {
    %c0_i32 = arith.constant 0 : i32
    %c0_i32_0 = arith.constant 0 : i32
    return %arg0, %c0_i32 : i32, i32
  }
  func.func @transform_1(%arg0: i32) -> (i32, i32) {
    %c0_i32 = arith.constant 0 : i32
    %c0_i32_0 = arith.constant 0 : i32
    %c0_i32_1 = arith.constant 0 : i32
    return %c0_i32, %c0_i32_0 : i32, i32
  }
  func.func @transform_2(%arg0: i32) -> (i32, i32) {
    %c0_i32 = arith.constant 0 : i32
    %c0_i32_0 = arith.constant 0 : i32
    %c0_i32_1 = arith.constant 0 : i32
    return %c0_i32, %c0_i32_0 : i32, i32
  }
  func.func @transform_3(%arg0: i32) -> (i32, i32) {
    %c0_i32 = arith.constant 0 : i32
    %c0_i32_0 = arith.constant 0 : i32
    return %arg0, %c0_i32 : i32, i32
  }
  func.func @transform_4(%arg0: i32) -> (i32, i32) {
    %c0_i32 = arith.constant 0 : i32
    %c0_i32_0 = arith.constant 0 : i32
    return %arg0, %c0_i32 : i32, i32
  }
}

module attributes {stable_mosaic.version = 11 : i64} {
  func.func @_dense_kernel(%arg0: i32, %arg1: memref<256x128xbf16, #tpu.memory_space<vmem>>, %arg2: memref<128x128xbf16, #tpu.memory_space<vmem>>, %arg3: memref<1x128xf32, #tpu.memory_space<vmem>>, %arg4: memref<256x128xf32, #tpu.memory_space<vmem>>) attributes {dimension_semantics = [#tpu.dimension_semantics<parallel>], iteration_bounds = array<i64: 2>, scalar_prefetch = 0 : i64, scratch_operands = 0 : i64, tpu.core_type = #tpu.core_type<tc>, window_params = [{transform_indices = @transform_0, window_bounds = array<i64: 256, 128>}, {pipeline_mode = #tpu.pipeline_mode<synchronous>, transform_indices = @transform_1, window_bounds = array<i64: 128, 128>}, {pipeline_mode = #tpu.pipeline_mode<synchronous>, transform_indices = @transform_2, window_bounds = array<i64: 1, 128>}, {transform_indices = @transform_3, window_bounds = array<i64: 256, 128>}]} {
    %c0 = arith.constant 0 : index
    %c0_0 = arith.constant 0 : index
    %0 = vector.load %arg1[%c0, %c0_0] : memref<256x128xbf16, #tpu.memory_space<vmem>>, vector<256x128xbf16>
    %c0_1 = arith.constant 0 : index
    %c0_2 = arith.constant 0 : index
    %1 = vector.load %arg2[%c0_1, %c0_2] : memref<128x128xbf16, #tpu.memory_space<vmem>>, vector<128x128xbf16>
    %cst = arith.constant dense<0.000000e+00> : vector<256x128xf32>
    %2 = tpu.matmul %0, %1, %cst {dimension_numbers = #tpu.dot_dimension_numbers<[1], [0], [0], [1], [0, 0, 1, 1], [], []>} : vector<256x128xbf16>, vector<128x128xbf16>, vector<256x128xf32> -> vector<256x128xf32>
    %c0_3 = arith.constant 0 : index
    %c0_4 = arith.constant 0 : index
    %3 = vector.load %arg3[%c0_3, %c0_4] : memref<1x128xf32, #tpu.memory_space<vmem>>, vector<1x128xf32>
    %4 = vector.broadcast %3 : vector<1x128xf32> to vector<256x128xf32>
    %5 = arith.addf %2, %4 : vector<256x128xf32>
    %cst_5 = arith.constant 0.000000e+00 : f32
    %6 = vector.broadcast %cst_5 : f32 to vector<256x128xf32>
    %7 = arith.maximumf %5, %6 : vector<256x128xf32>
    %c0_6 = arith.constant 0 : index
    %c0_7 = arith.constant 0 : index
    %8 = vector.load %arg4[%c0_6, %c0_7] : memref<256x128xf32, #tpu.memory_space<vmem>>, vector<256x128xf32>
    tpu.vector_store %arg4[%c0_6, %c0_7], %7 {strides = array<i32>} : memref<256x128xf32, #tpu.memory_space<vmem>>, vector<256x128xf32>,
    return
  }
  func.func @transform_0(%arg0: i32) -> (i32, i32) {
    %c0_i32 = arith.constant 0 : i32
    %c0_i32_0 = arith.constant 0 : i32
    return %arg0, %c0_i32 : i32, i32
  }
  func.func @transform_1(%arg0: i32) -> (i32, i32) {
    %c0_i32 = arith.constant 0 : i32
    %c0_i32_0 = arith.constant 0 : i32
    %c0_i32_1 = arith.constant 0 : i32
    return %c0_i32, %c0_i32_0 : i32, i32
  }
  func.func @transform_2(%arg0: i32) -> (i32, i32) {
    %c0_i32 = arith.constant 0 : i32
    %c0_i32_0 = arith.constant 0 : i32
    %c0_i32_1 = arith.constant 0 : i32
    return %c0_i32, %c0_i32_0 : i32, i32
  }
  func.func @transform_3(%arg0: i32) -> (i32, i32) {
    %c0_i32 = arith.constant 0 : i32
    %c0_i32_0 = arith.constant 0 : i32
    return %arg0, %c0_i32 : i32, i32
  }
}

module attributes {stable_mosaic.version = 11 : i64} {
  func.func @_liif_ensemble_mlp_kernel(%arg0: i32, %arg1: memref<4x256x128xbf16, #tpu.memory_space<vmem>>, %arg2: memref<256x4xf32, #tpu.memory_space<vmem>>, %arg3: memref<128x128xbf16, #tpu.memory_space<vmem>>, %arg4: memref<1x128xf32, #tpu.memory_space<vmem>>, %arg5: memref<128x128xbf16, #tpu.memory_space<vmem>>, %arg6: memref<1x128xf32, #tpu.memory_space<vmem>>, %arg7: memref<128x128xbf16, #tpu.memory_space<vmem>>, %arg8: memref<1x128xf32, #tpu.memory_space<vmem>>, %arg9: memref<256x128xf32, #tpu.memory_space<vmem>>) attributes {dimension_semantics = [#tpu.dimension_semantics<parallel>], iteration_bounds = array<i64: 2>, scalar_prefetch = 0 : i64, scratch_operands = 0 : i64, tpu.core_type = #tpu.core_type<tc>, window_params = [{transform_indices = @transform_0, window_bounds = array<i64: 4, 256, 128>}, {transform_indices = @transform_1, window_bounds = array<i64: 256, 4>}, {pipeline_mode = #tpu.pipeline_mode<synchronous>, transform_indices = @transform_2, window_bounds = array<i64: 128, 128>}, {pipeline_mode = #tpu.pipeline_mode<synchronous>, transform_indices = @transform_3, window_bounds = array<i64: 1, 128>}, {pipeline_mode = #tpu.pipeline_mode<synchronous>, transform_indices = @transform_4, window_bounds = array<i64: 128, 128>}, {pipeline_mode = #tpu.pipeline_mode<synchronous>, transform_indices = @transform_5, window_bounds = array<i64: 1, 128>}, {pipeline_mode = #tpu.pipeline_mode<synchronous>, transform_indices = @transform_6, window_bounds = array<i64: 128, 128>}, {pipeline_mode = #tpu.pipeline_mode<synchronous>, transform_indices = @transform_7, window_bounds = array<i64: 1, 128>}, {transform_indices = @transform_8, window_bounds = array<i64: 256, 128>}]} {
    %c0 = arith.constant 0 : index
    %c0_0 = arith.constant 0 : index
    %c0_1 = arith.constant 0 : index
    %0 = vector.load %arg1[%c0, %c0_0, %c0_1] : memref<4x256x128xbf16, #tpu.memory_space<vmem>>, vector<4x256x128xbf16>
    %1 = vector.shape_cast %0 : vector<4x256x128xbf16> to vector<1024x128xbf16>
    %c0_2 = arith.constant 0 : index
    %c0_3 = arith.constant 0 : index
    %2 = vector.load %arg3[%c0_2, %c0_3] : memref<128x128xbf16, #tpu.memory_space<vmem>>, vector<128x128xbf16>
    %c0_4 = arith.constant 0 : index
    %c0_5 = arith.constant 0 : index
    %3 = vector.load %arg4[%c0_4, %c0_5] : memref<1x128xf32, #tpu.memory_space<vmem>>, vector<1x128xf32>
    %cst = arith.constant dense<0.000000e+00> : vector<1024x128xf32>
    %4 = tpu.matmul %1, %2, %cst {dimension_numbers = #tpu.dot_dimension_numbers<[1], [0], [0], [1], [0, 0, 1, 1], [], []>} : vector<1024x128xbf16>, vector<128x128xbf16>, vector<1024x128xf32> -> vector<1024x128xf32>
    %5 = vector.broadcast %3 : vector<1x128xf32> to vector<1024x128xf32>
    %6 = arith.addf %4, %5 : vector<1024x128xf32>
    %cst_6 = arith.constant 0.000000e+00 : f32
    %7 = vector.broadcast %cst_6 : f32 to vector<1024x128xf32>
    %8 = arith.maximumf %6, %7 : vector<1024x128xf32>
    %c0_7 = arith.constant 0 : index
    %c0_8 = arith.constant 0 : index
    %9 = vector.load %arg5[%c0_7, %c0_8] : memref<128x128xbf16, #tpu.memory_space<vmem>>, vector<128x128xbf16>
    %c0_9 = arith.constant 0 : index
    %c0_10 = arith.constant 0 : index
    %10 = vector.load %arg6[%c0_9, %c0_10] : memref<1x128xf32, #tpu.memory_space<vmem>>, vector<1x128xf32>
    %11 = arith.truncf %8 : vector<1024x128xf32> to vector<1024x128xbf16>
    %cst_11 = arith.constant dense<0.000000e+00> : vector<1024x128xf32>
    %12 = tpu.matmul %11, %9, %cst_11 {dimension_numbers = #tpu.dot_dimension_numbers<[1], [0], [0], [1], [0, 0, 1, 1], [], []>} : vector<1024x128xbf16>, vector<128x128xbf16>, vector<1024x128xf32> -> vector<1024x128xf32>
    %13 = vector.broadcast %10 : vector<1x128xf32> to vector<1024x128xf32>
    %14 = arith.addf %12, %13 : vector<1024x128xf32>
    %cst_12 = arith.constant 0.000000e+00 : f32
    %15 = vector.broadcast %cst_12 : f32 to vector<1024x128xf32>
    %16 = arith.maximumf %14, %15 : vector<1024x128xf32>
    %c0_13 = arith.constant 0 : index
    %c0_14 = arith.constant 0 : index
    %17 = vector.load %arg7[%c0_13, %c0_14] : memref<128x128xbf16, #tpu.memory_space<vmem>>, vector<128x128xbf16>
    %c0_15 = arith.constant 0 : index
    %c0_16 = arith.constant 0 : index
    %18 = vector.load %arg8[%c0_15, %c0_16] : memref<1x128xf32, #tpu.memory_space<vmem>>, vector<1x128xf32>
    %19 = arith.truncf %16 : vector<1024x128xf32> to vector<1024x128xbf16>
    %cst_17 = arith.constant dense<0.000000e+00> : vector<1024x128xf32>
    %20 = tpu.matmul %19, %17, %cst_17 {dimension_numbers = #tpu.dot_dimension_numbers<[1], [0], [0], [1], [0, 0, 1, 1], [], []>} : vector<1024x128xbf16>, vector<128x128xbf16>, vector<1024x128xf32> -> vector<1024x128xf32>
    %21 = vector.broadcast %18 : vector<1x128xf32> to vector<1024x128xf32>
    %22 = arith.addf %20, %21 : vector<1024x128xf32>
    %23 = vector.shape_cast %22 : vector<1024x128xf32> to vector<4x256x128xf32>
    %c0_18 = arith.constant 0 : index
    %c0_19 = arith.constant 0 : index
    %24 = vector.load %arg2[%c0_18, %c0_19] : memref<256x4xf32, #tpu.memory_space<vmem>>, vector<256x4xf32>
    %25 = vector.extract_strided_slice %23 {offsets = [0, 0, 0], sizes = [1, 256, 128], strides = [1, 1, 1]} : vector<4x256x128xf32> to vector<1x256x128xf32>
    %26 = vector.shape_cast %25 : vector<1x256x128xf32> to vector<256x128xf32>
    %27 = vector.extract_strided_slice %24 {offsets = [0, 0], sizes = [256, 1], strides = [1, 1]} : vector<256x4xf32> to vector<256x1xf32>
    %28 = vector.broadcast %27 : vector<256x1xf32> to vector<256x128xf32>
    %29 = arith.mulf %26, %28 : vector<256x128xf32>
    %30 = vector.extract_strided_slice %23 {offsets = [1, 0, 0], sizes = [1, 256, 128], strides = [1, 1, 1]} : vector<4x256x128xf32> to vector<1x256x128xf32>
    %31 = vector.shape_cast %30 : vector<1x256x128xf32> to vector<256x128xf32>
    %32 = vector.extract_strided_slice %24 {offsets = [0, 1], sizes = [256, 1], strides = [1, 1]} : vector<256x4xf32> to vector<256x1xf32>
    %33 = vector.broadcast %32 : vector<256x1xf32> to vector<256x128xf32>
    %34 = arith.mulf %31, %33 : vector<256x128xf32>
    %35 = arith.addf %29, %34 : vector<256x128xf32>
    %36 = vector.extract_strided_slice %23 {offsets = [2, 0, 0], sizes = [1, 256, 128], strides = [1, 1, 1]} : vector<4x256x128xf32> to vector<1x256x128xf32>
    %37 = vector.shape_cast %36 : vector<1x256x128xf32> to vector<256x128xf32>
    %38 = vector.extract_strided_slice %24 {offsets = [0, 2], sizes = [256, 1], strides = [1, 1]} : vector<256x4xf32> to vector<256x1xf32>
    %39 = vector.broadcast %38 : vector<256x1xf32> to vector<256x128xf32>
    %40 = arith.mulf %37, %39 : vector<256x128xf32>
    %41 = arith.addf %35, %40 : vector<256x128xf32>
    %42 = vector.extract_strided_slice %23 {offsets = [3, 0, 0], sizes = [1, 256, 128], strides = [1, 1, 1]} : vector<4x256x128xf32> to vector<1x256x128xf32>
    %43 = vector.shape_cast %42 : vector<1x256x128xf32> to vector<256x128xf32>
    %44 = vector.extract_strided_slice %24 {offsets = [0, 3], sizes = [256, 1], strides = [1, 1]} : vector<256x4xf32> to vector<256x1xf32>
    %45 = vector.broadcast %44 : vector<256x1xf32> to vector<256x128xf32>
    %46 = arith.mulf %43, %45 : vector<256x128xf32>
    %47 = arith.addf %41, %46 : vector<256x128xf32>
    %c0_20 = arith.constant 0 : index
    %c0_21 = arith.constant 0 : index
    %48 = vector.load %arg9[%c0_20, %c0_21] : memref<256x128xf32, #tpu.memory_space<vmem>>, vector<256x128xf32>
    tpu.vector_store %arg9[%c0_20, %c0_21], %47 {strides = array<i32>} : memref<256x128xf32, #tpu.memory_space<vmem>>, vector<256x128xf32>,
    return
  }
  func.func @transform_0(%arg0: i32) -> (i32, i32, i32) {
    %c0_i32 = arith.constant 0 : i32
    %c0_i32_0 = arith.constant 0 : i32
    %c0_i32_1 = arith.constant 0 : i32
    return %c0_i32, %arg0, %c0_i32_0 : i32, i32, i32
  }
  func.func @transform_1(%arg0: i32) -> (i32, i32) {
    %c0_i32 = arith.constant 0 : i32
    %c0_i32_0 = arith.constant 0 : i32
    return %arg0, %c0_i32 : i32, i32
  }
  func.func @transform_2(%arg0: i32) -> (i32, i32) {
    %c0_i32 = arith.constant 0 : i32
    %c0_i32_0 = arith.constant 0 : i32
    %c0_i32_1 = arith.constant 0 : i32
    return %c0_i32, %c0_i32_0 : i32, i32
  }
  func.func @transform_3(%arg0: i32) -> (i32, i32) {
    %c0_i32 = arith.constant 0 : i32
    %c0_i32_0 = arith.constant 0 : i32
    %c0_i32_1 = arith.constant 0 : i32
    return %c0_i32, %c0_i32_0 : i32, i32
  }
  func.func @transform_4(%arg0: i32) -> (i32, i32) {
    %c0_i32 = arith.constant 0 : i32
    %c0_i32_0 = arith.constant 0 : i32
    %c0_i32_1 = arith.constant 0 : i32
    return %c0_i32, %c0_i32_0 : i32, i32
  }
  func.func @transform_5(%arg0: i32) -> (i32, i32) {
    %c0_i32 = arith.constant 0 : i32
    %c0_i32_0 = arith.constant 0 : i32
    %c0_i32_1 = arith.constant 0 : i32
    return %c0_i32, %c0_i32_0 : i32, i32
  }
  func.func @transform_6(%arg0: i32) -> (i32, i32) {
    %c0_i32 = arith.constant 0 : i32
    %c0_i32_0 = arith.constant 0 : i32
    %c0_i32_1 = arith.constant 0 : i32
    return %c0_i32, %c0_i32_0 : i32, i32
  }
  func.func @transform_7(%arg0: i32) -> (i32, i32) {
    %c0_i32 = arith.constant 0 : i32
    %c0_i32_0 = arith.constant 0 : i32
    %c0_i32_1 = arith.constant 0 : i32
    return %c0_i32, %c0_i32_0 : i32, i32
  }
  func.func @transform_8(%arg0: i32) -> (i32, i32) {
    %c0_i32 = arith.constant 0 : i32
    %c0_i32_0 = arith.constant 0 : i32
    return %arg0, %c0_i32 : i32, i32
  }
}

</mosaic_0001>

<llo_original>
// kernel: liif_forward.7
$region0: #{liif_forward.7}
  #allocation0 [shape = 'u32[]', space=smem, size = 0x4, offset = 0x4, fixed_abs, tag = 'smem constant byte address 0x4 - core index']
  #allocation1 [shape = 'u32[144,128]{1,0:T(1,128)}', space=vmem, size = 0x12000, scoped, tag = 'internal scratch']
  %s0 = inlined_call_operand.vmem [shape: bf16[512,128], index: 0, kind: input, shape index: {}]
  %s1 = inlined_call_operand.vmem [shape: bf16[128,128], index: 1, kind: input, shape index: {}]
  %s2 = inlined_call_operand.vmem [shape: f32[1,128], index: 2, kind: input, shape index: {}]
  %s3 = inlined_call_operand.vmem [shape: f32[512,128], index: 3, kind: output, shape index: {}]
  %s4 = sld [smem:[#allocation0]]
  $region45: #{liif_forward.7} parent=0
    _
  %s6 = ssub.s32 1, %s4
  %s7 = scalar_select 0, %s6, %s4
  loop: start=0, step=1, limit=4
  $region2: #{liif_forward.7} parent=0 // loop_pre_header
    _
  $region3: #{liif_forward.7} parent=0 // loop_header
    %s9 = sphi 0, %s13
    %p10 = scmp.ge.s32.totalorder %s9, 4
    %s19 = sphi 0, %s21
    %s22 = sphi 0, %s19
    %s23 = sphi 0, %s22
    %s39 = sphi 0, %s23
    %s43 = sphi 0, %s43
    %s45 = sphi 0, %s43
    %s46 = sphi 0, %s45
    %s60 = sphi 0, %s46
    %s64 = sphi 0, %s64
    %s66 = sphi 0, %s64
    %s67 = sphi 0, %s66
    %s81 = sphi 0, %s67
    %s87 = sphi 0, %s89
    %s90 = sphi 0, %s87
    %s91 = sphi 0, %s90
    %s107 = sphi 0, %s91
  $region4: #{liif_forward.7} parent=0 // loop_header_branch
    %12 = sbr.rel (%p10) target = $region8
  $region5: #{liif_forward.7} parent=0 // loop_body
    %s14 = ssub.s32 %s9, 1
    %s15 = ssub.s32 %s9, 2
    %s16 = sadd.s32 %s9, 1
    %s17 = ssub.s32 %s9, %s16
    %p18 = scmp.eq.s32.totalorder %s17, 0
    %s20 = sadd.s32 %s19, 1
    %s21 = scalar_select %p18, %s19, %s20
    %p24 = pneg %p18
    %p25 = scmp.eq.s32.totalorder %s9, 1
    %p26 = por %p24, %p25
    %p27 = scmp.ne.s32.totalorder %s19, %s22
    %p28 = scmp.eq.s32.totalorder %s9, 0
    %p29 = por %p27, %p28
    %p30 = scmp.ne.s32.totalorder %s19, %s22
    %p31 = scmp.eq.s32.totalorder %s14, 1
    %p32 = por %p30, %p31
    %p33 = scmp.ne.s32.totalorder %s22, %s23
    %p34 = scmp.eq.s32.totalorder %s14, 0
    %p35 = por %p33, %p34
    %p36 = scmp.ne.s32.totalorder %s22, %s23
    %p37 = scmp.eq.s32.totalorder %s15, 1
    %p38 = por %p36, %p37
    %p40 = scmp.ne.s32.totalorder %s23, %s39
    %p41 = scmp.eq.s32.totalorder %s15, 0
    %p42 = por %p40, %p41
    %s44 = sadd.s32 %s43, 1
    %p47 = scmp.eq.s32.totalorder %s9, 1
    %p48 = scmp.ne.s32.totalorder %s43, %s45
    %p49 = scmp.eq.s32.totalorder %s9, 0
    %p50 = por %p48, %p49
    %p51 = scmp.ne.s32.totalorder %s43, %s45
    %p52 = scmp.eq.s32.totalorder %s14, 1
    %p53 = por %p51, %p52
    %p54 = scmp.ne.s32.totalorder %s45, %s46
    %p55 = scmp.eq.s32.totalorder %s14, 0
    %p56 = por %p54, %p55
    %p57 = scmp.ne.s32.totalorder %s45, %s46
    %p58 = scmp.eq.s32.totalorder %s15, 1
    %p59 = por %p57, %p58
    %p61 = scmp.ne.s32.totalorder %s46, %s60
    %p62 = scmp.eq.s32.totalorder %s15, 0
    %p63 = por %p61, %p62
    %s65 = sadd.s32 %s64, 1
    %p68 = scmp.eq.s32.totalorder %s9, 1
    %p69 = scmp.ne.s32.totalorder %s64, %s66
    %p70 = scmp.eq.s32.totalorder %s9, 0
    %p71 = por %p69, %p70
    %p72 = scmp.ne.s32.totalorder %s64, %s66
    %p73 = scmp.eq.s32.totalorder %s14, 1
    %p74 = por %p72, %p73
    %p75 = scmp.ne.s32.totalorder %s66, %s67
    %p76 = scmp.eq.s32.totalorder %s14, 0
    %p77 = por %p75, %p76
    %p78 = scmp.ne.s32.totalorder %s66, %s67
    %p79 = scmp.eq.s32.totalorder %s15, 1
    %p80 = por %p78, %p79
    %p82 = scmp.ne.s32.totalorder %s67, %s81
    %p83 = scmp.eq.s32.totalorder %s15, 0
    %p84 = por %p82, %p83
    %s85 = ssub.s32 %s9, %s16
    %p86 = scmp.eq.s32.totalorder %s85, 0
    %s88 = sadd.s32 %s87, 1
    %s89 = scalar_select %p86, %s87, %s88
    %p92 = pneg %p86
    %p93 = scmp.eq.s32.totalorder %s9, 1
    %p94 = por %p92, %p93
    %p95 = scmp.ne.s32.totalorder %s87, %s90
    %p96 = scmp.eq.s32.totalorder %s9, 0
    %p97 = por %p95, %p96
    %p98 = scmp.ne.s32.totalorder %s87, %s90
    %p99 = scmp.eq.s32.totalorder %s14, 1
    %p100 = por %p98, %p99
    %p101 = scmp.ne.s32.totalorder %s90, %s91
    %p102 = scmp.eq.s32.totalorder %s14, 0
    %p103 = por %p101, %p102
    %p104 = scmp.ne.s32.totalorder %s90, %s91
    %p105 = scmp.eq.s32.totalorder %s15, 1
    %p106 = por %p104, %p105
    %p108 = scmp.ne.s32.totalorder %s91, %s107
    %p109 = scmp.eq.s32.totalorder %s15, 0
    %p110 = por %p108, %p109
    %p111 = scmp.le.s32.totalorder 1, %s9
    %p112 = scmp.lt.s32.totalorder %s9, 3
    %p113 = pnand %p111, %p112
    %p114 = pneg %p113
    // Predicated region
    $region9: #{liif_forward.7} parent=5 // pred_check
      _
    $region10: #{liif_forward.7} parent=5 // pred_check_branch
      %116 = sbr.rel (%p113) target = $region12
    $region11: #{liif_forward.7} parent=5 // pred_region
      %s117 = ssub.s32 %s9, 1
      // Predicated region
      $region13: #{liif_forward.7} parent=11 // pred_check
        %p118 = pneg %p56
      $region14: #{liif_forward.7} parent=11 // pred_check_branch
        %120 = sbr.rel (%p118) target = $region16
      $region15: #{liif_forward.7} parent=11 // pred_region
        _
      $region16: #{liif_forward.7} parent=11 // pred_fallthru
        _
      // Predicated region
      $region17: #{liif_forward.7} parent=11 // pred_check
        %p121 = pneg %p77
      $region18: #{liif_forward.7} parent=11 // pred_check_branch
        %123 = sbr.rel (%p121) target = $region20
      $region19: #{liif_forward.7} parent=11 // pred_region
        _
      $region20: #{liif_forward.7} parent=11 // pred_fallthru
        _
    $region12: #{liif_forward.7} parent=5 // pred_fallthru
      _
    %p124 = scmp.lt.s32.totalorder %s9, 2
    // Predicated region
    $region21: #{liif_forward.7} parent=5 // pred_check
      %p125 = pneg %p124
    $region22: #{liif_forward.7} parent=5 // pred_check_branch
      %127 = sbr.rel (%p125) target = $region24
    $region23: #{liif_forward.7} parent=5 // pred_region
      // Predicated region
      $region25: #{liif_forward.7} parent=23 // pred_check
        %p128 = pneg %p29
      $region26: #{liif_forward.7} parent=23 // pred_check_branch
        %130 = sbr.rel (%p128) target = $region28
      $region27: #{liif_forward.7} parent=23 // pred_region
        %s131 = smul.u32 32, %s9
        %p132 = scmp.lt.s32.totalorder %s131, 63
        %s133 = scalar_select %p132, %s131, 63
        %s134 = smul.addr %s133, 4
        %s135 = scalar_lea.vmem %s0, %s134
        %s136 = smul.u32 32, %s9
      $region28: #{liif_forward.7} parent=23 // pred_fallthru
        _
    $region24: #{liif_forward.7} parent=5 // pred_fallthru
      _
    %p137 = scmp.le.s32.totalorder 1, %s9
    %p138 = scmp.lt.s32.totalorder %s9, 3
    %p139 = pnand %p137, %p138
    %p140 = pneg %p139
    // Predicated region
    $region29: #{liif_forward.7} parent=5 // pred_check
      _
    $region30: #{liif_forward.7} parent=5 // pred_check_branch
      %142 = sbr.rel (%p139) target = $region32
    $region31: #{liif_forward.7} parent=5 // pred_region
      %s143 = ssub.s32 %s9, 1
      %s144 = smul.u32 32, %s14
      %p145 = scmp.lt.s32.totalorder %s144, 63
      %s146 = scalar_select %p145, %s144, 63
      %s147 = smul.addr %s146, 4
      %s148 = scalar_lea.vmem %s0, %s147
      %p149 = pneg %p35
      %p150 = pneg %p32
      %p151 = pneg %p56
      %p152 = pneg %p53
      %p153 = pneg %p77
      %p154 = pneg %p74
      %p155 = pneg %p103
      %p156 = pneg %p100
      %s157 = smul.u32 32, %s14
      %p158 = scmp.lt.s32.totalorder %s157, 63
      %s159 = scalar_select %p158, %s157, 63
      %s160 = smul.addr %s159, 8
      %s161 = scalar_lea.vmem %s3, %s160
      %s162 = smul.u32 32, %s14
      %p163 = scmp.lt.s32.totalorder %s162, 63
      %s164 = scalar_select %p163, %s162, 63
      %s165 = smul.addr %s164, 4
      %s166 = scalar_lea.vmem %s0, %s165
      %s167 = smul.u32 32, %s14
      %s168 = smul.u32 32, %s14
      %p169 = scmp.lt.s32.totalorder %s168, 63
      %s170 = scalar_select %p169, %s168, 63
      %s171 = smul.addr %s170, 8
      %s172 = scalar_lea.vmem %s3, %s171
      %s173 = smul.u32 32, %s14
      %v175 = vld [vmem:[%s166] sm:$0xf]
      %v176 = vld [vmem:[%s166 + $0x4] sm:$0xf]
      %v177 = vld [vmem:[%s166 + $0x8] sm:$0xf]
      %v178 = vld [vmem:[%s166 + $0xc] sm:$0xf]
      %v179 = vld [vmem:[%s166 + $0x10] sm:$0xf]
      %v180 = vld [vmem:[%s166 + $0x14] sm:$0xf]
      %v181 = vld [vmem:[%s166 + $0x18] sm:$0xf]
      %v182 = vld [vmem:[%s166 + $0x1c] sm:$0xf]
      %v183 = vld [vmem:[%s166 + $0x20] sm:$0xf]
      %v184 = vld [vmem:[%s166 + $0x24] sm:$0xf]
      %v185 = vld [vmem:[%s166 + $0x28] sm:$0xf]
      %v186 = vld [vmem:[%s166 + $0x2c] sm:$0xf]
      %v187 = vld [vmem:[%s166 + $0x30] sm:$0xf]
      %v188 = vld [vmem:[%s166 + $0x34] sm:$0xf]
      %v189 = vld [vmem:[%s166 + $0x38] sm:$0xf]
      %v190 = vld [vmem:[%s166 + $0x3c] sm:$0xf]
      %v191 = vld [vmem:[%s166 + $0x40] sm:$0xf]
      %v192 = vld [vmem:[%s166 + $0x44] sm:$0xf]
      %v193 = vld [vmem:[%s166 + $0x48] sm:$0xf]
      %v194 = vld [vmem:[%s166 + $0x4c] sm:$0xf]
      %v195 = vld [vmem:[%s166 + $0x50] sm:$0xf]
      %v196 = vld [vmem:[%s166 + $0x54] sm:$0xf]
      %v197 = vld [vmem:[%s166 + $0x58] sm:$0xf]
      %v198 = vld [vmem:[%s166 + $0x5c] sm:$0xf]
      %v199 = vld [vmem:[%s166 + $0x60] sm:$0xf]
      %v200 = vld [vmem:[%s166 + $0x64] sm:$0xf]
      %v201 = vld [vmem:[%s166 + $0x68] sm:$0xf]
      %v202 = vld [vmem:[%s166 + $0x6c] sm:$0xf]
      %v203 = vld [vmem:[%s166 + $0x70] sm:$0xf]
      %v204 = vld [vmem:[%s166 + $0x74] sm:$0xf]
      %v205 = vld [vmem:[%s166 + $0x78] sm:$0xf]
      %v206 = vld [vmem:[%s166 + $0x7c] sm:$0xf]
      %v207 = vld [vmem:[%s1] sm:$0xf]
      %v208 = vld [vmem:[%s1 + $0x4] sm:$0xf]
      %v209 = vld [vmem:[%s1 + $0x8] sm:$0xf]
      %v210 = vld [vmem:[%s1 + $0xc] sm:$0xf]
      %v211 = vld [vmem:[%s1 + $0x10] sm:$0xf]
      %v212 = vld [vmem:[%s1 + $0x14] sm:$0xf]
      %v213 = vld [vmem:[%s1 + $0x18] sm:$0xf]
      %v214 = vld [vmem:[%s1 + $0x1c] sm:$0xf]
      %v215 = vld [vmem:[%s1 + $0x20] sm:$0xf]
      %v216 = vld [vmem:[%s1 + $0x24] sm:$0xf]
      %v217 = vld [vmem:[%s1 + $0x28] sm:$0xf]
      %v218 = vld [vmem:[%s1 + $0x2c] sm:$0xf]
      %v219 = vld [vmem:[%s1 + $0x30] sm:$0xf]
      %v220 = vld [vmem:[%s1 + $0x34] sm:$0xf]
      %v221 = vld [vmem:[%s1 + $0x38] sm:$0xf]
      %v222 = vld [vmem:[%s1 + $0x3c] sm:$0xf]
      %v223 = vld [vmem:[%s2] sm:$0x1]
      %v225 = vlaneseq
      %v226 = vshrl.u32 %v225, 7
      %v227 = vsub.s32 0, %v226
      %v228 = vrot.slane %v223, %v227
      %v262 = vunpack.c.l.b16 %v175
      %v263 = vunpack.c.l.b16 %v176
      %v264 = vunpack.c.l.b16 %v177
      %v265 = vunpack.c.l.b16 %v178
      %v266 = vunpack.c.l.b16 %v179
      %v267 = vunpack.c.l.b16 %v180
      %v268 = vunpack.c.l.b16 %v181
      %v269 = vunpack.c.l.b16 %v182
      %v270 = vunpack.c.l.b16 %v183
      %v271 = vunpack.c.l.b16 %v184
      %v272 = vunpack.c.l.b16 %v185
      %v273 = vunpack.c.l.b16 %v186
      %v274 = vunpack.c.l.b16 %v187
      %v275 = vunpack.c.l.b16 %v188
      %v276 = vunpack.c.l.b16 %v189
      %v277 = vunpack.c.l.b16 %v190
      %v278 = vunpack.c.l.b16 %v191
      %v279 = vunpack.c.l.b16 %v192
      %v280 = vunpack.c.l.b16 %v193
      %v281 = vunpack.c.l.b16 %v194
      %v282 = vunpack.c.l.b16 %v195
      %v283 = vunpack.c.l.b16 %v196
      %v284 = vunpack.c.l.b16 %v197
      %v285 = vunpack.c.l.b16 %v198
      %v286 = vunpack.c.l.b16 %v199
      %v287 = vunpack.c.l.b16 %v200
      %v288 = vunpack.c.l.b16 %v201
      %v289 = vunpack.c.l.b16 %v202
      %v290 = vunpack.c.l.b16 %v203
      %v291 = vunpack.c.l.b16 %v204
      %v292 = vunpack.c.l.b16 %v205
      %v293 = vunpack.c.l.b16 %v206
      %v294 = vpack.c.b16 %v263, %v262
      %v295 = vpack.c.b16 %v265, %v264
      %v296 = vpack.c.b16 %v267, %v266
      %v297 = vpack.c.b16 %v269, %v268
      %v298 = vpack.c.b16 %v271, %v270
      %v299 = vpack.c.b16 %v273, %v272
      %v300 = vpack.c.b16 %v275, %v274
      %v301 = vpack.c.b16 %v277, %v276
      %v302 = vpack.c.b16 %v279, %v278
      %v303 = vpack.c.b16 %v281, %v280
      %v304 = vpack.c.b16 %v283, %v282
      %v305 = vpack.c.b16 %v285, %v284
      %v306 = vpack.c.b16 %v287, %v286
      %v307 = vpack.c.b16 %v289, %v288
      %v308 = vpack.c.b16 %v291, %v290
      %v309 = vpack.c.b16 %v293, %v292
      %v342 = vunpack.c.l.b16 %v207
      %v343 = vunpack.c.l.b16 %v208
      %v344 = vunpack.c.l.b16 %v209
      %v345 = vunpack.c.l.b16 %v210
      %v346 = vunpack.c.l.b16 %v211
      %v347 = vunpack.c.l.b16 %v212
      %v348 = vunpack.c.l.b16 %v213
      %v349 = vunpack.c.l.b16 %v214
      %v350 = vunpack.c.l.b16 %v215
      %v351 = vunpack.c.l.b16 %v216
      %v352 = vunpack.c.l.b16 %v217
      %v353 = vunpack.c.l.b16 %v218
      %v354 = vunpack.c.l.b16 %v219
      %v355 = vunpack.c.l.b16 %v220
      %v356 = vunpack.c.l.b16 %v221
      %v357 = vunpack.c.l.b16 %v222
      %v358 = vpack.c.b16 %v343, %v342
      %v359 = vpack.c.b16 %v345, %v344
      %v360 = vpack.c.b16 %v347, %v346
      %v361 = vpack.c.b16 %v349, %v348
      %v362 = vpack.c.b16 %v351, %v350
      %v363 = vpack.c.b16 %v353, %v352
      %v364 = vpack.c.b16 %v355, %v354
      %v365 = vpack.c.b16 %v357, %v356
      %374 = vmatprep.subr.bf16.mxu0 0
      %375 = vmatpush1.bf16.msra.mxu0 %v358
      %376 = vmatprep.subr.bf16.mxu0 0
      %377 = vmatpush1.bf16.msra.mxu0 %v359
      %378 = vmatprep.subr.bf16.mxu0 0
      %379 = vmatpush1.bf16.msra.mxu0 %v360
      %380 = vmatprep.subr.bf16.mxu0 0
      %381 = vmatpush1.bf16.msra.mxu0 %v361
      %382 = vmatprep.subr.bf16.mxu0 0
      %383 = vmatpush1.bf16.msra.mxu0 %v362
      %384 = vmatprep.subr.bf16.mxu0 0
      %385 = vmatpush1.bf16.msra.mxu0 %v363
      %386 = vmatprep.subr.bf16.mxu0 0
      %387 = vmatpush1.bf16.msra.mxu0 %v364
      %388 = vmatprep.subr.bf16.mxu0 0
      %389 = vmatpush1.bf16.msra.mxu0 %v365
      %390 = vmatprep.subr.bf16.mxu0 0
      %391 = vmatpush1.bf16.msra.mxu0 0
      %392 = vmatprep.subr.bf16.mxu0 0
      %393 = vmatpush1.bf16.msra.mxu0 0
      %394 = vmatprep.subr.bf16.mxu0 0
      %395 = vmatpush1.bf16.msra.mxu0 0
      %396 = vmatprep.subr.bf16.mxu0 0
      %397 = vmatpush1.bf16.msra.mxu0 0
      %398 = vmatprep.subr.bf16.mxu0 0
      %399 = vmatpush1.bf16.msra.mxu0 0
      %400 = vmatprep.subr.bf16.mxu0 0
      %401 = vmatpush1.bf16.msra.mxu0 0
      %402 = vmatprep.subr.bf16.mxu0 0
      %403 = vmatpush1.bf16.msra.mxu0 0
      %404 = vmatprep.subr.bf16.mxu0 0
      %405 = vmatpush1.bf16.msra.mxu0 0
      %406 = vmatprep.mubr.bf16.mxu0 0
      %407 = vmatmul.mubr.bf16.gmra.mrb[0].mxu0 %v294
      %v408 = vpop.f32.mrb[0].mxu0
      %v409 = vadd.f32 %v228, %v408
      %v410 = vpop.f32.mrb[0].mxu0
      %v411 = vpop.f32.mrb[0].mxu0
      %v412 = vadd.f32 %v228, %v411
      %v413 = vpop.f32.mrb[0].mxu0
      %414 = vmatprep.mubr.bf16.mxu0 0
      %415 = vmatmul.mubr.bf16.gmra.mrb[0].mxu0 %v295
      %v416 = vpop.f32.mrb[0].mxu0
      %v417 = vadd.f32 %v228, %v416
      %v418 = vpop.f32.mrb[0].mxu0
      %v419 = vpop.f32.mrb[0].mxu0
      %v420 = vadd.f32 %v228, %v419
      %v421 = vpop.f32.mrb[0].mxu0
      %422 = vmatprep.mubr.bf16.mxu0 0
      %423 = vmatmul.mubr.bf16.gmra.mrb[0].mxu0 %v296
      %v424 = vpop.f32.mrb[0].mxu0
      %v425 = vadd.f32 %v228, %v424
      %v426 = vpop.f32.mrb[0].mxu0
      %v427 = vpop.f32.mrb[0].mxu0
      %v428 = vadd.f32 %v228, %v427
      %v429 = vpop.f32.mrb[0].mxu0
      %430 = vmatprep.mubr.bf16.mxu0 0
      %431 = vmatmul.mubr.bf16.gmra.mrb[0].mxu0 %v297
      %v432 = vpop.f32.mrb[0].mxu0
      %v433 = vadd.f32 %v228, %v432
      %v434 = vpop.f32.mrb[0].mxu0
      %v435 = vpop.f32.mrb[0].mxu0
      %v436 = vadd.f32 %v228, %v435
      %v437 = vpop.f32.mrb[0].mxu0
      %438 = vmatprep.mubr.bf16.mxu0 0
      %439 = vmatmul.mubr.bf16.gmra.mrb[0].mxu0 %v298
      %v440 = vpop.f32.mrb[0].mxu0
      %v441 = vadd.f32 %v228, %v440
      %v442 = vpop.f32.mrb[0].mxu0
      %v443 = vpop.f32.mrb[0].mxu0
      %v444 = vadd.f32 %v228, %v443
      %v445 = vpop.f32.mrb[0].mxu0
      %446 = vmatprep.mubr.bf16.mxu0 0
      %447 = vmatmul.mubr.bf16.gmra.mrb[0].mxu0 %v299
      %v448 = vpop.f32.mrb[0].mxu0
      %v449 = vadd.f32 %v228, %v448
      %v450 = vpop.f32.mrb[0].mxu0
      %v451 = vpop.f32.mrb[0].mxu0
      %v452 = vadd.f32 %v228, %v451
      %v453 = vpop.f32.mrb[0].mxu0
      %454 = vmatprep.mubr.bf16.mxu0 0
      %455 = vmatmul.mubr.bf16.gmra.mrb[0].mxu0 %v300
      %v456 = vpop.f32.mrb[0].mxu0
      %v457 = vadd.f32 %v228, %v456
      %v458 = vpop.f32.mrb[0].mxu0
      %v459 = vpop.f32.mrb[0].mxu0
      %v460 = vadd.f32 %v228, %v459
      %v461 = vpop.f32.mrb[0].mxu0
      %462 = vmatprep.mubr.bf16.mxu0 0
      %463 = vmatmul.mubr.bf16.gmra.mrb[0].mxu0 %v301
      %v464 = vpop.f32.mrb[0].mxu0
      %v465 = vadd.f32 %v228, %v464
      %v466 = vpop.f32.mrb[0].mxu0
      %v467 = vpop.f32.mrb[0].mxu0
      %v468 = vadd.f32 %v228, %v467
      %v469 = vpop.f32.mrb[0].mxu0
      %470 = vmatprep.mubr.bf16.mxu0 0
      %471 = vmatmul.mubr.bf16.gmra.mrb[0].mxu0 %v302
      %v472 = vpop.f32.mrb[0].mxu0
      %v473 = vadd.f32 %v228, %v472
      %v474 = vpop.f32.mrb[0].mxu0
      %v475 = vpop.f32.mrb[0].mxu0
      %v476 = vadd.f32 %v228, %v475
      %v477 = vpop.f32.mrb[0].mxu0
      %478 = vmatprep.mubr.bf16.mxu0 0
      %479 = vmatmul.mubr.bf16.gmra.mrb[0].mxu0 %v303
      %v480 = vpop.f32.mrb[0].mxu0
      %v481 = vadd.f32 %v228, %v480
      %v482 = vpop.f32.mrb[0].mxu0
      %v483 = vpop.f32.mrb[0].mxu0
      %v484 = vadd.f32 %v228, %v483
      %v485 = vpop.f32.mrb[0].mxu0
      %486 = vmatprep.mubr.bf16.mxu0 0
      %487 = vmatmul.mubr.bf16.gmra.mrb[0].mxu0 %v304
      %v488 = vpop.f32.mrb[0].mxu0
      %v489 = vadd.f32 %v228, %v488
      %v490 = vpop.f32.mrb[0].mxu0
      %v491 = vpop.f32.mrb[0].mxu0
      %v492 = vadd.f32 %v228, %v491
      %v493 = vpop.f32.mrb[0].mxu0
      %494 = vmatprep.mubr.bf16.mxu0 0
      %495 = vmatmul.mubr.bf16.gmra.mrb[0].mxu0 %v305
      %v496 = vpop.f32.mrb[0].mxu0
      %v497 = vadd.f32 %v228, %v496
      %v498 = vpop.f32.mrb[0].mxu0
      %v499 = vpop.f32.mrb[0].mxu0
      %v500 = vadd.f32 %v228, %v499
      %v501 = vpop.f32.mrb[0].mxu0
      %502 = vmatprep.mubr.bf16.mxu0 0
      %503 = vmatmul.mubr.bf16.gmra.mrb[0].mxu0 %v306
      %v504 = vpop.f32.mrb[0].mxu0
      %v505 = vadd.f32 %v228, %v504
      %v506 = vpop.f32.mrb[0].mxu0
      %v507 = vpop.f32.mrb[0].mxu0
      %v508 = vadd.f32 %v228, %v507
      %v509 = vpop.f32.mrb[0].mxu0
      %510 = vmatprep.mubr.bf16.mxu0 0
      %511 = vmatmul.mubr.bf16.gmra.mrb[0].mxu0 %v307
      %v512 = vpop.f32.mrb[0].mxu0
      %v513 = vadd.f32 %v228, %v512
      %v514 = vpop.f32.mrb[0].mxu0
      %v515 = vpop.f32.mrb[0].mxu0
      %v516 = vadd.f32 %v228, %v515
      %v517 = vpop.f32.mrb[0].mxu0
      %518 = vmatprep.mubr.bf16.mxu0 0
      %519 = vmatmul.mubr.bf16.gmra.mrb[0].mxu0 %v308
      %v520 = vpop.f32.mrb[0].mxu0
      %v521 = vadd.f32 %v228, %v520
      %v522 = vpop.f32.mrb[0].mxu0
      %v523 = vpop.f32.mrb[0].mxu0
      %v524 = vadd.f32 %v228, %v523
      %v525 = vpop.f32.mrb[0].mxu0
      %526 = vmatprep.mubr.bf16.mxu0 0
      %527 = vmatmul.mubr.bf16.gmra.mrb[0].mxu0 %v309
      %v528 = vpop.f32.mrb[0].mxu0
      %v529 = vadd.f32 %v228, %v528
      %v530 = vpop.f32.mrb[0].mxu0
      %v531 = vpop.f32.mrb[0].mxu0
      %v532 = vadd.f32 %v228, %v531
      %v533 = vpop.f32.mrb[0].mxu0
      %534 = vdwg.mxu0
      %535 = vst [vmem:[%s172] sm:$0xff] %v409
      %536 = vst [vmem:[%s172 + $0x8] sm:$0xff] %v412
      %537 = vst [vmem:[%s172 + $0x10] sm:$0xff] %v417
      %538 = vst [vmem:[%s172 + $0x18] sm:$0xff] %v420
      %539 = vst [vmem:[%s172 + $0x20] sm:$0xff] %v425
      %540 = vst [vmem:[%s172 + $0x28] sm:$0xff] %v428
      %541 = vst [vmem:[%s172 + $0x30] sm:$0xff] %v433
      %542 = vst [vmem:[%s172 + $0x38] sm:$0xff] %v436
      %543 = vst [vmem:[%s172 + $0x40] sm:$0xff] %v441
      %544 = vst [vmem:[%s172 + $0x48] sm:$0xff] %v444
      %545 = vst [vmem:[%s172 + $0x50] sm:$0xff] %v449
      %546 = vst [vmem:[%s172 + $0x58] sm:$0xff] %v452
      %547 = vst [vmem:[%s172 + $0x60] sm:$0xff] %v457
      %548 = vst [vmem:[%s172 + $0x68] sm:$0xff] %v460
      %549 = vst [vmem:[%s172 + $0x70] sm:$0xff] %v465
      %550 = vst [vmem:[%s172 + $0x78] sm:$0xff] %v468
      %551 = vst [vmem:[%s172 + $0x80] sm:$0xff] %v473
      %552 = vst [vmem:[%s172 + $0x88] sm:$0xff] %v476
      %553 = vst [vmem:[%s172 + $0x90] sm:$0xff] %v481
      %554 = vst [vmem:[%s172 + $0x98] sm:$0xff] %v484
      %555 = vst [vmem:[%s172 + $0xa0] sm:$0xff] %v489
      %556 = vst [vmem:[%s172 + $0xa8] sm:$0xff] %v492
      %557 = vst [vmem:[%s172 + $0xb0] sm:$0xff] %v497
      %558 = vst [vmem:[%s172 + $0xb8] sm:$0xff] %v500
      %559 = vst [vmem:[%s172 + $0xc0] sm:$0xff] %v505
      %560 = vst [vmem:[%s172 + $0xc8] sm:$0xff] %v508
      %561 = vst [vmem:[%s172 + $0xd0] sm:$0xff] %v513
      %562 = vst [vmem:[%s172 + $0xd8] sm:$0xff] %v516
      %563 = vst [vmem:[%s172 + $0xe0] sm:$0xff] %v521
      %564 = vst [vmem:[%s172 + $0xe8] sm:$0xff] %v524
      %565 = vst [vmem:[%s172 + $0xf0] sm:$0xff] %v529
      %566 = vst [vmem:[%s172 + $0xf8] sm:$0xff] %v532
      %s567 = smul.u32 32, %s14
      %p568 = scmp.lt.s32.totalorder %s567, 63
      %s569 = scalar_select %p568, %s567, 63
      %s570 = smul.addr %s569, 8
      %s571 = scalar_lea.vmem %s3, %s570
      // Predicated region
      $region33: #{liif_forward.7} parent=31 // pred_check
        %p572 = pneg %p100
      $region34: #{liif_forward.7} parent=31 // pred_check_branch
        %574 = sbr.rel (%p572) target = $region36
      $region35: #{liif_forward.7} parent=31 // pred_region
        %s575 = smul.u32 32, %s14
      $region36: #{liif_forward.7} parent=31 // pred_fallthru
        _
    $region32: #{liif_forward.7} parent=5 // pred_fallthru
      _
    %p576 = scmp.le.s32.totalorder 2, %s9
    // Predicated region
    $region37: #{liif_forward.7} parent=5 // pred_check
      %p577 = pneg %p576
    $region38: #{liif_forward.7} parent=5 // pred_check_branch
      %579 = sbr.rel (%p577) target = $region40
    $region39: #{liif_forward.7} parent=5 // pred_region
      %s580 = ssub.s32 %s9, 2
      // Predicated region
      $region41: #{liif_forward.7} parent=39 // pred_check
        %p581 = pneg %p106
      $region42: #{liif_forward.7} parent=39 // pred_check_branch
        %583 = sbr.rel (%p581) target = $region44
      $region43: #{liif_forward.7} parent=39 // pred_region
        %s584 = smul.u32 32, %s15
        %p585 = scmp.lt.s32.totalorder %s584, 63
        %s586 = scalar_select %p585, %s584, 63
        %s587 = smul.addr %s586, 8
        %s588 = scalar_lea.vmem %s3, %s587
      $region44: #{liif_forward.7} parent=39 // pred_fallthru
        _
    $region40: #{liif_forward.7} parent=5 // pred_fallthru
      _
  $region6: #{liif_forward.7} parent=0 // loop_footer
    %s13 = sadd.s32 1, %s9
  $region7: #{liif_forward.7} parent=0 // loop_footer_branch
    %8 = sbr.rel target = $region3
  $region8: #{liif_forward.7} parent=0 // loop_exit
    _

// kernel: liif_forward.9
$region0: #{liif_forward.9}
  #allocation0 [shape = 'u32[]', space=smem, size = 0x4, offset = 0x4, fixed_abs, tag = 'smem constant byte address 0x4 - core index']
  #allocation1 [shape = 'u32[144,128]{1,0:T(1,128)}', space=vmem, size = 0x12000, scoped, tag = 'internal scratch']
  %s0 = inlined_call_operand.vmem [shape: bf16[512,128], index: 0, kind: input, shape index: {}]
  %s1 = inlined_call_operand.vmem [shape: bf16[128,128], index: 1, kind: input, shape index: {}]
  %s2 = inlined_call_operand.vmem [shape: f32[1,128], index: 2, kind: input, shape index: {}]
  %s3 = inlined_call_operand.vmem [shape: f32[512,128], index: 3, kind: input, shape index: {}]
  %s4 = inlined_call_operand.vmem [shape: f32[512,128], index: 4, kind: output, shape index: {}]
  %s5 = sld [smem:[#allocation0]]
  $region49: #{liif_forward.9} parent=0
    _
  %s7 = ssub.s32 1, %s5
  %s8 = scalar_select 0, %s7, %s5
  loop: start=0, step=1, limit=4
  $region2: #{liif_forward.9} parent=0 // loop_pre_header
    _
  $region3: #{liif_forward.9} parent=0 // loop_header
    %s10 = sphi 0, %s14
    %p11 = scmp.ge.s32.totalorder %s10, 4
    %s20 = sphi 0, %s22
    %s23 = sphi 0, %s20
    %s24 = sphi 0, %s23
    %s40 = sphi 0, %s24
    %s44 = sphi 0, %s44
    %s46 = sphi 0, %s44
    %s47 = sphi 0, %s46
    %s61 = sphi 0, %s47
    %s65 = sphi 0, %s65
    %s67 = sphi 0, %s65
    %s68 = sphi 0, %s67
    %s82 = sphi 0, %s68
    %s88 = sphi 0, %s90
    %s91 = sphi 0, %s88
    %s92 = sphi 0, %s91
    %s108 = sphi 0, %s92
    %s114 = sphi 0, %s116
    %s117 = sphi 0, %s114
    %s118 = sphi 0, %s117
    %s134 = sphi 0, %s118
  $region4: #{liif_forward.9} parent=0 // loop_header_branch
    %13 = sbr.rel (%p11) target = $region8
  $region5: #{liif_forward.9} parent=0 // loop_body
    %s15 = ssub.s32 %s10, 1
    %s16 = ssub.s32 %s10, 2
    %s17 = sadd.s32 %s10, 1
    %s18 = ssub.s32 %s10, %s17
    %p19 = scmp.eq.s32.totalorder %s18, 0
    %s21 = sadd.s32 %s20, 1
    %s22 = scalar_select %p19, %s20, %s21
    %p25 = pneg %p19
    %p26 = scmp.eq.s32.totalorder %s10, 1
    %p27 = por %p25, %p26
    %p28 = scmp.ne.s32.totalorder %s20, %s23
    %p29 = scmp.eq.s32.totalorder %s10, 0
    %p30 = por %p28, %p29
    %p31 = scmp.ne.s32.totalorder %s20, %s23
    %p32 = scmp.eq.s32.totalorder %s15, 1
    %p33 = por %p31, %p32
    %p34 = scmp.ne.s32.totalorder %s23, %s24
    %p35 = scmp.eq.s32.totalorder %s15, 0
    %p36 = por %p34, %p35
    %p37 = scmp.ne.s32.totalorder %s23, %s24
    %p38 = scmp.eq.s32.totalorder %s16, 1
    %p39 = por %p37, %p38
    %p41 = scmp.ne.s32.totalorder %s24, %s40
    %p42 = scmp.eq.s32.totalorder %s16, 0
    %p43 = por %p41, %p42
    %s45 = sadd.s32 %s44, 1
    %p48 = scmp.eq.s32.totalorder %s10, 1
    %p49 = scmp.ne.s32.totalorder %s44, %s46
    %p50 = scmp.eq.s32.totalorder %s10, 0
    %p51 = por %p49, %p50
    %p52 = scmp.ne.s32.totalorder %s44, %s46
    %p53 = scmp.eq.s32.totalorder %s15, 1
    %p54 = por %p52, %p53
    %p55 = scmp.ne.s32.totalorder %s46, %s47
    %p56 = scmp.eq.s32.totalorder %s15, 0
    %p57 = por %p55, %p56
    %p58 = scmp.ne.s32.totalorder %s46, %s47
    %p59 = scmp.eq.s32.totalorder %s16, 1
    %p60 = por %p58, %p59
    %p62 = scmp.ne.s32.totalorder %s47, %s61
    %p63 = scmp.eq.s32.totalorder %s16, 0
    %p64 = por %p62, %p63
    %s66 = sadd.s32 %s65, 1
    %p69 = scmp.eq.s32.totalorder %s10, 1
    %p70 = scmp.ne.s32.totalorder %s65, %s67
    %p71 = scmp.eq.s32.totalorder %s10, 0
    %p72 = por %p70, %p71
    %p73 = scmp.ne.s32.totalorder %s65, %s67
    %p74 = scmp.eq.s32.totalorder %s15, 1
    %p75 = por %p73, %p74
    %p76 = scmp.ne.s32.totalorder %s67, %s68
    %p77 = scmp.eq.s32.totalorder %s15, 0
    %p78 = por %p76, %p77
    %p79 = scmp.ne.s32.totalorder %s67, %s68
    %p80 = scmp.eq.s32.totalorder %s16, 1
    %p81 = por %p79, %p80
    %p83 = scmp.ne.s32.totalorder %s68, %s82
    %p84 = scmp.eq.s32.totalorder %s16, 0
    %p85 = por %p83, %p84
    %s86 = ssub.s32 %s10, %s17
    %p87 = scmp.eq.s32.totalorder %s86, 0
    %s89 = sadd.s32 %s88, 1
    %s90 = scalar_select %p87, %s88, %s89
    %p93 = pneg %p87
    %p94 = scmp.eq.s32.totalorder %s10, 1
    %p95 = por %p93, %p94
    %p96 = scmp.ne.s32.totalorder %s88, %s91
    %p97 = scmp.eq.s32.totalorder %s10, 0
    %p98 = por %p96, %p97
    %p99 = scmp.ne.s32.totalorder %s88, %s91
    %p100 = scmp.eq.s32.totalorder %s15, 1
    %p101 = por %p99, %p100
    %p102 = scmp.ne.s32.totalorder %s91, %s92
    %p103 = scmp.eq.s32.totalorder %s15, 0
    %p104 = por %p102, %p103
    %p105 = scmp.ne.s32.totalorder %s91, %s92
    %p106 = scmp.eq.s32.totalorder %s16, 1
    %p107 = por %p105, %p106
    %p109 = scmp.ne.s32.totalorder %s92, %s108
    %p110 = scmp.eq.s32.totalorder %s16, 0
    %p111 = por %p109, %p110
    %s112 = ssub.s32 %s10, %s17
    %p113 = scmp.eq.s32.totalorder %s112, 0
    %s115 = sadd.s32 %s114, 1
    %s116 = scalar_select %p113, %s114, %s115
    %p119 = pneg %p113
    %p120 = scmp.eq.s32.totalorder %s10, 1
    %p121 = por %p119, %p120
    %p122 = scmp.ne.s32.totalorder %s114, %s117
    %p123 = scmp.eq.s32.totalorder %s10, 0
    %p124 = por %p122, %p123
    %p125 = scmp.ne.s32.totalorder %s114, %s117
    %p126 = scmp.eq.s32.totalorder %s15, 1
    %p127 = por %p125, %p126
    %p128 = scmp.ne.s32.totalorder %s117, %s118
    %p129 = scmp.eq.s32.totalorder %s15, 0
    %p130 = por %p128, %p129
    %p131 = scmp.ne.s32.totalorder %s117, %s118
    %p132 = scmp.eq.s32.totalorder %s16, 1
    %p133 = por %p131, %p132
    %p135 = scmp.ne.s32.totalorder %s118, %s134
    %p136 = scmp.eq.s32.totalorder %s16, 0
    %p137 = por %p135, %p136
    %p138 = scmp.le.s32.totalorder 1, %s10
    %p139 = scmp.lt.s32.totalorder %s10, 3
    %p140 = pnand %p138, %p139
    %p141 = pneg %p140
    // Predicated region
    $region9: #{liif_forward.9} parent=5 // pred_check
      _
    $region10: #{liif_forward.9} parent=5 // pred_check_branch
      %143 = sbr.rel (%p140) target = $region12
    $region11: #{liif_forward.9} parent=5 // pred_region
      %s144 = ssub.s32 %s10, 1
      // Predicated region
      $region13: #{liif_forward.9} parent=11 // pred_check
        %p145 = pneg %p57
      $region14: #{liif_forward.9} parent=11 // pred_check_branch
        %147 = sbr.rel (%p145) target = $region16
      $region15: #{liif_forward.9} parent=11 // pred_region
        _
      $region16: #{liif_forward.9} parent=11 // pred_fallthru
        _
      // Predicated region
      $region17: #{liif_forward.9} parent=11 // pred_check
        %p148 = pneg %p78
      $region18: #{liif_forward.9} parent=11 // pred_check_branch
        %150 = sbr.rel (%p148) target = $region20
      $region19: #{liif_forward.9} parent=11 // pred_region
        _
      $region20: #{liif_forward.9} parent=11 // pred_fallthru
        _
    $region12: #{liif_forward.9} parent=5 // pred_fallthru
      _
    %p151 = scmp.lt.s32.totalorder %s10, 2
    // Predicated region
    $region21: #{liif_forward.9} parent=5 // pred_check
      %p152 = pneg %p151
    $region22: #{liif_forward.9} parent=5 // pred_check_branch
      %154 = sbr.rel (%p152) target = $region24
    $region23: #{liif_forward.9} parent=5 // pred_region
      // Predicated region
      $region25: #{liif_forward.9} parent=23 // pred_check
        %p155 = pneg %p30
      $region26: #{liif_forward.9} parent=23 // pred_check_branch
        %157 = sbr.rel (%p155) target = $region28
      $region27: #{liif_forward.9} parent=23 // pred_region
        %s158 = smul.u32 32, %s10
        %p159 = scmp.lt.s32.totalorder %s158, 63
        %s160 = scalar_select %p159, %s158, 63
        %s161 = smul.addr %s160, 4
        %s162 = scalar_lea.vmem %s0, %s161
        %s163 = smul.u32 32, %s10
      $region28: #{liif_forward.9} parent=23 // pred_fallthru
        _
      // Predicated region
      $region29: #{liif_forward.9} parent=23 // pred_check
        %p164 = pneg %p98
      $region30: #{liif_forward.9} parent=23 // pred_check_branch
        %166 = sbr.rel (%p164) target = $region32
      $region31: #{liif_forward.9} parent=23 // pred_region
        %s167 = smul.u32 32, %s10
        %p168 = scmp.lt.s32.totalorder %s167, 63
        %s169 = scalar_select %p168, %s167, 63
        %s170 = smul.addr %s169, 8
        %s171 = scalar_lea.vmem %s3, %s170
        %s172 = smul.u32 32, %s10
      $region32: #{liif_forward.9} parent=23 // pred_fallthru
        _
    $region24: #{liif_forward.9} parent=5 // pred_fallthru
      _
    %p173 = scmp.le.s32.totalorder 1, %s10
    %p174 = scmp.lt.s32.totalorder %s10, 3
    %p175 = pnand %p173, %p174
    %p176 = pneg %p175
    // Predicated region
    $region33: #{liif_forward.9} parent=5 // pred_check
      _
    $region34: #{liif_forward.9} parent=5 // pred_check_branch
      %178 = sbr.rel (%p175) target = $region36
    $region35: #{liif_forward.9} parent=5 // pred_region
      %s179 = ssub.s32 %s10, 1
      %s180 = smul.u32 32, %s15
      %p181 = scmp.lt.s32.totalorder %s180, 63
      %s182 = scalar_select %p181, %s180, 63
      %s183 = smul.addr %s182, 4
      %s184 = scalar_lea.vmem %s0, %s183
      %p185 = pneg %p36
      %p186 = pneg %p33
      %p187 = pneg %p57
      %p188 = pneg %p54
      %p189 = pneg %p78
      %p190 = pneg %p75
      %s191 = smul.u32 32, %s15
      %p192 = scmp.lt.s32.totalorder %s191, 63
      %s193 = scalar_select %p192, %s191, 63
      %s194 = smul.addr %s193, 8
      %s195 = scalar_lea.vmem %s3, %s194
      %p196 = pneg %p104
      %p197 = pneg %p101
      %p198 = pneg %p130
      %p199 = pneg %p127
      %s200 = smul.u32 32, %s15
      %p201 = scmp.lt.s32.totalorder %s200, 63
      %s202 = scalar_select %p201, %s200, 63
      %s203 = smul.addr %s202, 8
      %s204 = scalar_lea.vmem %s4, %s203
      %s205 = smul.u32 32, %s15
      %p206 = scmp.lt.s32.totalorder %s205, 63
      %s207 = scalar_select %p206, %s205, 63
      %s208 = smul.addr %s207, 4
      %s209 = scalar_lea.vmem %s0, %s208
      %s210 = smul.u32 32, %s15
      %s211 = smul.u32 32, %s15
      %p212 = scmp.lt.s32.totalorder %s211, 63
      %s213 = scalar_select %p212, %s211, 63
      %s214 = smul.addr %s213, 8
      %s215 = scalar_lea.vmem %s3, %s214
      %s216 = smul.u32 32, %s15
      %s217 = smul.u32 32, %s15
      %p218 = scmp.lt.s32.totalorder %s217, 63
      %s219 = scalar_select %p218, %s217, 63
      %s220 = smul.addr %s219, 8
      %s221 = scalar_lea.vmem %s4, %s220
      %s222 = smul.u32 32, %s15
      %v224 = vld [vmem:[%s209] sm:$0xf]
      %v225 = vld [vmem:[%s209 + $0x4] sm:$0xf]
      %v226 = vld [vmem:[%s209 + $0x8] sm:$0xf]
      %v227 = vld [vmem:[%s209 + $0xc] sm:$0xf]
      %v228 = vld [vmem:[%s209 + $0x10] sm:$0xf]
      %v229 = vld [vmem:[%s209 + $0x14] sm:$0xf]
      %v230 = vld [vmem:[%s209 + $0x18] sm:$0xf]
      %v231 = vld [vmem:[%s209 + $0x1c] sm:$0xf]
      %v232 = vld [vmem:[%s209 + $0x20] sm:$0xf]
      %v233 = vld [vmem:[%s209 + $0x24] sm:$0xf]
      %v234 = vld [vmem:[%s209 + $0x28] sm:$0xf]
      %v235 = vld [vmem:[%s209 + $0x2c] sm:$0xf]
      %v236 = vld [vmem:[%s209 + $0x30] sm:$0xf]
      %v237 = vld [vmem:[%s209 + $0x34] sm:$0xf]
      %v238 = vld [vmem:[%s209 + $0x38] sm:$0xf]
      %v239 = vld [vmem:[%s209 + $0x3c] sm:$0xf]
      %v240 = vld [vmem:[%s209 + $0x40] sm:$0xf]
      %v241 = vld [vmem:[%s209 + $0x44] sm:$0xf]
      %v242 = vld [vmem:[%s209 + $0x48] sm:$0xf]
      %v243 = vld [vmem:[%s209 + $0x4c] sm:$0xf]
      %v244 = vld [vmem:[%s209 + $0x50] sm:$0xf]
      %v245 = vld [vmem:[%s209 + $0x54] sm:$0xf]
      %v246 = vld [vmem:[%s209 + $0x58] sm:$0xf]
      %v247 = vld [vmem:[%s209 + $0x5c] sm:$0xf]
      %v248 = vld [vmem:[%s209 + $0x60] sm:$0xf]
      %v249 = vld [vmem:[%s209 + $0x64] sm:$0xf]
      %v250 = vld [vmem:[%s209 + $0x68] sm:$0xf]
      %v251 = vld [vmem:[%s209 + $0x6c] sm:$0xf]
      %v252 = vld [vmem:[%s209 + $0x70] sm:$0xf]
      %v253 = vld [vmem:[%s209 + $0x74] sm:$0xf]
      %v254 = vld [vmem:[%s209 + $0x78] sm:$0xf]
      %v255 = vld [vmem:[%s209 + $0x7c] sm:$0xf]
      %v256 = vld [vmem:[%s1] sm:$0xf]
      %v257 = vld [vmem:[%s1 + $0x4] sm:$0xf]
      %v258 = vld [vmem:[%s1 + $0x8] sm:$0xf]
      %v259 = vld [vmem:[%s1 + $0xc] sm:$0xf]
      %v260 = vld [vmem:[%s1 + $0x10] sm:$0xf]
      %v261 = vld [vmem:[%s1 + $0x14] sm:$0xf]
      %v262 = vld [vmem:[%s1 + $0x18] sm:$0xf]
      %v263 = vld [vmem:[%s1 + $0x1c] sm:$0xf]
      %v264 = vld [vmem:[%s1 + $0x20] sm:$0xf]
      %v265 = vld [vmem:[%s1 + $0x24] sm:$0xf]
      %v266 = vld [vmem:[%s1 + $0x28] sm:$0xf]
      %v267 = vld [vmem:[%s1 + $0x2c] sm:$0xf]
      %v268 = vld [vmem:[%s1 + $0x30] sm:$0xf]
      %v269 = vld [vmem:[%s1 + $0x34] sm:$0xf]
      %v270 = vld [vmem:[%s1 + $0x38] sm:$0xf]
      %v271 = vld [vmem:[%s1 + $0x3c] sm:$0xf]
      %v272 = vld [vmem:[%s2] sm:$0x1]
      %v274 = vlaneseq
      %v275 = vshrl.u32 %v274, 7
      %v276 = vsub.s32 0, %v275
      %v277 = vrot.slane %v272, %v276
      %v311 = vunpack.c.l.b16 %v224
      %v312 = vunpack.c.l.b16 %v225
      %v313 = vunpack.c.l.b16 %v226
      %v314 = vunpack.c.l.b16 %v227
      %v315 = vunpack.c.l.b16 %v228
      %v316 = vunpack.c.l.b16 %v229
      %v317 = vunpack.c.l.b16 %v230
      %v318 = vunpack.c.l.b16 %v231
      %v319 = vunpack.c.l.b16 %v232
      %v320 = vunpack.c.l.b16 %v233
      %v321 = vunpack.c.l.b16 %v234
      %v322 = vunpack.c.l.b16 %v235
      %v323 = vunpack.c.l.b16 %v236
      %v324 = vunpack.c.l.b16 %v237
      %v325 = vunpack.c.l.b16 %v238
      %v326 = vunpack.c.l.b16 %v239
      %v327 = vunpack.c.l.b16 %v240
      %v328 = vunpack.c.l.b16 %v241
      %v329 = vunpack.c.l.b16 %v242
      %v330 = vunpack.c.l.b16 %v243
      %v331 = vunpack.c.l.b16 %v244
      %v332 = vunpack.c.l.b16 %v245
      %v333 = vunpack.c.l.b16 %v246
      %v334 = vunpack.c.l.b16 %v247
      %v335 = vunpack.c.l.b16 %v248
      %v336 = vunpack.c.l.b16 %v249
      %v337 = vunpack.c.l.b16 %v250
      %v338 = vunpack.c.l.b16 %v251
      %v339 = vunpack.c.l.b16 %v252
      %v340 = vunpack.c.l.b16 %v253
      %v341 = vunpack.c.l.b16 %v254
      %v342 = vunpack.c.l.b16 %v255
      %v343 = vpack.c.b16 %v312, %v311
      %v344 = vpack.c.b16 %v314, %v313
      %v345 = vpack.c.b16 %v316, %v315
      %v346 = vpack.c.b16 %v318, %v317
      %v347 = vpack.c.b16 %v320, %v319
      %v348 = vpack.c.b16 %v322, %v321
      %v349 = vpack.c.b16 %v324, %v323
      %v350 = vpack.c.b16 %v326, %v325
      %v351 = vpack.c.b16 %v328, %v327
      %v352 = vpack.c.b16 %v330, %v329
      %v353 = vpack.c.b16 %v332, %v331
      %v354 = vpack.c.b16 %v334, %v333
      %v355 = vpack.c.b16 %v336, %v335
      %v356 = vpack.c.b16 %v338, %v337
      %v357 = vpack.c.b16 %v340, %v339
      %v358 = vpack.c.b16 %v342, %v341
      %v391 = vunpack.c.l.b16 %v256
      %v392 = vunpack.c.l.b16 %v257
      %v393 = vunpack.c.l.b16 %v258
      %v394 = vunpack.c.l.b16 %v259
      %v395 = vunpack.c.l.b16 %v260
      %v396 = vunpack.c.l.b16 %v261
      %v397 = vunpack.c.l.b16 %v262
      %v398 = vunpack.c.l.b16 %v263
      %v399 = vunpack.c.l.b16 %v264
      %v400 = vunpack.c.l.b16 %v265
      %v401 = vunpack.c.l.b16 %v266
      %v402 = vunpack.c.l.b16 %v267
      %v403 = vunpack.c.l.b16 %v268
      %v404 = vunpack.c.l.b16 %v269
      %v405 = vunpack.c.l.b16 %v270
      %v406 = vunpack.c.l.b16 %v271
      %v407 = vpack.c.b16 %v392, %v391
      %v408 = vpack.c.b16 %v394, %v393
      %v409 = vpack.c.b16 %v396, %v395
      %v410 = vpack.c.b16 %v398, %v397
      %v411 = vpack.c.b16 %v400, %v399
      %v412 = vpack.c.b16 %v402, %v401
      %v413 = vpack.c.b16 %v404, %v403
      %v414 = vpack.c.b16 %v406, %v405
      %423 = vmatprep.subr.bf16.mxu0 0
      %424 = vmatpush1.bf16.msra.mxu0 %v407
      %425 = vmatprep.subr.bf16.mxu0 0
      %426 = vmatpush1.bf16.msra.mxu0 %v408
      %427 = vmatprep.subr.bf16.mxu0 0
      %428 = vmatpush1.bf16.msra.mxu0 %v409
      %429 = vmatprep.subr.bf16.mxu0 0
      %430 = vmatpush1.bf16.msra.mxu0 %v410
      %431 = vmatprep.subr.bf16.mxu0 0
      %432 = vmatpush1.bf16.msra.mxu0 %v411
      %433 = vmatprep.subr.bf16.mxu0 0
      %434 = vmatpush1.bf16.msra.mxu0 %v412
      %435 = vmatprep.subr.bf16.mxu0 0
      %436 = vmatpush1.bf16.msra.mxu0 %v413
      %437 = vmatprep.subr.bf16.mxu0 0
      %438 = vmatpush1.bf16.msra.mxu0 %v414
      %439 = vmatprep.subr.bf16.mxu0 0
      %440 = vmatpush1.bf16.msra.mxu0 0
      %441 = vmatprep.subr.bf16.mxu0 0
      %442 = vmatpush1.bf16.msra.mxu0 0
      %443 = vmatprep.subr.bf16.mxu0 0
      %444 = vmatpush1.bf16.msra.mxu0 0
      %445 = vmatprep.subr.bf16.mxu0 0
      %446 = vmatpush1.bf16.msra.mxu0 0
      %447 = vmatprep.subr.bf16.mxu0 0
      %448 = vmatpush1.bf16.msra.mxu0 0
      %449 = vmatprep.subr.bf16.mxu0 0
      %450 = vmatpush1.bf16.msra.mxu0 0
      %451 = vmatprep.subr.bf16.mxu0 0
      %452 = vmatpush1.bf16.msra.mxu0 0
      %453 = vmatprep.subr.bf16.mxu0 0
      %454 = vmatpush1.bf16.msra.mxu0 0
      %455 = vmatprep.mubr.bf16.mxu0 0
      %456 = vmatmul.mubr.bf16.gmra.mrb[0].mxu0 %v343
      %v457 = vpop.f32.mrb[0].mxu0
      %v458 = vadd.f32 %v277, %v457
      %v459 = vpop.f32.mrb[0].mxu0
      %v460 = vpop.f32.mrb[0].mxu0
      %v461 = vadd.f32 %v277, %v460
      %v462 = vpop.f32.mrb[0].mxu0
      %463 = vmatprep.mubr.bf16.mxu0 0
      %464 = vmatmul.mubr.bf16.gmra.mrb[0].mxu0 %v344
      %v465 = vpop.f32.mrb[0].mxu0
      %v466 = vadd.f32 %v277, %v465
      %v467 = vpop.f32.mrb[0].mxu0
      %v468 = vpop.f32.mrb[0].mxu0
      %v469 = vadd.f32 %v277, %v468
      %v470 = vpop.f32.mrb[0].mxu0
      %471 = vmatprep.mubr.bf16.mxu0 0
      %472 = vmatmul.mubr.bf16.gmra.mrb[0].mxu0 %v345
      %v473 = vpop.f32.mrb[0].mxu0
      %v474 = vadd.f32 %v277, %v473
      %v475 = vpop.f32.mrb[0].mxu0
      %v476 = vpop.f32.mrb[0].mxu0
      %v477 = vadd.f32 %v277, %v476
      %v478 = vpop.f32.mrb[0].mxu0
      %479 = vmatprep.mubr.bf16.mxu0 0
      %480 = vmatmul.mubr.bf16.gmra.mrb[0].mxu0 %v346
      %v481 = vpop.f32.mrb[0].mxu0
      %v482 = vadd.f32 %v277, %v481
      %v483 = vpop.f32.mrb[0].mxu0
      %v484 = vpop.f32.mrb[0].mxu0
      %v485 = vadd.f32 %v277, %v484
      %v486 = vpop.f32.mrb[0].mxu0
      %487 = vmatprep.mubr.bf16.mxu0 0
      %488 = vmatmul.mubr.bf16.gmra.mrb[0].mxu0 %v347
      %v489 = vpop.f32.mrb[0].mxu0
      %v490 = vadd.f32 %v277, %v489
      %v491 = vpop.f32.mrb[0].mxu0
      %v492 = vpop.f32.mrb[0].mxu0
      %v493 = vadd.f32 %v277, %v492
      %v494 = vpop.f32.mrb[0].mxu0
      %495 = vmatprep.mubr.bf16.mxu0 0
      %496 = vmatmul.mubr.bf16.gmra.mrb[0].mxu0 %v348
      %v497 = vpop.f32.mrb[0].mxu0
      %v498 = vadd.f32 %v277, %v497
      %v499 = vpop.f32.mrb[0].mxu0
      %v500 = vpop.f32.mrb[0].mxu0
      %v501 = vadd.f32 %v277, %v500
      %v502 = vpop.f32.mrb[0].mxu0
      %503 = vmatprep.mubr.bf16.mxu0 0
      %504 = vmatmul.mubr.bf16.gmra.mrb[0].mxu0 %v349
      %v505 = vpop.f32.mrb[0].mxu0
      %v506 = vadd.f32 %v277, %v505
      %v507 = vpop.f32.mrb[0].mxu0
      %v508 = vpop.f32.mrb[0].mxu0
      %v509 = vadd.f32 %v277, %v508
      %v510 = vpop.f32.mrb[0].mxu0
      %511 = vmatprep.mubr.bf16.mxu0 0
      %512 = vmatmul.mubr.bf16.gmra.mrb[0].mxu0 %v350
      %v513 = vpop.f32.mrb[0].mxu0
      %v514 = vadd.f32 %v277, %v513
      %v515 = vpop.f32.mrb[0].mxu0
      %v516 = vpop.f32.mrb[0].mxu0
      %v517 = vadd.f32 %v277, %v516
      %v518 = vpop.f32.mrb[0].mxu0
      %519 = vmatprep.mubr.bf16.mxu0 0
      %520 = vmatmul.mubr.bf16.gmra.mrb[0].mxu0 %v351
      %v521 = vpop.f32.mrb[0].mxu0
      %v522 = vadd.f32 %v277, %v521
      %v523 = vpop.f32.mrb[0].mxu0
      %v524 = vpop.f32.mrb[0].mxu0
      %v525 = vadd.f32 %v277, %v524
      %v526 = vpop.f32.mrb[0].mxu0
      %527 = vmatprep.mubr.bf16.mxu0 0
      %528 = vmatmul.mubr.bf16.gmra.mrb[0].mxu0 %v352
      %v529 = vpop.f32.mrb[0].mxu0
      %v530 = vadd.f32 %v277, %v529
      %v531 = vpop.f32.mrb[0].mxu0
      %v532 = vpop.f32.mrb[0].mxu0
      %v533 = vadd.f32 %v277, %v532
      %v534 = vpop.f32.mrb[0].mxu0
      %535 = vmatprep.mubr.bf16.mxu0 0
      %536 = vmatmul.mubr.bf16.gmra.mrb[0].mxu0 %v353
      %v537 = vpop.f32.mrb[0].mxu0
      %v538 = vadd.f32 %v277, %v537
      %v539 = vpop.f32.mrb[0].mxu0
      %v540 = vpop.f32.mrb[0].mxu0
      %v541 = vadd.f32 %v277, %v540
      %v542 = vpop.f32.mrb[0].mxu0
      %543 = vmatprep.mubr.bf16.mxu0 0
      %544 = vmatmul.mubr.bf16.gmra.mrb[0].mxu0 %v354
      %v545 = vpop.f32.mrb[0].mxu0
      %v546 = vadd.f32 %v277, %v545
      %v547 = vpop.f32.mrb[0].mxu0
      %v548 = vpop.f32.mrb[0].mxu0
      %v549 = vadd.f32 %v277, %v548
      %v550 = vpop.f32.mrb[0].mxu0
      %551 = vmatprep.mubr.bf16.mxu0 0
      %552 = vmatmul.mubr.bf16.gmra.mrb[0].mxu0 %v355
      %v553 = vpop.f32.mrb[0].mxu0
      %v554 = vadd.f32 %v277, %v553
      %v555 = vpop.f32.mrb[0].mxu0
      %v556 = vpop.f32.mrb[0].mxu0
      %v557 = vadd.f32 %v277, %v556
      %v558 = vpop.f32.mrb[0].mxu0
      %559 = vmatprep.mubr.bf16.mxu0 0
      %560 = vmatmul.mubr.bf16.gmra.mrb[0].mxu0 %v356
      %v561 = vpop.f32.mrb[0].mxu0
      %v562 = vadd.f32 %v277, %v561
      %v563 = vpop.f32.mrb[0].mxu0
      %v564 = vpop.f32.mrb[0].mxu0
      %v565 = vadd.f32 %v277, %v564
      %v566 = vpop.f32.mrb[0].mxu0
      %567 = vmatprep.mubr.bf16.mxu0 0
      %568 = vmatmul.mubr.bf16.gmra.mrb[0].mxu0 %v357
      %v569 = vpop.f32.mrb[0].mxu0
      %v570 = vadd.f32 %v277, %v569
      %v571 = vpop.f32.mrb[0].mxu0
      %v572 = vpop.f32.mrb[0].mxu0
      %v573 = vadd.f32 %v277, %v572
      %v574 = vpop.f32.mrb[0].mxu0
      %575 = vmatprep.mubr.bf16.mxu0 0
      %576 = vmatmul.mubr.bf16.gmra.mrb[0].mxu0 %v358
      %v577 = vpop.f32.mrb[0].mxu0
      %v578 = vadd.f32 %v277, %v577
      %v579 = vpop.f32.mrb[0].mxu0
      %v580 = vpop.f32.mrb[0].mxu0
      %v581 = vadd.f32 %v277, %v580
      %v582 = vpop.f32.mrb[0].mxu0
      %583 = vdwg.mxu0
      %v584 = vld [vmem:[%s215] sm:$0xff]
      %v585 = vld [vmem:[%s215 + $0x8] sm:$0xff]
      %v586 = vld [vmem:[%s215 + $0x10] sm:$0xff]
      %v587 = vld [vmem:[%s215 + $0x18] sm:$0xff]
      %v588 = vld [vmem:[%s215 + $0x20] sm:$0xff]
      %v589 = vld [vmem:[%s215 + $0x28] sm:$0xff]
      %v590 = vld [vmem:[%s215 + $0x30] sm:$0xff]
      %v591 = vld [vmem:[%s215 + $0x38] sm:$0xff]
      %v592 = vld [vmem:[%s215 + $0x40] sm:$0xff]
      %v593 = vld [vmem:[%s215 + $0x48] sm:$0xff]
      %v594 = vld [vmem:[%s215 + $0x50] sm:$0xff]
      %v595 = vld [vmem:[%s215 + $0x58] sm:$0xff]
      %v596 = vld [vmem:[%s215 + $0x60] sm:$0xff]
      %v597 = vld [vmem:[%s215 + $0x68] sm:$0xff]
      %v598 = vld [vmem:[%s215 + $0x70] sm:$0xff]
      %v599 = vld [vmem:[%s215 + $0x78] sm:$0xff]
      %v600 = vld [vmem:[%s215 + $0x80] sm:$0xff]
      %v601 = vld [vmem:[%s215 + $0x88] sm:$0xff]
      %v602 = vld [vmem:[%s215 + $0x90] sm:$0xff]
      %v603 = vld [vmem:[%s215 + $0x98] sm:$0xff]
      %v604 = vld [vmem:[%s215 + $0xa0] sm:$0xff]
      %v605 = vld [vmem:[%s215 + $0xa8] sm:$0xff]
      %v606 = vld [vmem:[%s215 + $0xb0] sm:$0xff]
      %v607 = vld [vmem:[%s215 + $0xb8] sm:$0xff]
      %v608 = vld [vmem:[%s215 + $0xc0] sm:$0xff]
      %v609 = vld [vmem:[%s215 + $0xc8] sm:$0xff]
      %v610 = vld [vmem:[%s215 + $0xd0] sm:$0xff]
      %v611 = vld [vmem:[%s215 + $0xd8] sm:$0xff]
      %v612 = vld [vmem:[%s215 + $0xe0] sm:$0xff]
      %v613 = vld [vmem:[%s215 + $0xe8] sm:$0xff]
      %v614 = vld [vmem:[%s215 + $0xf0] sm:$0xff]
      %v615 = vld [vmem:[%s215 + $0xf8] sm:$0xff]
      %v616 = vadd.f32 %v458, %v584
      %v617 = vadd.f32 %v461, %v585
      %v618 = vadd.f32 %v466, %v586
      %v619 = vadd.f32 %v469, %v587
      %v620 = vadd.f32 %v474, %v588
      %v621 = vadd.f32 %v477, %v589
      %v622 = vadd.f32 %v482, %v590
      %v623 = vadd.f32 %v485, %v591
      %v624 = vadd.f32 %v490, %v592
      %v625 = vadd.f32 %v493, %v593
      %v626 = vadd.f32 %v498, %v594
      %v627 = vadd.f32 %v501, %v595
      %v628 = vadd.f32 %v506, %v596
      %v629 = vadd.f32 %v509, %v597
      %v630 = vadd.f32 %v514, %v598
      %v631 = vadd.f32 %v517, %v599
      %v632 = vadd.f32 %v522, %v600
      %v633 = vadd.f32 %v525, %v601
      %v634 = vadd.f32 %v530, %v602
      %v635 = vadd.f32 %v533, %v603
      %v636 = vadd.f32 %v538, %v604
      %v637 = vadd.f32 %v541, %v605
      %v638 = vadd.f32 %v546, %v606
      %v639 = vadd.f32 %v549, %v607
      %v640 = vadd.f32 %v554, %v608
      %v641 = vadd.f32 %v557, %v609
      %v642 = vadd.f32 %v562, %v610
      %v643 = vadd.f32 %v565, %v611
      %v644 = vadd.f32 %v570, %v612
      %v645 = vadd.f32 %v573, %v613
      %v646 = vadd.f32 %v578, %v614
      %v647 = vadd.f32 %v581, %v615
      %648 = vst [vmem:[%s221] sm:$0xff] %v616
      %649 = vst [vmem:[%s221 + $0x8] sm:$0xff] %v617
      %650 = vst [vmem:[%s221 + $0x10] sm:$0xff] %v618
      %651 = vst [vmem:[%s221 + $0x18] sm:$0xff] %v619
      %652 = vst [vmem:[%s221 + $0x20] sm:$0xff] %v620
      %653 = vst [vmem:[%s221 + $0x28] sm:$0xff] %v621
      %654 = vst [vmem:[%s221 + $0x30] sm:$0xff] %v622
      %655 = vst [vmem:[%s221 + $0x38] sm:$0xff] %v623
      %656 = vst [vmem:[%s221 + $0x40] sm:$0xff] %v624
      %657 = vst [vmem:[%s221 + $0x48] sm:$0xff] %v625
      %658 = vst [vmem:[%s221 + $0x50] sm:$0xff] %v626
      %659 = vst [vmem:[%s221 + $0x58] sm:$0xff] %v627
      %660 = vst [vmem:[%s221 + $0x60] sm:$0xff] %v628
      %661 = vst [vmem:[%s221 + $0x68] sm:$0xff] %v629
      %662 = vst [vmem:[%s221 + $0x70] sm:$0xff] %v630
      %663 = vst [vmem:[%s221 + $0x78] sm:$0xff] %v631
      %664 = vst [vmem:[%s221 + $0x80] sm:$0xff] %v632
      %665 = vst [vmem:[%s221 + $0x88] sm:$0xff] %v633
      %666 = vst [vmem:[%s221 + $0x90] sm:$0xff] %v634
      %667 = vst [vmem:[%s221 + $0x98] sm:$0xff] %v635
      %668 = vst [vmem:[%s221 + $0xa0] sm:$0xff] %v636
      %669 = vst [vmem:[%s221 + $0xa8] sm:$0xff] %v637
      %670 = vst [vmem:[%s221 + $0xb0] sm:$0xff] %v638
      %671 = vst [vmem:[%s221 + $0xb8] sm:$0xff] %v639
      %672 = vst [vmem:[%s221 + $0xc0] sm:$0xff] %v640
      %673 = vst [vmem:[%s221 + $0xc8] sm:$0xff] %v641
      %674 = vst [vmem:[%s221 + $0xd0] sm:$0xff] %v642
      %675 = vst [vmem:[%s221 + $0xd8] sm:$0xff] %v643
      %676 = vst [vmem:[%s221 + $0xe0] sm:$0xff] %v644
      %677 = vst [vmem:[%s221 + $0xe8] sm:$0xff] %v645
      %678 = vst [vmem:[%s221 + $0xf0] sm:$0xff] %v646
      %679 = vst [vmem:[%s221 + $0xf8] sm:$0xff] %v647
      %s680 = smul.u32 32, %s15
      %p681 = scmp.lt.s32.totalorder %s680, 63
      %s682 = scalar_select %p681, %s680, 63
      %s683 = smul.addr %s682, 8
      %s684 = scalar_lea.vmem %s4, %s683
      // Predicated region
      $region37: #{liif_forward.9} parent=35 // pred_check
        %p685 = pneg %p127
      $region38: #{liif_forward.9} parent=35 // pred_check_branch
        %687 = sbr.rel (%p685) target = $region40
      $region39: #{liif_forward.9} parent=35 // pred_region
        %s688 = smul.u32 32, %s15
      $region40: #{liif_forward.9} parent=35 // pred_fallthru
        _
    $region36: #{liif_forward.9} parent=5 // pred_fallthru
      _
    %p689 = scmp.le.s32.totalorder 2, %s10
    // Predicated region
    $region41: #{liif_forward.9} parent=5 // pred_check
      %p690 = pneg %p689
    $region42: #{liif_forward.9} parent=5 // pred_check_branch
      %692 = sbr.rel (%p690) target = $region44
    $region43: #{liif_forward.9} parent=5 // pred_region
      %s693 = ssub.s32 %s10, 2
      // Predicated region
      $region45: #{liif_forward.9} parent=43 // pred_check
        %p694 = pneg %p133
      $region46: #{liif_forward.9} parent=43 // pred_check_branch
        %696 = sbr.rel (%p694) target = $region48
      $region47: #{liif_forward.9} parent=43 // pred_region
        %s697 = smul.u32 32, %s16
        %p698 = scmp.lt.s32.totalorder %s697, 63
        %s699 = scalar_select %p698, %s697, 63
        %s700 = smul.addr %s699, 8
        %s701 = scalar_lea.vmem %s4, %s700
      $region48: #{liif_forward.9} parent=43 // pred_fallthru
        _
    $region44: #{liif_forward.9} parent=5 // pred_fallthru
      _
  $region6: #{liif_forward.9} parent=0 // loop_footer
    %s14 = sadd.s32 1, %s10
  $region7: #{liif_forward.9} parent=0 // loop_footer_branch
    %9 = sbr.rel target = $region3
  $region8: #{liif_forward.9} parent=0 // loop_exit
    _

// kernel: liif_forward.8
$region0: #{liif_forward.8}
  #allocation0 [shape = 'u32[]', space=smem, size = 0x4, offset = 0x4, fixed_abs, tag = 'smem constant byte address 0x4 - core index']
  #allocation1 [shape = 'u32[144,128]{1,0:T(1,128)}', space=vmem, size = 0x12000, scoped, tag = 'internal scratch']
  %s0 = inlined_call_operand.vmem [shape: bf16[512,128], index: 0, kind: input, shape index: {}]
  %s1 = inlined_call_operand.vmem [shape: bf16[128,128], index: 1, kind: input, shape index: {}]
  %s2 = inlined_call_operand.vmem [shape: f32[1,128], index: 2, kind: input, shape index: {}]
  %s3 = inlined_call_operand.vmem [shape: f32[512,128], index: 3, kind: output, shape index: {}]
  %s4 = sld [smem:[#allocation0]]
  $region45: #{liif_forward.8} parent=0
    _
  %s6 = ssub.s32 1, %s4
  %s7 = scalar_select 0, %s6, %s4
  loop: start=0, step=1, limit=4
  $region2: #{liif_forward.8} parent=0 // loop_pre_header
    _
  $region3: #{liif_forward.8} parent=0 // loop_header
    %s9 = sphi 0, %s13
    %p10 = scmp.ge.s32.totalorder %s9, 4
    %s19 = sphi 0, %s21
    %s22 = sphi 0, %s19
    %s23 = sphi 0, %s22
    %s39 = sphi 0, %s23
    %s43 = sphi 0, %s43
    %s45 = sphi 0, %s43
    %s46 = sphi 0, %s45
    %s60 = sphi 0, %s46
    %s64 = sphi 0, %s64
    %s66 = sphi 0, %s64
    %s67 = sphi 0, %s66
    %s81 = sphi 0, %s67
    %s87 = sphi 0, %s89
    %s90 = sphi 0, %s87
    %s91 = sphi 0, %s90
    %s107 = sphi 0, %s91
  $region4: #{liif_forward.8} parent=0 // loop_header_branch
    %12 = sbr.rel (%p10) target = $region8
  $region5: #{liif_forward.8} parent=0 // loop_body
    %s14 = ssub.s32 %s9, 1
    %s15 = ssub.s32 %s9, 2
    %s16 = sadd.s32 %s9, 1
    %s17 = ssub.s32 %s9, %s16
    %p18 = scmp.eq.s32.totalorder %s17, 0
    %s20 = sadd.s32 %s19, 1
    %s21 = scalar_select %p18, %s19, %s20
    %p24 = pneg %p18
    %p25 = scmp.eq.s32.totalorder %s9, 1
    %p26 = por %p24, %p25
    %p27 = scmp.ne.s32.totalorder %s19, %s22
    %p28 = scmp.eq.s32.totalorder %s9, 0
    %p29 = por %p27, %p28
    %p30 = scmp.ne.s32.totalorder %s19, %s22
    %p31 = scmp.eq.s32.totalorder %s14, 1
    %p32 = por %p30, %p31
    %p33 = scmp.ne.s32.totalorder %s22, %s23
    %p34 = scmp.eq.s32.totalorder %s14, 0
    %p35 = por %p33, %p34
    %p36 = scmp.ne.s32.totalorder %s22, %s23
    %p37 = scmp.eq.s32.totalorder %s15, 1
    %p38 = por %p36, %p37
    %p40 = scmp.ne.s32.totalorder %s23, %s39
    %p41 = scmp.eq.s32.totalorder %s15, 0
    %p42 = por %p40, %p41
    %s44 = sadd.s32 %s43, 1
    %p47 = scmp.eq.s32.totalorder %s9, 1
    %p48 = scmp.ne.s32.totalorder %s43, %s45
    %p49 = scmp.eq.s32.totalorder %s9, 0
    %p50 = por %p48, %p49
    %p51 = scmp.ne.s32.totalorder %s43, %s45
    %p52 = scmp.eq.s32.totalorder %s14, 1
    %p53 = por %p51, %p52
    %p54 = scmp.ne.s32.totalorder %s45, %s46
    %p55 = scmp.eq.s32.totalorder %s14, 0
    %p56 = por %p54, %p55
    %p57 = scmp.ne.s32.totalorder %s45, %s46
    %p58 = scmp.eq.s32.totalorder %s15, 1
    %p59 = por %p57, %p58
    %p61 = scmp.ne.s32.totalorder %s46, %s60
    %p62 = scmp.eq.s32.totalorder %s15, 0
    %p63 = por %p61, %p62
    %s65 = sadd.s32 %s64, 1
    %p68 = scmp.eq.s32.totalorder %s9, 1
    %p69 = scmp.ne.s32.totalorder %s64, %s66
    %p70 = scmp.eq.s32.totalorder %s9, 0
    %p71 = por %p69, %p70
    %p72 = scmp.ne.s32.totalorder %s64, %s66
    %p73 = scmp.eq.s32.totalorder %s14, 1
    %p74 = por %p72, %p73
    %p75 = scmp.ne.s32.totalorder %s66, %s67
    %p76 = scmp.eq.s32.totalorder %s14, 0
    %p77 = por %p75, %p76
    %p78 = scmp.ne.s32.totalorder %s66, %s67
    %p79 = scmp.eq.s32.totalorder %s15, 1
    %p80 = por %p78, %p79
    %p82 = scmp.ne.s32.totalorder %s67, %s81
    %p83 = scmp.eq.s32.totalorder %s15, 0
    %p84 = por %p82, %p83
    %s85 = ssub.s32 %s9, %s16
    %p86 = scmp.eq.s32.totalorder %s85, 0
    %s88 = sadd.s32 %s87, 1
    %s89 = scalar_select %p86, %s87, %s88
    %p92 = pneg %p86
    %p93 = scmp.eq.s32.totalorder %s9, 1
    %p94 = por %p92, %p93
    %p95 = scmp.ne.s32.totalorder %s87, %s90
    %p96 = scmp.eq.s32.totalorder %s9, 0
    %p97 = por %p95, %p96
    %p98 = scmp.ne.s32.totalorder %s87, %s90
    %p99 = scmp.eq.s32.totalorder %s14, 1
    %p100 = por %p98, %p99
    %p101 = scmp.ne.s32.totalorder %s90, %s91
    %p102 = scmp.eq.s32.totalorder %s14, 0
    %p103 = por %p101, %p102
    %p104 = scmp.ne.s32.totalorder %s90, %s91
    %p105 = scmp.eq.s32.totalorder %s15, 1
    %p106 = por %p104, %p105
    %p108 = scmp.ne.s32.totalorder %s91, %s107
    %p109 = scmp.eq.s32.totalorder %s15, 0
    %p110 = por %p108, %p109
    %p111 = scmp.le.s32.totalorder 1, %s9
    %p112 = scmp.lt.s32.totalorder %s9, 3
    %p113 = pnand %p111, %p112
    %p114 = pneg %p113
    // Predicated region
    $region9: #{liif_forward.8} parent=5 // pred_check
      _
    $region10: #{liif_forward.8} parent=5 // pred_check_branch
      %116 = sbr.rel (%p113) target = $region12
    $region11: #{liif_forward.8} parent=5 // pred_region
      %s117 = ssub.s32 %s9, 1
      // Predicated region
      $region13: #{liif_forward.8} parent=11 // pred_check
        %p118 = pneg %p56
      $region14: #{liif_forward.8} parent=11 // pred_check_branch
        %120 = sbr.rel (%p118) target = $region16
      $region15: #{liif_forward.8} parent=11 // pred_region
        _
      $region16: #{liif_forward.8} parent=11 // pred_fallthru
        _
      // Predicated region
      $region17: #{liif_forward.8} parent=11 // pred_check
        %p121 = pneg %p77
      $region18: #{liif_forward.8} parent=11 // pred_check_branch
        %123 = sbr.rel (%p121) target = $region20
      $region19: #{liif_forward.8} parent=11 // pred_region
        _
      $region20: #{liif_forward.8} parent=11 // pred_fallthru
        _
    $region12: #{liif_forward.8} parent=5 // pred_fallthru
      _
    %p124 = scmp.lt.s32.totalorder %s9, 2
    // Predicated region
    $region21: #{liif_forward.8} parent=5 // pred_check
      %p125 = pneg %p124
    $region22: #{liif_forward.8} parent=5 // pred_check_branch
      %127 = sbr.rel (%p125) target = $region24
    $region23: #{liif_forward.8} parent=5 // pred_region
      // Predicated region
      $region25: #{liif_forward.8} parent=23 // pred_check
        %p128 = pneg %p29
      $region26: #{liif_forward.8} parent=23 // pred_check_branch
        %130 = sbr.rel (%p128) target = $region28
      $region27: #{liif_forward.8} parent=23 // pred_region
        %s131 = smul.u32 32, %s9
        %p132 = scmp.lt.s32.totalorder %s131, 63
        %s133 = scalar_select %p132, %s131, 63
        %s134 = smul.addr %s133, 4
        %s135 = scalar_lea.vmem %s0, %s134
        %s136 = smul.u32 32, %s9
      $region28: #{liif_forward.8} parent=23 // pred_fallthru
        _
    $region24: #{liif_forward.8} parent=5 // pred_fallthru
      _
    %p137 = scmp.le.s32.totalorder 1, %s9
    %p138 = scmp.lt.s32.totalorder %s9, 3
    %p139 = pnand %p137, %p138
    %p140 = pneg %p139
    // Predicated region
    $region29: #{liif_forward.8} parent=5 // pred_check
      _
    $region30: #{liif_forward.8} parent=5 // pred_check_branch
      %142 = sbr.rel (%p139) target = $region32
    $region31: #{liif_forward.8} parent=5 // pred_region
      %s143 = ssub.s32 %s9, 1
      %s144 = smul.u32 32, %s14
      %p145 = scmp.lt.s32.totalorder %s144, 63
      %s146 = scalar_select %p145, %s144, 63
      %s147 = smul.addr %s146, 4
      %s148 = scalar_lea.vmem %s0, %s147
      %p149 = pneg %p35
      %p150 = pneg %p32
      %p151 = pneg %p56
      %p152 = pneg %p53
      %p153 = pneg %p77
      %p154 = pneg %p74
      %p155 = pneg %p103
      %p156 = pneg %p100
      %s157 = smul.u32 32, %s14
      %p158 = scmp.lt.s32.totalorder %s157, 63
      %s159 = scalar_select %p158, %s157, 63
      %s160 = smul.addr %s159, 8
      %s161 = scalar_lea.vmem %s3, %s160
      %s162 = smul.u32 32, %s14
      %p163 = scmp.lt.s32.totalorder %s162, 63
      %s164 = scalar_select %p163, %s162, 63
      %s165 = smul.addr %s164, 4
      %s166 = scalar_lea.vmem %s0, %s165
      %s167 = smul.u32 32, %s14
      %s168 = smul.u32 32, %s14
      %p169 = scmp.lt.s32.totalorder %s168, 63
      %s170 = scalar_select %p169, %s168, 63
      %s171 = smul.addr %s170, 8
      %s172 = scalar_lea.vmem %s3, %s171
      %s173 = smul.u32 32, %s14
      %v175 = vld [vmem:[%s166] sm:$0xf]
      %v176 = vld [vmem:[%s166 + $0x4] sm:$0xf]
      %v177 = vld [vmem:[%s166 + $0x8] sm:$0xf]
      %v178 = vld [vmem:[%s166 + $0xc] sm:$0xf]
      %v179 = vld [vmem:[%s166 + $0x10] sm:$0xf]
      %v180 = vld [vmem:[%s166 + $0x14] sm:$0xf]
      %v181 = vld [vmem:[%s166 + $0x18] sm:$0xf]
      %v182 = vld [vmem:[%s166 + $0x1c] sm:$0xf]
      %v183 = vld [vmem:[%s166 + $0x20] sm:$0xf]
      %v184 = vld [vmem:[%s166 + $0x24] sm:$0xf]
      %v185 = vld [vmem:[%s166 + $0x28] sm:$0xf]
      %v186 = vld [vmem:[%s166 + $0x2c] sm:$0xf]
      %v187 = vld [vmem:[%s166 + $0x30] sm:$0xf]
      %v188 = vld [vmem:[%s166 + $0x34] sm:$0xf]
      %v189 = vld [vmem:[%s166 + $0x38] sm:$0xf]
      %v190 = vld [vmem:[%s166 + $0x3c] sm:$0xf]
      %v191 = vld [vmem:[%s166 + $0x40] sm:$0xf]
      %v192 = vld [vmem:[%s166 + $0x44] sm:$0xf]
      %v193 = vld [vmem:[%s166 + $0x48] sm:$0xf]
      %v194 = vld [vmem:[%s166 + $0x4c] sm:$0xf]
      %v195 = vld [vmem:[%s166 + $0x50] sm:$0xf]
      %v196 = vld [vmem:[%s166 + $0x54] sm:$0xf]
      %v197 = vld [vmem:[%s166 + $0x58] sm:$0xf]
      %v198 = vld [vmem:[%s166 + $0x5c] sm:$0xf]
      %v199 = vld [vmem:[%s166 + $0x60] sm:$0xf]
      %v200 = vld [vmem:[%s166 + $0x64] sm:$0xf]
      %v201 = vld [vmem:[%s166 + $0x68] sm:$0xf]
      %v202 = vld [vmem:[%s166 + $0x6c] sm:$0xf]
      %v203 = vld [vmem:[%s166 + $0x70] sm:$0xf]
      %v204 = vld [vmem:[%s166 + $0x74] sm:$0xf]
      %v205 = vld [vmem:[%s166 + $0x78] sm:$0xf]
      %v206 = vld [vmem:[%s166 + $0x7c] sm:$0xf]
      %v207 = vld [vmem:[%s1] sm:$0xf]
      %v208 = vld [vmem:[%s1 + $0x4] sm:$0xf]
      %v209 = vld [vmem:[%s1 + $0x8] sm:$0xf]
      %v210 = vld [vmem:[%s1 + $0xc] sm:$0xf]
      %v211 = vld [vmem:[%s1 + $0x10] sm:$0xf]
      %v212 = vld [vmem:[%s1 + $0x14] sm:$0xf]
      %v213 = vld [vmem:[%s1 + $0x18] sm:$0xf]
      %v214 = vld [vmem:[%s1 + $0x1c] sm:$0xf]
      %v215 = vld [vmem:[%s1 + $0x20] sm:$0xf]
      %v216 = vld [vmem:[%s1 + $0x24] sm:$0xf]
      %v217 = vld [vmem:[%s1 + $0x28] sm:$0xf]
      %v218 = vld [vmem:[%s1 + $0x2c] sm:$0xf]
      %v219 = vld [vmem:[%s1 + $0x30] sm:$0xf]
      %v220 = vld [vmem:[%s1 + $0x34] sm:$0xf]
      %v221 = vld [vmem:[%s1 + $0x38] sm:$0xf]
      %v222 = vld [vmem:[%s1 + $0x3c] sm:$0xf]
      %v223 = vld [vmem:[%s2] sm:$0x1]
      %v225 = vlaneseq
      %v226 = vshrl.u32 %v225, 7
      %v227 = vsub.s32 0, %v226
      %v228 = vrot.slane %v223, %v227
      %v262 = vunpack.c.l.b16 %v175
      %v263 = vunpack.c.l.b16 %v176
      %v264 = vunpack.c.l.b16 %v177
      %v265 = vunpack.c.l.b16 %v178
      %v266 = vunpack.c.l.b16 %v179
      %v267 = vunpack.c.l.b16 %v180
      %v268 = vunpack.c.l.b16 %v181
      %v269 = vunpack.c.l.b16 %v182
      %v270 = vunpack.c.l.b16 %v183
      %v271 = vunpack.c.l.b16 %v184
      %v272 = vunpack.c.l.b16 %v185
      %v273 = vunpack.c.l.b16 %v186
      %v274 = vunpack.c.l.b16 %v187
      %v275 = vunpack.c.l.b16 %v188
      %v276 = vunpack.c.l.b16 %v189
      %v277 = vunpack.c.l.b16 %v190
      %v278 = vunpack.c.l.b16 %v191
      %v279 = vunpack.c.l.b16 %v192
      %v280 = vunpack.c.l.b16 %v193
      %v281 = vunpack.c.l.b16 %v194
      %v282 = vunpack.c.l.b16 %v195
      %v283 = vunpack.c.l.b16 %v196
      %v284 = vunpack.c.l.b16 %v197
      %v285 = vunpack.c.l.b16 %v198
      %v286 = vunpack.c.l.b16 %v199
      %v287 = vunpack.c.l.b16 %v200
      %v288 = vunpack.c.l.b16 %v201
      %v289 = vunpack.c.l.b16 %v202
      %v290 = vunpack.c.l.b16 %v203
      %v291 = vunpack.c.l.b16 %v204
      %v292 = vunpack.c.l.b16 %v205
      %v293 = vunpack.c.l.b16 %v206
      %v294 = vpack.c.b16 %v263, %v262
      %v295 = vpack.c.b16 %v265, %v264
      %v296 = vpack.c.b16 %v267, %v266
      %v297 = vpack.c.b16 %v269, %v268
      %v298 = vpack.c.b16 %v271, %v270
      %v299 = vpack.c.b16 %v273, %v272
      %v300 = vpack.c.b16 %v275, %v274
      %v301 = vpack.c.b16 %v277, %v276
      %v302 = vpack.c.b16 %v279, %v278
      %v303 = vpack.c.b16 %v281, %v280
      %v304 = vpack.c.b16 %v283, %v282
      %v305 = vpack.c.b16 %v285, %v284
      %v306 = vpack.c.b16 %v287, %v286
      %v307 = vpack.c.b16 %v289, %v288
      %v308 = vpack.c.b16 %v291, %v290
      %v309 = vpack.c.b16 %v293, %v292
      %v342 = vunpack.c.l.b16 %v207
      %v343 = vunpack.c.l.b16 %v208
      %v344 = vunpack.c.l.b16 %v209
      %v345 = vunpack.c.l.b16 %v210
      %v346 = vunpack.c.l.b16 %v211
      %v347 = vunpack.c.l.b16 %v212
      %v348 = vunpack.c.l.b16 %v213
      %v349 = vunpack.c.l.b16 %v214
      %v350 = vunpack.c.l.b16 %v215
      %v351 = vunpack.c.l.b16 %v216
      %v352 = vunpack.c.l.b16 %v217
      %v353 = vunpack.c.l.b16 %v218
      %v354 = vunpack.c.l.b16 %v219
      %v355 = vunpack.c.l.b16 %v220
      %v356 = vunpack.c.l.b16 %v221
      %v357 = vunpack.c.l.b16 %v222
      %v358 = vpack.c.b16 %v343, %v342
      %v359 = vpack.c.b16 %v345, %v344
      %v360 = vpack.c.b16 %v347, %v346
      %v361 = vpack.c.b16 %v349, %v348
      %v362 = vpack.c.b16 %v351, %v350
      %v363 = vpack.c.b16 %v353, %v352
      %v364 = vpack.c.b16 %v355, %v354
      %v365 = vpack.c.b16 %v357, %v356
      %374 = vmatprep.subr.bf16.mxu0 0
      %375 = vmatpush1.bf16.msra.mxu0 %v358
      %376 = vmatprep.subr.bf16.mxu0 0
      %377 = vmatpush1.bf16.msra.mxu0 %v359
      %378 = vmatprep.subr.bf16.mxu0 0
      %379 = vmatpush1.bf16.msra.mxu0 %v360
      %380 = vmatprep.subr.bf16.mxu0 0
      %381 = vmatpush1.bf16.msra.mxu0 %v361
      %382 = vmatprep.subr.bf16.mxu0 0
      %383 = vmatpush1.bf16.msra.mxu0 %v362
      %384 = vmatprep.subr.bf16.mxu0 0
      %385 = vmatpush1.bf16.msra.mxu0 %v363
      %386 = vmatprep.subr.bf16.mxu0 0
      %387 = vmatpush1.bf16.msra.mxu0 %v364
      %388 = vmatprep.subr.bf16.mxu0 0
      %389 = vmatpush1.bf16.msra.mxu0 %v365
      %390 = vmatprep.subr.bf16.mxu0 0
      %391 = vmatpush1.bf16.msra.mxu0 0
      %392 = vmatprep.subr.bf16.mxu0 0
      %393 = vmatpush1.bf16.msra.mxu0 0
      %394 = vmatprep.subr.bf16.mxu0 0
      %395 = vmatpush1.bf16.msra.mxu0 0
      %396 = vmatprep.subr.bf16.mxu0 0
      %397 = vmatpush1.bf16.msra.mxu0 0
      %398 = vmatprep.subr.bf16.mxu0 0
      %399 = vmatpush1.bf16.msra.mxu0 0
      %400 = vmatprep.subr.bf16.mxu0 0
      %401 = vmatpush1.bf16.msra.mxu0 0
      %402 = vmatprep.subr.bf16.mxu0 0
      %403 = vmatpush1.bf16.msra.mxu0 0
      %404 = vmatprep.subr.bf16.mxu0 0
      %405 = vmatpush1.bf16.msra.mxu0 0
      %406 = vmatprep.mubr.bf16.mxu0 0
      %407 = vmatmul.mubr.bf16.gmra.mrb[0].mxu0 %v294
      %v408 = vpop.f32.mrb[0].mxu0
      %v409 = vadd.f32 %v228, %v408
      %v410 = vpop.f32.mrb[0].mxu0
      %v411 = vpop.f32.mrb[0].mxu0
      %v412 = vadd.f32 %v228, %v411
      %v413 = vpop.f32.mrb[0].mxu0
      %414 = vmatprep.mubr.bf16.mxu0 0
      %415 = vmatmul.mubr.bf16.gmra.mrb[0].mxu0 %v295
      %v416 = vpop.f32.mrb[0].mxu0
      %v417 = vadd.f32 %v228, %v416
      %v418 = vpop.f32.mrb[0].mxu0
      %v419 = vpop.f32.mrb[0].mxu0
      %v420 = vadd.f32 %v228, %v419
      %v421 = vpop.f32.mrb[0].mxu0
      %422 = vmatprep.mubr.bf16.mxu0 0
      %423 = vmatmul.mubr.bf16.gmra.mrb[0].mxu0 %v296
      %v424 = vpop.f32.mrb[0].mxu0
      %v425 = vadd.f32 %v228, %v424
      %v426 = vpop.f32.mrb[0].mxu0
      %v427 = vpop.f32.mrb[0].mxu0
      %v428 = vadd.f32 %v228, %v427
      %v429 = vpop.f32.mrb[0].mxu0
      %430 = vmatprep.mubr.bf16.mxu0 0
      %431 = vmatmul.mubr.bf16.gmra.mrb[0].mxu0 %v297
      %v432 = vpop.f32.mrb[0].mxu0
      %v433 = vadd.f32 %v228, %v432
      %v434 = vpop.f32.mrb[0].mxu0
      %v435 = vpop.f32.mrb[0].mxu0
      %v436 = vadd.f32 %v228, %v435
      %v437 = vpop.f32.mrb[0].mxu0
      %438 = vmatprep.mubr.bf16.mxu0 0
      %439 = vmatmul.mubr.bf16.gmra.mrb[0].mxu0 %v298
      %v440 = vpop.f32.mrb[0].mxu0
      %v441 = vadd.f32 %v228, %v440
      %v442 = vpop.f32.mrb[0].mxu0
      %v443 = vpop.f32.mrb[0].mxu0
      %v444 = vadd.f32 %v228, %v443
      %v445 = vpop.f32.mrb[0].mxu0
      %446 = vmatprep.mubr.bf16.mxu0 0
      %447 = vmatmul.mubr.bf16.gmra.mrb[0].mxu0 %v299
      %v448 = vpop.f32.mrb[0].mxu0
      %v449 = vadd.f32 %v228, %v448
      %v450 = vpop.f32.mrb[0].mxu0
      %v451 = vpop.f32.mrb[0].mxu0
      %v452 = vadd.f32 %v228, %v451
      %v453 = vpop.f32.mrb[0].mxu0
      %454 = vmatprep.mubr.bf16.mxu0 0
      %455 = vmatmul.mubr.bf16.gmra.mrb[0].mxu0 %v300
      %v456 = vpop.f32.mrb[0].mxu0
      %v457 = vadd.f32 %v228, %v456
      %v458 = vpop.f32.mrb[0].mxu0
      %v459 = vpop.f32.mrb[0].mxu0
      %v460 = vadd.f32 %v228, %v459
      %v461 = vpop.f32.mrb[0].mxu0
      %462 = vmatprep.mubr.bf16.mxu0 0
      %463 = vmatmul.mubr.bf16.gmra.mrb[0].mxu0 %v301
      %v464 = vpop.f32.mrb[0].mxu0
      %v465 = vadd.f32 %v228, %v464
      %v466 = vpop.f32.mrb[0].mxu0
      %v467 = vpop.f32.mrb[0].mxu0
      %v468 = vadd.f32 %v228, %v467
      %v469 = vpop.f32.mrb[0].mxu0
      %470 = vmatprep.mubr.bf16.mxu0 0
      %471 = vmatmul.mubr.bf16.gmra.mrb[0].mxu0 %v302
      %v472 = vpop.f32.mrb[0].mxu0
      %v473 = vadd.f32 %v228, %v472
      %v474 = vpop.f32.mrb[0].mxu0
      %v475 = vpop.f32.mrb[0].mxu0
      %v476 = vadd.f32 %v228, %v475
      %v477 = vpop.f32.mrb[0].mxu0
      %478 = vmatprep.mubr.bf16.mxu0 0
      %479 = vmatmul.mubr.bf16.gmra.mrb[0].mxu0 %v303
      %v480 = vpop.f32.mrb[0].mxu0
      %v481 = vadd.f32 %v228, %v480
      %v482 = vpop.f32.mrb[0].mxu0
      %v483 = vpop.f32.mrb[0].mxu0
      %v484 = vadd.f32 %v228, %v483
      %v485 = vpop.f32.mrb[0].mxu0
      %486 = vmatprep.mubr.bf16.mxu0 0
      %487 = vmatmul.mubr.bf16.gmra.mrb[0].mxu0 %v304
      %v488 = vpop.f32.mrb[0].mxu0
      %v489 = vadd.f32 %v228, %v488
      %v490 = vpop.f32.mrb[0].mxu0
      %v491 = vpop.f32.mrb[0].mxu0
      %v492 = vadd.f32 %v228, %v491
      %v493 = vpop.f32.mrb[0].mxu0
      %494 = vmatprep.mubr.bf16.mxu0 0
      %495 = vmatmul.mubr.bf16.gmra.mrb[0].mxu0 %v305
      %v496 = vpop.f32.mrb[0].mxu0
      %v497 = vadd.f32 %v228, %v496
      %v498 = vpop.f32.mrb[0].mxu0
      %v499 = vpop.f32.mrb[0].mxu0
      %v500 = vadd.f32 %v228, %v499
      %v501 = vpop.f32.mrb[0].mxu0
      %502 = vmatprep.mubr.bf16.mxu0 0
      %503 = vmatmul.mubr.bf16.gmra.mrb[0].mxu0 %v306
      %v504 = vpop.f32.mrb[0].mxu0
      %v505 = vadd.f32 %v228, %v504
      %v506 = vpop.f32.mrb[0].mxu0
      %v507 = vpop.f32.mrb[0].mxu0
      %v508 = vadd.f32 %v228, %v507
      %v509 = vpop.f32.mrb[0].mxu0
      %510 = vmatprep.mubr.bf16.mxu0 0
      %511 = vmatmul.mubr.bf16.gmra.mrb[0].mxu0 %v307
      %v512 = vpop.f32.mrb[0].mxu0
      %v513 = vadd.f32 %v228, %v512
      %v514 = vpop.f32.mrb[0].mxu0
      %v515 = vpop.f32.mrb[0].mxu0
      %v516 = vadd.f32 %v228, %v515
      %v517 = vpop.f32.mrb[0].mxu0
      %518 = vmatprep.mubr.bf16.mxu0 0
      %519 = vmatmul.mubr.bf16.gmra.mrb[0].mxu0 %v308
      %v520 = vpop.f32.mrb[0].mxu0
      %v521 = vadd.f32 %v228, %v520
      %v522 = vpop.f32.mrb[0].mxu0
      %v523 = vpop.f32.mrb[0].mxu0
      %v524 = vadd.f32 %v228, %v523
      %v525 = vpop.f32.mrb[0].mxu0
      %526 = vmatprep.mubr.bf16.mxu0 0
      %527 = vmatmul.mubr.bf16.gmra.mrb[0].mxu0 %v309
      %v528 = vpop.f32.mrb[0].mxu0
      %v529 = vadd.f32 %v228, %v528
      %v530 = vpop.f32.mrb[0].mxu0
      %v531 = vpop.f32.mrb[0].mxu0
      %v532 = vadd.f32 %v228, %v531
      %v533 = vpop.f32.mrb[0].mxu0
      %534 = vdwg.mxu0
      %v535 = vmax.f32 %v409, 0.0
      %v536 = vmax.f32 %v412, 0.0
      %v537 = vmax.f32 %v417, 0.0
      %v538 = vmax.f32 %v420, 0.0
      %v539 = vmax.f32 %v425, 0.0
      %v540 = vmax.f32 %v428, 0.0
      %v541 = vmax.f32 %v433, 0.0
      %v542 = vmax.f32 %v436, 0.0
      %v543 = vmax.f32 %v441, 0.0
      %v544 = vmax.f32 %v444, 0.0
      %v545 = vmax.f32 %v449, 0.0
      %v546 = vmax.f32 %v452, 0.0
      %v547 = vmax.f32 %v457, 0.0
      %v548 = vmax.f32 %v460, 0.0
      %v549 = vmax.f32 %v465, 0.0
      %v550 = vmax.f32 %v468, 0.0
      %v551 = vmax.f32 %v473, 0.0
      %v552 = vmax.f32 %v476, 0.0
      %v553 = vmax.f32 %v481, 0.0
      %v554 = vmax.f32 %v484, 0.0
      %v555 = vmax.f32 %v489, 0.0
      %v556 = vmax.f32 %v492, 0.0
      %v557 = vmax.f32 %v497, 0.0
      %v558 = vmax.f32 %v500, 0.0
      %v559 = vmax.f32 %v505, 0.0
      %v560 = vmax.f32 %v508, 0.0
      %v561 = vmax.f32 %v513, 0.0
      %v562 = vmax.f32 %v516, 0.0
      %v563 = vmax.f32 %v521, 0.0
      %v564 = vmax.f32 %v524, 0.0
      %v565 = vmax.f32 %v529, 0.0
      %v566 = vmax.f32 %v532, 0.0
      %567 = vst [vmem:[%s172] sm:$0xff] %v535
      %568 = vst [vmem:[%s172 + $0x8] sm:$0xff] %v536
      %569 = vst [vmem:[%s172 + $0x10] sm:$0xff] %v537
      %570 = vst [vmem:[%s172 + $0x18] sm:$0xff] %v538
      %571 = vst [vmem:[%s172 + $0x20] sm:$0xff] %v539
      %572 = vst [vmem:[%s172 + $0x28] sm:$0xff] %v540
      %573 = vst [vmem:[%s172 + $0x30] sm:$0xff] %v541
      %574 = vst [vmem:[%s172 + $0x38] sm:$0xff] %v542
      %575 = vst [vmem:[%s172 + $0x40] sm:$0xff] %v543
      %576 = vst [vmem:[%s172 + $0x48] sm:$0xff] %v544
      %577 = vst [vmem:[%s172 + $0x50] sm:$0xff] %v545
      %578 = vst [vmem:[%s172 + $0x58] sm:$0xff] %v546
      %579 = vst [vmem:[%s172 + $0x60] sm:$0xff] %v547
      %580 = vst [vmem:[%s172 + $0x68] sm:$0xff] %v548
      %581 = vst [vmem:[%s172 + $0x70] sm:$0xff] %v549
      %582 = vst [vmem:[%s172 + $0x78] sm:$0xff] %v550
      %583 = vst [vmem:[%s172 + $0x80] sm:$0xff] %v551
      %584 = vst [vmem:[%s172 + $0x88] sm:$0xff] %v552
      %585 = vst [vmem:[%s172 + $0x90] sm:$0xff] %v553
      %586 = vst [vmem:[%s172 + $0x98] sm:$0xff] %v554
      %587 = vst [vmem:[%s172 + $0xa0] sm:$0xff] %v555
      %588 = vst [vmem:[%s172 + $0xa8] sm:$0xff] %v556
      %589 = vst [vmem:[%s172 + $0xb0] sm:$0xff] %v557
      %590 = vst [vmem:[%s172 + $0xb8] sm:$0xff] %v558
      %591 = vst [vmem:[%s172 + $0xc0] sm:$0xff] %v559
      %592 = vst [vmem:[%s172 + $0xc8] sm:$0xff] %v560
      %593 = vst [vmem:[%s172 + $0xd0] sm:$0xff] %v561
      %594 = vst [vmem:[%s172 + $0xd8] sm:$0xff] %v562
      %595 = vst [vmem:[%s172 + $0xe0] sm:$0xff] %v563
      %596 = vst [vmem:[%s172 + $0xe8] sm:$0xff] %v564
      %597 = vst [vmem:[%s172 + $0xf0] sm:$0xff] %v565
      %598 = vst [vmem:[%s172 + $0xf8] sm:$0xff] %v566
      %s599 = smul.u32 32, %s14
      %p600 = scmp.lt.s32.totalorder %s599, 63
      %s601 = scalar_select %p600, %s599, 63
      %s602 = smul.addr %s601, 8
      %s603 = scalar_lea.vmem %s3, %s602
      // Predicated region
      $region33: #{liif_forward.8} parent=31 // pred_check
        %p604 = pneg %p100
      $region34: #{liif_forward.8} parent=31 // pred_check_branch
        %606 = sbr.rel (%p604) target = $region36
      $region35: #{liif_forward.8} parent=31 // pred_region
        %s607 = smul.u32 32, %s14
      $region36: #{liif_forward.8} parent=31 // pred_fallthru
        _
    $region32: #{liif_forward.8} parent=5 // pred_fallthru
      _
    %p608 = scmp.le.s32.totalorder 2, %s9
    // Predicated region
    $region37: #{liif_forward.8} parent=5 // pred_check
      %p609 = pneg %p608
    $region38: #{liif_forward.8} parent=5 // pred_check_branch
      %611 = sbr.rel (%p609) target = $region40
    $region39: #{liif_forward.8} parent=5 // pred_region
      %s612 = ssub.s32 %s9, 2
      // Predicated region
      $region41: #{liif_forward.8} parent=39 // pred_check
        %p613 = pneg %p106
      $region42: #{liif_forward.8} parent=39 // pred_check_branch
        %615 = sbr.rel (%p613) target = $region44
      $region43: #{liif_forward.8} parent=39 // pred_region
        %s616 = smul.u32 32, %s15
        %p617 = scmp.lt.s32.totalorder %s616, 63
        %s618 = scalar_select %p617, %s616, 63
        %s619 = smul.addr %s618, 8
        %s620 = scalar_lea.vmem %s3, %s619
      $region44: #{liif_forward.8} parent=39 // pred_fallthru
        _
    $region40: #{liif_forward.8} parent=5 // pred_fallthru
      _
  $region6: #{liif_forward.8} parent=0 // loop_footer
    %s13 = sadd.s32 1, %s9
  $region7: #{liif_forward.8} parent=0 // loop_footer_branch
    %8 = sbr.rel target = $region3
  $region8: #{liif_forward.8} parent=0 // loop_exit
    _

// kernel: liif_forward.13
$region0: #{liif_forward.13}
  #allocation0 [shape = 'u32[]', space=smem, size = 0x4, offset = 0x4, fixed_abs, tag = 'smem constant byte address 0x4 - core index']
  #allocation1 [shape = 'u32[144,128]{1,0:T(1,128)}', space=vmem, size = 0x12000, scoped, tag = 'internal scratch']
  %s0 = inlined_call_operand.vmem [shape: bf16[4,512,128], index: 0, kind: input, shape index: {}]
  %s1 = inlined_call_operand.vmem [shape: f32[512,4], index: 1, kind: input, shape index: {}]
  %s2 = inlined_call_operand.vmem [shape: bf16[128,128], index: 2, kind: input, shape index: {}]
  %s3 = inlined_call_operand.vmem [shape: f32[1,128], index: 3, kind: input, shape index: {}]
  %s4 = inlined_call_operand.vmem [shape: bf16[128,128], index: 4, kind: input, shape index: {}]
  %s5 = inlined_call_operand.vmem [shape: f32[1,128], index: 5, kind: input, shape index: {}]
  %s6 = inlined_call_operand.vmem [shape: bf16[128,128], index: 6, kind: input, shape index: {}]
  %s7 = inlined_call_operand.vmem [shape: f32[1,128], index: 7, kind: input, shape index: {}]
  %s8 = inlined_call_operand.vmem [shape: f32[512,128], index: 8, kind: output, shape index: {}]
  %s9 = sld [smem:[#allocation0]]
  $region106: #{liif_forward.13} parent=0
    _
  %s11 = ssub.s32 1, %s9
  %s12 = scalar_select 0, %s11, %s9
  $region1: #{liif_forward.13} parent=0
    #allocation2 [shape = 'u8[524288]{0}', space=vmem, size = 0x80000, scoped, tag = 'input window, operand 0']
    loop: start=0, step=1, limit=4
    $region2: #{liif_forward.13} parent=1 // loop_pre_header
      _
    $region3: #{liif_forward.13} parent=1 // loop_header
      %s14 = sphi 0, %s18
      %p15 = scmp.ge.s32.totalorder %s14, 4
      %s24 = sphi 0, %s26
      %s27 = sphi 0, %s24
      %s28 = sphi 0, %s27
      %s44 = sphi 0, %s28
      %s50 = sphi 0, %s52
      %s53 = sphi 0, %s50
      %s54 = sphi 0, %s53
      %s70 = sphi 0, %s54
      %s74 = sphi 0, %s74
      %s76 = sphi 0, %s74
      %s77 = sphi 0, %s76
      %s91 = sphi 0, %s77
      %s95 = sphi 0, %s95
      %s97 = sphi 0, %s95
      %s98 = sphi 0, %s97
      %s112 = sphi 0, %s98
      %s116 = sphi 0, %s116
      %s118 = sphi 0, %s116
      %s119 = sphi 0, %s118
      %s133 = sphi 0, %s119
      %s137 = sphi 0, %s137
      %s139 = sphi 0, %s137
      %s140 = sphi 0, %s139
      %s154 = sphi 0, %s140
      %s158 = sphi 0, %s158
      %s160 = sphi 0, %s158
      %s161 = sphi 0, %s160
      %s175 = sphi 0, %s161
      %s179 = sphi 0, %s179
      %s181 = sphi 0, %s179
      %s182 = sphi 0, %s181
      %s196 = sphi 0, %s182
      %s202 = sphi 0, %s204
      %s205 = sphi 0, %s202
      %s206 = sphi 0, %s205
      %s222 = sphi 0, %s206
    $region4: #{liif_forward.13} parent=1 // loop_header_branch
      %17 = sbr.rel (%p15) target = $region8
    $region5: #{liif_forward.13} parent=1 // loop_body
      %s19 = ssub.s32 %s14, 1
      %s20 = ssub.s32 %s14, 2
      %s21 = sadd.s32 %s14, 1
      %s22 = ssub.s32 %s14, %s21
      %p23 = scmp.eq.s32.totalorder %s22, 0
      %s25 = sadd.s32 %s24, 1
      %s26 = scalar_select %p23, %s24, %s25
      %p29 = pneg %p23
      %p30 = scmp.eq.s32.totalorder %s14, 1
      %p31 = por %p29, %p30
      %p32 = scmp.ne.s32.totalorder %s24, %s27
      %p33 = scmp.eq.s32.totalorder %s14, 0
      %p34 = por %p32, %p33
      %p35 = scmp.ne.s32.totalorder %s24, %s27
      %p36 = scmp.eq.s32.totalorder %s19, 1
      %p37 = por %p35, %p36
      %p38 = scmp.ne.s32.totalorder %s27, %s28
      %p39 = scmp.eq.s32.totalorder %s19, 0
      %p40 = por %p38, %p39
      %p41 = scmp.ne.s32.totalorder %s27, %s28
      %p42 = scmp.eq.s32.totalorder %s20, 1
      %p43 = por %p41, %p42
      %p45 = scmp.ne.s32.totalorder %s28, %s44
      %p46 = scmp.eq.s32.totalorder %s20, 0
      %p47 = por %p45, %p46
      %s48 = ssub.s32 %s14, %s21
      %p49 = scmp.eq.s32.totalorder %s48, 0
      %s51 = sadd.s32 %s50, 1
      %s52 = scalar_select %p49, %s50, %s51
      %p55 = pneg %p49
      %p56 = scmp.eq.s32.totalorder %s14, 1
      %p57 = por %p55, %p56
      %p58 = scmp.ne.s32.totalorder %s50, %s53
      %p59 = scmp.eq.s32.totalorder %s14, 0
      %p60 = por %p58, %p59
      %p61 = scmp.ne.s32.totalorder %s50, %s53
      %p62 = scmp.eq.s32.totalorder %s19, 1
      %p63 = por %p61, %p62
      %p64 = scmp.ne.s32.totalorder %s53, %s54
      %p65 = scmp.eq.s32.totalorder %s19, 0
      %p66 = por %p64, %p65
      %p67 = scmp.ne.s32.totalorder %s53, %s54
      %p68 = scmp.eq.s32.totalorder %s20, 1
      %p69 = por %p67, %p68
      %p71 = scmp.ne.s32.totalorder %s54, %s70
      %p72 = scmp.eq.s32.totalorder %s20, 0
      %p73 = por %p71, %p72
      %s75 = sadd.s32 %s74, 1
      %p78 = scmp.eq.s32.totalorder %s14, 1
      %p79 = scmp.ne.s32.totalorder %s74, %s76
      %p80 = scmp.eq.s32.totalorder %s14, 0
      %p81 = por %p79, %p80
      %p82 = scmp.ne.s32.totalorder %s74, %s76
      %p83 = scmp.eq.s32.totalorder %s19, 1
      %p84 = por %p82, %p83
      %p85 = scmp.ne.s32.totalorder %s76, %s77
      %p86 = scmp.eq.s32.totalorder %s19, 0
      %p87 = por %p85, %p86
      %p88 = scmp.ne.s32.totalorder %s76, %s77
      %p89 = scmp.eq.s32.totalorder %s20, 1
      %p90 = por %p88, %p89
      %p92 = scmp.ne.s32.totalorder %s77, %s91
      %p93 = scmp.eq.s32.totalorder %s20, 0
      %p94 = por %p92, %p93
      %s96 = sadd.s32 %s95, 1
      %p99 = scmp.eq.s32.totalorder %s14, 1
      %p100 = scmp.ne.s32.totalorder %s95, %s97
      %p101 = scmp.eq.s32.totalorder %s14, 0
      %p102 = por %p100, %p101
      %p103 = scmp.ne.s32.totalorder %s95, %s97
      %p104 = scmp.eq.s32.totalorder %s19, 1
      %p105 = por %p103, %p104
      %p106 = scmp.ne.s32.totalorder %s97, %s98
      %p107 = scmp.eq.s32.totalorder %s19, 0
      %p108 = por %p106, %p107
      %p109 = scmp.ne.s32.totalorder %s97, %s98
      %p110 = scmp.eq.s32.totalorder %s20, 1
      %p111 = por %p109, %p110
      %p113 = scmp.ne.s32.totalorder %s98, %s112
      %p114 = scmp.eq.s32.totalorder %s20, 0
      %p115 = por %p113, %p114
      %s117 = sadd.s32 %s116, 1
      %p120 = scmp.eq.s32.totalorder %s14, 1
      %p121 = scmp.ne.s32.totalorder %s116, %s118
      %p122 = scmp.eq.s32.totalorder %s14, 0
      %p123 = por %p121, %p122
      %p124 = scmp.ne.s32.totalorder %s116, %s118
      %p125 = scmp.eq.s32.totalorder %s19, 1
      %p126 = por %p124, %p125
      %p127 = scmp.ne.s32.totalorder %s118, %s119
      %p128 = scmp.eq.s32.totalorder %s19, 0
      %p129 = por %p127, %p128
      %p130 = scmp.ne.s32.totalorder %s118, %s119
      %p131 = scmp.eq.s32.totalorder %s20, 1
      %p132 = por %p130, %p131
      %p134 = scmp.ne.s32.totalorder %s119, %s133
      %p135 = scmp.eq.s32.totalorder %s20, 0
      %p136 = por %p134, %p135
      %s138 = sadd.s32 %s137, 1
      %p141 = scmp.eq.s32.totalorder %s14, 1
      %p142 = scmp.ne.s32.totalorder %s137, %s139
      %p143 = scmp.eq.s32.totalorder %s14, 0
      %p144 = por %p142, %p143
      %p145 = scmp.ne.s32.totalorder %s137, %s139
      %p146 = scmp.eq.s32.totalorder %s19, 1
      %p147 = por %p145, %p146
      %p148 = scmp.ne.s32.totalorder %s139, %s140
      %p149 = scmp.eq.s32.totalorder %s19, 0
      %p150 = por %p148, %p149
      %p151 = scmp.ne.s32.totalorder %s139, %s140
      %p152 = scmp.eq.s32.totalorder %s20, 1
      %p153 = por %p151, %p152
      %p155 = scmp.ne.s32.totalorder %s140, %s154
      %p156 = scmp.eq.s32.totalorder %s20, 0
      %p157 = por %p155, %p156
      %s159 = sadd.s32 %s158, 1
      %p162 = scmp.eq.s32.totalorder %s14, 1
      %p163 = scmp.ne.s32.totalorder %s158, %s160
      %p164 = scmp.eq.s32.totalorder %s14, 0
      %p165 = por %p163, %p164
      %p166 = scmp.ne.s32.totalorder %s158, %s160
      %p167 = scmp.eq.s32.totalorder %s19, 1
      %p168 = por %p166, %p167
      %p169 = scmp.ne.s32.totalorder %s160, %s161
      %p170 = scmp.eq.s32.totalorder %s19, 0
      %p171 = por %p169, %p170
      %p172 = scmp.ne.s32.totalorder %s160, %s161
      %p173 = scmp.eq.s32.totalorder %s20, 1
      %p174 = por %p172, %p173
      %p176 = scmp.ne.s32.totalorder %s161, %s175
      %p177 = scmp.eq.s32.totalorder %s20, 0
      %p178 = por %p176, %p177
      %s180 = sadd.s32 %s179, 1
      %p183 = scmp.eq.s32.totalorder %s14, 1
      %p184 = scmp.ne.s32.totalorder %s179, %s181
      %p185 = scmp.eq.s32.totalorder %s14, 0
      %p186 = por %p184, %p185
      %p187 = scmp.ne.s32.totalorder %s179, %s181
      %p188 = scmp.eq.s32.totalorder %s19, 1
      %p189 = por %p187, %p188
      %p190 = scmp.ne.s32.totalorder %s181, %s182
      %p191 = scmp.eq.s32.totalorder %s19, 0
      %p192 = por %p190, %p191
      %p193 = scmp.ne.s32.totalorder %s181, %s182
      %p194 = scmp.eq.s32.totalorder %s20, 1
      %p195 = por %p193, %p194
      %p197 = scmp.ne.s32.totalorder %s182, %s196
      %p198 = scmp.eq.s32.totalorder %s20, 0
      %p199 = por %p197, %p198
      %s200 = ssub.s32 %s14, %s21
      %p201 = scmp.eq.s32.totalorder %s200, 0
      %s203 = sadd.s32 %s202, 1
      %s204 = scalar_select %p201, %s202, %s203
      %p207 = pneg %p201
      %p208 = scmp.eq.s32.totalorder %s14, 1
      %p209 = por %p207, %p208
      %p210 = scmp.ne.s32.totalorder %s202, %s205
      %p211 = scmp.eq.s32.totalorder %s14, 0
      %p212 = por %p210, %p211
      %p213 = scmp.ne.s32.totalorder %s202, %s205
      %p214 = scmp.eq.s32.totalorder %s19, 1
      %p215 = por %p213, %p214
      %p216 = scmp.ne.s32.totalorder %s205, %s206
      %p217 = scmp.eq.s32.totalorder %s19, 0
      %p218 = por %p216, %p217
      %p219 = scmp.ne.s32.totalorder %s205, %s206
      %p220 = scmp.eq.s32.totalorder %s20, 1
      %p221 = por %p219, %p220
      %p223 = scmp.ne.s32.totalorder %s206, %s222
      %p224 = scmp.eq.s32.totalorder %s20, 0
      %p225 = por %p223, %p224
      %p226 = scmp.le.s32.totalorder 1, %s14
      %p227 = scmp.lt.s32.totalorder %s14, 3
      %p228 = pnand %p226, %p227
      %p229 = pneg %p228
      // Predicated region
      $region9: #{liif_forward.13} parent=5 // pred_check
        _
      $region10: #{liif_forward.13} parent=5 // pred_check_branch
        %231 = sbr.rel (%p228) target = $region12
      $region11: #{liif_forward.13} parent=5 // pred_region
        %s232 = ssub.s32 %s14, 1
        // Predicated region
        $region13: #{liif_forward.13} parent=11 // pred_check
          %p233 = pneg %p87
        $region14: #{liif_forward.13} parent=11 // pred_check_branch
          %235 = sbr.rel (%p233) target = $region16
        $region15: #{liif_forward.13} parent=11 // pred_region
          _
        $region16: #{liif_forward.13} parent=11 // pred_fallthru
          _
        // Predicated region
        $region17: #{liif_forward.13} parent=11 // pred_check
          %p236 = pneg %p108
        $region18: #{liif_forward.13} parent=11 // pred_check_branch
          %238 = sbr.rel (%p236) target = $region20
        $region19: #{liif_forward.13} parent=11 // pred_region
          _
        $region20: #{liif_forward.13} parent=11 // pred_fallthru
          _
        // Predicated region
        $region21: #{liif_forward.13} parent=11 // pred_check
          %p239 = pneg %p129
        $region22: #{liif_forward.13} parent=11 // pred_check_branch
          %241 = sbr.rel (%p239) target = $region24
        $region23: #{liif_forward.13} parent=11 // pred_region
          _
        $region24: #{liif_forward.13} parent=11 // pred_fallthru
          _
        // Predicated region
        $region25: #{liif_forward.13} parent=11 // pred_check
          %p242 = pneg %p150
        $region26: #{liif_forward.13} parent=11 // pred_check_branch
          %244 = sbr.rel (%p242) target = $region28
        $region27: #{liif_forward.13} parent=11 // pred_region
          _
        $region28: #{liif_forward.13} parent=11 // pred_fallthru
          _
        // Predicated region
        $region29: #{liif_forward.13} parent=11 // pred_check
          %p245 = pneg %p171
        $region30: #{liif_forward.13} parent=11 // pred_check_branch
          %247 = sbr.rel (%p245) target = $region32
        $region31: #{liif_forward.13} parent=11 // pred_region
          _
        $region32: #{liif_forward.13} parent=11 // pred_fallthru
          _
        // Predicated region
        $region33: #{liif_forward.13} parent=11 // pred_check
          %p248 = pneg %p192
        $region34: #{liif_forward.13} parent=11 // pred_check_branch
          %250 = sbr.rel (%p248) target = $region36
        $region35: #{liif_forward.13} parent=11 // pred_region
          _
        $region36: #{liif_forward.13} parent=11 // pred_fallthru
          _
      $region12: #{liif_forward.13} parent=5 // pred_fallthru
        _
      %p251 = scmp.lt.s32.totalorder %s14, 2
      // Predicated region
      $region37: #{liif_forward.13} parent=5 // pred_check
        %p252 = pneg %p251
      $region38: #{liif_forward.13} parent=5 // pred_check_branch
        %254 = sbr.rel (%p252) target = $region40
      $region39: #{liif_forward.13} parent=5 // pred_region
        // Predicated region
        $region41: #{liif_forward.13} parent=39 // pred_check
          %p255 = pneg %p34
        $region42: #{liif_forward.13} parent=39 // pred_check_branch
          %257 = sbr.rel (%p255) target = $region44
        $region43: #{liif_forward.13} parent=39 // pred_region
          %s258 = sand.u32 %s24, 1
          %s259 = sand.u32 %s24, 1
          %s260 = smul.addr %s259, 512
          %s261 = scalar_lea.vmem [#allocation2], %s260
          %s262 = smul.u32 32, %s14
          %s263 = smul.addr %s262, 4
          %s264 = scalar_lea.vmem %s0, %s263
          // Predicated region
          $region45: #{liif_forward.13} parent=43 // pred_check
            _
          $region46: #{liif_forward.13} parent=43 // pred_check_branch
            %266 = sbr.rel (0) target = $region48
          $region47: #{liif_forward.13} parent=43 // pred_region
            // Predicated region
            $region49: #{liif_forward.13} parent=47 // pred_check
              _
            $region50: #{liif_forward.13} parent=47 // pred_check_branch
              %268 = sbr.rel target = $region52
            $region51: #{liif_forward.13} parent=47 // pred_region
              // Predicated region
              $region64: #{liif_forward.13} parent=51 // pred_check
                _
              $region65: #{liif_forward.13} parent=51 // pred_check_branch
                %537 = sbr.rel (0) target = $region67
              $region66: #{liif_forward.13} parent=51 // pred_region
                loop: start=0, step=1, limit=1
                $region68: #{liif_forward.13} parent=66 // loop_pre_header
                  _
                $region69: #{liif_forward.13} parent=66 // loop_header
                  %s539 = sphi 0, %s543
                  %p540 = scmp.ge.s32.totalorder %s539, 1
                  %s544 = sphi %s264, %s264
                  %s545 = sphi %s261, %s261
                $region70: #{liif_forward.13} parent=66 // loop_header_branch
                  %542 = sbr.rel (%p540) target = $region74
                $region71: #{liif_forward.13} parent=66 // loop_body
                  _
                $region72: #{liif_forward.13} parent=66 // loop_footer
                  %s543 = sadd.s32 1, %s539
                $region73: #{liif_forward.13} parent=66 // loop_footer_branch
                  %538 = sbr.rel target = $region69
                $region74: #{liif_forward.13} parent=66 // loop_exit
                  _
                loop: start=0, step=1, limit=1
                $region75: #{liif_forward.13} parent=66 // loop_pre_header
                  _
                $region76: #{liif_forward.13} parent=66 // loop_header
                  %s548 = sphi 0, %s552
                  %p549 = scmp.ge.s32.totalorder %s548, 1
                  %s553 = sphi %s264, %s264
                  %s554 = sphi %s261, %s261
                $region77: #{liif_forward.13} parent=66 // loop_header_branch
                  %551 = sbr.rel (%p549) target = $region81
                $region78: #{liif_forward.13} parent=66 // loop_body
                  %v555 = vld [vmem:[%s553] sm:$0xf]
                  %556 = vst [vmem:[%s554] sm:$0xf] %v555
                  %v557 = vld [vmem:[%s553 + $0x4] sm:$0xf]
                  %558 = vst [vmem:[%s554 + $0x4] sm:$0xf] %v557
                  %v559 = vld [vmem:[%s553 + $0x8] sm:$0xf]
                  %560 = vst [vmem:[%s554 + $0x8] sm:$0xf] %v559
                  %v561 = vld [vmem:[%s553 + $0xc] sm:$0xf]
                  %562 = vst [vmem:[%s554 + $0xc] sm:$0xf] %v561
                  %v563 = vld [vmem:[%s553 + $0x10] sm:$0xf]
                  %564 = vst [vmem:[%s554 + $0x10] sm:$0xf] %v563
                  %v565 = vld [vmem:[%s553 + $0x14] sm:$0xf]
                  %566 = vst [vmem:[%s554 + $0x14] sm:$0xf] %v565
                  %v567 = vld [vmem:[%s553 + $0x18] sm:$0xf]
                  %568 = vst [vmem:[%s554 + $0x18] sm:$0xf] %v567
                  %v569 = vld [vmem:[%s553 + $0x1c] sm:$0xf]
                  %570 = vst [vmem:[%s554 + $0x1c] sm:$0xf] %v569
                  %v571 = vld [vmem:[%s553 + $0x20] sm:$0xf]
                  %572 = vst [vmem:[%s554 + $0x20] sm:$0xf] %v571
                  %v573 = vld [vmem:[%s553 + $0x24] sm:$0xf]
                  %574 = vst [vmem:[%s554 + $0x24] sm:$0xf] %v573
                  %v575 = vld [vmem:[%s553 + $0x28] sm:$0xf]
                  %576 = vst [vmem:[%s554 + $0x28] sm:$0xf] %v575
                  %v577 = vld [vmem:[%s553 + $0x2c] sm:$0xf]
                  %578 = vst [vmem:[%s554 + $0x2c] sm:$0xf] %v577
                  %v579 = vld [vmem:[%s553 + $0x30] sm:$0xf]
                  %580 = vst [vmem:[%s554 + $0x30] sm:$0xf] %v579
                  %v581 = vld [vmem:[%s553 + $0x34] sm:$0xf]
                  %582 = vst [vmem:[%s554 + $0x34] sm:$0xf] %v581
                  %v583 = vld [vmem:[%s553 + $0x38] sm:$0xf]
                  %584 = vst [vmem:[%s554 + $0x38] sm:$0xf] %v583
                  %v585 = vld [vmem:[%s553 + $0x3c] sm:$0xf]
                  %586 = vst [vmem:[%s554 + $0x3c] sm:$0xf] %v585
                  %v587 = vld [vmem:[%s553 + $0x40] sm:$0xf]
                  %588 = vst [vmem:[%s554 + $0x40] sm:$0xf] %v587
                  %v589 = vld [vmem:[%s553 + $0x44] sm:$0xf]
                  %590 = vst [vmem:[%s554 + $0x44] sm:$0xf] %v589
                  %v591 = vld [vmem:[%s553 + $0x48] sm:$0xf]
                  %592 = vst [vmem:[%s554 + $0x48] sm:$0xf] %v591
                  %v593 = vld [vmem:[%s553 + $0x4c] sm:$0xf]
                  %594 = vst [vmem:[%s554 + $0x4c] sm:$0xf] %v593
                  %v595 = vld [vmem:[%s553 + $0x50] sm:$0xf]
                  %596 = vst [vmem:[%s554 + $0x50] sm:$0xf] %v595
                  %v597 = vld [vmem:[%s553 + $0x54] sm:$0xf]
                  %598 = vst [vmem:[%s554 + $0x54] sm:$0xf] %v597
                  %v599 = vld [vmem:[%s553 + $0x58] sm:$0xf]
                  %600 = vst [vmem:[%s554 + $0x58] sm:$0xf] %v599
                  %v601 = vld [vmem:[%s553 + $0x5c] sm:$0xf]
                  %602 = vst [vmem:[%s554 + $0x5c] sm:$0xf] %v601
                  %v603 = vld [vmem:[%s553 + $0x60] sm:$0xf]
                  %604 = vst [vmem:[%s554 + $0x60] sm:$0xf] %v603
                  %v605 = vld [vmem:[%s553 + $0x64] sm:$0xf]
                  %606 = vst [vmem:[%s554 + $0x64] sm:$0xf] %v605
                  %v607 = vld [vmem:[%s553 + $0x68] sm:$0xf]
                  %608 = vst [vmem:[%s554 + $0x68] sm:$0xf] %v607
                  %v609 = vld [vmem:[%s553 + $0x6c] sm:$0xf]
                  %610 = vst [vmem:[%s554 + $0x6c] sm:$0xf] %v609
                  %v611 = vld [vmem:[%s553 + $0x70] sm:$0xf]
                  %612 = vst [vmem:[%s554 + $0x70] sm:$0xf] %v611
                  %v613 = vld [vmem:[%s553 + $0x74] sm:$0xf]
                  %614 = vst [vmem:[%s554 + $0x74] sm:$0xf] %v613
                  %v615 = vld [vmem:[%s553 + $0x78] sm:$0xf]
                  %616 = vst [vmem:[%s554 + $0x78] sm:$0xf] %v615
                  %v617 = vld [vmem:[%s553 + $0x7c] sm:$0xf]
                  %618 = vst [vmem:[%s554 + $0x7c] sm:$0xf] %v617
                  %v619 = vld [vmem:[%s553 + $0x100] sm:$0xf]
                  %620 = vst [vmem:[%s554 + $0x80] sm:$0xf] %v619
                  %v621 = vld [vmem:[%s553 + $0x104] sm:$0xf]
                  %622 = vst [vmem:[%s554 + $0x84] sm:$0xf] %v621
                  %v623 = vld [vmem:[%s553 + $0x108] sm:$0xf]
                  %624 = vst [vmem:[%s554 + $0x88] sm:$0xf] %v623
                  %v625 = vld [vmem:[%s553 + $0x10c] sm:$0xf]
                  %626 = vst [vmem:[%s554 + $0x8c] sm:$0xf] %v625
                  %v627 = vld [vmem:[%s553 + $0x110] sm:$0xf]
                  %628 = vst [vmem:[%s554 + $0x90] sm:$0xf] %v627
                  %v629 = vld [vmem:[%s553 + $0x114] sm:$0xf]
                  %630 = vst [vmem:[%s554 + $0x94] sm:$0xf] %v629
                  %v631 = vld [vmem:[%s553 + $0x118] sm:$0xf]
                  %632 = vst [vmem:[%s554 + $0x98] sm:$0xf] %v631
                  %v633 = vld [vmem:[%s553 + $0x11c] sm:$0xf]
                  %634 = vst [vmem:[%s554 + $0x9c] sm:$0xf] %v633
                  %v635 = vld [vmem:[%s553 + $0x120] sm:$0xf]
                  %636 = vst [vmem:[%s554 + $0xa0] sm:$0xf] %v635
                  %v637 = vld [vmem:[%s553 + $0x124] sm:$0xf]
                  %638 = vst [vmem:[%s554 + $0xa4] sm:$0xf] %v637
                  %v639 = vld [vmem:[%s553 + $0x128] sm:$0xf]
                  %640 = vst [vmem:[%s554 + $0xa8] sm:$0xf] %v639
                  %v641 = vld [vmem:[%s553 + $0x12c] sm:$0xf]
                  %642 = vst [vmem:[%s554 + $0xac] sm:$0xf] %v641
                  %v643 = vld [vmem:[%s553 + $0x130] sm:$0xf]
                  %644 = vst [vmem:[%s554 + $0xb0] sm:$0xf] %v643
                  %v645 = vld [vmem:[%s553 + $0x134] sm:$0xf]
                  %646 = vst [vmem:[%s554 + $0xb4] sm:$0xf] %v645
                  %v647 = vld [vmem:[%s553 + $0x138] sm:$0xf]
                  %648 = vst [vmem:[%s554 + $0xb8] sm:$0xf] %v647
                  %v649 = vld [vmem:[%s553 + $0x13c] sm:$0xf]
                  %650 = vst [vmem:[%s554 + $0xbc] sm:$0xf] %v649
                  %v651 = vld [vmem:[%s553 + $0x140] sm:$0xf]
                  %652 = vst [vmem:[%s554 + $0xc0] sm:$0xf] %v651
                  %v653 = vld [vmem:[%s553 + $0x144] sm:$0xf]
                  %654 = vst [vmem:[%s554 + $0xc4] sm:$0xf] %v653
                  %v655 = vld [vmem:[%s553 + $0x148] sm:$0xf]
                  %656 = vst [vmem:[%s554 + $0xc8] sm:$0xf] %v655
                  %v657 = vld [vmem:[%s553 + $0x14c] sm:$0xf]
                  %658 = vst [vmem:[%s554 + $0xcc] sm:$0xf] %v657
                  %v659 = vld [vmem:[%s553 + $0x150] sm:$0xf]
                  %660 = vst [vmem:[%s554 + $0xd0] sm:$0xf] %v659
                  %v661 = vld [vmem:[%s553 + $0x154] sm:$0xf]
                  %662 = vst [vmem:[%s554 + $0xd4] sm:$0xf] %v661
                  %v663 = vld [vmem:[%s553 + $0x158] sm:$0xf]
                  %664 = vst [vmem:[%s554 + $0xd8] sm:$0xf] %v663
                  %v665 = vld [vmem:[%s553 + $0x15c] sm:$0xf]
                  %666 = vst [vmem:[%s554 + $0xdc] sm:$0xf] %v665
                  %v667 = vld [vmem:[%s553 + $0x160] sm:$0xf]
                  %668 = vst [vmem:[%s554 + $0xe0] sm:$0xf] %v667
                  %v669 = vld [vmem:[%s553 + $0x164] sm:$0xf]
                  %670 = vst [vmem:[%s554 + $0xe4] sm:$0xf] %v669
                  %v671 = vld [vmem:[%s553 + $0x168] sm:$0xf]
                  %672 = vst [vmem:[%s554 + $0xe8] sm:$0xf] %v671
                  %v673 = vld [vmem:[%s553 + $0x16c] sm:$0xf]
                  %674 = vst [vmem:[%s554 + $0xec] sm:$0xf] %v673
                  %v675 = vld [vmem:[%s553 + $0x170] sm:$0xf]
                  %676 = vst [vmem:[%s554 + $0xf0] sm:$0xf] %v675
                  %v677 = vld [vmem:[%s553 + $0x174] sm:$0xf]
                  %678 = vst [vmem:[%s554 + $0xf4] sm:$0xf] %v677
                  %v679 = vld [vmem:[%s553 + $0x178] sm:$0xf]
                  %680 = vst [vmem:[%s554 + $0xf8] sm:$0xf] %v679
                  %v681 = vld [vmem:[%s553 + $0x17c] sm:$0xf]
                  %682 = vst [vmem:[%s554 + $0xfc] sm:$0xf] %v681
                  %v683 = vld [vmem:[%s553 + $0x200] sm:$0xf]
                  %684 = vst [vmem:[%s554 + $0x100] sm:$0xf] %v683
                  %v685 = vld [vmem:[%s553 + $0x204] sm:$0xf]
                  %686 = vst [vmem:[%s554 + $0x104] sm:$0xf] %v685
                  %v687 = vld [vmem:[%s553 + $0x208] sm:$0xf]
                  %688 = vst [vmem:[%s554 + $0x108] sm:$0xf] %v687
                  %v689 = vld [vmem:[%s553 + $0x20c] sm:$0xf]
                  %690 = vst [vmem:[%s554 + $0x10c] sm:$0xf] %v689
                  %v691 = vld [vmem:[%s553 + $0x210] sm:$0xf]
                  %692 = vst [vmem:[%s554 + $0x110] sm:$0xf] %v691
                  %v693 = vld [vmem:[%s553 + $0x214] sm:$0xf]
                  %694 = vst [vmem:[%s554 + $0x114] sm:$0xf] %v693
                  %v695 = vld [vmem:[%s553 + $0x218] sm:$0xf]
                  %696 = vst [vmem:[%s554 + $0x118] sm:$0xf] %v695
                  %v697 = vld [vmem:[%s553 + $0x21c] sm:$0xf]
                  %698 = vst [vmem:[%s554 + $0x11c] sm:$0xf] %v697
                  %v699 = vld [vmem:[%s553 + $0x220] sm:$0xf]
                  %700 = vst [vmem:[%s554 + $0x120] sm:$0xf] %v699
                  %v701 = vld [vmem:[%s553 + $0x224] sm:$0xf]
                  %702 = vst [vmem:[%s554 + $0x124] sm:$0xf] %v701
                  %v703 = vld [vmem:[%s553 + $0x228] sm:$0xf]
                  %704 = vst [vmem:[%s554 + $0x128] sm:$0xf] %v703
                  %v705 = vld [vmem:[%s553 + $0x22c] sm:$0xf]
                  %706 = vst [vmem:[%s554 + $0x12c] sm:$0xf] %v705
                  %v707 = vld [vmem:[%s553 + $0x230] sm:$0xf]
                  %708 = vst [vmem:[%s554 + $0x130] sm:$0xf] %v707
                  %v709 = vld [vmem:[%s553 + $0x234] sm:$0xf]
                  %710 = vst [vmem:[%s554 + $0x134] sm:$0xf] %v709
                  %v711 = vld [vmem:[%s553 + $0x238] sm:$0xf]
                  %712 = vst [vmem:[%s554 + $0x138] sm:$0xf] %v711
                  %v713 = vld [vmem:[%s553 + $0x23c] sm:$0xf]
                  %714 = vst [vmem:[%s554 + $0x13c] sm:$0xf] %v713
                  %v715 = vld [vmem:[%s553 + $0x240] sm:$0xf]
                  %716 = vst [vmem:[%s554 + $0x140] sm:$0xf] %v715
                  %v717 = vld [vmem:[%s553 + $0x244] sm:$0xf]
                  %718 = vst [vmem:[%s554 + $0x144] sm:$0xf] %v717
                  %v719 = vld [vmem:[%s553 + $0x248] sm:$0xf]
                  %720 = vst [vmem:[%s554 + $0x148] sm:$0xf] %v719
                  %v721 = vld [vmem:[%s553 + $0x24c] sm:$0xf]
                  %722 = vst [vmem:[%s554 + $0x14c] sm:$0xf] %v721
                  %v723 = vld [vmem:[%s553 + $0x250] sm:$0xf]
                  %724 = vst [vmem:[%s554 + $0x150] sm:$0xf] %v723
                  %v725 = vld [vmem:[%s553 + $0x254] sm:$0xf]
                  %726 = vst [vmem:[%s554 + $0x154] sm:$0xf] %v725
                  %v727 = vld [vmem:[%s553 + $0x258] sm:$0xf]
                  %728 = vst [vmem:[%s554 + $0x158] sm:$0xf] %v727
                  %v729 = vld [vmem:[%s553 + $0x25c] sm:$0xf]
                  %730 = vst [vmem:[%s554 + $0x15c] sm:$0xf] %v729
                  %v731 = vld [vmem:[%s553 + $0x260] sm:$0xf]
                  %732 = vst [vmem:[%s554 + $0x160] sm:$0xf] %v731
                  %v733 = vld [vmem:[%s553 + $0x264] sm:$0xf]
                  %734 = vst [vmem:[%s554 + $0x164] sm:$0xf] %v733
                  %v735 = vld [vmem:[%s553 + $0x268] sm:$0xf]
                  %736 = vst [vmem:[%s554 + $0x168] sm:$0xf] %v735
                  %v737 = vld [vmem:[%s553 + $0x26c] sm:$0xf]
                  %738 = vst [vmem:[%s554 + $0x16c] sm:$0xf] %v737
                  %v739 = vld [vmem:[%s553 + $0x270] sm:$0xf]
                  %740 = vst [vmem:[%s554 + $0x170] sm:$0xf] %v739
                  %v741 = vld [vmem:[%s553 + $0x274] sm:$0xf]
                  %742 = vst [vmem:[%s554 + $0x174] sm:$0xf] %v741
                  %v743 = vld [vmem:[%s553 + $0x278] sm:$0xf]
                  %744 = vst [vmem:[%s554 + $0x178] sm:$0xf] %v743
                  %v745 = vld [vmem:[%s553 + $0x27c] sm:$0xf]
                  %746 = vst [vmem:[%s554 + $0x17c] sm:$0xf] %v745
                  %v747 = vld [vmem:[%s553 + $0x300] sm:$0xf]
                  %748 = vst [vmem:[%s554 + $0x180] sm:$0xf] %v747
                  %v749 = vld [vmem:[%s553 + $0x304] sm:$0xf]
                  %750 = vst [vmem:[%s554 + $0x184] sm:$0xf] %v749
                  %v751 = vld [vmem:[%s553 + $0x308] sm:$0xf]
                  %752 = vst [vmem:[%s554 + $0x188] sm:$0xf] %v751
                  %v753 = vld [vmem:[%s553 + $0x30c] sm:$0xf]
                  %754 = vst [vmem:[%s554 + $0x18c] sm:$0xf] %v753
                  %v755 = vld [vmem:[%s553 + $0x310] sm:$0xf]
                  %756 = vst [vmem:[%s554 + $0x190] sm:$0xf] %v755
                  %v757 = vld [vmem:[%s553 + $0x314] sm:$0xf]
                  %758 = vst [vmem:[%s554 + $0x194] sm:$0xf] %v757
                  %v759 = vld [vmem:[%s553 + $0x318] sm:$0xf]
                  %760 = vst [vmem:[%s554 + $0x198] sm:$0xf] %v759
                  %v761 = vld [vmem:[%s553 + $0x31c] sm:$0xf]
                  %762 = vst [vmem:[%s554 + $0x19c] sm:$0xf] %v761
                  %v763 = vld [vmem:[%s553 + $0x320] sm:$0xf]
                  %764 = vst [vmem:[%s554 + $0x1a0] sm:$0xf] %v763
                  %v765 = vld [vmem:[%s553 + $0x324] sm:$0xf]
                  %766 = vst [vmem:[%s554 + $0x1a4] sm:$0xf] %v765
                  %v767 = vld [vmem:[%s553 + $0x328] sm:$0xf]
                  %768 = vst [vmem:[%s554 + $0x1a8] sm:$0xf] %v767
                  %v769 = vld [vmem:[%s553 + $0x32c] sm:$0xf]
                  %770 = vst [vmem:[%s554 + $0x1ac] sm:$0xf] %v769
                  %v771 = vld [vmem:[%s553 + $0x330] sm:$0xf]
                  %772 = vst [vmem:[%s554 + $0x1b0] sm:$0xf] %v771
                  %v773 = vld [vmem:[%s553 + $0x334] sm:$0xf]
                  %774 = vst [vmem:[%s554 + $0x1b4] sm:$0xf] %v773
                  %v775 = vld [vmem:[%s553 + $0x338] sm:$0xf]
                  %776 = vst [vmem:[%s554 + $0x1b8] sm:$0xf] %v775
                  %v777 = vld [vmem:[%s553 + $0x33c] sm:$0xf]
                  %778 = vst [vmem:[%s554 + $0x1bc] sm:$0xf] %v777
                  %v779 = vld [vmem:[%s553 + $0x340] sm:$0xf]
                  %780 = vst [vmem:[%s554 + $0x1c0] sm:$0xf] %v779
                  %v781 = vld [vmem:[%s553 + $0x344] sm:$0xf]
                  %782 = vst [vmem:[%s554 + $0x1c4] sm:$0xf] %v781
                  %v783 = vld [vmem:[%s553 + $0x348] sm:$0xf]
                  %784 = vst [vmem:[%s554 + $0x1c8] sm:$0xf] %v783
                  %v785 = vld [vmem:[%s553 + $0x34c] sm:$0xf]
                  %786 = vst [vmem:[%s554 + $0x1cc] sm:$0xf] %v785
                  %v787 = vld [vmem:[%s553 + $0x350] sm:$0xf]
                  %788 = vst [vmem:[%s554 + $0x1d0] sm:$0xf] %v787
                  %v789 = vld [vmem:[%s553 + $0x354] sm:$0xf]
                  %790 = vst [vmem:[%s554 + $0x1d4] sm:$0xf] %v789
                  %v791 = vld [vmem:[%s553 + $0x358] sm:$0xf]
                  %792 = vst [vmem:[%s554 + $0x1d8] sm:$0xf] %v791
                  %v793 = vld [vmem:[%s553 + $0x35c] sm:$0xf]
                  %794 = vst [vmem:[%s554 + $0x1dc] sm:$0xf] %v793
                  %v795 = vld [vmem:[%s553 + $0x360] sm:$0xf]
                  %796 = vst [vmem:[%s554 + $0x1e0] sm:$0xf] %v795
                  %v797 = vld [vmem:[%s553 + $0x364] sm:$0xf]
                  %798 = vst [vmem:[%s554 + $0x1e4] sm:$0xf] %v797
                  %v799 = vld [vmem:[%s553 + $0x368] sm:$0xf]
                  %800 = vst [vmem:[%s554 + $0x1e8] sm:$0xf] %v799
                  %v801 = vld [vmem:[%s553 + $0x36c] sm:$0xf]
                  %802 = vst [vmem:[%s554 + $0x1ec] sm:$0xf] %v801
                  %v803 = vld [vmem:[%s553 + $0x370] sm:$0xf]
                  %804 = vst [vmem:[%s554 + $0x1f0] sm:$0xf] %v803
                  %v805 = vld [vmem:[%s553 + $0x374] sm:$0xf]
                  %806 = vst [vmem:[%s554 + $0x1f4] sm:$0xf] %v805
                  %v807 = vld [vmem:[%s553 + $0x378] sm:$0xf]
                  %808 = vst [vmem:[%s554 + $0x1f8] sm:$0xf] %v807
                  %v809 = vld [vmem:[%s553 + $0x37c] sm:$0xf]
                  %810 = vst [vmem:[%s554 + $0x1fc] sm:$0xf] %v809
                $region79: #{liif_forward.13} parent=66 // loop_footer
                  %s552 = sadd.s32 1, %s548
                $region80: #{liif_forward.13} parent=66 // loop_footer_branch
                  %547 = sbr.rel target = $region76
                $region81: #{liif_forward.13} parent=66 // loop_exit
                  _
              $region67: #{liif_forward.13} parent=51 // pred_fallthru
                _
            $region52: #{liif_forward.13} parent=47 // pred_fallthru
              _
            // Predicated region
            $region53: #{liif_forward.13} parent=47 // pred_check
              _
            $region54: #{liif_forward.13} parent=47 // pred_check_branch
              %270 = sbr.rel (0) target = $region56
            $region55: #{liif_forward.13} parent=47 // pred_region
              loop: start=0, step=1, limit=1
              $region57: #{liif_forward.13} parent=55 // loop_pre_header
                _
              $region58: #{liif_forward.13} parent=55 // loop_header
                %s273 = sphi 0, %s277
                %p274 = scmp.ge.s32.totalorder %s273, 1
                %s278 = sphi %s264, %s264
                %s279 = sphi %s261, %s261
              $region59: #{liif_forward.13} parent=55 // loop_header_branch
                %276 = sbr.rel (%p274) target = $region63
              $region60: #{liif_forward.13} parent=55 // loop_body
                %v280 = vld [vmem:[%s278] sm:$0xf]
                %281 = vst [vmem:[%s279] sm:$0xf] %v280
                %v282 = vld [vmem:[%s278 + $0x4] sm:$0xf]
                %283 = vst [vmem:[%s279 + $0x4] sm:$0xf] %v282
                %v284 = vld [vmem:[%s278 + $0x8] sm:$0xf]
                %285 = vst [vmem:[%s279 + $0x8] sm:$0xf] %v284
                %v286 = vld [vmem:[%s278 + $0xc] sm:$0xf]
                %287 = vst [vmem:[%s279 + $0xc] sm:$0xf] %v286
                %v288 = vld [vmem:[%s278 + $0x10] sm:$0xf]
                %289 = vst [vmem:[%s279 + $0x10] sm:$0xf] %v288
                %v290 = vld [vmem:[%s278 + $0x14] sm:$0xf]
                %291 = vst [vmem:[%s279 + $0x14] sm:$0xf] %v290
                %v292 = vld [vmem:[%s278 + $0x18] sm:$0xf]
                %293 = vst [vmem:[%s279 + $0x18] sm:$0xf] %v292
                %v294 = vld [vmem:[%s278 + $0x1c] sm:$0xf]
                %295 = vst [vmem:[%s279 + $0x1c] sm:$0xf] %v294
                %v296 = vld [vmem:[%s278 + $0x20] sm:$0xf]
                %297 = vst [vmem:[%s279 + $0x20] sm:$0xf] %v296
                %v298 = vld [vmem:[%s278 + $0x24] sm:$0xf]
                %299 = vst [vmem:[%s279 + $0x24] sm:$0xf] %v298
                %v300 = vld [vmem:[%s278 + $0x28] sm:$0xf]
                %301 = vst [vmem:[%s279 + $0x28] sm:$0xf] %v300
                %v302 = vld [vmem:[%s278 + $0x2c] sm:$0xf]
                %303 = vst [vmem:[%s279 + $0x2c] sm:$0xf] %v302
                %v304 = vld [vmem:[%s278 + $0x30] sm:$0xf]
                %305 = vst [vmem:[%s279 + $0x30] sm:$0xf] %v304
                %v306 = vld [vmem:[%s278 + $0x34] sm:$0xf]
                %307 = vst [vmem:[%s279 + $0x34] sm:$0xf] %v306
                %v308 = vld [vmem:[%s278 + $0x38] sm:$0xf]
                %309 = vst [vmem:[%s279 + $0x38] sm:$0xf] %v308
                %v310 = vld [vmem:[%s278 + $0x3c] sm:$0xf]
                %311 = vst [vmem:[%s279 + $0x3c] sm:$0xf] %v310
                %v312 = vld [vmem:[%s278 + $0x40] sm:$0xf]
                %313 = vst [vmem:[%s279 + $0x40] sm:$0xf] %v312
                %v314 = vld [vmem:[%s278 + $0x44] sm:$0xf]
                %315 = vst [vmem:[%s279 + $0x44] sm:$0xf] %v314
                %v316 = vld [vmem:[%s278 + $0x48] sm:$0xf]
                %317 = vst [vmem:[%s279 + $0x48] sm:$0xf] %v316
                %v318 = vld [vmem:[%s278 + $0x4c] sm:$0xf]
                %319 = vst [vmem:[%s279 + $0x4c] sm:$0xf] %v318
                %v320 = vld [vmem:[%s278 + $0x50] sm:$0xf]
                %321 = vst [vmem:[%s279 + $0x50] sm:$0xf] %v320
                %v322 = vld [vmem:[%s278 + $0x54] sm:$0xf]
                %323 = vst [vmem:[%s279 + $0x54] sm:$0xf] %v322
                %v324 = vld [vmem:[%s278 + $0x58] sm:$0xf]
                %325 = vst [vmem:[%s279 + $0x58] sm:$0xf] %v324
                %v326 = vld [vmem:[%s278 + $0x5c] sm:$0xf]
                %327 = vst [vmem:[%s279 + $0x5c] sm:$0xf] %v326
                %v328 = vld [vmem:[%s278 + $0x60] sm:$0xf]
                %329 = vst [vmem:[%s279 + $0x60] sm:$0xf] %v328
                %v330 = vld [vmem:[%s278 + $0x64] sm:$0xf]
                %331 = vst [vmem:[%s279 + $0x64] sm:$0xf] %v330
                %v332 = vld [vmem:[%s278 + $0x68] sm:$0xf]
                %333 = vst [vmem:[%s279 + $0x68] sm:$0xf] %v332
                %v334 = vld [vmem:[%s278 + $0x6c] sm:$0xf]
                %335 = vst [vmem:[%s279 + $0x6c] sm:$0xf] %v334
                %v336 = vld [vmem:[%s278 + $0x70] sm:$0xf]
                %337 = vst [vmem:[%s279 + $0x70] sm:$0xf] %v336
                %v338 = vld [vmem:[%s278 + $0x74] sm:$0xf]
                %339 = vst [vmem:[%s279 + $0x74] sm:$0xf] %v338
                %v340 = vld [vmem:[%s278 + $0x78] sm:$0xf]
                %341 = vst [vmem:[%s279 + $0x78] sm:$0xf] %v340
                %v342 = vld [vmem:[%s278 + $0x7c] sm:$0xf]
                %343 = vst [vmem:[%s279 + $0x7c] sm:$0xf] %v342
                %v344 = vld [vmem:[%s278 + $0x100] sm:$0xf]
                %345 = vst [vmem:[%s279 + $0x80] sm:$0xf] %v344
                %v346 = vld [vmem:[%s278 + $0x104] sm:$0xf]
                %347 = vst [vmem:[%s279 + $0x84] sm:$0xf] %v346
                %v348 = vld [vmem:[%s278 + $0x108] sm:$0xf]
                %349 = vst [vmem:[%s279 + $0x88] sm:$0xf] %v348
                %v350 = vld [vmem:[%s278 + $0x10c] sm:$0xf]
                %351 = vst [vmem:[%s279 + $0x8c] sm:$0xf] %v350
                %v352 = vld [vmem:[%s278 + $0x110] sm:$0xf]
                %353 = vst [vmem:[%s279 + $0x90] sm:$0xf] %v352
                %v354 = vld [vmem:[%s278 + $0x114] sm:$0xf]
                %355 = vst [vmem:[%s279 + $0x94] sm:$0xf] %v354
                %v356 = vld [vmem:[%s278 + $0x118] sm:$0xf]
                %357 = vst [vmem:[%s279 + $0x98] sm:$0xf] %v356
                %v358 = vld [vmem:[%s278 + $0x11c] sm:$0xf]
                %359 = vst [vmem:[%s279 + $0x9c] sm:$0xf] %v358
                %v360 = vld [vmem:[%s278 + $0x120] sm:$0xf]
                %361 = vst [vmem:[%s279 + $0xa0] sm:$0xf] %v360
                %v362 = vld [vmem:[%s278 + $0x124] sm:$0xf]
                %363 = vst [vmem:[%s279 + $0xa4] sm:$0xf] %v362
                %v364 = vld [vmem:[%s278 + $0x128] sm:$0xf]
                %365 = vst [vmem:[%s279 + $0xa8] sm:$0xf] %v364
                %v366 = vld [vmem:[%s278 + $0x12c] sm:$0xf]
                %367 = vst [vmem:[%s279 + $0xac] sm:$0xf] %v366
                %v368 = vld [vmem:[%s278 + $0x130] sm:$0xf]
                %369 = vst [vmem:[%s279 + $0xb0] sm:$0xf] %v368
                %v370 = vld [vmem:[%s278 + $0x134] sm:$0xf]
                %371 = vst [vmem:[%s279 + $0xb4] sm:$0xf] %v370
                %v372 = vld [vmem:[%s278 + $0x138] sm:$0xf]
                %373 = vst [vmem:[%s279 + $0xb8] sm:$0xf] %v372
                %v374 = vld [vmem:[%s278 + $0x13c] sm:$0xf]
                %375 = vst [vmem:[%s279 + $0xbc] sm:$0xf] %v374
                %v376 = vld [vmem:[%s278 + $0x140] sm:$0xf]
                %377 = vst [vmem:[%s279 + $0xc0] sm:$0xf] %v376
                %v378 = vld [vmem:[%s278 + $0x144] sm:$0xf]
                %379 = vst [vmem:[%s279 + $0xc4] sm:$0xf] %v378
                %v380 = vld [vmem:[%s278 + $0x148] sm:$0xf]
                %381 = vst [vmem:[%s279 + $0xc8] sm:$0xf] %v380
                %v382 = vld [vmem:[%s278 + $0x14c] sm:$0xf]
                %383 = vst [vmem:[%s279 + $0xcc] sm:$0xf] %v382
                %v384 = vld [vmem:[%s278 + $0x150] sm:$0xf]
                %385 = vst [vmem:[%s279 + $0xd0] sm:$0xf] %v384
                %v386 = vld [vmem:[%s278 + $0x154] sm:$0xf]
                %387 = vst [vmem:[%s279 + $0xd4] sm:$0xf] %v386
                %v388 = vld [vmem:[%s278 + $0x158] sm:$0xf]
                %389 = vst [vmem:[%s279 + $0xd8] sm:$0xf] %v388
                %v390 = vld [vmem:[%s278 + $0x15c] sm:$0xf]
                %391 = vst [vmem:[%s279 + $0xdc] sm:$0xf] %v390
                %v392 = vld [vmem:[%s278 + $0x160] sm:$0xf]
                %393 = vst [vmem:[%s279 + $0xe0] sm:$0xf] %v392
                %v394 = vld [vmem:[%s278 + $0x164] sm:$0xf]
                %395 = vst [vmem:[%s279 + $0xe4] sm:$0xf] %v394
                %v396 = vld [vmem:[%s278 + $0x168] sm:$0xf]
                %397 = vst [vmem:[%s279 + $0xe8] sm:$0xf] %v396
                %v398 = vld [vmem:[%s278 + $0x16c] sm:$0xf]
                %399 = vst [vmem:[%s279 + $0xec] sm:$0xf] %v398
                %v400 = vld [vmem:[%s278 + $0x170] sm:$0xf]
                %401 = vst [vmem:[%s279 + $0xf0] sm:$0xf] %v400
                %v402 = vld [vmem:[%s278 + $0x174] sm:$0xf]
                %403 = vst [vmem:[%s279 + $0xf4] sm:$0xf] %v402
                %v404 = vld [vmem:[%s278 + $0x178] sm:$0xf]
                %405 = vst [vmem:[%s279 + $0xf8] sm:$0xf] %v404
                %v406 = vld [vmem:[%s278 + $0x17c] sm:$0xf]
                %407 = vst [vmem:[%s279 + $0xfc] sm:$0xf] %v406
                %v408 = vld [vmem:[%s278 + $0x200] sm:$0xf]
                %409 = vst [vmem:[%s279 + $0x100] sm:$0xf] %v408
                %v410 = vld [vmem:[%s278 + $0x204] sm:$0xf]
                %411 = vst [vmem:[%s279 + $0x104] sm:$0xf] %v410
                %v412 = vld [vmem:[%s278 + $0x208] sm:$0xf]
                %413 = vst [vmem:[%s279 + $0x108] sm:$0xf] %v412
                %v414 = vld [vmem:[%s278 + $0x20c] sm:$0xf]
                %415 = vst [vmem:[%s279 + $0x10c] sm:$0xf] %v414
                %v416 = vld [vmem:[%s278 + $0x210] sm:$0xf]
                %417 = vst [vmem:[%s279 + $0x110] sm:$0xf] %v416
                %v418 = vld [vmem:[%s278 + $0x214] sm:$0xf]
                %419 = vst [vmem:[%s279 + $0x114] sm:$0xf] %v418
                %v420 = vld [vmem:[%s278 + $0x218] sm:$0xf]
                %421 = vst [vmem:[%s279 + $0x118] sm:$0xf] %v420
                %v422 = vld [vmem:[%s278 + $0x21c] sm:$0xf]
                %423 = vst [vmem:[%s279 + $0x11c] sm:$0xf] %v422
                %v424 = vld [vmem:[%s278 + $0x220] sm:$0xf]
                %425 = vst [vmem:[%s279 + $0x120] sm:$0xf] %v424
                %v426 = vld [vmem:[%s278 + $0x224] sm:$0xf]
                %427 = vst [vmem:[%s279 + $0x124] sm:$0xf] %v426
                %v428 = vld [vmem:[%s278 + $0x228] sm:$0xf]
                %429 = vst [vmem:[%s279 + $0x128] sm:$0xf] %v428
                %v430 = vld [vmem:[%s278 + $0x22c] sm:$0xf]
                %431 = vst [vmem:[%s279 + $0x12c] sm:$0xf] %v430
                %v432 = vld [vmem:[%s278 + $0x230] sm:$0xf]
                %433 = vst [vmem:[%s279 + $0x130] sm:$0xf] %v432
                %v434 = vld [vmem:[%s278 + $0x234] sm:$0xf]
                %435 = vst [vmem:[%s279 + $0x134] sm:$0xf] %v434
                %v436 = vld [vmem:[%s278 + $0x238] sm:$0xf]
                %437 = vst [vmem:[%s279 + $0x138] sm:$0xf] %v436
                %v438 = vld [vmem:[%s278 + $0x23c] sm:$0xf]
                %439 = vst [vmem:[%s279 + $0x13c] sm:$0xf] %v438
                %v440 = vld [vmem:[%s278 + $0x240] sm:$0xf]
                %441 = vst [vmem:[%s279 + $0x140] sm:$0xf] %v440
                %v442 = vld [vmem:[%s278 + $0x244] sm:$0xf]
                %443 = vst [vmem:[%s279 + $0x144] sm:$0xf] %v442
                %v444 = vld [vmem:[%s278 + $0x248] sm:$0xf]
                %445 = vst [vmem:[%s279 + $0x148] sm:$0xf] %v444
                %v446 = vld [vmem:[%s278 + $0x24c] sm:$0xf]
                %447 = vst [vmem:[%s279 + $0x14c] sm:$0xf] %v446
                %v448 = vld [vmem:[%s278 + $0x250] sm:$0xf]
                %449 = vst [vmem:[%s279 + $0x150] sm:$0xf] %v448
                %v450 = vld [vmem:[%s278 + $0x254] sm:$0xf]
                %451 = vst [vmem:[%s279 + $0x154] sm:$0xf] %v450
                %v452 = vld [vmem:[%s278 + $0x258] sm:$0xf]
                %453 = vst [vmem:[%s279 + $0x158] sm:$0xf] %v452
                %v454 = vld [vmem:[%s278 + $0x25c] sm:$0xf]
                %455 = vst [vmem:[%s279 + $0x15c] sm:$0xf] %v454
                %v456 = vld [vmem:[%s278 + $0x260] sm:$0xf]
                %457 = vst [vmem:[%s279 + $0x160] sm:$0xf] %v456
                %v458 = vld [vmem:[%s278 + $0x264] sm:$0xf]
                %459 = vst [vmem:[%s279 + $0x164] sm:$0xf] %v458
                %v460 = vld [vmem:[%s278 + $0x268] sm:$0xf]
                %461 = vst [vmem:[%s279 + $0x168] sm:$0xf] %v460
                %v462 = vld [vmem:[%s278 + $0x26c] sm:$0xf]
                %463 = vst [vmem:[%s279 + $0x16c] sm:$0xf] %v462
                %v464 = vld [vmem:[%s278 + $0x270] sm:$0xf]
                %465 = vst [vmem:[%s279 + $0x170] sm:$0xf] %v464
                %v466 = vld [vmem:[%s278 + $0x274] sm:$0xf]
                %467 = vst [vmem:[%s279 + $0x174] sm:$0xf] %v466
                %v468 = vld [vmem:[%s278 + $0x278] sm:$0xf]
                %469 = vst [vmem:[%s279 + $0x178] sm:$0xf] %v468
                %v470 = vld [vmem:[%s278 + $0x27c] sm:$0xf]
                %471 = vst [vmem:[%s279 + $0x17c] sm:$0xf] %v470
                %v472 = vld [vmem:[%s278 + $0x300] sm:$0xf]
                %473 = vst [vmem:[%s279 + $0x180] sm:$0xf] %v472
                %v474 = vld [vmem:[%s278 + $0x304] sm:$0xf]
                %475 = vst [vmem:[%s279 + $0x184] sm:$0xf] %v474
                %v476 = vld [vmem:[%s278 + $0x308] sm:$0xf]
                %477 = vst [vmem:[%s279 + $0x188] sm:$0xf] %v476
                %v478 = vld [vmem:[%s278 + $0x30c] sm:$0xf]
                %479 = vst [vmem:[%s279 + $0x18c] sm:$0xf] %v478
                %v480 = vld [vmem:[%s278 + $0x310] sm:$0xf]
                %481 = vst [vmem:[%s279 + $0x190] sm:$0xf] %v480
                %v482 = vld [vmem:[%s278 + $0x314] sm:$0xf]
                %483 = vst [vmem:[%s279 + $0x194] sm:$0xf] %v482
                %v484 = vld [vmem:[%s278 + $0x318] sm:$0xf]
                %485 = vst [vmem:[%s279 + $0x198] sm:$0xf] %v484
                %v486 = vld [vmem:[%s278 + $0x31c] sm:$0xf]
                %487 = vst [vmem:[%s279 + $0x19c] sm:$0xf] %v486
                %v488 = vld [vmem:[%s278 + $0x320] sm:$0xf]
                %489 = vst [vmem:[%s279 + $0x1a0] sm:$0xf] %v488
                %v490 = vld [vmem:[%s278 + $0x324] sm:$0xf]
                %491 = vst [vmem:[%s279 + $0x1a4] sm:$0xf] %v490
                %v492 = vld [vmem:[%s278 + $0x328] sm:$0xf]
                %493 = vst [vmem:[%s279 + $0x1a8] sm:$0xf] %v492
                %v494 = vld [vmem:[%s278 + $0x32c] sm:$0xf]
                %495 = vst [vmem:[%s279 + $0x1ac] sm:$0xf] %v494
                %v496 = vld [vmem:[%s278 + $0x330] sm:$0xf]
                %497 = vst [vmem:[%s279 + $0x1b0] sm:$0xf] %v496
                %v498 = vld [vmem:[%s278 + $0x334] sm:$0xf]
                %499 = vst [vmem:[%s279 + $0x1b4] sm:$0xf] %v498
                %v500 = vld [vmem:[%s278 + $0x338] sm:$0xf]
                %501 = vst [vmem:[%s279 + $0x1b8] sm:$0xf] %v500
                %v502 = vld [vmem:[%s278 + $0x33c] sm:$0xf]
                %503 = vst [vmem:[%s279 + $0x1bc] sm:$0xf] %v502
                %v504 = vld [vmem:[%s278 + $0x340] sm:$0xf]
                %505 = vst [vmem:[%s279 + $0x1c0] sm:$0xf] %v504
                %v506 = vld [vmem:[%s278 + $0x344] sm:$0xf]
                %507 = vst [vmem:[%s279 + $0x1c4] sm:$0xf] %v506
                %v508 = vld [vmem:[%s278 + $0x348] sm:$0xf]
                %509 = vst [vmem:[%s279 + $0x1c8] sm:$0xf] %v508
                %v510 = vld [vmem:[%s278 + $0x34c] sm:$0xf]
                %511 = vst [vmem:[%s279 + $0x1cc] sm:$0xf] %v510
                %v512 = vld [vmem:[%s278 + $0x350] sm:$0xf]
                %513 = vst [vmem:[%s279 + $0x1d0] sm:$0xf] %v512
                %v514 = vld [vmem:[%s278 + $0x354] sm:$0xf]
                %515 = vst [vmem:[%s279 + $0x1d4] sm:$0xf] %v514
                %v516 = vld [vmem:[%s278 + $0x358] sm:$0xf]
                %517 = vst [vmem:[%s279 + $0x1d8] sm:$0xf] %v516
                %v518 = vld [vmem:[%s278 + $0x35c] sm:$0xf]
                %519 = vst [vmem:[%s279 + $0x1dc] sm:$0xf] %v518
                %v520 = vld [vmem:[%s278 + $0x360] sm:$0xf]
                %521 = vst [vmem:[%s279 + $0x1e0] sm:$0xf] %v520
                %v522 = vld [vmem:[%s278 + $0x364] sm:$0xf]
                %523 = vst [vmem:[%s279 + $0x1e4] sm:$0xf] %v522
                %v524 = vld [vmem:[%s278 + $0x368] sm:$0xf]
                %525 = vst [vmem:[%s279 + $0x1e8] sm:$0xf] %v524
                %v526 = vld [vmem:[%s278 + $0x36c] sm:$0xf]
                %527 = vst [vmem:[%s279 + $0x1ec] sm:$0xf] %v526
                %v528 = vld [vmem:[%s278 + $0x370] sm:$0xf]
                %529 = vst [vmem:[%s279 + $0x1f0] sm:$0xf] %v528
                %v530 = vld [vmem:[%s278 + $0x374] sm:$0xf]
                %531 = vst [vmem:[%s279 + $0x1f4] sm:$0xf] %v530
                %v532 = vld [vmem:[%s278 + $0x378] sm:$0xf]
                %533 = vst [vmem:[%s279 + $0x1f8] sm:$0xf] %v532
                %v534 = vld [vmem:[%s278 + $0x37c] sm:$0xf]
                %535 = vst [vmem:[%s279 + $0x1fc] sm:$0xf] %v534
              $region61: #{liif_forward.13} parent=55 // loop_footer
                %s277 = sadd.s32 1, %s273
              $region62: #{liif_forward.13} parent=55 // loop_footer_branch
                %272 = sbr.rel target = $region58
              $region63: #{liif_forward.13} parent=55 // loop_exit
                _
            $region56: #{liif_forward.13} parent=47 // pred_fallthru
              _
          $region48: #{liif_forward.13} parent=43 // pred_fallthru
            _
          %811 = vnop
        $region44: #{liif_forward.13} parent=39 // pred_fallthru
          _
        // Predicated region
        $region82: #{liif_forward.13} parent=39 // pred_check
          %p812 = pneg %p60
        $region83: #{liif_forward.13} parent=39 // pred_check_branch
          %814 = sbr.rel (%p812) target = $region85
        $region84: #{liif_forward.13} parent=39 // pred_region
          %s815 = smul.u32 32, %s14
          %p816 = scmp.lt.s32.totalorder %s815, 63
          %s817 = scalar_select %p816, %s815, 63
          %s818 = smul.addr %s817, 8
          %s819 = scalar_lea.vmem %s1, %s818
          %s820 = smul.u32 32, %s14
        $region85: #{liif_forward.13} parent=39 // pred_fallthru
          _
      $region40: #{liif_forward.13} parent=5 // pred_fallthru
        _
      %p821 = scmp.le.s32.totalorder 1, %s14
      %p822 = scmp.lt.s32.totalorder %s14, 3
      %p823 = pnand %p821, %p822
      %p824 = pneg %p823
      // Predicated region
      $region86: #{liif_forward.13} parent=5 // pred_check
        _
      $region87: #{liif_forward.13} parent=5 // pred_check_branch
        %826 = sbr.rel (%p823) target = $region89
      $region88: #{liif_forward.13} parent=5 // pred_region
        %s827 = ssub.s32 %s14, 1
        %s828 = sand.u32 %s27, 1
        %s829 = sand.u32 %s27, 1
        %s830 = smul.addr %s829, 512
        %s831 = scalar_lea.vmem [#allocation2], %s830
        // Predicated region
        $region90: #{liif_forward.13} parent=88 // pred_check
          %p832 = pneg %p40
        $region91: #{liif_forward.13} parent=88 // pred_check_branch
          %834 = sbr.rel (%p832) target = $region93
        $region92: #{liif_forward.13} parent=88 // pred_region
          _
        $region93: #{liif_forward.13} parent=88 // pred_fallthru
          _
        %s835 = sand.u32 %s27, 1
        %s836 = sand.u32 %s27, 1
        %s837 = smul.addr %s836, 512
        %s838 = scalar_lea.vmem [#allocation2], %s837
        %p839 = pneg %p40
        %p840 = pneg %p37
        %s841 = smul.u32 32, %s19
        %p842 = scmp.lt.s32.totalorder %s841, 63
        %s843 = scalar_select %p842, %s841, 63
        %s844 = smul.addr %s843, 8
        %s845 = scalar_lea.vmem %s1, %s844
        %p846 = pneg %p66
        %p847 = pneg %p63
        %p848 = pneg %p87
        %p849 = pneg %p84
        %p850 = pneg %p108
        %p851 = pneg %p105
        %p852 = pneg %p129
        %p853 = pneg %p126
        %p854 = pneg %p150
        %p855 = pneg %p147
        %p856 = pneg %p171
        %p857 = pneg %p168
        %p858 = pneg %p192
        %p859 = pneg %p189
        %p860 = pneg %p218
        %p861 = pneg %p215
        %s862 = smul.u32 32, %s19
        %p863 = scmp.lt.s32.totalorder %s862, 63
        %s864 = scalar_select %p863, %s862, 63
        %s865 = smul.addr %s864, 8
        %s866 = scalar_lea.vmem %s8, %s865
        %s867 = smul.u32 32, %s19
        %s868 = smul.u32 32, %s19
        %p869 = scmp.lt.s32.totalorder %s868, 63
        %s870 = scalar_select %p869, %s868, 63
        %s871 = smul.addr %s870, 8
        %s872 = scalar_lea.vmem %s1, %s871
        %s873 = smul.u32 32, %s19
        %s874 = smul.u32 32, %s19
        %p875 = scmp.lt.s32.totalorder %s874, 63
        %s876 = scalar_select %p875, %s874, 63
        %s877 = smul.addr %s876, 8
        %s878 = scalar_lea.vmem %s8, %s877
        %s879 = smul.u32 32, %s19
        %v881 = vld [vmem:[%s831] sm:$0xf]
        %v882 = vld [vmem:[%s831 + $0x4] sm:$0xf]
        %v883 = vld [vmem:[%s831 + $0x8] sm:$0xf]
        %v884 = vld [vmem:[%s831 + $0xc] sm:$0xf]
        %v885 = vld [vmem:[%s831 + $0x10] sm:$0xf]
        %v886 = vld [vmem:[%s831 + $0x14] sm:$0xf]
        %v887 = vld [vmem:[%s831 + $0x18] sm:$0xf]
        %v888 = vld [vmem:[%s831 + $0x1c] sm:$0xf]
        %v889 = vld [vmem:[%s831 + $0x20] sm:$0xf]
        %v890 = vld [vmem:[%s831 + $0x24] sm:$0xf]
        %v891 = vld [vmem:[%s831 + $0x28] sm:$0xf]
        %v892 = vld [vmem:[%s831 + $0x2c] sm:$0xf]
        %v893 = vld [vmem:[%s831 + $0x30] sm:$0xf]
        %v894 = vld [vmem:[%s831 + $0x34] sm:$0xf]
        %v895 = vld [vmem:[%s831 + $0x38] sm:$0xf]
        %v896 = vld [vmem:[%s831 + $0x3c] sm:$0xf]
        %v897 = vld [vmem:[%s831 + $0x40] sm:$0xf]
        %v898 = vld [vmem:[%s831 + $0x44] sm:$0xf]
        %v899 = vld [vmem:[%s831 + $0x48] sm:$0xf]
        %v900 = vld [vmem:[%s831 + $0x4c] sm:$0xf]
        %v901 = vld [vmem:[%s831 + $0x50] sm:$0xf]
        %v902 = vld [vmem:[%s831 + $0x54] sm:$0xf]
        %v903 = vld [vmem:[%s831 + $0x58] sm:$0xf]
        %v904 = vld [vmem:[%s831 + $0x5c] sm:$0xf]
        %v905 = vld [vmem:[%s831 + $0x60] sm:$0xf]
        %v906 = vld [vmem:[%s831 + $0x64] sm:$0xf]
        %v907 = vld [vmem:[%s831 + $0x68] sm:$0xf]
        %v908 = vld [vmem:[%s831 + $0x6c] sm:$0xf]
        %v909 = vld [vmem:[%s831 + $0x70] sm:$0xf]
        %v910 = vld [vmem:[%s831 + $0x74] sm:$0xf]
        %v911 = vld [vmem:[%s831 + $0x78] sm:$0xf]
        %v912 = vld [vmem:[%s831 + $0x7c] sm:$0xf]
        %v913 = vld [vmem:[%s831 + $0x80] sm:$0xf]
        %v914 = vld [vmem:[%s831 + $0x84] sm:$0xf]
        %v915 = vld [vmem:[%s831 + $0x88] sm:$0xf]
        %v916 = vld [vmem:[%s831 + $0x8c] sm:$0xf]
        %v917 = vld [vmem:[%s831 + $0x90] sm:$0xf]
        %v918 = vld [vmem:[%s831 + $0x94] sm:$0xf]
        %v919 = vld [vmem:[%s831 + $0x98] sm:$0xf]
        %v920 = vld [vmem:[%s831 + $0x9c] sm:$0xf]
        %v921 = vld [vmem:[%s831 + $0xa0] sm:$0xf]
        %v922 = vld [vmem:[%s831 + $0xa4] sm:$0xf]
        %v923 = vld [vmem:[%s831 + $0xa8] sm:$0xf]
        %v924 = vld [vmem:[%s831 + $0xac] sm:$0xf]
        %v925 = vld [vmem:[%s831 + $0xb0] sm:$0xf]
        %v926 = vld [vmem:[%s831 + $0xb4] sm:$0xf]
        %v927 = vld [vmem:[%s831 + $0xb8] sm:$0xf]
        %v928 = vld [vmem:[%s831 + $0xbc] sm:$0xf]
        %v929 = vld [vmem:[%s831 + $0xc0] sm:$0xf]
        %v930 = vld [vmem:[%s831 + $0xc4] sm:$0xf]
        %v931 = vld [vmem:[%s831 + $0xc8] sm:$0xf]
        %v932 = vld [vmem:[%s831 + $0xcc] sm:$0xf]
        %v933 = vld [vmem:[%s831 + $0xd0] sm:$0xf]
        %v934 = vld [vmem:[%s831 + $0xd4] sm:$0xf]
        %v935 = vld [vmem:[%s831 + $0xd8] sm:$0xf]
        %v936 = vld [vmem:[%s831 + $0xdc] sm:$0xf]
        %v937 = vld [vmem:[%s831 + $0xe0] sm:$0xf]
        %v938 = vld [vmem:[%s831 + $0xe4] sm:$0xf]
        %v939 = vld [vmem:[%s831 + $0xe8] sm:$0xf]
        %v940 = vld [vmem:[%s831 + $0xec] sm:$0xf]
        %v941 = vld [vmem:[%s831 + $0xf0] sm:$0xf]
        %v942 = vld [vmem:[%s831 + $0xf4] sm:$0xf]
        %v943 = vld [vmem:[%s831 + $0xf8] sm:$0xf]
        %v944 = vld [vmem:[%s831 + $0xfc] sm:$0xf]
        %v945 = vld [vmem:[%s831 + $0x100] sm:$0xf]
        %v946 = vld [vmem:[%s831 + $0x104] sm:$0xf]
        %v947 = vld [vmem:[%s831 + $0x108] sm:$0xf]
        %v948 = vld [vmem:[%s831 + $0x10c] sm:$0xf]
        %v949 = vld [vmem:[%s831 + $0x110] sm:$0xf]
        %v950 = vld [vmem:[%s831 + $0x114] sm:$0xf]
        %v951 = vld [vmem:[%s831 + $0x118] sm:$0xf]
        %v952 = vld [vmem:[%s831 + $0x11c] sm:$0xf]
        %v953 = vld [vmem:[%s831 + $0x120] sm:$0xf]
        %v954 = vld [vmem:[%s831 + $0x124] sm:$0xf]
        %v955 = vld [vmem:[%s831 + $0x128] sm:$0xf]
        %v956 = vld [vmem:[%s831 + $0x12c] sm:$0xf]
        %v957 = vld [vmem:[%s831 + $0x130] sm:$0xf]
        %v958 = vld [vmem:[%s831 + $0x134] sm:$0xf]
        %v959 = vld [vmem:[%s831 + $0x138] sm:$0xf]
        %v960 = vld [vmem:[%s831 + $0x13c] sm:$0xf]
        %v961 = vld [vmem:[%s831 + $0x140] sm:$0xf]
        %v962 = vld [vmem:[%s831 + $0x144] sm:$0xf]
        %v963 = vld [vmem:[%s831 + $0x148] sm:$0xf]
        %v964 = vld [vmem:[%s831 + $0x14c] sm:$0xf]
        %v965 = vld [vmem:[%s831 + $0x150] sm:$0xf]
        %v966 = vld [vmem:[%s831 + $0x154] sm:$0xf]
        %v967 = vld [vmem:[%s831 + $0x158] sm:$0xf]
        %v968 = vld [vmem:[%s831 + $0x15c] sm:$0xf]
        %v969 = vld [vmem:[%s831 + $0x160] sm:$0xf]
        %v970 = vld [vmem:[%s831 + $0x164] sm:$0xf]
        %v971 = vld [vmem:[%s831 + $0x168] sm:$0xf]
        %v972 = vld [vmem:[%s831 + $0x16c] sm:$0xf]
        %v973 = vld [vmem:[%s831 + $0x170] sm:$0xf]
        %v974 = vld [vmem:[%s831 + $0x174] sm:$0xf]
        %v975 = vld [vmem:[%s831 + $0x178] sm:$0xf]
        %v976 = vld [vmem:[%s831 + $0x17c] sm:$0xf]
        %v977 = vld [vmem:[%s831 + $0x180] sm:$0xf]
        %v978 = vld [vmem:[%s831 + $0x184] sm:$0xf]
        %v979 = vld [vmem:[%s831 + $0x188] sm:$0xf]
        %v980 = vld [vmem:[%s831 + $0x18c] sm:$0xf]
        %v981 = vld [vmem:[%s831 + $0x190] sm:$0xf]
        %v982 = vld [vmem:[%s831 + $0x194] sm:$0xf]
        %v983 = vld [vmem:[%s831 + $0x198] sm:$0xf]
        %v984 = vld [vmem:[%s831 + $0x19c] sm:$0xf]
        %v985 = vld [vmem:[%s831 + $0x1a0] sm:$0xf]
        %v986 = vld [vmem:[%s831 + $0x1a4] sm:$0xf]
        %v987 = vld [vmem:[%s831 + $0x1a8] sm:$0xf]
        %v988 = vld [vmem:[%s831 + $0x1ac] sm:$0xf]
        %v989 = vld [vmem:[%s831 + $0x1b0] sm:$0xf]
        %v990 = vld [vmem:[%s831 + $0x1b4] sm:$0xf]
        %v991 = vld [vmem:[%s831 + $0x1b8] sm:$0xf]
        %v992 = vld [vmem:[%s831 + $0x1bc] sm:$0xf]
        %v993 = vld [vmem:[%s831 + $0x1c0] sm:$0xf]
        %v994 = vld [vmem:[%s831 + $0x1c4] sm:$0xf]
        %v995 = vld [vmem:[%s831 + $0x1c8] sm:$0xf]
        %v996 = vld [vmem:[%s831 + $0x1cc] sm:$0xf]
        %v997 = vld [vmem:[%s831 + $0x1d0] sm:$0xf]
        %v998 = vld [vmem:[%s831 + $0x1d4] sm:$0xf]
        %v999 = vld [vmem:[%s831 + $0x1d8] sm:$0xf]
        %v1000 = vld [vmem:[%s831 + $0x1dc] sm:$0xf]
        %v1001 = vld [vmem:[%s831 + $0x1e0] sm:$0xf]
        %v1002 = vld [vmem:[%s831 + $0x1e4] sm:$0xf]
        %v1003 = vld [vmem:[%s831 + $0x1e8] sm:$0xf]
        %v1004 = vld [vmem:[%s831 + $0x1ec] sm:$0xf]
        %v1005 = vld [vmem:[%s831 + $0x1f0] sm:$0xf]
        %v1006 = vld [vmem:[%s831 + $0x1f4] sm:$0xf]
        %v1007 = vld [vmem:[%s831 + $0x1f8] sm:$0xf]
        %v1008 = vld [vmem:[%s831 + $0x1fc] sm:$0xf]
        %v1009 = vld [vmem:[%s2] sm:$0xf]
        %v1010 = vld [vmem:[%s2 + $0x4] sm:$0xf]
        %v1011 = vld [vmem:[%s2 + $0x8] sm:$0xf]
        %v1012 = vld [vmem:[%s2 + $0xc] sm:$0xf]
        %v1013 = vld [vmem:[%s2 + $0x10] sm:$0xf]
        %v1014 = vld [vmem:[%s2 + $0x14] sm:$0xf]
        %v1015 = vld [vmem:[%s2 + $0x18] sm:$0xf]
        %v1016 = vld [vmem:[%s2 + $0x1c] sm:$0xf]
        %v1017 = vld [vmem:[%s2 + $0x20] sm:$0xf]
        %v1018 = vld [vmem:[%s2 + $0x24] sm:$0xf]
        %v1019 = vld [vmem:[%s2 + $0x28] sm:$0xf]
        %v1020 = vld [vmem:[%s2 + $0x2c] sm:$0xf]
        %v1021 = vld [vmem:[%s2 + $0x30] sm:$0xf]
        %v1022 = vld [vmem:[%s2 + $0x34] sm:$0xf]
        %v1023 = vld [vmem:[%s2 + $0x38] sm:$0xf]
        %v1024 = vld [vmem:[%s2 + $0x3c] sm:$0xf]
        %v1025 = vld [vmem:[%s3] sm:$0x1]
        %v1027 = vlaneseq
        %v1028 = vshrl.u32 %v1027, 7
        %v1029 = vsub.s32 0, %v1028
        %v1030 = vrot.slane %v1025, %v1029
        %v1160 = vunpack.c.l.b16 %v881
        %v1161 = vunpack.c.l.b16 %v882
        %v1162 = vunpack.c.l.b16 %v883
        %v1163 = vunpack.c.l.b16 %v884
        %v1164 = vunpack.c.l.b16 %v885
        %v1165 = vunpack.c.l.b16 %v886
        %v1166 = vunpack.c.l.b16 %v887
        %v1167 = vunpack.c.l.b16 %v888
        %v1168 = vunpack.c.l.b16 %v889
        %v1169 = vunpack.c.l.b16 %v890
        %v1170 = vunpack.c.l.b16 %v891
        %v1171 = vunpack.c.l.b16 %v892
        %v1172 = vunpack.c.l.b16 %v893
        %v1173 = vunpack.c.l.b16 %v894
        %v1174 = vunpack.c.l.b16 %v895
        %v1175 = vunpack.c.l.b16 %v896
        %v1176 = vunpack.c.l.b16 %v897
        %v1177 = vunpack.c.l.b16 %v898
        %v1178 = vunpack.c.l.b16 %v899
        %v1179 = vunpack.c.l.b16 %v900
        %v1180 = vunpack.c.l.b16 %v901
        %v1181 = vunpack.c.l.b16 %v902
        %v1182 = vunpack.c.l.b16 %v903
        %v1183 = vunpack.c.l.b16 %v904
        %v1184 = vunpack.c.l.b16 %v905
        %v1185 = vunpack.c.l.b16 %v906
        %v1186 = vunpack.c.l.b16 %v907
        %v1187 = vunpack.c.l.b16 %v908
        %v1188 = vunpack.c.l.b16 %v909
        %v1189 = vunpack.c.l.b16 %v910
        %v1190 = vunpack.c.l.b16 %v911
        %v1191 = vunpack.c.l.b16 %v912
        %v1192 = vunpack.c.l.b16 %v913
        %v1193 = vunpack.c.l.b16 %v914
        %v1194 = vunpack.c.l.b16 %v915
        %v1195 = vunpack.c.l.b16 %v916
        %v1196 = vunpack.c.l.b16 %v917
        %v1197 = vunpack.c.l.b16 %v918
        %v1198 = vunpack.c.l.b16 %v919
        %v1199 = vunpack.c.l.b16 %v920
        %v1200 = vunpack.c.l.b16 %v921
        %v1201 = vunpack.c.l.b16 %v922
        %v1202 = vunpack.c.l.b16 %v923
        %v1203 = vunpack.c.l.b16 %v924
        %v1204 = vunpack.c.l.b16 %v925
        %v1205 = vunpack.c.l.b16 %v926
        %v1206 = vunpack.c.l.b16 %v927
        %v1207 = vunpack.c.l.b16 %v928
        %v1208 = vunpack.c.l.b16 %v929
        %v1209 = vunpack.c.l.b16 %v930
        %v1210 = vunpack.c.l.b16 %v931
        %v1211 = vunpack.c.l.b16 %v932
        %v1212 = vunpack.c.l.b16 %v933
        %v1213 = vunpack.c.l.b16 %v934
        %v1214 = vunpack.c.l.b16 %v935
        %v1215 = vunpack.c.l.b16 %v936
        %v1216 = vunpack.c.l.b16 %v937
        %v1217 = vunpack.c.l.b16 %v938
        %v1218 = vunpack.c.l.b16 %v939
        %v1219 = vunpack.c.l.b16 %v940
        %v1220 = vunpack.c.l.b16 %v941
        %v1221 = vunpack.c.l.b16 %v942
        %v1222 = vunpack.c.l.b16 %v943
        %v1223 = vunpack.c.l.b16 %v944
        %v1224 = vunpack.c.l.b16 %v945
        %v1225 = vunpack.c.l.b16 %v946
        %v1226 = vunpack.c.l.b16 %v947
        %v1227 = vunpack.c.l.b16 %v948
        %v1228 = vunpack.c.l.b16 %v949
        %v1229 = vunpack.c.l.b16 %v950
        %v1230 = vunpack.c.l.b16 %v951
        %v1231 = vunpack.c.l.b16 %v952
        %v1232 = vunpack.c.l.b16 %v953
        %v1233 = vunpack.c.l.b16 %v954
        %v1234 = vunpack.c.l.b16 %v955
        %v1235 = vunpack.c.l.b16 %v956
        %v1236 = vunpack.c.l.b16 %v957
        %v1237 = vunpack.c.l.b16 %v958
        %v1238 = vunpack.c.l.b16 %v959
        %v1239 = vunpack.c.l.b16 %v960
        %v1240 = vunpack.c.l.b16 %v961
        %v1241 = vunpack.c.l.b16 %v962
        %v1242 = vunpack.c.l.b16 %v963
        %v1243 = vunpack.c.l.b16 %v964
        %v1244 = vunpack.c.l.b16 %v965
        %v1245 = vunpack.c.l.b16 %v966
        %v1246 = vunpack.c.l.b16 %v967
        %v1247 = vunpack.c.l.b16 %v968
        %v1248 = vunpack.c.l.b16 %v969
        %v1249 = vunpack.c.l.b16 %v970
        %v1250 = vunpack.c.l.b16 %v971
        %v1251 = vunpack.c.l.b16 %v972
        %v1252 = vunpack.c.l.b16 %v973
        %v1253 = vunpack.c.l.b16 %v974
        %v1254 = vunpack.c.l.b16 %v975
        %v1255 = vunpack.c.l.b16 %v976
        %v1256 = vunpack.c.l.b16 %v977
        %v1257 = vunpack.c.l.b16 %v978
        %v1258 = vunpack.c.l.b16 %v979
        %v1259 = vunpack.c.l.b16 %v980
        %v1260 = vunpack.c.l.b16 %v981
        %v1261 = vunpack.c.l.b16 %v982
        %v1262 = vunpack.c.l.b16 %v983
        %v1263 = vunpack.c.l.b16 %v984
        %v1264 = vunpack.c.l.b16 %v985
        %v1265 = vunpack.c.l.b16 %v986
        %v1266 = vunpack.c.l.b16 %v987
        %v1267 = vunpack.c.l.b16 %v988
        %v1268 = vunpack.c.l.b16 %v989
        %v1269 = vunpack.c.l.b16 %v990
        %v1270 = vunpack.c.l.b16 %v991
        %v1271 = vunpack.c.l.b16 %v992
        %v1272 = vunpack.c.l.b16 %v993
        %v1273 = vunpack.c.l.b16 %v994
        %v1274 = vunpack.c.l.b16 %v995
        %v1275 = vunpack.c.l.b16 %v996
        %v1276 = vunpack.c.l.b16 %v997
        %v1277 = vunpack.c.l.b16 %v998
        %v1278 = vunpack.c.l.b16 %v999
        %v1279 = vunpack.c.l.b16 %v1000
        %v1280 = vunpack.c.l.b16 %v1001
        %v1281 = vunpack.c.l.b16 %v1002
        %v1282 = vunpack.c.l.b16 %v1003
        %v1283 = vunpack.c.l.b16 %v1004
        %v1284 = vunpack.c.l.b16 %v1005
        %v1285 = vunpack.c.l.b16 %v1006
        %v1286 = vunpack.c.l.b16 %v1007
        %v1287 = vunpack.c.l.b16 %v1008
        %v1288 = vpack.c.b16 %v1161, %v1160
        %v1289 = vpack.c.b16 %v1163, %v1162
        %v1290 = vpack.c.b16 %v1165, %v1164
        %v1291 = vpack.c.b16 %v1167, %v1166
        %v1292 = vpack.c.b16 %v1169, %v1168
        %v1293 = vpack.c.b16 %v1171, %v1170
        %v1294 = vpack.c.b16 %v1173, %v1172
        %v1295 = vpack.c.b16 %v1175, %v1174
        %v1296 = vpack.c.b16 %v1177, %v1176
        %v1297 = vpack.c.b16 %v1179, %v1178
        %v1298 = vpack.c.b16 %v1181, %v1180
        %v1299 = vpack.c.b16 %v1183, %v1182
        %v1300 = vpack.c.b16 %v1185, %v1184
        %v1301 = vpack.c.b16 %v1187, %v1186
        %v1302 = vpack.c.b16 %v1189, %v1188
        %v1303 = vpack.c.b16 %v1191, %v1190
        %v1304 = vpack.c.b16 %v1193, %v1192
        %v1305 = vpack.c.b16 %v1195, %v1194
        %v1306 = vpack.c.b16 %v1197, %v1196
        %v1307 = vpack.c.b16 %v1199, %v1198
        %v1308 = vpack.c.b16 %v1201, %v1200
        %v1309 = vpack.c.b16 %v1203, %v1202
        %v1310 = vpack.c.b16 %v1205, %v1204
        %v1311 = vpack.c.b16 %v1207, %v1206
        %v1312 = vpack.c.b16 %v1209, %v1208
        %v1313 = vpack.c.b16 %v1211, %v1210
        %v1314 = vpack.c.b16 %v1213, %v1212
        %v1315 = vpack.c.b16 %v1215, %v1214
        %v1316 = vpack.c.b16 %v1217, %v1216
        %v1317 = vpack.c.b16 %v1219, %v1218
        %v1318 = vpack.c.b16 %v1221, %v1220
        %v1319 = vpack.c.b16 %v1223, %v1222
        %v1320 = vpack.c.b16 %v1225, %v1224
        %v1321 = vpack.c.b16 %v1227, %v1226
        %v1322 = vpack.c.b16 %v1229, %v1228
        %v1323 = vpack.c.b16 %v1231, %v1230
        %v1324 = vpack.c.b16 %v1233, %v1232
        %v1325 = vpack.c.b16 %v1235, %v1234
        %v1326 = vpack.c.b16 %v1237, %v1236
        %v1327 = vpack.c.b16 %v1239, %v1238
        %v1328 = vpack.c.b16 %v1241, %v1240
        %v1329 = vpack.c.b16 %v1243, %v1242
        %v1330 = vpack.c.b16 %v1245, %v1244
        %v1331 = vpack.c.b16 %v1247, %v1246
        %v1332 = vpack.c.b16 %v1249, %v1248
        %v1333 = vpack.c.b16 %v1251, %v1250
        %v1334 = vpack.c.b16 %v1253, %v1252
        %v1335 = vpack.c.b16 %v1255, %v1254
        %v1336 = vpack.c.b16 %v1257, %v1256
        %v1337 = vpack.c.b16 %v1259, %v1258
        %v1338 = vpack.c.b16 %v1261, %v1260
        %v1339 = vpack.c.b16 %v1263, %v1262
        %v1340 = vpack.c.b16 %v1265, %v1264
        %v1341 = vpack.c.b16 %v1267, %v1266
        %v1342 = vpack.c.b16 %v1269, %v1268
        %v1343 = vpack.c.b16 %v1271, %v1270
        %v1344 = vpack.c.b16 %v1273, %v1272
        %v1345 = vpack.c.b16 %v1275, %v1274
        %v1346 = vpack.c.b16 %v1277, %v1276
        %v1347 = vpack.c.b16 %v1279, %v1278
        %v1348 = vpack.c.b16 %v1281, %v1280
        %v1349 = vpack.c.b16 %v1283, %v1282
        %v1350 = vpack.c.b16 %v1285, %v1284
        %v1351 = vpack.c.b16 %v1287, %v1286
        %v1432 = vunpack.c.l.b16 %v1009
        %v1433 = vunpack.c.l.b16 %v1010
        %v1434 = vunpack.c.l.b16 %v1011
        %v1435 = vunpack.c.l.b16 %v1012
        %v1436 = vunpack.c.l.b16 %v1013
        %v1437 = vunpack.c.l.b16 %v1014
        %v1438 = vunpack.c.l.b16 %v1015
        %v1439 = vunpack.c.l.b16 %v1016
        %v1440 = vunpack.c.l.b16 %v1017
        %v1441 = vunpack.c.l.b16 %v1018
        %v1442 = vunpack.c.l.b16 %v1019
        %v1443 = vunpack.c.l.b16 %v1020
        %v1444 = vunpack.c.l.b16 %v1021
        %v1445 = vunpack.c.l.b16 %v1022
        %v1446 = vunpack.c.l.b16 %v1023
        %v1447 = vunpack.c.l.b16 %v1024
        %v1448 = vpack.c.b16 %v1433, %v1432
        %v1449 = vpack.c.b16 %v1435, %v1434
        %v1450 = vpack.c.b16 %v1437, %v1436
        %v1451 = vpack.c.b16 %v1439, %v1438
        %v1452 = vpack.c.b16 %v1441, %v1440
        %v1453 = vpack.c.b16 %v1443, %v1442
        %v1454 = vpack.c.b16 %v1445, %v1444
        %v1455 = vpack.c.b16 %v1447, %v1446
        %1464 = vmatprep.subr.bf16.mxu0 0
        %1465 = vmatpush1.bf16.msra.mxu0 %v1448
        %1466 = vmatprep.subr.bf16.mxu0 0
        %1467 = vmatpush1.bf16.msra.mxu0 %v1449
        %1468 = vmatprep.subr.bf16.mxu0 0
        %1469 = vmatpush1.bf16.msra.mxu0 %v1450
        %1470 = vmatprep.subr.bf16.mxu0 0
        %1471 = vmatpush1.bf16.msra.mxu0 %v1451
        %1472 = vmatprep.subr.bf16.mxu0 0
        %1473 = vmatpush1.bf16.msra.mxu0 %v1452
        %1474 = vmatprep.subr.bf16.mxu0 0
        %1475 = vmatpush1.bf16.msra.mxu0 %v1453
        %1476 = vmatprep.subr.bf16.mxu0 0
        %1477 = vmatpush1.bf16.msra.mxu0 %v1454
        %1478 = vmatprep.subr.bf16.mxu0 0
        %1479 = vmatpush1.bf16.msra.mxu0 %v1455
        %1480 = vmatprep.subr.bf16.mxu0 0
        %1481 = vmatpush1.bf16.msra.mxu0 0
        %1482 = vmatprep.subr.bf16.mxu0 0
        %1483 = vmatpush1.bf16.msra.mxu0 0
        %1484 = vmatprep.subr.bf16.mxu0 0
        %1485 = vmatpush1.bf16.msra.mxu0 0
        %1486 = vmatprep.subr.bf16.mxu0 0
        %1487 = vmatpush1.bf16.msra.mxu0 0
        %1488 = vmatprep.subr.bf16.mxu0 0
        %1489 = vmatpush1.bf16.msra.mxu0 0
        %1490 = vmatprep.subr.bf16.mxu0 0
        %1491 = vmatpush1.bf16.msra.mxu0 0
        %1492 = vmatprep.subr.bf16.mxu0 0
        %1493 = vmatpush1.bf16.msra.mxu0 0
        %1494 = vmatprep.subr.bf16.mxu0 0
        %1495 = vmatpush1.bf16.msra.mxu0 0
        %1496 = vmatprep.mubr.bf16.mxu0 0
        %1497 = vmatmul.mubr.bf16.gmra.mrb[0].mxu0 %v1288
        %v1498 = vpop.f32.mrb[0].mxu0
        %v1499 = vadd.f32 %v1030, %v1498
        %v1500 = vpop.f32.mrb[0].mxu0
        %v1501 = vpop.f32.mrb[0].mxu0
        %v1502 = vadd.f32 %v1030, %v1501
        %v1503 = vpop.f32.mrb[0].mxu0
        %1504 = vmatprep.mubr.bf16.mxu0 0
        %1505 = vmatmul.mubr.bf16.gmra.mrb[0].mxu0 %v1289
        %v1506 = vpop.f32.mrb[0].mxu0
        %v1507 = vadd.f32 %v1030, %v1506
        %v1508 = vpop.f32.mrb[0].mxu0
        %v1509 = vpop.f32.mrb[0].mxu0
        %v1510 = vadd.f32 %v1030, %v1509
        %v1511 = vpop.f32.mrb[0].mxu0
        %1512 = vmatprep.mubr.bf16.mxu0 0
        %1513 = vmatmul.mubr.bf16.gmra.mrb[0].mxu0 %v1290
        %v1514 = vpop.f32.mrb[0].mxu0
        %v1515 = vadd.f32 %v1030, %v1514
        %v1516 = vpop.f32.mrb[0].mxu0
        %v1517 = vpop.f32.mrb[0].mxu0
        %v1518 = vadd.f32 %v1030, %v1517
        %v1519 = vpop.f32.mrb[0].mxu0
        %1520 = vmatprep.mubr.bf16.mxu0 0
        %1521 = vmatmul.mubr.bf16.gmra.mrb[0].mxu0 %v1291
        %v1522 = vpop.f32.mrb[0].mxu0
        %v1523 = vadd.f32 %v1030, %v1522
        %v1524 = vpop.f32.mrb[0].mxu0
        %v1525 = vpop.f32.mrb[0].mxu0
        %v1526 = vadd.f32 %v1030, %v1525
        %v1527 = vpop.f32.mrb[0].mxu0
        %1528 = vmatprep.mubr.bf16.mxu0 0
        %1529 = vmatmul.mubr.bf16.gmra.mrb[0].mxu0 %v1292
        %v1530 = vpop.f32.mrb[0].mxu0
        %v1531 = vadd.f32 %v1030, %v1530
        %v1532 = vpop.f32.mrb[0].mxu0
        %v1533 = vpop.f32.mrb[0].mxu0
        %v1534 = vadd.f32 %v1030, %v1533
        %v1535 = vpop.f32.mrb[0].mxu0
        %1536 = vmatprep.mubr.bf16.mxu0 0
        %1537 = vmatmul.mubr.bf16.gmra.mrb[0].mxu0 %v1293
        %v1538 = vpop.f32.mrb[0].mxu0
        %v1539 = vadd.f32 %v1030, %v1538
        %v1540 = vpop.f32.mrb[0].mxu0
        %v1541 = vpop.f32.mrb[0].mxu0
        %v1542 = vadd.f32 %v1030, %v1541
        %v1543 = vpop.f32.mrb[0].mxu0
        %1544 = vmatprep.mubr.bf16.mxu0 0
        %1545 = vmatmul.mubr.bf16.gmra.mrb[0].mxu0 %v1294
        %v1546 = vpop.f32.mrb[0].mxu0
        %v1547 = vadd.f32 %v1030, %v1546
        %v1548 = vpop.f32.mrb[0].mxu0
        %v1549 = vpop.f32.mrb[0].mxu0
        %v1550 = vadd.f32 %v1030, %v1549
        %v1551 = vpop.f32.mrb[0].mxu0
        %1552 = vmatprep.mubr.bf16.mxu0 0
        %1553 = vmatmul.mubr.bf16.gmra.mrb[0].mxu0 %v1295
        %v1554 = vpop.f32.mrb[0].mxu0
        %v1555 = vadd.f32 %v1030, %v1554
        %v1556 = vpop.f32.mrb[0].mxu0
        %v1557 = vpop.f32.mrb[0].mxu0
        %v1558 = vadd.f32 %v1030, %v1557
        %v1559 = vpop.f32.mrb[0].mxu0
        %1560 = vmatprep.mubr.bf16.mxu0 0
        %1561 = vmatmul.mubr.bf16.gmra.mrb[0].mxu0 %v1296
        %v1562 = vpop.f32.mrb[0].mxu0
        %v1563 = vadd.f32 %v1030, %v1562
        %v1564 = vpop.f32.mrb[0].mxu0
        %v1565 = vpop.f32.mrb[0].mxu0
        %v1566 = vadd.f32 %v1030, %v1565
        %v1567 = vpop.f32.mrb[0].mxu0
        %1568 = vmatprep.mubr.bf16.mxu0 0
        %1569 = vmatmul.mubr.bf16.gmra.mrb[0].mxu0 %v1297
        %v1570 = vpop.f32.mrb[0].mxu0
        %v1571 = vadd.f32 %v1030, %v1570
        %v1572 = vpop.f32.mrb[0].mxu0
        %v1573 = vpop.f32.mrb[0].mxu0
        %v1574 = vadd.f32 %v1030, %v1573
        %v1575 = vpop.f32.mrb[0].mxu0
        %1576 = vmatprep.mubr.bf16.mxu0 0
        %1577 = vmatmul.mubr.bf16.gmra.mrb[0].mxu0 %v1298
        %v1578 = vpop.f32.mrb[0].mxu0
        %v1579 = vadd.f32 %v1030, %v1578
        %v1580 = vpop.f32.mrb[0].mxu0
        %v1581 = vpop.f32.mrb[0].mxu0
        %v1582 = vadd.f32 %v1030, %v1581
        %v1583 = vpop.f32.mrb[0].mxu0
        %1584 = vmatprep.mubr.bf16.mxu0 0
        %1585 = vmatmul.mubr.bf16.gmra.mrb[0].mxu0 %v1299
        %v1586 = vpop.f32.mrb[0].mxu0
        %v1587 = vadd.f32 %v1030, %v1586
        %v1588 = vpop.f32.mrb[0].mxu0
        %v1589 = vpop.f32.mrb[0].mxu0
        %v1590 = vadd.f32 %v1030, %v1589
        %v1591 = vpop.f32.mrb[0].mxu0
        %1592 = vmatprep.mubr.bf16.mxu0 0
        %1593 = vmatmul.mubr.bf16.gmra.mrb[0].mxu0 %v1300
        %v1594 = vpop.f32.mrb[0].mxu0
        %v1595 = vadd.f32 %v1030, %v1594
        %v1596 = vpop.f32.mrb[0].mxu0
        %v1597 = vpop.f32.mrb[0].mxu0
        %v1598 = vadd.f32 %v1030, %v1597
        %v1599 = vpop.f32.mrb[0].mxu0
        %1600 = vmatprep.mubr.bf16.mxu0 0
        %1601 = vmatmul.mubr.bf16.gmra.mrb[0].mxu0 %v1301
        %v1602 = vpop.f32.mrb[0].mxu0
        %v1603 = vadd.f32 %v1030, %v1602
        %v1604 = vpop.f32.mrb[0].mxu0
        %v1605 = vpop.f32.mrb[0].mxu0
        %v1606 = vadd.f32 %v1030, %v1605
        %v1607 = vpop.f32.mrb[0].mxu0
        %1608 = vmatprep.mubr.bf16.mxu0 0
        %1609 = vmatmul.mubr.bf16.gmra.mrb[0].mxu0 %v1302
        %v1610 = vpop.f32.mrb[0].mxu0
        %v1611 = vadd.f32 %v1030, %v1610
        %v1612 = vpop.f32.mrb[0].mxu0
        %v1613 = vpop.f32.mrb[0].mxu0
        %v1614 = vadd.f32 %v1030, %v1613
        %v1615 = vpop.f32.mrb[0].mxu0
        %1616 = vmatprep.mubr.bf16.mxu0 0
        %1617 = vmatmul.mubr.bf16.gmra.mrb[0].mxu0 %v1303
        %v1618 = vpop.f32.mrb[0].mxu0
        %v1619 = vadd.f32 %v1030, %v1618
        %v1620 = vpop.f32.mrb[0].mxu0
        %v1621 = vpop.f32.mrb[0].mxu0
        %v1622 = vadd.f32 %v1030, %v1621
        %v1623 = vpop.f32.mrb[0].mxu0
        %1624 = vmatprep.mubr.bf16.mxu0 0
        %1625 = vmatmul.mubr.bf16.gmra.mrb[0].mxu0 %v1304
        %v1626 = vpop.f32.mrb[0].mxu0
        %v1627 = vadd.f32 %v1030, %v1626
        %v1628 = vpop.f32.mrb[0].mxu0
        %v1629 = vpop.f32.mrb[0].mxu0
        %v1630 = vadd.f32 %v1030, %v1629
        %v1631 = vpop.f32.mrb[0].mxu0
        %1632 = vmatprep.mubr.bf16.mxu0 0
        %1633 = vmatmul.mubr.bf16.gmra.mrb[0].mxu0 %v1305
        %v1634 = vpop.f32.mrb[0].mxu0
        %v1635 = vadd.f32 %v1030, %v1634
        %v1636 = vpop.f32.mrb[0].mxu0
        %v1637 = vpop.f32.mrb[0].mxu0
        %v1638 = vadd.f32 %v1030, %v1637
        %v1639 = vpop.f32.mrb[0].mxu0
        %1640 = vmatprep.mubr.bf16.mxu0 0
        %1641 = vmatmul.mubr.bf16.gmra.mrb[0].mxu0 %v1306
        %v1642 = vpop.f32.mrb[0].mxu0
        %v1643 = vadd.f32 %v1030, %v1642
        %v1644 = vpop.f32.mrb[0].mxu0
        %v1645 = vpop.f32.mrb[0].mxu0
        %v1646 = vadd.f32 %v1030, %v1645
        %v1647 = vpop.f32.mrb[0].mxu0
        %1648 = vmatprep.mubr.bf16.mxu0 0
        %1649 = vmatmul.mubr.bf16.gmra.mrb[0].mxu0 %v1307
        %v1650 = vpop.f32.mrb[0].mxu0
        %v1651 = vadd.f32 %v1030, %v1650
        %v1652 = vpop.f32.mrb[0].mxu0
        %v1653 = vpop.f32.mrb[0].mxu0
        %v1654 = vadd.f32 %v1030, %v1653
        %v1655 = vpop.f32.mrb[0].mxu0
        %1656 = vmatprep.mubr.bf16.mxu0 0
        %1657 = vmatmul.mubr.bf16.gmra.mrb[0].mxu0 %v1308
        %v1658 = vpop.f32.mrb[0].mxu0
        %v1659 = vadd.f32 %v1030, %v1658
        %v1660 = vpop.f32.mrb[0].mxu0
        %v1661 = vpop.f32.mrb[0].mxu0
        %v1662 = vadd.f32 %v1030, %v1661
        %v1663 = vpop.f32.mrb[0].mxu0
        %1664 = vmatprep.mubr.bf16.mxu0 0
        %1665 = vmatmul.mubr.bf16.gmra.mrb[0].mxu0 %v1309
        %v1666 = vpop.f32.mrb[0].mxu0
        %v1667 = vadd.f32 %v1030, %v1666
        %v1668 = vpop.f32.mrb[0].mxu0
        %v1669 = vpop.f32.mrb[0].mxu0
        %v1670 = vadd.f32 %v1030, %v1669
        %v1671 = vpop.f32.mrb[0].mxu0
        %1672 = vmatprep.mubr.bf16.mxu0 0
        %1673 = vmatmul.mubr.bf16.gmra.mrb[0].mxu0 %v1310
        %v1674 = vpop.f32.mrb[0].mxu0
        %v1675 = vadd.f32 %v1030, %v1674
        %v1676 = vpop.f32.mrb[0].mxu0
        %v1677 = vpop.f32.mrb[0].mxu0
        %v1678 = vadd.f32 %v1030, %v1677
        %v1679 = vpop.f32.mrb[0].mxu0
        %1680 = vmatprep.mubr.bf16.mxu0 0
        %1681 = vmatmul.mubr.bf16.gmra.mrb[0].mxu0 %v1311
        %v1682 = vpop.f32.mrb[0].mxu0
        %v1683 = vadd.f32 %v1030, %v1682
        %v1684 = vpop.f32.mrb[0].mxu0
        %v1685 = vpop.f32.mrb[0].mxu0
        %v1686 = vadd.f32 %v1030, %v1685
        %v1687 = vpop.f32.mrb[0].mxu0
        %1688 = vmatprep.mubr.bf16.mxu0 0
        %1689 = vmatmul.mubr.bf16.gmra.mrb[0].mxu0 %v1312
        %v1690 = vpop.f32.mrb[0].mxu0
        %v1691 = vadd.f32 %v1030, %v1690
        %v1692 = vpop.f32.mrb[0].mxu0
        %v1693 = vpop.f32.mrb[0].mxu0
        %v1694 = vadd.f32 %v1030, %v1693
        %v1695 = vpop.f32.mrb[0].mxu0
        %1696 = vmatprep.mubr.bf16.mxu0 0
        %1697 = vmatmul.mubr.bf16.gmra.mrb[0].mxu0 %v1313
        %v1698 = vpop.f32.mrb[0].mxu0
        %v1699 = vadd.f32 %v1030, %v1698
        %v1700 = vpop.f32.mrb[0].mxu0
        %v1701 = vpop.f32.mrb[0].mxu0
        %v1702 = vadd.f32 %v1030, %v1701
        %v1703 = vpop.f32.mrb[0].mxu0
        %1704 = vmatprep.mubr.bf16.mxu0 0
        %1705 = vmatmul.mubr.bf16.gmra.mrb[0].mxu0 %v1314
        %v1706 = vpop.f32.mrb[0].mxu0
        %v1707 = vadd.f32 %v1030, %v1706
        %v1708 = vpop.f32.mrb[0].mxu0
        %v1709 = vpop.f32.mrb[0].mxu0
        %v1710 = vadd.f32 %v1030, %v1709
        %v1711 = vpop.f32.mrb[0].mxu0
        %1712 = vmatprep.mubr.bf16.mxu0 0
        %1713 = vmatmul.mubr.bf16.gmra.mrb[0].mxu0 %v1315
        %v1714 = vpop.f32.mrb[0].mxu0
        %v1715 = vadd.f32 %v1030, %v1714
        %v1716 = vpop.f32.mrb[0].mxu0
        %v1717 = vpop.f32.mrb[0].mxu0
        %v1718 = vadd.f32 %v1030, %v1717
        %v1719 = vpop.f32.mrb[0].mxu0
        %1720 = vmatprep.mubr.bf16.mxu0 0
        %1721 = vmatmul.mubr.bf16.gmra.mrb[0].mxu0 %v1316
        %v1722 = vpop.f32.mrb[0].mxu0
        %v1723 = vadd.f32 %v1030, %v1722
        %v1724 = vpop.f32.mrb[0].mxu0
        %v1725 = vpop.f32.mrb[0].mxu0
        %v1726 = vadd.f32 %v1030, %v1725
        %v1727 = vpop.f32.mrb[0].mxu0
        %1728 = vmatprep.mubr.bf16.mxu0 0
        %1729 = vmatmul.mubr.bf16.gmra.mrb[0].mxu0 %v1317
        %v1730 = vpop.f32.mrb[0].mxu0
        %v1731 = vadd.f32 %v1030, %v1730
        %v1732 = vpop.f32.mrb[0].mxu0
        %v1733 = vpop.f32.mrb[0].mxu0
        %v1734 = vadd.f32 %v1030, %v1733
        %v1735 = vpop.f32.mrb[0].mxu0
        %1736 = vmatprep.mubr.bf16.mxu0 0
        %1737 = vmatmul.mubr.bf16.gmra.mrb[0].mxu0 %v1318
        %v1738 = vpop.f32.mrb[0].mxu0
        %v1739 = vadd.f32 %v1030, %v1738
        %v1740 = vpop.f32.mrb[0].mxu0
        %v1741 = vpop.f32.mrb[0].mxu0
        %v1742 = vadd.f32 %v1030, %v1741
        %v1743 = vpop.f32.mrb[0].mxu0
        %1744 = vmatprep.mubr.bf16.mxu0 0
        %1745 = vmatmul.mubr.bf16.gmra.mrb[0].mxu0 %v1319
        %v1746 = vpop.f32.mrb[0].mxu0
        %v1747 = vadd.f32 %v1030, %v1746
        %v1748 = vpop.f32.mrb[0].mxu0
        %v1749 = vpop.f32.mrb[0].mxu0
        %v1750 = vadd.f32 %v1030, %v1749
        %v1751 = vpop.f32.mrb[0].mxu0
        %1752 = vmatprep.mubr.bf16.mxu0 0
        %1753 = vmatmul.mubr.bf16.gmra.mrb[0].mxu0 %v1320
        %v1754 = vpop.f32.mrb[0].mxu0
        %v1755 = vadd.f32 %v1030, %v1754
        %v1756 = vpop.f32.mrb[0].mxu0
        %v1757 = vpop.f32.mrb[0].mxu0
        %v1758 = vadd.f32 %v1030, %v1757
        %v1759 = vpop.f32.mrb[0].mxu0
        %1760 = vmatprep.mubr.bf16.mxu0 0
        %1761 = vmatmul.mubr.bf16.gmra.mrb[0].mxu0 %v1321
        %v1762 = vpop.f32.mrb[0].mxu0
        %v1763 = vadd.f32 %v1030, %v1762
        %v1764 = vpop.f32.mrb[0].mxu0
        %v1765 = vpop.f32.mrb[0].mxu0
        %v1766 = vadd.f32 %v1030, %v1765
        %v1767 = vpop.f32.mrb[0].mxu0
        %1768 = vmatprep.mubr.bf16.mxu0 0
        %1769 = vmatmul.mubr.bf16.gmra.mrb[0].mxu0 %v1322
        %v1770 = vpop.f32.mrb[0].mxu0
        %v1771 = vadd.f32 %v1030, %v1770
        %v1772 = vpop.f32.mrb[0].mxu0
        %v1773 = vpop.f32.mrb[0].mxu0
        %v1774 = vadd.f32 %v1030, %v1773
        %v1775 = vpop.f32.mrb[0].mxu0
        %1776 = vmatprep.mubr.bf16.mxu0 0
        %1777 = vmatmul.mubr.bf16.gmra.mrb[0].mxu0 %v1323
        %v1778 = vpop.f32.mrb[0].mxu0
        %v1779 = vadd.f32 %v1030, %v1778
        %v1780 = vpop.f32.mrb[0].mxu0
        %v1781 = vpop.f32.mrb[0].mxu0
        %v1782 = vadd.f32 %v1030, %v1781
        %v1783 = vpop.f32.mrb[0].mxu0
        %1784 = vmatprep.mubr.bf16.mxu0 0
        %1785 = vmatmul.mubr.bf16.gmra.mrb[0].mxu0 %v1324
        %v1786 = vpop.f32.mrb[0].mxu0
        %v1787 = vadd.f32 %v1030, %v1786
        %v1788 = vpop.f32.mrb[0].mxu0
        %v1789 = vpop.f32.mrb[0].mxu0
        %v1790 = vadd.f32 %v1030, %v1789
        %v1791 = vpop.f32.mrb[0].mxu0
        %1792 = vmatprep.mubr.bf16.mxu0 0
        %1793 = vmatmul.mubr.bf16.gmra.mrb[0].mxu0 %v1325
        %v1794 = vpop.f32.mrb[0].mxu0
        %v1795 = vadd.f32 %v1030, %v1794
        %v1796 = vpop.f32.mrb[0].mxu0
        %v1797 = vpop.f32.mrb[0].mxu0
        %v1798 = vadd.f32 %v1030, %v1797
        %v1799 = vpop.f32.mrb[0].mxu0
        %1800 = vmatprep.mubr.bf16.mxu0 0
        %1801 = vmatmul.mubr.bf16.gmra.mrb[0].mxu0 %v1326
        %v1802 = vpop.f32.mrb[0].mxu0
        %v1803 = vadd.f32 %v1030, %v1802
        %v1804 = vpop.f32.mrb[0].mxu0
        %v1805 = vpop.f32.mrb[0].mxu0
        %v1806 = vadd.f32 %v1030, %v1805
        %v1807 = vpop.f32.mrb[0].mxu0
        %1808 = vmatprep.mubr.bf16.mxu0 0
        %1809 = vmatmul.mubr.bf16.gmra.mrb[0].mxu0 %v1327
        %v1810 = vpop.f32.mrb[0].mxu0
        %v1811 = vadd.f32 %v1030, %v1810
        %v1812 = vpop.f32.mrb[0].mxu0
        %v1813 = vpop.f32.mrb[0].mxu0
        %v1814 = vadd.f32 %v1030, %v1813
        %v1815 = vpop.f32.mrb[0].mxu0
        %1816 = vmatprep.mubr.bf16.mxu0 0
        %1817 = vmatmul.mubr.bf16.gmra.mrb[0].mxu0 %v1328
        %v1818 = vpop.f32.mrb[0].mxu0
        %v1819 = vadd.f32 %v1030, %v1818
        %v1820 = vpop.f32.mrb[0].mxu0
        %v1821 = vpop.f32.mrb[0].mxu0
        %v1822 = vadd.f32 %v1030, %v1821
        %v1823 = vpop.f32.mrb[0].mxu0
        %1824 = vmatprep.mubr.bf16.mxu0 0
        %1825 = vmatmul.mubr.bf16.gmra.mrb[0].mxu0 %v1329
        %v1826 = vpop.f32.mrb[0].mxu0
        %v1827 = vadd.f32 %v1030, %v1826
        %v1828 = vpop.f32.mrb[0].mxu0
        %v1829 = vpop.f32.mrb[0].mxu0
        %v1830 = vadd.f32 %v1030, %v1829
        %v1831 = vpop.f32.mrb[0].mxu0
        %1832 = vmatprep.mubr.bf16.mxu0 0
        %1833 = vmatmul.mubr.bf16.gmra.mrb[0].mxu0 %v1330
        %v1834 = vpop.f32.mrb[0].mxu0
        %v1835 = vadd.f32 %v1030, %v1834
        %v1836 = vpop.f32.mrb[0].mxu0
        %v1837 = vpop.f32.mrb[0].mxu0
        %v1838 = vadd.f32 %v1030, %v1837
        %v1839 = vpop.f32.mrb[0].mxu0
        %1840 = vmatprep.mubr.bf16.mxu0 0
        %1841 = vmatmul.mubr.bf16.gmra.mrb[0].mxu0 %v1331
        %v1842 = vpop.f32.mrb[0].mxu0
        %v1843 = vadd.f32 %v1030, %v1842
        %v1844 = vpop.f32.mrb[0].mxu0
        %v1845 = vpop.f32.mrb[0].mxu0
        %v1846 = vadd.f32 %v1030, %v1845
        %v1847 = vpop.f32.mrb[0].mxu0
        %1848 = vmatprep.mubr.bf16.mxu0 0
        %1849 = vmatmul.mubr.bf16.gmra.mrb[0].mxu0 %v1332
        %v1850 = vpop.f32.mrb[0].mxu0
        %v1851 = vadd.f32 %v1030, %v1850
        %v1852 = vpop.f32.mrb[0].mxu0
        %v1853 = vpop.f32.mrb[0].mxu0
        %v1854 = vadd.f32 %v1030, %v1853
        %v1855 = vpop.f32.mrb[0].mxu0
        %1856 = vmatprep.mubr.bf16.mxu0 0
        %1857 = vmatmul.mubr.bf16.gmra.mrb[0].mxu0 %v1333
        %v1858 = vpop.f32.mrb[0].mxu0
        %v1859 = vadd.f32 %v1030, %v1858
        %v1860 = vpop.f32.mrb[0].mxu0
        %v1861 = vpop.f32.mrb[0].mxu0
        %v1862 = vadd.f32 %v1030, %v1861
        %v1863 = vpop.f32.mrb[0].mxu0
        %1864 = vmatprep.mubr.bf16.mxu0 0
        %1865 = vmatmul.mubr.bf16.gmra.mrb[0].mxu0 %v1334
        %v1866 = vpop.f32.mrb[0].mxu0
        %v1867 = vadd.f32 %v1030, %v1866
        %v1868 = vpop.f32.mrb[0].mxu0
        %v1869 = vpop.f32.mrb[0].mxu0
        %v1870 = vadd.f32 %v1030, %v1869
        %v1871 = vpop.f32.mrb[0].mxu0
        %1872 = vmatprep.mubr.bf16.mxu0 0
        %1873 = vmatmul.mubr.bf16.gmra.mrb[0].mxu0 %v1335
        %v1874 = vpop.f32.mrb[0].mxu0
        %v1875 = vadd.f32 %v1030, %v1874
        %v1876 = vpop.f32.mrb[0].mxu0
        %v1877 = vpop.f32.mrb[0].mxu0
        %v1878 = vadd.f32 %v1030, %v1877
        %v1879 = vpop.f32.mrb[0].mxu0
        %1880 = vmatprep.mubr.bf16.mxu0 0
        %1881 = vmatmul.mubr.bf16.gmra.mrb[0].mxu0 %v1336
        %v1882 = vpop.f32.mrb[0].mxu0
        %v1883 = vadd.f32 %v1030, %v1882
        %v1884 = vpop.f32.mrb[0].mxu0
        %v1885 = vpop.f32.mrb[0].mxu0
        %v1886 = vadd.f32 %v1030, %v1885
        %v1887 = vpop.f32.mrb[0].mxu0
        %1888 = vmatprep.mubr.bf16.mxu0 0
        %1889 = vmatmul.mubr.bf16.gmra.mrb[0].mxu0 %v1337
        %v1890 = vpop.f32.mrb[0].mxu0
        %v1891 = vadd.f32 %v1030, %v1890
        %v1892 = vpop.f32.mrb[0].mxu0
        %v1893 = vpop.f32.mrb[0].mxu0
        %v1894 = vadd.f32 %v1030, %v1893
        %v1895 = vpop.f32.mrb[0].mxu0
        %1896 = vmatprep.mubr.bf16.mxu0 0
        %1897 = vmatmul.mubr.bf16.gmra.mrb[0].mxu0 %v1338
        %v1898 = vpop.f32.mrb[0].mxu0
        %v1899 = vadd.f32 %v1030, %v1898
        %v1900 = vpop.f32.mrb[0].mxu0
        %v1901 = vpop.f32.mrb[0].mxu0
        %v1902 = vadd.f32 %v1030, %v1901
        %v1903 = vpop.f32.mrb[0].mxu0
        %1904 = vmatprep.mubr.bf16.mxu0 0
        %1905 = vmatmul.mubr.bf16.gmra.mrb[0].mxu0 %v1339
        %v1906 = vpop.f32.mrb[0].mxu0
        %v1907 = vadd.f32 %v1030, %v1906
        %v1908 = vpop.f32.mrb[0].mxu0
        %v1909 = vpop.f32.mrb[0].mxu0
        %v1910 = vadd.f32 %v1030, %v1909
        %v1911 = vpop.f32.mrb[0].mxu0
        %1912 = vmatprep.mubr.bf16.mxu0 0
        %1913 = vmatmul.mubr.bf16.gmra.mrb[0].mxu0 %v1340
        %v1914 = vpop.f32.mrb[0].mxu0
        %v1915 = vadd.f32 %v1030, %v1914
        %v1916 = vpop.f32.mrb[0].mxu0
        %v1917 = vpop.f32.mrb[0].mxu0
        %v1918 = vadd.f32 %v1030, %v1917
        %v1919 = vpop.f32.mrb[0].mxu0
        %1920 = vmatprep.mubr.bf16.mxu0 0
        %1921 = vmatmul.mubr.bf16.gmra.mrb[0].mxu0 %v1341
        %v1922 = vpop.f32.mrb[0].mxu0
        %v1923 = vadd.f32 %v1030, %v1922
        %v1924 = vpop.f32.mrb[0].mxu0
        %v1925 = vpop.f32.mrb[0].mxu0
        %v1926 = vadd.f32 %v1030, %v1925
        %v1927 = vpop.f32.mrb[0].mxu0
        %1928 = vmatprep.mubr.bf16.mxu0 0
        %1929 = vmatmul.mubr.bf16.gmra.mrb[0].mxu0 %v1342
        %v1930 = vpop.f32.mrb[0].mxu0
        %v1931 = vadd.f32 %v1030, %v1930
        %v1932 = vpop.f32.mrb[0].mxu0
        %v1933 = vpop.f32.mrb[0].mxu0
        %v1934 = vadd.f32 %v1030, %v1933
        %v1935 = vpop.f32.mrb[0].mxu0
        %1936 = vmatprep.mubr.bf16.mxu0 0
        %1937 = vmatmul.mubr.bf16.gmra.mrb[0].mxu0 %v1343
        %v1938 = vpop.f32.mrb[0].mxu0
        %v1939 = vadd.f32 %v1030, %v1938
        %v1940 = vpop.f32.mrb[0].mxu0
        %v1941 = vpop.f32.mrb[0].mxu0
        %v1942 = vadd.f32 %v1030, %v1941
        %v1943 = vpop.f32.mrb[0].mxu0
        %1944 = vmatprep.mubr.bf16.mxu0 0
        %1945 = vmatmul.mubr.bf16.gmra.mrb[0].mxu0 %v1344
        %v1946 = vpop.f32.mrb[0].mxu0
        %v1947 = vadd.f32 %v1030, %v1946
        %v1948 = vpop.f32.mrb[0].mxu0
        %v1949 = vpop.f32.mrb[0].mxu0
        %v1950 = vadd.f32 %v1030, %v1949
        %v1951 = vpop.f32.mrb[0].mxu0
        %1952 = vmatprep.mubr.bf16.mxu0 0
        %1953 = vmatmul.mubr.bf16.gmra.mrb[0].mxu0 %v1345
        %v1954 = vpop.f32.mrb[0].mxu0
        %v1955 = vadd.f32 %v1030, %v1954
        %v1956 = vpop.f32.mrb[0].mxu0
        %v1957 = vpop.f32.mrb[0].mxu0
        %v1958 = vadd.f32 %v1030, %v1957
        %v1959 = vpop.f32.mrb[0].mxu0
        %1960 = vmatprep.mubr.bf16.mxu0 0
        %1961 = vmatmul.mubr.bf16.gmra.mrb[0].mxu0 %v1346
        %v1962 = vpop.f32.mrb[0].mxu0
        %v1963 = vadd.f32 %v1030, %v1962
        %v1964 = vpop.f32.mrb[0].mxu0
        %v1965 = vpop.f32.mrb[0].mxu0
        %v1966 = vadd.f32 %v1030, %v1965
        %v1967 = vpop.f32.mrb[0].mxu0
        %1968 = vmatprep.mubr.bf16.mxu0 0
        %1969 = vmatmul.mubr.bf16.gmra.mrb[0].mxu0 %v1347
        %v1970 = vpop.f32.mrb[0].mxu0
        %v1971 = vadd.f32 %v1030, %v1970
        %v1972 = vpop.f32.mrb[0].mxu0
        %v1973 = vpop.f32.mrb[0].mxu0
        %v1974 = vadd.f32 %v1030, %v1973
        %v1975 = vpop.f32.mrb[0].mxu0
        %1976 = vmatprep.mubr.bf16.mxu0 0
        %1977 = vmatmul.mubr.bf16.gmra.mrb[0].mxu0 %v1348
        %v1978 = vpop.f32.mrb[0].mxu0
        %v1979 = vadd.f32 %v1030, %v1978
        %v1980 = vpop.f32.mrb[0].mxu0
        %v1981 = vpop.f32.mrb[0].mxu0
        %v1982 = vadd.f32 %v1030, %v1981
        %v1983 = vpop.f32.mrb[0].mxu0
        %1984 = vmatprep.mubr.bf16.mxu0 0
        %1985 = vmatmul.mubr.bf16.gmra.mrb[0].mxu0 %v1349
        %v1986 = vpop.f32.mrb[0].mxu0
        %v1987 = vadd.f32 %v1030, %v1986
        %v1988 = vpop.f32.mrb[0].mxu0
        %v1989 = vpop.f32.mrb[0].mxu0
        %v1990 = vadd.f32 %v1030, %v1989
        %v1991 = vpop.f32.mrb[0].mxu0
        %1992 = vmatprep.mubr.bf16.mxu0 0
        %1993 = vmatmul.mubr.bf16.gmra.mrb[0].mxu0 %v1350
        %v1994 = vpop.f32.mrb[0].mxu0
        %v1995 = vadd.f32 %v1030, %v1994
        %v1996 = vpop.f32.mrb[0].mxu0
        %v1997 = vpop.f32.mrb[0].mxu0
        %v1998 = vadd.f32 %v1030, %v1997
        %v1999 = vpop.f32.mrb[0].mxu0
        %2000 = vmatprep.mubr.bf16.mxu0 0
        %2001 = vmatmul.mubr.bf16.gmra.mrb[0].mxu0 %v1351
        %v2002 = vpop.f32.mrb[0].mxu0
        %v2003 = vadd.f32 %v1030, %v2002
        %v2004 = vpop.f32.mrb[0].mxu0
        %v2005 = vpop.f32.mrb[0].mxu0
        %v2006 = vadd.f32 %v1030, %v2005
        %v2007 = vpop.f32.mrb[0].mxu0
        %2008 = vdwg.mxu0
        %v2009 = vmax.f32 %v1499, 0.0
        %v2010 = vmax.f32 %v1502, 0.0
        %v2011 = vmax.f32 %v1507, 0.0
        %v2012 = vmax.f32 %v1510, 0.0
        %v2013 = vmax.f32 %v1515, 0.0
        %v2014 = vmax.f32 %v1518, 0.0
        %v2015 = vmax.f32 %v1523, 0.0
        %v2016 = vmax.f32 %v1526, 0.0
        %v2017 = vmax.f32 %v1531, 0.0
        %v2018 = vmax.f32 %v1534, 0.0
        %v2019 = vmax.f32 %v1539, 0.0
        %v2020 = vmax.f32 %v1542, 0.0
        %v2021 = vmax.f32 %v1547, 0.0
        %v2022 = vmax.f32 %v1550, 0.0
        %v2023 = vmax.f32 %v1555, 0.0
        %v2024 = vmax.f32 %v1558, 0.0
        %v2025 = vmax.f32 %v1563, 0.0
        %v2026 = vmax.f32 %v1566, 0.0
        %v2027 = vmax.f32 %v1571, 0.0
        %v2028 = vmax.f32 %v1574, 0.0
        %v2029 = vmax.f32 %v1579, 0.0
        %v2030 = vmax.f32 %v1582, 0.0
        %v2031 = vmax.f32 %v1587, 0.0
        %v2032 = vmax.f32 %v1590, 0.0
        %v2033 = vmax.f32 %v1595, 0.0
        %v2034 = vmax.f32 %v1598, 0.0
        %v2035 = vmax.f32 %v1603, 0.0
        %v2036 = vmax.f32 %v1606, 0.0
        %v2037 = vmax.f32 %v1611, 0.0
        %v2038 = vmax.f32 %v1614, 0.0
        %v2039 = vmax.f32 %v1619, 0.0
        %v2040 = vmax.f32 %v1622, 0.0
        %v2041 = vmax.f32 %v1627, 0.0
        %v2042 = vmax.f32 %v1630, 0.0
        %v2043 = vmax.f32 %v1635, 0.0
        %v2044 = vmax.f32 %v1638, 0.0
        %v2045 = vmax.f32 %v1643, 0.0
        %v2046 = vmax.f32 %v1646, 0.0
        %v2047 = vmax.f32 %v1651, 0.0
        %v2048 = vmax.f32 %v1654, 0.0
        %v2049 = vmax.f32 %v1659, 0.0
        %v2050 = vmax.f32 %v1662, 0.0
        %v2051 = vmax.f32 %v1667, 0.0
        %v2052 = vmax.f32 %v1670, 0.0
        %v2053 = vmax.f32 %v1675, 0.0
        %v2054 = vmax.f32 %v1678, 0.0
        %v2055 = vmax.f32 %v1683, 0.0
        %v2056 = vmax.f32 %v1686, 0.0
        %v2057 = vmax.f32 %v1691, 0.0
        %v2058 = vmax.f32 %v1694, 0.0
        %v2059 = vmax.f32 %v1699, 0.0
        %v2060 = vmax.f32 %v1702, 0.0
        %v2061 = vmax.f32 %v1707, 0.0
        %v2062 = vmax.f32 %v1710, 0.0
        %v2063 = vmax.f32 %v1715, 0.0
        %v2064 = vmax.f32 %v1718, 0.0
        %v2065 = vmax.f32 %v1723, 0.0
        %v2066 = vmax.f32 %v1726, 0.0
        %v2067 = vmax.f32 %v1731, 0.0
        %v2068 = vmax.f32 %v1734, 0.0
        %v2069 = vmax.f32 %v1739, 0.0
        %v2070 = vmax.f32 %v1742, 0.0
        %v2071 = vmax.f32 %v1747, 0.0
        %v2072 = vmax.f32 %v1750, 0.0
        %v2073 = vmax.f32 %v1755, 0.0
        %v2074 = vmax.f32 %v1758, 0.0
        %v2075 = vmax.f32 %v1763, 0.0
        %v2076 = vmax.f32 %v1766, 0.0
        %v2077 = vmax.f32 %v1771, 0.0
        %v2078 = vmax.f32 %v1774, 0.0
        %v2079 = vmax.f32 %v1779, 0.0
        %v2080 = vmax.f32 %v1782, 0.0
        %v2081 = vmax.f32 %v1787, 0.0
        %v2082 = vmax.f32 %v1790, 0.0
        %v2083 = vmax.f32 %v1795, 0.0
        %v2084 = vmax.f32 %v1798, 0.0
        %v2085 = vmax.f32 %v1803, 0.0
        %v2086 = vmax.f32 %v1806, 0.0
        %v2087 = vmax.f32 %v1811, 0.0
        %v2088 = vmax.f32 %v1814, 0.0
        %v2089 = vmax.f32 %v1819, 0.0
        %v2090 = vmax.f32 %v1822, 0.0
        %v2091 = vmax.f32 %v1827, 0.0
        %v2092 = vmax.f32 %v1830, 0.0
        %v2093 = vmax.f32 %v1835, 0.0
        %v2094 = vmax.f32 %v1838, 0.0
        %v2095 = vmax.f32 %v1843, 0.0
        %v2096 = vmax.f32 %v1846, 0.0
        %v2097 = vmax.f32 %v1851, 0.0
        %v2098 = vmax.f32 %v1854, 0.0
        %v2099 = vmax.f32 %v1859, 0.0
        %v2100 = vmax.f32 %v1862, 0.0
        %v2101 = vmax.f32 %v1867, 0.0
        %v2102 = vmax.f32 %v1870, 0.0
        %v2103 = vmax.f32 %v1875, 0.0
        %v2104 = vmax.f32 %v1878, 0.0
        %v2105 = vmax.f32 %v1883, 0.0
        %v2106 = vmax.f32 %v1886, 0.0
        %v2107 = vmax.f32 %v1891, 0.0
        %v2108 = vmax.f32 %v1894, 0.0
        %v2109 = vmax.f32 %v1899, 0.0
        %v2110 = vmax.f32 %v1902, 0.0
        %v2111 = vmax.f32 %v1907, 0.0
        %v2112 = vmax.f32 %v1910, 0.0
        %v2113 = vmax.f32 %v1915, 0.0
        %v2114 = vmax.f32 %v1918, 0.0
        %v2115 = vmax.f32 %v1923, 0.0
        %v2116 = vmax.f32 %v1926, 0.0
        %v2117 = vmax.f32 %v1931, 0.0
        %v2118 = vmax.f32 %v1934, 0.0
        %v2119 = vmax.f32 %v1939, 0.0
        %v2120 = vmax.f32 %v1942, 0.0
        %v2121 = vmax.f32 %v1947, 0.0
        %v2122 = vmax.f32 %v1950, 0.0
        %v2123 = vmax.f32 %v1955, 0.0
        %v2124 = vmax.f32 %v1958, 0.0
        %v2125 = vmax.f32 %v1963, 0.0
        %v2126 = vmax.f32 %v1966, 0.0
        %v2127 = vmax.f32 %v1971, 0.0
        %v2128 = vmax.f32 %v1974, 0.0
        %v2129 = vmax.f32 %v1979, 0.0
        %v2130 = vmax.f32 %v1982, 0.0
        %v2131 = vmax.f32 %v1987, 0.0
        %v2132 = vmax.f32 %v1990, 0.0
        %v2133 = vmax.f32 %v1995, 0.0
        %v2134 = vmax.f32 %v1998, 0.0
        %v2135 = vmax.f32 %v2003, 0.0
        %v2136 = vmax.f32 %v2006, 0.0
        %v2137 = vld [vmem:[%s4] sm:$0xf]
        %v2138 = vld [vmem:[%s4 + $0x4] sm:$0xf]
        %v2139 = vld [vmem:[%s4 + $0x8] sm:$0xf]
        %v2140 = vld [vmem:[%s4 + $0xc] sm:$0xf]
        %v2141 = vld [vmem:[%s4 + $0x10] sm:$0xf]
        %v2142 = vld [vmem:[%s4 + $0x14] sm:$0xf]
        %v2143 = vld [vmem:[%s4 + $0x18] sm:$0xf]
        %v2144 = vld [vmem:[%s4 + $0x1c] sm:$0xf]
        %v2145 = vld [vmem:[%s4 + $0x20] sm:$0xf]
        %v2146 = vld [vmem:[%s4 + $0x24] sm:$0xf]
        %v2147 = vld [vmem:[%s4 + $0x28] sm:$0xf]
        %v2148 = vld [vmem:[%s4 + $0x2c] sm:$0xf]
        %v2149 = vld [vmem:[%s4 + $0x30] sm:$0xf]
        %v2150 = vld [vmem:[%s4 + $0x34] sm:$0xf]
        %v2151 = vld [vmem:[%s4 + $0x38] sm:$0xf]
        %v2152 = vld [vmem:[%s4 + $0x3c] sm:$0xf]
        %v2153 = vld [vmem:[%s5] sm:$0x1]
        %v2154 = vpack.c.bf16 %v2010, %v2009
        %v2155 = vpack.c.bf16 %v2012, %v2011
        %v2156 = vpack.c.bf16 %v2014, %v2013
        %v2157 = vpack.c.bf16 %v2016, %v2015
        %v2158 = vpack.c.bf16 %v2018, %v2017
        %v2159 = vpack.c.bf16 %v2020, %v2019
        %v2160 = vpack.c.bf16 %v2022, %v2021
        %v2161 = vpack.c.bf16 %v2024, %v2023
        %v2162 = vpack.c.bf16 %v2026, %v2025
        %v2163 = vpack.c.bf16 %v2028, %v2027
        %v2164 = vpack.c.bf16 %v2030, %v2029
        %v2165 = vpack.c.bf16 %v2032, %v2031
        %v2166 = vpack.c.bf16 %v2034, %v2033
        %v2167 = vpack.c.bf16 %v2036, %v2035
        %v2168 = vpack.c.bf16 %v2038, %v2037
        %v2169 = vpack.c.bf16 %v2040, %v2039
        %v2170 = vpack.c.bf16 %v2042, %v2041
        %v2171 = vpack.c.bf16 %v2044, %v2043
        %v2172 = vpack.c.bf16 %v2046, %v2045
        %v2173 = vpack.c.bf16 %v2048, %v2047
        %v2174 = vpack.c.bf16 %v2050, %v2049
        %v2175 = vpack.c.bf16 %v2052, %v2051
        %v2176 = vpack.c.bf16 %v2054, %v2053
        %v2177 = vpack.c.bf16 %v2056, %v2055
        %v2178 = vpack.c.bf16 %v2058, %v2057
        %v2179 = vpack.c.bf16 %v2060, %v2059
        %v2180 = vpack.c.bf16 %v2062, %v2061
        %v2181 = vpack.c.bf16 %v2064, %v2063
        %v2182 = vpack.c.bf16 %v2066, %v2065
        %v2183 = vpack.c.bf16 %v2068, %v2067
        %v2184 = vpack.c.bf16 %v2070, %v2069
        %v2185 = vpack.c.bf16 %v2072, %v2071
        %v2186 = vpack.c.bf16 %v2074, %v2073
        %v2187 = vpack.c.bf16 %v2076, %v2075
        %v2188 = vpack.c.bf16 %v2078, %v2077
        %v2189 = vpack.c.bf16 %v2080, %v2079
        %v2190 = vpack.c.bf16 %v2082, %v2081
        %v2191 = vpack.c.bf16 %v2084, %v2083
        %v2192 = vpack.c.bf16 %v2086, %v2085
        %v2193 = vpack.c.bf16 %v2088, %v2087
        %v2194 = vpack.c.bf16 %v2090, %v2089
        %v2195 = vpack.c.bf16 %v2092, %v2091
        %v2196 = vpack.c.bf16 %v2094, %v2093
        %v2197 = vpack.c.bf16 %v2096, %v2095
        %v2198 = vpack.c.bf16 %v2098, %v2097
        %v2199 = vpack.c.bf16 %v2100, %v2099
        %v2200 = vpack.c.bf16 %v2102, %v2101
        %v2201 = vpack.c.bf16 %v2104, %v2103
        %v2202 = vpack.c.bf16 %v2106, %v2105
        %v2203 = vpack.c.bf16 %v2108, %v2107
        %v2204 = vpack.c.bf16 %v2110, %v2109
        %v2205 = vpack.c.bf16 %v2112, %v2111
        %v2206 = vpack.c.bf16 %v2114, %v2113
        %v2207 = vpack.c.bf16 %v2116, %v2115
        %v2208 = vpack.c.bf16 %v2118, %v2117
        %v2209 = vpack.c.bf16 %v2120, %v2119
        %v2210 = vpack.c.bf16 %v2122, %v2121
        %v2211 = vpack.c.bf16 %v2124, %v2123
        %v2212 = vpack.c.bf16 %v2126, %v2125
        %v2213 = vpack.c.bf16 %v2128, %v2127
        %v2214 = vpack.c.bf16 %v2130, %v2129
        %v2215 = vpack.c.bf16 %v2132, %v2131
        %v2216 = vpack.c.bf16 %v2134, %v2133
        %v2217 = vpack.c.bf16 %v2136, %v2135
        %v2219 = vlaneseq
        %v2220 = vshrl.u32 %v2219, 7
        %v2221 = vsub.s32 0, %v2220
        %v2222 = vrot.slane %v2153, %v2221
        %v2240 = vunpack.c.l.b16 %v2137
        %v2241 = vunpack.c.l.b16 %v2138
        %v2242 = vunpack.c.l.b16 %v2139
        %v2243 = vunpack.c.l.b16 %v2140
        %v2244 = vunpack.c.l.b16 %v2141
        %v2245 = vunpack.c.l.b16 %v2142
        %v2246 = vunpack.c.l.b16 %v2143
        %v2247 = vunpack.c.l.b16 %v2144
        %v2248 = vunpack.c.l.b16 %v2145
        %v2249 = vunpack.c.l.b16 %v2146
        %v2250 = vunpack.c.l.b16 %v2147
        %v2251 = vunpack.c.l.b16 %v2148
        %v2252 = vunpack.c.l.b16 %v2149
        %v2253 = vunpack.c.l.b16 %v2150
        %v2254 = vunpack.c.l.b16 %v2151
        %v2255 = vunpack.c.l.b16 %v2152
        %v2256 = vpack.c.b16 %v2241, %v2240
        %v2257 = vpack.c.b16 %v2243, %v2242
        %v2258 = vpack.c.b16 %v2245, %v2244
        %v2259 = vpack.c.b16 %v2247, %v2246
        %v2260 = vpack.c.b16 %v2249, %v2248
        %v2261 = vpack.c.b16 %v2251, %v2250
        %v2262 = vpack.c.b16 %v2253, %v2252
        %v2263 = vpack.c.b16 %v2255, %v2254
        %2272 = vmatprep.subr.bf16.mxu0 0
        %2273 = vmatpush1.bf16.msra.mxu0 %v2256
        %2274 = vmatprep.subr.bf16.mxu0 0
        %2275 = vmatpush1.bf16.msra.mxu0 %v2257
        %2276 = vmatprep.subr.bf16.mxu0 0
        %2277 = vmatpush1.bf16.msra.mxu0 %v2258
        %2278 = vmatprep.subr.bf16.mxu0 0
        %2279 = vmatpush1.bf16.msra.mxu0 %v2259
        %2280 = vmatprep.subr.bf16.mxu0 0
        %2281 = vmatpush1.bf16.msra.mxu0 %v2260
        %2282 = vmatprep.subr.bf16.mxu0 0
        %2283 = vmatpush1.bf16.msra.mxu0 %v2261
        %2284 = vmatprep.subr.bf16.mxu0 0
        %2285 = vmatpush1.bf16.msra.mxu0 %v2262
        %2286 = vmatprep.subr.bf16.mxu0 0
        %2287 = vmatpush1.bf16.msra.mxu0 %v2263
        %2288 = vmatprep.subr.bf16.mxu0 0
        %2289 = vmatpush1.bf16.msra.mxu0 0
        %2290 = vmatprep.subr.bf16.mxu0 0
        %2291 = vmatpush1.bf16.msra.mxu0 0
        %2292 = vmatprep.subr.bf16.mxu0 0
        %2293 = vmatpush1.bf16.msra.mxu0 0
        %2294 = vmatprep.subr.bf16.mxu0 0
        %2295 = vmatpush1.bf16.msra.mxu0 0
        %2296 = vmatprep.subr.bf16.mxu0 0
        %2297 = vmatpush1.bf16.msra.mxu0 0
        %2298 = vmatprep.subr.bf16.mxu0 0
        %2299 = vmatpush1.bf16.msra.mxu0 0
        %2300 = vmatprep.subr.bf16.mxu0 0
        %2301 = vmatpush1.bf16.msra.mxu0 0
        %2302 = vmatprep.subr.bf16.mxu0 0
        %2303 = vmatpush1.bf16.msra.mxu0 0
        %2304 = vmatprep.mubr.bf16.mxu0 0
        %2305 = vmatmul.mubr.bf16.gmra.mrb[0].mxu0 %v2154
        %v2306 = vpop.f32.mrb[0].mxu0
        %v2307 = vadd.f32 %v2222, %v2306
        %v2308 = vpop.f32.mrb[0].mxu0
        %v2309 = vpop.f32.mrb[0].mxu0
        %v2310 = vadd.f32 %v2222, %v2309
        %v2311 = vpop.f32.mrb[0].mxu0
        %2312 = vmatprep.mubr.bf16.mxu0 0
        %2313 = vmatmul.mubr.bf16.gmra.mrb[0].mxu0 %v2155
        %v2314 = vpop.f32.mrb[0].mxu0
        %v2315 = vadd.f32 %v2222, %v2314
        %v2316 = vpop.f32.mrb[0].mxu0
        %v2317 = vpop.f32.mrb[0].mxu0
        %v2318 = vadd.f32 %v2222, %v2317
        %v2319 = vpop.f32.mrb[0].mxu0
        %2320 = vmatprep.mubr.bf16.mxu0 0
        %2321 = vmatmul.mubr.bf16.gmra.mrb[0].mxu0 %v2156
        %v2322 = vpop.f32.mrb[0].mxu0
        %v2323 = vadd.f32 %v2222, %v2322
        %v2324 = vpop.f32.mrb[0].mxu0
        %v2325 = vpop.f32.mrb[0].mxu0
        %v2326 = vadd.f32 %v2222, %v2325
        %v2327 = vpop.f32.mrb[0].mxu0
        %2328 = vmatprep.mubr.bf16.mxu0 0
        %2329 = vmatmul.mubr.bf16.gmra.mrb[0].mxu0 %v2157
        %v2330 = vpop.f32.mrb[0].mxu0
        %v2331 = vadd.f32 %v2222, %v2330
        %v2332 = vpop.f32.mrb[0].mxu0
        %v2333 = vpop.f32.mrb[0].mxu0
        %v2334 = vadd.f32 %v2222, %v2333
        %v2335 = vpop.f32.mrb[0].mxu0
        %2336 = vmatprep.mubr.bf16.mxu0 0
        %2337 = vmatmul.mubr.bf16.gmra.mrb[0].mxu0 %v2158
        %v2338 = vpop.f32.mrb[0].mxu0
        %v2339 = vadd.f32 %v2222, %v2338
        %v2340 = vpop.f32.mrb[0].mxu0
        %v2341 = vpop.f32.mrb[0].mxu0
        %v2342 = vadd.f32 %v2222, %v2341
        %v2343 = vpop.f32.mrb[0].mxu0
        %2344 = vmatprep.mubr.bf16.mxu0 0
        %2345 = vmatmul.mubr.bf16.gmra.mrb[0].mxu0 %v2159
        %v2346 = vpop.f32.mrb[0].mxu0
        %v2347 = vadd.f32 %v2222, %v2346
        %v2348 = vpop.f32.mrb[0].mxu0
        %v2349 = vpop.f32.mrb[0].mxu0
        %v2350 = vadd.f32 %v2222, %v2349
        %v2351 = vpop.f32.mrb[0].mxu0
        %2352 = vmatprep.mubr.bf16.mxu0 0
        %2353 = vmatmul.mubr.bf16.gmra.mrb[0].mxu0 %v2160
        %v2354 = vpop.f32.mrb[0].mxu0
        %v2355 = vadd.f32 %v2222, %v2354
        %v2356 = vpop.f32.mrb[0].mxu0
        %v2357 = vpop.f32.mrb[0].mxu0
        %v2358 = vadd.f32 %v2222, %v2357
        %v2359 = vpop.f32.mrb[0].mxu0
        %2360 = vmatprep.mubr.bf16.mxu0 0
        %2361 = vmatmul.mubr.bf16.gmra.mrb[0].mxu0 %v2161
        %v2362 = vpop.f32.mrb[0].mxu0
        %v2363 = vadd.f32 %v2222, %v2362
        %v2364 = vpop.f32.mrb[0].mxu0
        %v2365 = vpop.f32.mrb[0].mxu0
        %v2366 = vadd.f32 %v2222, %v2365
        %v2367 = vpop.f32.mrb[0].mxu0
        %2368 = vmatprep.mubr.bf16.mxu0 0
        %2369 = vmatmul.mubr.bf16.gmra.mrb[0].mxu0 %v2162
        %v2370 = vpop.f32.mrb[0].mxu0
        %v2371 = vadd.f32 %v2222, %v2370
        %v2372 = vpop.f32.mrb[0].mxu0
        %v2373 = vpop.f32.mrb[0].mxu0
        %v2374 = vadd.f32 %v2222, %v2373
        %v2375 = vpop.f32.mrb[0].mxu0
        %2376 = vmatprep.mubr.bf16.mxu0 0
        %2377 = vmatmul.mubr.bf16.gmra.mrb[0].mxu0 %v2163
        %v2378 = vpop.f32.mrb[0].mxu0
        %v2379 = vadd.f32 %v2222, %v2378
        %v2380 = vpop.f32.mrb[0].mxu0
        %v2381 = vpop.f32.mrb[0].mxu0
        %v2382 = vadd.f32 %v2222, %v2381
        %v2383 = vpop.f32.mrb[0].mxu0
        %2384 = vmatprep.mubr.bf16.mxu0 0
        %2385 = vmatmul.mubr.bf16.gmra.mrb[0].mxu0 %v2164
        %v2386 = vpop.f32.mrb[0].mxu0
        %v2387 = vadd.f32 %v2222, %v2386
        %v2388 = vpop.f32.mrb[0].mxu0
        %v2389 = vpop.f32.mrb[0].mxu0
        %v2390 = vadd.f32 %v2222, %v2389
        %v2391 = vpop.f32.mrb[0].mxu0
        %2392 = vmatprep.mubr.bf16.mxu0 0
        %2393 = vmatmul.mubr.bf16.gmra.mrb[0].mxu0 %v2165
        %v2394 = vpop.f32.mrb[0].mxu0
        %v2395 = vadd.f32 %v2222, %v2394
        %v2396 = vpop.f32.mrb[0].mxu0
        %v2397 = vpop.f32.mrb[0].mxu0
        %v2398 = vadd.f32 %v2222, %v2397
        %v2399 = vpop.f32.mrb[0].mxu0
        %2400 = vmatprep.mubr.bf16.mxu0 0
        %2401 = vmatmul.mubr.bf16.gmra.mrb[0].mxu0 %v2166
        %v2402 = vpop.f32.mrb[0].mxu0
        %v2403 = vadd.f32 %v2222, %v2402
        %v2404 = vpop.f32.mrb[0].mxu0
        %v2405 = vpop.f32.mrb[0].mxu0
        %v2406 = vadd.f32 %v2222, %v2405
        %v2407 = vpop.f32.mrb[0].mxu0
        %2408 = vmatprep.mubr.bf16.mxu0 0
        %2409 = vmatmul.mubr.bf16.gmra.mrb[0].mxu0 %v2167
        %v2410 = vpop.f32.mrb[0].mxu0
        %v2411 = vadd.f32 %v2222, %v2410
        %v2412 = vpop.f32.mrb[0].mxu0
        %v2413 = vpop.f32.mrb[0].mxu0
        %v2414 = vadd.f32 %v2222, %v2413
        %v2415 = vpop.f32.mrb[0].mxu0
        %2416 = vmatprep.mubr.bf16.mxu0 0
        %2417 = vmatmul.mubr.bf16.gmra.mrb[0].mxu0 %v2168
        %v2418 = vpop.f32.mrb[0].mxu0
        %v2419 = vadd.f32 %v2222, %v2418
        %v2420 = vpop.f32.mrb[0].mxu0
        %v2421 = vpop.f32.mrb[0].mxu0
        %v2422 = vadd.f32 %v2222, %v2421
        %v2423 = vpop.f32.mrb[0].mxu0
        %2424 = vmatprep.mubr.bf16.mxu0 0
        %2425 = vmatmul.mubr.bf16.gmra.mrb[0].mxu0 %v2169
        %v2426 = vpop.f32.mrb[0].mxu0
        %v2427 = vadd.f32 %v2222, %v2426
        %v2428 = vpop.f32.mrb[0].mxu0
        %v2429 = vpop.f32.mrb[0].mxu0
        %v2430 = vadd.f32 %v2222, %v2429
        %v2431 = vpop.f32.mrb[0].mxu0
        %2432 = vmatprep.mubr.bf16.mxu0 0
        %2433 = vmatmul.mubr.bf16.gmra.mrb[0].mxu0 %v2170
        %v2434 = vpop.f32.mrb[0].mxu0
        %v2435 = vadd.f32 %v2222, %v2434
        %v2436 = vpop.f32.mrb[0].mxu0
        %v2437 = vpop.f32.mrb[0].mxu0
        %v2438 = vadd.f32 %v2222, %v2437
        %v2439 = vpop.f32.mrb[0].mxu0
        %2440 = vmatprep.mubr.bf16.mxu0 0
        %2441 = vmatmul.mubr.bf16.gmra.mrb[0].mxu0 %v2171
        %v2442 = vpop.f32.mrb[0].mxu0
        %v2443 = vadd.f32 %v2222, %v2442
        %v2444 = vpop.f32.mrb[0].mxu0
        %v2445 = vpop.f32.mrb[0].mxu0
        %v2446 = vadd.f32 %v2222, %v2445
        %v2447 = vpop.f32.mrb[0].mxu0
        %2448 = vmatprep.mubr.bf16.mxu0 0
        %2449 = vmatmul.mubr.bf16.gmra.mrb[0].mxu0 %v2172
        %v2450 = vpop.f32.mrb[0].mxu0
        %v2451 = vadd.f32 %v2222, %v2450
        %v2452 = vpop.f32.mrb[0].mxu0
        %v2453 = vpop.f32.mrb[0].mxu0
        %v2454 = vadd.f32 %v2222, %v2453
        %v2455 = vpop.f32.mrb[0].mxu0
        %2456 = vmatprep.mubr.bf16.mxu0 0
        %2457 = vmatmul.mubr.bf16.gmra.mrb[0].mxu0 %v2173
        %v2458 = vpop.f32.mrb[0].mxu0
        %v2459 = vadd.f32 %v2222, %v2458
        %v2460 = vpop.f32.mrb[0].mxu0
        %v2461 = vpop.f32.mrb[0].mxu0
        %v2462 = vadd.f32 %v2222, %v2461
        %v2463 = vpop.f32.mrb[0].mxu0
        %2464 = vmatprep.mubr.bf16.mxu0 0
        %2465 = vmatmul.mubr.bf16.gmra.mrb[0].mxu0 %v2174
        %v2466 = vpop.f32.mrb[0].mxu0
        %v2467 = vadd.f32 %v2222, %v2466
        %v2468 = vpop.f32.mrb[0].mxu0
        %v2469 = vpop.f32.mrb[0].mxu0
        %v2470 = vadd.f32 %v2222, %v2469
        %v2471 = vpop.f32.mrb[0].mxu0
        %2472 = vmatprep.mubr.bf16.mxu0 0
        %2473 = vmatmul.mubr.bf16.gmra.mrb[0].mxu0 %v2175
        %v2474 = vpop.f32.mrb[0].mxu0
        %v2475 = vadd.f32 %v2222, %v2474
        %v2476 = vpop.f32.mrb[0].mxu0
        %v2477 = vpop.f32.mrb[0].mxu0
        %v2478 = vadd.f32 %v2222, %v2477
        %v2479 = vpop.f32.mrb[0].mxu0
        %2480 = vmatprep.mubr.bf16.mxu0 0
        %2481 = vmatmul.mubr.bf16.gmra.mrb[0].mxu0 %v2176
        %v2482 = vpop.f32.mrb[0].mxu0
        %v2483 = vadd.f32 %v2222, %v2482
        %v2484 = vpop.f32.mrb[0].mxu0
        %v2485 = vpop.f32.mrb[0].mxu0
        %v2486 = vadd.f32 %v2222, %v2485
        %v2487 = vpop.f32.mrb[0].mxu0
        %2488 = vmatprep.mubr.bf16.mxu0 0
        %2489 = vmatmul.mubr.bf16.gmra.mrb[0].mxu0 %v2177
        %v2490 = vpop.f32.mrb[0].mxu0
        %v2491 = vadd.f32 %v2222, %v2490
        %v2492 = vpop.f32.mrb[0].mxu0
        %v2493 = vpop.f32.mrb[0].mxu0
        %v2494 = vadd.f32 %v2222, %v2493
        %v2495 = vpop.f32.mrb[0].mxu0
        %2496 = vmatprep.mubr.bf16.mxu0 0
        %2497 = vmatmul.mubr.bf16.gmra.mrb[0].mxu0 %v2178
        %v2498 = vpop.f32.mrb[0].mxu0
        %v2499 = vadd.f32 %v2222, %v2498
        %v2500 = vpop.f32.mrb[0].mxu0
        %v2501 = vpop.f32.mrb[0].mxu0
        %v2502 = vadd.f32 %v2222, %v2501
        %v2503 = vpop.f32.mrb[0].mxu0
        %2504 = vmatprep.mubr.bf16.mxu0 0
        %2505 = vmatmul.mubr.bf16.gmra.mrb[0].mxu0 %v2179
        %v2506 = vpop.f32.mrb[0].mxu0
        %v2507 = vadd.f32 %v2222, %v2506
        %v2508 = vpop.f32.mrb[0].mxu0
        %v2509 = vpop.f32.mrb[0].mxu0
        %v2510 = vadd.f32 %v2222, %v2509
        %v2511 = vpop.f32.mrb[0].mxu0
        %2512 = vmatprep.mubr.bf16.mxu0 0
        %2513 = vmatmul.mubr.bf16.gmra.mrb[0].mxu0 %v2180
        %v2514 = vpop.f32.mrb[0].mxu0
        %v2515 = vadd.f32 %v2222, %v2514
        %v2516 = vpop.f32.mrb[0].mxu0
        %v2517 = vpop.f32.mrb[0].mxu0
        %v2518 = vadd.f32 %v2222, %v2517
        %v2519 = vpop.f32.mrb[0].mxu0
        %2520 = vmatprep.mubr.bf16.mxu0 0
        %2521 = vmatmul.mubr.bf16.gmra.mrb[0].mxu0 %v2181
        %v2522 = vpop.f32.mrb[0].mxu0
        %v2523 = vadd.f32 %v2222, %v2522
        %v2524 = vpop.f32.mrb[0].mxu0
        %v2525 = vpop.f32.mrb[0].mxu0
        %v2526 = vadd.f32 %v2222, %v2525
        %v2527 = vpop.f32.mrb[0].mxu0
        %2528 = vmatprep.mubr.bf16.mxu0 0
        %2529 = vmatmul.mubr.bf16.gmra.mrb[0].mxu0 %v2182
        %v2530 = vpop.f32.mrb[0].mxu0
        %v2531 = vadd.f32 %v2222, %v2530
        %v2532 = vpop.f32.mrb[0].mxu0
        %v2533 = vpop.f32.mrb[0].mxu0
        %v2534 = vadd.f32 %v2222, %v2533
        %v2535 = vpop.f32.mrb[0].mxu0
        %2536 = vmatprep.mubr.bf16.mxu0 0
        %2537 = vmatmul.mubr.bf16.gmra.mrb[0].mxu0 %v2183
        %v2538 = vpop.f32.mrb[0].mxu0
        %v2539 = vadd.f32 %v2222, %v2538
        %v2540 = vpop.f32.mrb[0].mxu0
        %v2541 = vpop.f32.mrb[0].mxu0
        %v2542 = vadd.f32 %v2222, %v2541
        %v2543 = vpop.f32.mrb[0].mxu0
        %2544 = vmatprep.mubr.bf16.mxu0 0
        %2545 = vmatmul.mubr.bf16.gmra.mrb[0].mxu0 %v2184
        %v2546 = vpop.f32.mrb[0].mxu0
        %v2547 = vadd.f32 %v2222, %v2546
        %v2548 = vpop.f32.mrb[0].mxu0
        %v2549 = vpop.f32.mrb[0].mxu0
        %v2550 = vadd.f32 %v2222, %v2549
        %v2551 = vpop.f32.mrb[0].mxu0
        %2552 = vmatprep.mubr.bf16.mxu0 0
        %2553 = vmatmul.mubr.bf16.gmra.mrb[0].mxu0 %v2185
        %v2554 = vpop.f32.mrb[0].mxu0
        %v2555 = vadd.f32 %v2222, %v2554
        %v2556 = vpop.f32.mrb[0].mxu0
        %v2557 = vpop.f32.mrb[0].mxu0
        %v2558 = vadd.f32 %v2222, %v2557
        %v2559 = vpop.f32.mrb[0].mxu0
        %2560 = vmatprep.mubr.bf16.mxu0 0
        %2561 = vmatmul.mubr.bf16.gmra.mrb[0].mxu0 %v2186
        %v2562 = vpop.f32.mrb[0].mxu0
        %v2563 = vadd.f32 %v2222, %v2562
        %v2564 = vpop.f32.mrb[0].mxu0
        %v2565 = vpop.f32.mrb[0].mxu0
        %v2566 = vadd.f32 %v2222, %v2565
        %v2567 = vpop.f32.mrb[0].mxu0
        %2568 = vmatprep.mubr.bf16.mxu0 0
        %2569 = vmatmul.mubr.bf16.gmra.mrb[0].mxu0 %v2187
        %v2570 = vpop.f32.mrb[0].mxu0
        %v2571 = vadd.f32 %v2222, %v2570
        %v2572 = vpop.f32.mrb[0].mxu0
        %v2573 = vpop.f32.mrb[0].mxu0
        %v2574 = vadd.f32 %v2222, %v2573
        %v2575 = vpop.f32.mrb[0].mxu0
        %2576 = vmatprep.mubr.bf16.mxu0 0
        %2577 = vmatmul.mubr.bf16.gmra.mrb[0].mxu0 %v2188
        %v2578 = vpop.f32.mrb[0].mxu0
        %v2579 = vadd.f32 %v2222, %v2578
        %v2580 = vpop.f32.mrb[0].mxu0
        %v2581 = vpop.f32.mrb[0].mxu0
        %v2582 = vadd.f32 %v2222, %v2581
        %v2583 = vpop.f32.mrb[0].mxu0
        %2584 = vmatprep.mubr.bf16.mxu0 0
        %2585 = vmatmul.mubr.bf16.gmra.mrb[0].mxu0 %v2189
        %v2586 = vpop.f32.mrb[0].mxu0
        %v2587 = vadd.f32 %v2222, %v2586
        %v2588 = vpop.f32.mrb[0].mxu0
        %v2589 = vpop.f32.mrb[0].mxu0
        %v2590 = vadd.f32 %v2222, %v2589
        %v2591 = vpop.f32.mrb[0].mxu0
        %2592 = vmatprep.mubr.bf16.mxu0 0
        %2593 = vmatmul.mubr.bf16.gmra.mrb[0].mxu0 %v2190
        %v2594 = vpop.f32.mrb[0].mxu0
        %v2595 = vadd.f32 %v2222, %v2594
        %v2596 = vpop.f32.mrb[0].mxu0
        %v2597 = vpop.f32.mrb[0].mxu0
        %v2598 = vadd.f32 %v2222, %v2597
        %v2599 = vpop.f32.mrb[0].mxu0
        %2600 = vmatprep.mubr.bf16.mxu0 0
        %2601 = vmatmul.mubr.bf16.gmra.mrb[0].mxu0 %v2191
        %v2602 = vpop.f32.mrb[0].mxu0
        %v2603 = vadd.f32 %v2222, %v2602
        %v2604 = vpop.f32.mrb[0].mxu0
        %v2605 = vpop.f32.mrb[0].mxu0
        %v2606 = vadd.f32 %v2222, %v2605
        %v2607 = vpop.f32.mrb[0].mxu0
        %2608 = vmatprep.mubr.bf16.mxu0 0
        %2609 = vmatmul.mubr.bf16.gmra.mrb[0].mxu0 %v2192
        %v2610 = vpop.f32.mrb[0].mxu0
        %v2611 = vadd.f32 %v2222, %v2610
        %v2612 = vpop.f32.mrb[0].mxu0
        %v2613 = vpop.f32.mrb[0].mxu0
        %v2614 = vadd.f32 %v2222, %v2613
        %v2615 = vpop.f32.mrb[0].mxu0
        %2616 = vmatprep.mubr.bf16.mxu0 0
        %2617 = vmatmul.mubr.bf16.gmra.mrb[0].mxu0 %v2193
        %v2618 = vpop.f32.mrb[0].mxu0
        %v2619 = vadd.f32 %v2222, %v2618
        %v2620 = vpop.f32.mrb[0].mxu0
        %v2621 = vpop.f32.mrb[0].mxu0
        %v2622 = vadd.f32 %v2222, %v2621
        %v2623 = vpop.f32.mrb[0].mxu0
        %2624 = vmatprep.mubr.bf16.mxu0 0
        %2625 = vmatmul.mubr.bf16.gmra.mrb[0].mxu0 %v2194
        %v2626 = vpop.f32.mrb[0].mxu0
        %v2627 = vadd.f32 %v2222, %v2626
        %v2628 = vpop.f32.mrb[0].mxu0
        %v2629 = vpop.f32.mrb[0].mxu0
        %v2630 = vadd.f32 %v2222, %v2629
        %v2631 = vpop.f32.mrb[0].mxu0
        %2632 = vmatprep.mubr.bf16.mxu0 0
        %2633 = vmatmul.mubr.bf16.gmra.mrb[0].mxu0 %v2195
        %v2634 = vpop.f32.mrb[0].mxu0
        %v2635 = vadd.f32 %v2222, %v2634
        %v2636 = vpop.f32.mrb[0].mxu0
        %v2637 = vpop.f32.mrb[0].mxu0
        %v2638 = vadd.f32 %v2222, %v2637
        %v2639 = vpop.f32.mrb[0].mxu0
        %2640 = vmatprep.mubr.bf16.mxu0 0
        %2641 = vmatmul.mubr.bf16.gmra.mrb[0].mxu0 %v2196
        %v2642 = vpop.f32.mrb[0].mxu0
        %v2643 = vadd.f32 %v2222, %v2642
        %v2644 = vpop.f32.mrb[0].mxu0
        %v2645 = vpop.f32.mrb[0].mxu0
        %v2646 = vadd.f32 %v2222, %v2645
        %v2647 = vpop.f32.mrb[0].mxu0
        %2648 = vmatprep.mubr.bf16.mxu0 0
        %2649 = vmatmul.mubr.bf16.gmra.mrb[0].mxu0 %v2197
        %v2650 = vpop.f32.mrb[0].mxu0
        %v2651 = vadd.f32 %v2222, %v2650
        %v2652 = vpop.f32.mrb[0].mxu0
        %v2653 = vpop.f32.mrb[0].mxu0
        %v2654 = vadd.f32 %v2222, %v2653
        %v2655 = vpop.f32.mrb[0].mxu0
        %2656 = vmatprep.mubr.bf16.mxu0 0
        %2657 = vmatmul.mubr.bf16.gmra.mrb[0].mxu0 %v2198
        %v2658 = vpop.f32.mrb[0].mxu0
        %v2659 = vadd.f32 %v2222, %v2658
        %v2660 = vpop.f32.mrb[0].mxu0
        %v2661 = vpop.f32.mrb[0].mxu0
        %v2662 = vadd.f32 %v2222, %v2661
        %v2663 = vpop.f32.mrb[0].mxu0
        %2664 = vmatprep.mubr.bf16.mxu0 0
        %2665 = vmatmul.mubr.bf16.gmra.mrb[0].mxu0 %v2199
        %v2666 = vpop.f32.mrb[0].mxu0
        %v2667 = vadd.f32 %v2222, %v2666
        %v2668 = vpop.f32.mrb[0].mxu0
        %v2669 = vpop.f32.mrb[0].mxu0
        %v2670 = vadd.f32 %v2222, %v2669
        %v2671 = vpop.f32.mrb[0].mxu0
        %2672 = vmatprep.mubr.bf16.mxu0 0
        %2673 = vmatmul.mubr.bf16.gmra.mrb[0].mxu0 %v2200
        %v2674 = vpop.f32.mrb[0].mxu0
        %v2675 = vadd.f32 %v2222, %v2674
        %v2676 = vpop.f32.mrb[0].mxu0
        %v2677 = vpop.f32.mrb[0].mxu0
        %v2678 = vadd.f32 %v2222, %v2677
        %v2679 = vpop.f32.mrb[0].mxu0
        %2680 = vmatprep.mubr.bf16.mxu0 0
        %2681 = vmatmul.mubr.bf16.gmra.mrb[0].mxu0 %v2201
        %v2682 = vpop.f32.mrb[0].mxu0
        %v2683 = vadd.f32 %v2222, %v2682
        %v2684 = vpop.f32.mrb[0].mxu0
        %v2685 = vpop.f32.mrb[0].mxu0
        %v2686 = vadd.f32 %v2222, %v2685
        %v2687 = vpop.f32.mrb[0].mxu0
        %2688 = vmatprep.mubr.bf16.mxu0 0
        %2689 = vmatmul.mubr.bf16.gmra.mrb[0].mxu0 %v2202
        %v2690 = vpop.f32.mrb[0].mxu0
        %v2691 = vadd.f32 %v2222, %v2690
        %v2692 = vpop.f32.mrb[0].mxu0
        %v2693 = vpop.f32.mrb[0].mxu0
        %v2694 = vadd.f32 %v2222, %v2693
        %v2695 = vpop.f32.mrb[0].mxu0
        %2696 = vmatprep.mubr.bf16.mxu0 0
        %2697 = vmatmul.mubr.bf16.gmra.mrb[0].mxu0 %v2203
        %v2698 = vpop.f32.mrb[0].mxu0
        %v2699 = vadd.f32 %v2222, %v2698
        %v2700 = vpop.f32.mrb[0].mxu0
        %v2701 = vpop.f32.mrb[0].mxu0
        %v2702 = vadd.f32 %v2222, %v2701
        %v2703 = vpop.f32.mrb[0].mxu0
        %2704 = vmatprep.mubr.bf16.mxu0 0
        %2705 = vmatmul.mubr.bf16.gmra.mrb[0].mxu0 %v2204
        %v2706 = vpop.f32.mrb[0].mxu0
        %v2707 = vadd.f32 %v2222, %v2706
        %v2708 = vpop.f32.mrb[0].mxu0
        %v2709 = vpop.f32.mrb[0].mxu0
        %v2710 = vadd.f32 %v2222, %v2709
        %v2711 = vpop.f32.mrb[0].mxu0
        %2712 = vmatprep.mubr.bf16.mxu0 0
        %2713 = vmatmul.mubr.bf16.gmra.mrb[0].mxu0 %v2205
        %v2714 = vpop.f32.mrb[0].mxu0
        %v2715 = vadd.f32 %v2222, %v2714
        %v2716 = vpop.f32.mrb[0].mxu0
        %v2717 = vpop.f32.mrb[0].mxu0
        %v2718 = vadd.f32 %v2222, %v2717
        %v2719 = vpop.f32.mrb[0].mxu0
        %2720 = vmatprep.mubr.bf16.mxu0 0
        %2721 = vmatmul.mubr.bf16.gmra.mrb[0].mxu0 %v2206
        %v2722 = vpop.f32.mrb[0].mxu0
        %v2723 = vadd.f32 %v2222, %v2722
        %v2724 = vpop.f32.mrb[0].mxu0
        %v2725 = vpop.f32.mrb[0].mxu0
        %v2726 = vadd.f32 %v2222, %v2725
        %v2727 = vpop.f32.mrb[0].mxu0
        %2728 = vmatprep.mubr.bf16.mxu0 0
        %2729 = vmatmul.mubr.bf16.gmra.mrb[0].mxu0 %v2207
        %v2730 = vpop.f32.mrb[0].mxu0
        %v2731 = vadd.f32 %v2222, %v2730
        %v2732 = vpop.f32.mrb[0].mxu0
        %v2733 = vpop.f32.mrb[0].mxu0
        %v2734 = vadd.f32 %v2222, %v2733
        %v2735 = vpop.f32.mrb[0].mxu0
        %2736 = vmatprep.mubr.bf16.mxu0 0
        %2737 = vmatmul.mubr.bf16.gmra.mrb[0].mxu0 %v2208
        %v2738 = vpop.f32.mrb[0].mxu0
        %v2739 = vadd.f32 %v2222, %v2738
        %v2740 = vpop.f32.mrb[0].mxu0
        %v2741 = vpop.f32.mrb[0].mxu0
        %v2742 = vadd.f32 %v2222, %v2741
        %v2743 = vpop.f32.mrb[0].mxu0
        %2744 = vmatprep.mubr.bf16.mxu0 0
        %2745 = vmatmul.mubr.bf16.gmra.mrb[0].mxu0 %v2209
        %v2746 = vpop.f32.mrb[0].mxu0
        %v2747 = vadd.f32 %v2222, %v2746
        %v2748 = vpop.f32.mrb[0].mxu0
        %v2749 = vpop.f32.mrb[0].mxu0
        %v2750 = vadd.f32 %v2222, %v2749
        %v2751 = vpop.f32.mrb[0].mxu0
        %2752 = vmatprep.mubr.bf16.mxu0 0
        %2753 = vmatmul.mubr.bf16.gmra.mrb[0].mxu0 %v2210
        %v2754 = vpop.f32.mrb[0].mxu0
        %v2755 = vadd.f32 %v2222, %v2754
        %v2756 = vpop.f32.mrb[0].mxu0
        %v2757 = vpop.f32.mrb[0].mxu0
        %v2758 = vadd.f32 %v2222, %v2757
        %v2759 = vpop.f32.mrb[0].mxu0
        %2760 = vmatprep.mubr.bf16.mxu0 0
        %2761 = vmatmul.mubr.bf16.gmra.mrb[0].mxu0 %v2211
        %v2762 = vpop.f32.mrb[0].mxu0
        %v2763 = vadd.f32 %v2222, %v2762
        %v2764 = vpop.f32.mrb[0].mxu0
        %v2765 = vpop.f32.mrb[0].mxu0
        %v2766 = vadd.f32 %v2222, %v2765
        %v2767 = vpop.f32.mrb[0].mxu0
        %2768 = vmatprep.mubr.bf16.mxu0 0
        %2769 = vmatmul.mubr.bf16.gmra.mrb[0].mxu0 %v2212
        %v2770 = vpop.f32.mrb[0].mxu0
        %v2771 = vadd.f32 %v2222, %v2770
        %v2772 = vpop.f32.mrb[0].mxu0
        %v2773 = vpop.f32.mrb[0].mxu0
        %v2774 = vadd.f32 %v2222, %v2773
        %v2775 = vpop.f32.mrb[0].mxu0
        %2776 = vmatprep.mubr.bf16.mxu0 0
        %2777 = vmatmul.mubr.bf16.gmra.mrb[0].mxu0 %v2213
        %v2778 = vpop.f32.mrb[0].mxu0
        %v2779 = vadd.f32 %v2222, %v2778
        %v2780 = vpop.f32.mrb[0].mxu0
        %v2781 = vpop.f32.mrb[0].mxu0
        %v2782 = vadd.f32 %v2222, %v2781
        %v2783 = vpop.f32.mrb[0].mxu0
        %2784 = vmatprep.mubr.bf16.mxu0 0
        %2785 = vmatmul.mubr.bf16.gmra.mrb[0].mxu0 %v2214
        %v2786 = vpop.f32.mrb[0].mxu0
        %v2787 = vadd.f32 %v2222, %v2786
        %v2788 = vpop.f32.mrb[0].mxu0
        %v2789 = vpop.f32.mrb[0].mxu0
        %v2790 = vadd.f32 %v2222, %v2789
        %v2791 = vpop.f32.mrb[0].mxu0
        %2792 = vmatprep.mubr.bf16.mxu0 0
        %2793 = vmatmul.mubr.bf16.gmra.mrb[0].mxu0 %v2215
        %v2794 = vpop.f32.mrb[0].mxu0
        %v2795 = vadd.f32 %v2222, %v2794
        %v2796 = vpop.f32.mrb[0].mxu0
        %v2797 = vpop.f32.mrb[0].mxu0
        %v2798 = vadd.f32 %v2222, %v2797
        %v2799 = vpop.f32.mrb[0].mxu0
        %2800 = vmatprep.mubr.bf16.mxu0 0
        %2801 = vmatmul.mubr.bf16.gmra.mrb[0].mxu0 %v2216
        %v2802 = vpop.f32.mrb[0].mxu0
        %v2803 = vadd.f32 %v2222, %v2802
        %v2804 = vpop.f32.mrb[0].mxu0
        %v2805 = vpop.f32.mrb[0].mxu0
        %v2806 = vadd.f32 %v2222, %v2805
        %v2807 = vpop.f32.mrb[0].mxu0
        %2808 = vmatprep.mubr.bf16.mxu0 0
        %2809 = vmatmul.mubr.bf16.gmra.mrb[0].mxu0 %v2217
        %v2810 = vpop.f32.mrb[0].mxu0
        %v2811 = vadd.f32 %v2222, %v2810
        %v2812 = vpop.f32.mrb[0].mxu0
        %v2813 = vpop.f32.mrb[0].mxu0
        %v2814 = vadd.f32 %v2222, %v2813
        %v2815 = vpop.f32.mrb[0].mxu0
        %2816 = vdwg.mxu0
        %v2817 = vmax.f32 %v2307, 0.0
        %v2818 = vmax.f32 %v2310, 0.0
        %v2819 = vmax.f32 %v2315, 0.0
        %v2820 = vmax.f32 %v2318, 0.0
        %v2821 = vmax.f32 %v2323, 0.0
        %v2822 = vmax.f32 %v2326, 0.0
        %v2823 = vmax.f32 %v2331, 0.0
        %v2824 = vmax.f32 %v2334, 0.0
        %v2825 = vmax.f32 %v2339, 0.0
        %v2826 = vmax.f32 %v2342, 0.0
        %v2827 = vmax.f32 %v2347, 0.0
        %v2828 = vmax.f32 %v2350, 0.0
        %v2829 = vmax.f32 %v2355, 0.0
        %v2830 = vmax.f32 %v2358, 0.0
        %v2831 = vmax.f32 %v2363, 0.0
        %v2832 = vmax.f32 %v2366, 0.0
        %v2833 = vmax.f32 %v2371, 0.0
        %v2834 = vmax.f32 %v2374, 0.0
        %v2835 = vmax.f32 %v2379, 0.0
        %v2836 = vmax.f32 %v2382, 0.0
        %v2837 = vmax.f32 %v2387, 0.0
        %v2838 = vmax.f32 %v2390, 0.0
        %v2839 = vmax.f32 %v2395, 0.0
        %v2840 = vmax.f32 %v2398, 0.0
        %v2841 = vmax.f32 %v2403, 0.0
        %v2842 = vmax.f32 %v2406, 0.0
        %v2843 = vmax.f32 %v2411, 0.0
        %v2844 = vmax.f32 %v2414, 0.0
        %v2845 = vmax.f32 %v2419, 0.0
        %v2846 = vmax.f32 %v2422, 0.0
        %v2847 = vmax.f32 %v2427, 0.0
        %v2848 = vmax.f32 %v2430, 0.0
        %v2849 = vmax.f32 %v2435, 0.0
        %v2850 = vmax.f32 %v2438, 0.0
        %v2851 = vmax.f32 %v2443, 0.0
        %v2852 = vmax.f32 %v2446, 0.0
        %v2853 = vmax.f32 %v2451, 0.0
        %v2854 = vmax.f32 %v2454, 0.0
        %v2855 = vmax.f32 %v2459, 0.0
        %v2856 = vmax.f32 %v2462, 0.0
        %v2857 = vmax.f32 %v2467, 0.0
        %v2858 = vmax.f32 %v2470, 0.0
        %v2859 = vmax.f32 %v2475, 0.0
        %v2860 = vmax.f32 %v2478, 0.0
        %v2861 = vmax.f32 %v2483, 0.0
        %v2862 = vmax.f32 %v2486, 0.0
        %v2863 = vmax.f32 %v2491, 0.0
        %v2864 = vmax.f32 %v2494, 0.0
        %v2865 = vmax.f32 %v2499, 0.0
        %v2866 = vmax.f32 %v2502, 0.0
        %v2867 = vmax.f32 %v2507, 0.0
        %v2868 = vmax.f32 %v2510, 0.0
        %v2869 = vmax.f32 %v2515, 0.0
        %v2870 = vmax.f32 %v2518, 0.0
        %v2871 = vmax.f32 %v2523, 0.0
        %v2872 = vmax.f32 %v2526, 0.0
        %v2873 = vmax.f32 %v2531, 0.0
        %v2874 = vmax.f32 %v2534, 0.0
        %v2875 = vmax.f32 %v2539, 0.0
        %v2876 = vmax.f32 %v2542, 0.0
        %v2877 = vmax.f32 %v2547, 0.0
        %v2878 = vmax.f32 %v2550, 0.0
        %v2879 = vmax.f32 %v2555, 0.0
        %v2880 = vmax.f32 %v2558, 0.0
        %v2881 = vmax.f32 %v2563, 0.0
        %v2882 = vmax.f32 %v2566, 0.0
        %v2883 = vmax.f32 %v2571, 0.0
        %v2884 = vmax.f32 %v2574, 0.0
        %v2885 = vmax.f32 %v2579, 0.0
        %v2886 = vmax.f32 %v2582, 0.0
        %v2887 = vmax.f32 %v2587, 0.0
        %v2888 = vmax.f32 %v2590, 0.0
        %v2889 = vmax.f32 %v2595, 0.0
        %v2890 = vmax.f32 %v2598, 0.0
        %v2891 = vmax.f32 %v2603, 0.0
        %v2892 = vmax.f32 %v2606, 0.0
        %v2893 = vmax.f32 %v2611, 0.0
        %v2894 = vmax.f32 %v2614, 0.0
        %v2895 = vmax.f32 %v2619, 0.0
        %v2896 = vmax.f32 %v2622, 0.0
        %v2897 = vmax.f32 %v2627, 0.0
        %v2898 = vmax.f32 %v2630, 0.0
        %v2899 = vmax.f32 %v2635, 0.0
        %v2900 = vmax.f32 %v2638, 0.0
        %v2901 = vmax.f32 %v2643, 0.0
        %v2902 = vmax.f32 %v2646, 0.0
        %v2903 = vmax.f32 %v2651, 0.0
        %v2904 = vmax.f32 %v2654, 0.0
        %v2905 = vmax.f32 %v2659, 0.0
        %v2906 = vmax.f32 %v2662, 0.0
        %v2907 = vmax.f32 %v2667, 0.0
        %v2908 = vmax.f32 %v2670, 0.0
        %v2909 = vmax.f32 %v2675, 0.0
        %v2910 = vmax.f32 %v2678, 0.0
        %v2911 = vmax.f32 %v2683, 0.0
        %v2912 = vmax.f32 %v2686, 0.0
        %v2913 = vmax.f32 %v2691, 0.0
        %v2914 = vmax.f32 %v2694, 0.0
        %v2915 = vmax.f32 %v2699, 0.0
        %v2916 = vmax.f32 %v2702, 0.0
        %v2917 = vmax.f32 %v2707, 0.0
        %v2918 = vmax.f32 %v2710, 0.0
        %v2919 = vmax.f32 %v2715, 0.0
        %v2920 = vmax.f32 %v2718, 0.0
        %v2921 = vmax.f32 %v2723, 0.0
        %v2922 = vmax.f32 %v2726, 0.0
        %v2923 = vmax.f32 %v2731, 0.0
        %v2924 = vmax.f32 %v2734, 0.0
        %v2925 = vmax.f32 %v2739, 0.0
        %v2926 = vmax.f32 %v2742, 0.0
        %v2927 = vmax.f32 %v2747, 0.0
        %v2928 = vmax.f32 %v2750, 0.0
        %v2929 = vmax.f32 %v2755, 0.0
        %v2930 = vmax.f32 %v2758, 0.0
        %v2931 = vmax.f32 %v2763, 0.0
        %v2932 = vmax.f32 %v2766, 0.0
        %v2933 = vmax.f32 %v2771, 0.0
        %v2934 = vmax.f32 %v2774, 0.0
        %v2935 = vmax.f32 %v2779, 0.0
        %v2936 = vmax.f32 %v2782, 0.0
        %v2937 = vmax.f32 %v2787, 0.0
        %v2938 = vmax.f32 %v2790, 0.0
        %v2939 = vmax.f32 %v2795, 0.0
        %v2940 = vmax.f32 %v2798, 0.0
        %v2941 = vmax.f32 %v2803, 0.0
        %v2942 = vmax.f32 %v2806, 0.0
        %v2943 = vmax.f32 %v2811, 0.0
        %v2944 = vmax.f32 %v2814, 0.0
        %v2945 = vld [vmem:[%s6] sm:$0xf]
        %v2946 = vld [vmem:[%s6 + $0x4] sm:$0xf]
        %v2947 = vld [vmem:[%s6 + $0x8] sm:$0xf]
        %v2948 = vld [vmem:[%s6 + $0xc] sm:$0xf]
        %v2949 = vld [vmem:[%s6 + $0x10] sm:$0xf]
        %v2950 = vld [vmem:[%s6 + $0x14] sm:$0xf]
        %v2951 = vld [vmem:[%s6 + $0x18] sm:$0xf]
        %v2952 = vld [vmem:[%s6 + $0x1c] sm:$0xf]
        %v2953 = vld [vmem:[%s6 + $0x20] sm:$0xf]
        %v2954 = vld [vmem:[%s6 + $0x24] sm:$0xf]
        %v2955 = vld [vmem:[%s6 + $0x28] sm:$0xf]
        %v2956 = vld [vmem:[%s6 + $0x2c] sm:$0xf]
        %v2957 = vld [vmem:[%s6 + $0x30] sm:$0xf]
        %v2958 = vld [vmem:[%s6 + $0x34] sm:$0xf]
        %v2959 = vld [vmem:[%s6 + $0x38] sm:$0xf]
        %v2960 = vld [vmem:[%s6 + $0x3c] sm:$0xf]
        %v2961 = vld [vmem:[%s7] sm:$0x1]
        %v2962 = vpack.c.bf16 %v2818, %v2817
        %v2963 = vpack.c.bf16 %v2820, %v2819
        %v2964 = vpack.c.bf16 %v2822, %v2821
        %v2965 = vpack.c.bf16 %v2824, %v2823
        %v2966 = vpack.c.bf16 %v2826, %v2825
        %v2967 = vpack.c.bf16 %v2828, %v2827
        %v2968 = vpack.c.bf16 %v2830, %v2829
        %v2969 = vpack.c.bf16 %v2832, %v2831
        %v2970 = vpack.c.bf16 %v2834, %v2833
        %v2971 = vpack.c.bf16 %v2836, %v2835
        %v2972 = vpack.c.bf16 %v2838, %v2837
        %v2973 = vpack.c.bf16 %v2840, %v2839
        %v2974 = vpack.c.bf16 %v2842, %v2841
        %v2975 = vpack.c.bf16 %v2844, %v2843
        %v2976 = vpack.c.bf16 %v2846, %v2845
        %v2977 = vpack.c.bf16 %v2848, %v2847
        %v2978 = vpack.c.bf16 %v2850, %v2849
        %v2979 = vpack.c.bf16 %v2852, %v2851
        %v2980 = vpack.c.bf16 %v2854, %v2853
        %v2981 = vpack.c.bf16 %v2856, %v2855
        %v2982 = vpack.c.bf16 %v2858, %v2857
        %v2983 = vpack.c.bf16 %v2860, %v2859
        %v2984 = vpack.c.bf16 %v2862, %v2861
        %v2985 = vpack.c.bf16 %v2864, %v2863
        %v2986 = vpack.c.bf16 %v2866, %v2865
        %v2987 = vpack.c.bf16 %v2868, %v2867
        %v2988 = vpack.c.bf16 %v2870, %v2869
        %v2989 = vpack.c.bf16 %v2872, %v2871
        %v2990 = vpack.c.bf16 %v2874, %v2873
        %v2991 = vpack.c.bf16 %v2876, %v2875
        %v2992 = vpack.c.bf16 %v2878, %v2877
        %v2993 = vpack.c.bf16 %v2880, %v2879
        %v2994 = vpack.c.bf16 %v2882, %v2881
        %v2995 = vpack.c.bf16 %v2884, %v2883
        %v2996 = vpack.c.bf16 %v2886, %v2885
        %v2997 = vpack.c.bf16 %v2888, %v2887
        %v2998 = vpack.c.bf16 %v2890, %v2889
        %v2999 = vpack.c.bf16 %v2892, %v2891
        %v3000 = vpack.c.bf16 %v2894, %v2893
        %v3001 = vpack.c.bf16 %v2896, %v2895
        %v3002 = vpack.c.bf16 %v2898, %v2897
        %v3003 = vpack.c.bf16 %v2900, %v2899
        %v3004 = vpack.c.bf16 %v2902, %v2901
        %v3005 = vpack.c.bf16 %v2904, %v2903
        %v3006 = vpack.c.bf16 %v2906, %v2905
        %v3007 = vpack.c.bf16 %v2908, %v2907
        %v3008 = vpack.c.bf16 %v2910, %v2909
        %v3009 = vpack.c.bf16 %v2912, %v2911
        %v3010 = vpack.c.bf16 %v2914, %v2913
        %v3011 = vpack.c.bf16 %v2916, %v2915
        %v3012 = vpack.c.bf16 %v2918, %v2917
        %v3013 = vpack.c.bf16 %v2920, %v2919
        %v3014 = vpack.c.bf16 %v2922, %v2921
        %v3015 = vpack.c.bf16 %v2924, %v2923
        %v3016 = vpack.c.bf16 %v2926, %v2925
        %v3017 = vpack.c.bf16 %v2928, %v2927
        %v3018 = vpack.c.bf16 %v2930, %v2929
        %v3019 = vpack.c.bf16 %v2932, %v2931
        %v3020 = vpack.c.bf16 %v2934, %v2933
        %v3021 = vpack.c.bf16 %v2936, %v2935
        %v3022 = vpack.c.bf16 %v2938, %v2937
        %v3023 = vpack.c.bf16 %v2940, %v2939
        %v3024 = vpack.c.bf16 %v2942, %v2941
        %v3025 = vpack.c.bf16 %v2944, %v2943
        %v3027 = vlaneseq
        %v3028 = vshrl.u32 %v3027, 7
        %v3029 = vsub.s32 0, %v3028
        %v3030 = vrot.slane %v2961, %v3029
        %v3048 = vunpack.c.l.b16 %v2945
        %v3049 = vunpack.c.l.b16 %v2946
        %v3050 = vunpack.c.l.b16 %v2947
        %v3051 = vunpack.c.l.b16 %v2948
        %v3052 = vunpack.c.l.b16 %v2949
        %v3053 = vunpack.c.l.b16 %v2950
        %v3054 = vunpack.c.l.b16 %v2951
        %v3055 = vunpack.c.l.b16 %v2952
        %v3056 = vunpack.c.l.b16 %v2953
        %v3057 = vunpack.c.l.b16 %v2954
        %v3058 = vunpack.c.l.b16 %v2955
        %v3059 = vunpack.c.l.b16 %v2956
        %v3060 = vunpack.c.l.b16 %v2957
        %v3061 = vunpack.c.l.b16 %v2958
        %v3062 = vunpack.c.l.b16 %v2959
        %v3063 = vunpack.c.l.b16 %v2960
        %v3064 = vpack.c.b16 %v3049, %v3048
        %v3065 = vpack.c.b16 %v3051, %v3050
        %v3066 = vpack.c.b16 %v3053, %v3052
        %v3067 = vpack.c.b16 %v3055, %v3054
        %v3068 = vpack.c.b16 %v3057, %v3056
        %v3069 = vpack.c.b16 %v3059, %v3058
        %v3070 = vpack.c.b16 %v3061, %v3060
        %v3071 = vpack.c.b16 %v3063, %v3062
        %3080 = vmatprep.subr.bf16.mxu0 0
        %3081 = vmatpush1.bf16.msra.mxu0 %v3064
        %3082 = vmatprep.subr.bf16.mxu0 0
        %3083 = vmatpush1.bf16.msra.mxu0 %v3065
        %3084 = vmatprep.subr.bf16.mxu0 0
        %3085 = vmatpush1.bf16.msra.mxu0 %v3066
        %3086 = vmatprep.subr.bf16.mxu0 0
        %3087 = vmatpush1.bf16.msra.mxu0 %v3067
        %3088 = vmatprep.subr.bf16.mxu0 0
        %3089 = vmatpush1.bf16.msra.mxu0 %v3068
        %3090 = vmatprep.subr.bf16.mxu0 0
        %3091 = vmatpush1.bf16.msra.mxu0 %v3069
        %3092 = vmatprep.subr.bf16.mxu0 0
        %3093 = vmatpush1.bf16.msra.mxu0 %v3070
        %3094 = vmatprep.subr.bf16.mxu0 0
        %3095 = vmatpush1.bf16.msra.mxu0 %v3071
        %3096 = vmatprep.subr.bf16.mxu0 0
        %3097 = vmatpush1.bf16.msra.mxu0 0
        %3098 = vmatprep.subr.bf16.mxu0 0
        %3099 = vmatpush1.bf16.msra.mxu0 0
        %3100 = vmatprep.subr.bf16.mxu0 0
        %3101 = vmatpush1.bf16.msra.mxu0 0
        %3102 = vmatprep.subr.bf16.mxu0 0
        %3103 = vmatpush1.bf16.msra.mxu0 0
        %3104 = vmatprep.subr.bf16.mxu0 0
        %3105 = vmatpush1.bf16.msra.mxu0 0
        %3106 = vmatprep.subr.bf16.mxu0 0
        %3107 = vmatpush1.bf16.msra.mxu0 0
        %3108 = vmatprep.subr.bf16.mxu0 0
        %3109 = vmatpush1.bf16.msra.mxu0 0
        %3110 = vmatprep.subr.bf16.mxu0 0
        %3111 = vmatpush1.bf16.msra.mxu0 0
        %3112 = vmatprep.mubr.bf16.mxu0 0
        %3113 = vmatmul.mubr.bf16.gmra.mrb[0].mxu0 %v2962
        %v3114 = vpop.f32.mrb[0].mxu0
        %v3115 = vadd.f32 %v3030, %v3114
        %v3116 = vpop.f32.mrb[0].mxu0
        %v3117 = vpop.f32.mrb[0].mxu0
        %v3118 = vadd.f32 %v3030, %v3117
        %v3119 = vpop.f32.mrb[0].mxu0
        %3120 = vmatprep.mubr.bf16.mxu0 0
        %3121 = vmatmul.mubr.bf16.gmra.mrb[0].mxu0 %v2963
        %v3122 = vpop.f32.mrb[0].mxu0
        %v3123 = vadd.f32 %v3030, %v3122
        %v3124 = vpop.f32.mrb[0].mxu0
        %v3125 = vpop.f32.mrb[0].mxu0
        %v3126 = vadd.f32 %v3030, %v3125
        %v3127 = vpop.f32.mrb[0].mxu0
        %3128 = vmatprep.mubr.bf16.mxu0 0
        %3129 = vmatmul.mubr.bf16.gmra.mrb[0].mxu0 %v2964
        %v3130 = vpop.f32.mrb[0].mxu0
        %v3131 = vadd.f32 %v3030, %v3130
        %v3132 = vpop.f32.mrb[0].mxu0
        %v3133 = vpop.f32.mrb[0].mxu0
        %v3134 = vadd.f32 %v3030, %v3133
        %v3135 = vpop.f32.mrb[0].mxu0
        %3136 = vmatprep.mubr.bf16.mxu0 0
        %3137 = vmatmul.mubr.bf16.gmra.mrb[0].mxu0 %v2965
        %v3138 = vpop.f32.mrb[0].mxu0
        %v3139 = vadd.f32 %v3030, %v3138
        %v3140 = vpop.f32.mrb[0].mxu0
        %v3141 = vpop.f32.mrb[0].mxu0
        %v3142 = vadd.f32 %v3030, %v3141
        %v3143 = vpop.f32.mrb[0].mxu0
        %3144 = vmatprep.mubr.bf16.mxu0 0
        %3145 = vmatmul.mubr.bf16.gmra.mrb[0].mxu0 %v2966
        %v3146 = vpop.f32.mrb[0].mxu0
        %v3147 = vadd.f32 %v3030, %v3146
        %v3148 = vpop.f32.mrb[0].mxu0
        %v3149 = vpop.f32.mrb[0].mxu0
        %v3150 = vadd.f32 %v3030, %v3149
        %v3151 = vpop.f32.mrb[0].mxu0
        %3152 = vmatprep.mubr.bf16.mxu0 0
        %3153 = vmatmul.mubr.bf16.gmra.mrb[0].mxu0 %v2967
        %v3154 = vpop.f32.mrb[0].mxu0
        %v3155 = vadd.f32 %v3030, %v3154
        %v3156 = vpop.f32.mrb[0].mxu0
        %v3157 = vpop.f32.mrb[0].mxu0
        %v3158 = vadd.f32 %v3030, %v3157
        %v3159 = vpop.f32.mrb[0].mxu0
        %3160 = vmatprep.mubr.bf16.mxu0 0
        %3161 = vmatmul.mubr.bf16.gmra.mrb[0].mxu0 %v2968
        %v3162 = vpop.f32.mrb[0].mxu0
        %v3163 = vadd.f32 %v3030, %v3162
        %v3164 = vpop.f32.mrb[0].mxu0
        %v3165 = vpop.f32.mrb[0].mxu0
        %v3166 = vadd.f32 %v3030, %v3165
        %v3167 = vpop.f32.mrb[0].mxu0
        %3168 = vmatprep.mubr.bf16.mxu0 0
        %3169 = vmatmul.mubr.bf16.gmra.mrb[0].mxu0 %v2969
        %v3170 = vpop.f32.mrb[0].mxu0
        %v3171 = vadd.f32 %v3030, %v3170
        %v3172 = vpop.f32.mrb[0].mxu0
        %v3173 = vpop.f32.mrb[0].mxu0
        %v3174 = vadd.f32 %v3030, %v3173
        %v3175 = vpop.f32.mrb[0].mxu0
        %3176 = vmatprep.mubr.bf16.mxu0 0
        %3177 = vmatmul.mubr.bf16.gmra.mrb[0].mxu0 %v2970
        %v3178 = vpop.f32.mrb[0].mxu0
        %v3179 = vadd.f32 %v3030, %v3178
        %v3180 = vpop.f32.mrb[0].mxu0
        %v3181 = vpop.f32.mrb[0].mxu0
        %v3182 = vadd.f32 %v3030, %v3181
        %v3183 = vpop.f32.mrb[0].mxu0
        %3184 = vmatprep.mubr.bf16.mxu0 0
        %3185 = vmatmul.mubr.bf16.gmra.mrb[0].mxu0 %v2971
        %v3186 = vpop.f32.mrb[0].mxu0
        %v3187 = vadd.f32 %v3030, %v3186
        %v3188 = vpop.f32.mrb[0].mxu0
        %v3189 = vpop.f32.mrb[0].mxu0
        %v3190 = vadd.f32 %v3030, %v3189
        %v3191 = vpop.f32.mrb[0].mxu0
        %3192 = vmatprep.mubr.bf16.mxu0 0
        %3193 = vmatmul.mubr.bf16.gmra.mrb[0].mxu0 %v2972
        %v3194 = vpop.f32.mrb[0].mxu0
        %v3195 = vadd.f32 %v3030, %v3194
        %v3196 = vpop.f32.mrb[0].mxu0
        %v3197 = vpop.f32.mrb[0].mxu0
        %v3198 = vadd.f32 %v3030, %v3197
        %v3199 = vpop.f32.mrb[0].mxu0
        %3200 = vmatprep.mubr.bf16.mxu0 0
        %3201 = vmatmul.mubr.bf16.gmra.mrb[0].mxu0 %v2973
        %v3202 = vpop.f32.mrb[0].mxu0
        %v3203 = vadd.f32 %v3030, %v3202
        %v3204 = vpop.f32.mrb[0].mxu0
        %v3205 = vpop.f32.mrb[0].mxu0
        %v3206 = vadd.f32 %v3030, %v3205
        %v3207 = vpop.f32.mrb[0].mxu0
        %3208 = vmatprep.mubr.bf16.mxu0 0
        %3209 = vmatmul.mubr.bf16.gmra.mrb[0].mxu0 %v2974
        %v3210 = vpop.f32.mrb[0].mxu0
        %v3211 = vadd.f32 %v3030, %v3210
        %v3212 = vpop.f32.mrb[0].mxu0
        %v3213 = vpop.f32.mrb[0].mxu0
        %v3214 = vadd.f32 %v3030, %v3213
        %v3215 = vpop.f32.mrb[0].mxu0
        %3216 = vmatprep.mubr.bf16.mxu0 0
        %3217 = vmatmul.mubr.bf16.gmra.mrb[0].mxu0 %v2975
        %v3218 = vpop.f32.mrb[0].mxu0
        %v3219 = vadd.f32 %v3030, %v3218
        %v3220 = vpop.f32.mrb[0].mxu0
        %v3221 = vpop.f32.mrb[0].mxu0
        %v3222 = vadd.f32 %v3030, %v3221
        %v3223 = vpop.f32.mrb[0].mxu0
        %3224 = vmatprep.mubr.bf16.mxu0 0
        %3225 = vmatmul.mubr.bf16.gmra.mrb[0].mxu0 %v2976
        %v3226 = vpop.f32.mrb[0].mxu0
        %v3227 = vadd.f32 %v3030, %v3226
        %v3228 = vpop.f32.mrb[0].mxu0
        %v3229 = vpop.f32.mrb[0].mxu0
        %v3230 = vadd.f32 %v3030, %v3229
        %v3231 = vpop.f32.mrb[0].mxu0
        %3232 = vmatprep.mubr.bf16.mxu0 0
        %3233 = vmatmul.mubr.bf16.gmra.mrb[0].mxu0 %v2977
        %v3234 = vpop.f32.mrb[0].mxu0
        %v3235 = vadd.f32 %v3030, %v3234
        %v3236 = vpop.f32.mrb[0].mxu0
        %v3237 = vpop.f32.mrb[0].mxu0
        %v3238 = vadd.f32 %v3030, %v3237
        %v3239 = vpop.f32.mrb[0].mxu0
        %3240 = vmatprep.mubr.bf16.mxu0 0
        %3241 = vmatmul.mubr.bf16.gmra.mrb[0].mxu0 %v2978
        %v3242 = vpop.f32.mrb[0].mxu0
        %v3243 = vadd.f32 %v3030, %v3242
        %v3244 = vpop.f32.mrb[0].mxu0
        %v3245 = vpop.f32.mrb[0].mxu0
        %v3246 = vadd.f32 %v3030, %v3245
        %v3247 = vpop.f32.mrb[0].mxu0
        %3248 = vmatprep.mubr.bf16.mxu0 0
        %3249 = vmatmul.mubr.bf16.gmra.mrb[0].mxu0 %v2979
        %v3250 = vpop.f32.mrb[0].mxu0
        %v3251 = vadd.f32 %v3030, %v3250
        %v3252 = vpop.f32.mrb[0].mxu0
        %v3253 = vpop.f32.mrb[0].mxu0
        %v3254 = vadd.f32 %v3030, %v3253
        %v3255 = vpop.f32.mrb[0].mxu0
        %3256 = vmatprep.mubr.bf16.mxu0 0
        %3257 = vmatmul.mubr.bf16.gmra.mrb[0].mxu0 %v2980
        %v3258 = vpop.f32.mrb[0].mxu0
        %v3259 = vadd.f32 %v3030, %v3258
        %v3260 = vpop.f32.mrb[0].mxu0
        %v3261 = vpop.f32.mrb[0].mxu0
        %v3262 = vadd.f32 %v3030, %v3261
        %v3263 = vpop.f32.mrb[0].mxu0
        %3264 = vmatprep.mubr.bf16.mxu0 0
        %3265 = vmatmul.mubr.bf16.gmra.mrb[0].mxu0 %v2981
        %v3266 = vpop.f32.mrb[0].mxu0
        %v3267 = vadd.f32 %v3030, %v3266
        %v3268 = vpop.f32.mrb[0].mxu0
        %v3269 = vpop.f32.mrb[0].mxu0
        %v3270 = vadd.f32 %v3030, %v3269
        %v3271 = vpop.f32.mrb[0].mxu0
        %3272 = vmatprep.mubr.bf16.mxu0 0
        %3273 = vmatmul.mubr.bf16.gmra.mrb[0].mxu0 %v2982
        %v3274 = vpop.f32.mrb[0].mxu0
        %v3275 = vadd.f32 %v3030, %v3274
        %v3276 = vpop.f32.mrb[0].mxu0
        %v3277 = vpop.f32.mrb[0].mxu0
        %v3278 = vadd.f32 %v3030, %v3277
        %v3279 = vpop.f32.mrb[0].mxu0
        %3280 = vmatprep.mubr.bf16.mxu0 0
        %3281 = vmatmul.mubr.bf16.gmra.mrb[0].mxu0 %v2983
        %v3282 = vpop.f32.mrb[0].mxu0
        %v3283 = vadd.f32 %v3030, %v3282
        %v3284 = vpop.f32.mrb[0].mxu0
        %v3285 = vpop.f32.mrb[0].mxu0
        %v3286 = vadd.f32 %v3030, %v3285
        %v3287 = vpop.f32.mrb[0].mxu0
        %3288 = vmatprep.mubr.bf16.mxu0 0
        %3289 = vmatmul.mubr.bf16.gmra.mrb[0].mxu0 %v2984
        %v3290 = vpop.f32.mrb[0].mxu0
        %v3291 = vadd.f32 %v3030, %v3290
        %v3292 = vpop.f32.mrb[0].mxu0
        %v3293 = vpop.f32.mrb[0].mxu0
        %v3294 = vadd.f32 %v3030, %v3293
        %v3295 = vpop.f32.mrb[0].mxu0
        %3296 = vmatprep.mubr.bf16.mxu0 0
        %3297 = vmatmul.mubr.bf16.gmra.mrb[0].mxu0 %v2985
        %v3298 = vpop.f32.mrb[0].mxu0
        %v3299 = vadd.f32 %v3030, %v3298
        %v3300 = vpop.f32.mrb[0].mxu0
        %v3301 = vpop.f32.mrb[0].mxu0
        %v3302 = vadd.f32 %v3030, %v3301
        %v3303 = vpop.f32.mrb[0].mxu0
        %3304 = vmatprep.mubr.bf16.mxu0 0
        %3305 = vmatmul.mubr.bf16.gmra.mrb[0].mxu0 %v2986
        %v3306 = vpop.f32.mrb[0].mxu0
        %v3307 = vadd.f32 %v3030, %v3306
        %v3308 = vpop.f32.mrb[0].mxu0
        %v3309 = vpop.f32.mrb[0].mxu0
        %v3310 = vadd.f32 %v3030, %v3309
        %v3311 = vpop.f32.mrb[0].mxu0
        %3312 = vmatprep.mubr.bf16.mxu0 0
        %3313 = vmatmul.mubr.bf16.gmra.mrb[0].mxu0 %v2987
        %v3314 = vpop.f32.mrb[0].mxu0
        %v3315 = vadd.f32 %v3030, %v3314
        %v3316 = vpop.f32.mrb[0].mxu0
        %v3317 = vpop.f32.mrb[0].mxu0
        %v3318 = vadd.f32 %v3030, %v3317
        %v3319 = vpop.f32.mrb[0].mxu0
        %3320 = vmatprep.mubr.bf16.mxu0 0
        %3321 = vmatmul.mubr.bf16.gmra.mrb[0].mxu0 %v2988
        %v3322 = vpop.f32.mrb[0].mxu0
        %v3323 = vadd.f32 %v3030, %v3322
        %v3324 = vpop.f32.mrb[0].mxu0
        %v3325 = vpop.f32.mrb[0].mxu0
        %v3326 = vadd.f32 %v3030, %v3325
        %v3327 = vpop.f32.mrb[0].mxu0
        %3328 = vmatprep.mubr.bf16.mxu0 0
        %3329 = vmatmul.mubr.bf16.gmra.mrb[0].mxu0 %v2989
        %v3330 = vpop.f32.mrb[0].mxu0
        %v3331 = vadd.f32 %v3030, %v3330
        %v3332 = vpop.f32.mrb[0].mxu0
        %v3333 = vpop.f32.mrb[0].mxu0
        %v3334 = vadd.f32 %v3030, %v3333
        %v3335 = vpop.f32.mrb[0].mxu0
        %3336 = vmatprep.mubr.bf16.mxu0 0
        %3337 = vmatmul.mubr.bf16.gmra.mrb[0].mxu0 %v2990
        %v3338 = vpop.f32.mrb[0].mxu0
        %v3339 = vadd.f32 %v3030, %v3338
        %v3340 = vpop.f32.mrb[0].mxu0
        %v3341 = vpop.f32.mrb[0].mxu0
        %v3342 = vadd.f32 %v3030, %v3341
        %v3343 = vpop.f32.mrb[0].mxu0
        %3344 = vmatprep.mubr.bf16.mxu0 0
        %3345 = vmatmul.mubr.bf16.gmra.mrb[0].mxu0 %v2991
        %v3346 = vpop.f32.mrb[0].mxu0
        %v3347 = vadd.f32 %v3030, %v3346
        %v3348 = vpop.f32.mrb[0].mxu0
        %v3349 = vpop.f32.mrb[0].mxu0
        %v3350 = vadd.f32 %v3030, %v3349
        %v3351 = vpop.f32.mrb[0].mxu0
        %3352 = vmatprep.mubr.bf16.mxu0 0
        %3353 = vmatmul.mubr.bf16.gmra.mrb[0].mxu0 %v2992
        %v3354 = vpop.f32.mrb[0].mxu0
        %v3355 = vadd.f32 %v3030, %v3354
        %v3356 = vpop.f32.mrb[0].mxu0
        %v3357 = vpop.f32.mrb[0].mxu0
        %v3358 = vadd.f32 %v3030, %v3357
        %v3359 = vpop.f32.mrb[0].mxu0
        %3360 = vmatprep.mubr.bf16.mxu0 0
        %3361 = vmatmul.mubr.bf16.gmra.mrb[0].mxu0 %v2993
        %v3362 = vpop.f32.mrb[0].mxu0
        %v3363 = vadd.f32 %v3030, %v3362
        %v3364 = vpop.f32.mrb[0].mxu0
        %v3365 = vpop.f32.mrb[0].mxu0
        %v3366 = vadd.f32 %v3030, %v3365
        %v3367 = vpop.f32.mrb[0].mxu0
        %3368 = vmatprep.mubr.bf16.mxu0 0
        %3369 = vmatmul.mubr.bf16.gmra.mrb[0].mxu0 %v2994
        %v3370 = vpop.f32.mrb[0].mxu0
        %v3371 = vadd.f32 %v3030, %v3370
        %v3372 = vpop.f32.mrb[0].mxu0
        %v3373 = vpop.f32.mrb[0].mxu0
        %v3374 = vadd.f32 %v3030, %v3373
        %v3375 = vpop.f32.mrb[0].mxu0
        %3376 = vmatprep.mubr.bf16.mxu0 0
        %3377 = vmatmul.mubr.bf16.gmra.mrb[0].mxu0 %v2995
        %v3378 = vpop.f32.mrb[0].mxu0
        %v3379 = vadd.f32 %v3030, %v3378
        %v3380 = vpop.f32.mrb[0].mxu0
        %v3381 = vpop.f32.mrb[0].mxu0
        %v3382 = vadd.f32 %v3030, %v3381
        %v3383 = vpop.f32.mrb[0].mxu0
        %3384 = vmatprep.mubr.bf16.mxu0 0
        %3385 = vmatmul.mubr.bf16.gmra.mrb[0].mxu0 %v2996
        %v3386 = vpop.f32.mrb[0].mxu0
        %v3387 = vadd.f32 %v3030, %v3386
        %v3388 = vpop.f32.mrb[0].mxu0
        %v3389 = vpop.f32.mrb[0].mxu0
        %v3390 = vadd.f32 %v3030, %v3389
        %v3391 = vpop.f32.mrb[0].mxu0
        %3392 = vmatprep.mubr.bf16.mxu0 0
        %3393 = vmatmul.mubr.bf16.gmra.mrb[0].mxu0 %v2997
        %v3394 = vpop.f32.mrb[0].mxu0
        %v3395 = vadd.f32 %v3030, %v3394
        %v3396 = vpop.f32.mrb[0].mxu0
        %v3397 = vpop.f32.mrb[0].mxu0
        %v3398 = vadd.f32 %v3030, %v3397
        %v3399 = vpop.f32.mrb[0].mxu0
        %3400 = vmatprep.mubr.bf16.mxu0 0
        %3401 = vmatmul.mubr.bf16.gmra.mrb[0].mxu0 %v2998
        %v3402 = vpop.f32.mrb[0].mxu0
        %v3403 = vadd.f32 %v3030, %v3402
        %v3404 = vpop.f32.mrb[0].mxu0
        %v3405 = vpop.f32.mrb[0].mxu0
        %v3406 = vadd.f32 %v3030, %v3405
        %v3407 = vpop.f32.mrb[0].mxu0
        %3408 = vmatprep.mubr.bf16.mxu0 0
        %3409 = vmatmul.mubr.bf16.gmra.mrb[0].mxu0 %v2999
        %v3410 = vpop.f32.mrb[0].mxu0
        %v3411 = vadd.f32 %v3030, %v3410
        %v3412 = vpop.f32.mrb[0].mxu0
        %v3413 = vpop.f32.mrb[0].mxu0
        %v3414 = vadd.f32 %v3030, %v3413
        %v3415 = vpop.f32.mrb[0].mxu0
        %3416 = vmatprep.mubr.bf16.mxu0 0
        %3417 = vmatmul.mubr.bf16.gmra.mrb[0].mxu0 %v3000
        %v3418 = vpop.f32.mrb[0].mxu0
        %v3419 = vadd.f32 %v3030, %v3418
        %v3420 = vpop.f32.mrb[0].mxu0
        %v3421 = vpop.f32.mrb[0].mxu0
        %v3422 = vadd.f32 %v3030, %v3421
        %v3423 = vpop.f32.mrb[0].mxu0
        %3424 = vmatprep.mubr.bf16.mxu0 0
        %3425 = vmatmul.mubr.bf16.gmra.mrb[0].mxu0 %v3001
        %v3426 = vpop.f32.mrb[0].mxu0
        %v3427 = vadd.f32 %v3030, %v3426
        %v3428 = vpop.f32.mrb[0].mxu0
        %v3429 = vpop.f32.mrb[0].mxu0
        %v3430 = vadd.f32 %v3030, %v3429
        %v3431 = vpop.f32.mrb[0].mxu0
        %3432 = vmatprep.mubr.bf16.mxu0 0
        %3433 = vmatmul.mubr.bf16.gmra.mrb[0].mxu0 %v3002
        %v3434 = vpop.f32.mrb[0].mxu0
        %v3435 = vadd.f32 %v3030, %v3434
        %v3436 = vpop.f32.mrb[0].mxu0
        %v3437 = vpop.f32.mrb[0].mxu0
        %v3438 = vadd.f32 %v3030, %v3437
        %v3439 = vpop.f32.mrb[0].mxu0
        %3440 = vmatprep.mubr.bf16.mxu0 0
        %3441 = vmatmul.mubr.bf16.gmra.mrb[0].mxu0 %v3003
        %v3442 = vpop.f32.mrb[0].mxu0
        %v3443 = vadd.f32 %v3030, %v3442
        %v3444 = vpop.f32.mrb[0].mxu0
        %v3445 = vpop.f32.mrb[0].mxu0
        %v3446 = vadd.f32 %v3030, %v3445
        %v3447 = vpop.f32.mrb[0].mxu0
        %3448 = vmatprep.mubr.bf16.mxu0 0
        %3449 = vmatmul.mubr.bf16.gmra.mrb[0].mxu0 %v3004
        %v3450 = vpop.f32.mrb[0].mxu0
        %v3451 = vadd.f32 %v3030, %v3450
        %v3452 = vpop.f32.mrb[0].mxu0
        %v3453 = vpop.f32.mrb[0].mxu0
        %v3454 = vadd.f32 %v3030, %v3453
        %v3455 = vpop.f32.mrb[0].mxu0
        %3456 = vmatprep.mubr.bf16.mxu0 0
        %3457 = vmatmul.mubr.bf16.gmra.mrb[0].mxu0 %v3005
        %v3458 = vpop.f32.mrb[0].mxu0
        %v3459 = vadd.f32 %v3030, %v3458
        %v3460 = vpop.f32.mrb[0].mxu0
        %v3461 = vpop.f32.mrb[0].mxu0
        %v3462 = vadd.f32 %v3030, %v3461
        %v3463 = vpop.f32.mrb[0].mxu0
        %3464 = vmatprep.mubr.bf16.mxu0 0
        %3465 = vmatmul.mubr.bf16.gmra.mrb[0].mxu0 %v3006
        %v3466 = vpop.f32.mrb[0].mxu0
        %v3467 = vadd.f32 %v3030, %v3466
        %v3468 = vpop.f32.mrb[0].mxu0
        %v3469 = vpop.f32.mrb[0].mxu0
        %v3470 = vadd.f32 %v3030, %v3469
        %v3471 = vpop.f32.mrb[0].mxu0
        %3472 = vmatprep.mubr.bf16.mxu0 0
        %3473 = vmatmul.mubr.bf16.gmra.mrb[0].mxu0 %v3007
        %v3474 = vpop.f32.mrb[0].mxu0
        %v3475 = vadd.f32 %v3030, %v3474
        %v3476 = vpop.f32.mrb[0].mxu0
        %v3477 = vpop.f32.mrb[0].mxu0
        %v3478 = vadd.f32 %v3030, %v3477
        %v3479 = vpop.f32.mrb[0].mxu0
        %3480 = vmatprep.mubr.bf16.mxu0 0
        %3481 = vmatmul.mubr.bf16.gmra.mrb[0].mxu0 %v3008
        %v3482 = vpop.f32.mrb[0].mxu0
        %v3483 = vadd.f32 %v3030, %v3482
        %v3484 = vpop.f32.mrb[0].mxu0
        %v3485 = vpop.f32.mrb[0].mxu0
        %v3486 = vadd.f32 %v3030, %v3485
        %v3487 = vpop.f32.mrb[0].mxu0
        %3488 = vmatprep.mubr.bf16.mxu0 0
        %3489 = vmatmul.mubr.bf16.gmra.mrb[0].mxu0 %v3009
        %v3490 = vpop.f32.mrb[0].mxu0
        %v3491 = vadd.f32 %v3030, %v3490
        %v3492 = vpop.f32.mrb[0].mxu0
        %v3493 = vpop.f32.mrb[0].mxu0
        %v3494 = vadd.f32 %v3030, %v3493
        %v3495 = vpop.f32.mrb[0].mxu0
        %3496 = vmatprep.mubr.bf16.mxu0 0
        %3497 = vmatmul.mubr.bf16.gmra.mrb[0].mxu0 %v3010
        %v3498 = vpop.f32.mrb[0].mxu0
        %v3499 = vadd.f32 %v3030, %v3498
        %v3500 = vpop.f32.mrb[0].mxu0
        %v3501 = vpop.f32.mrb[0].mxu0
        %v3502 = vadd.f32 %v3030, %v3501
        %v3503 = vpop.f32.mrb[0].mxu0
        %3504 = vmatprep.mubr.bf16.mxu0 0
        %3505 = vmatmul.mubr.bf16.gmra.mrb[0].mxu0 %v3011
        %v3506 = vpop.f32.mrb[0].mxu0
        %v3507 = vadd.f32 %v3030, %v3506
        %v3508 = vpop.f32.mrb[0].mxu0
        %v3509 = vpop.f32.mrb[0].mxu0
        %v3510 = vadd.f32 %v3030, %v3509
        %v3511 = vpop.f32.mrb[0].mxu0
        %3512 = vmatprep.mubr.bf16.mxu0 0
        %3513 = vmatmul.mubr.bf16.gmra.mrb[0].mxu0 %v3012
        %v3514 = vpop.f32.mrb[0].mxu0
        %v3515 = vadd.f32 %v3030, %v3514
        %v3516 = vpop.f32.mrb[0].mxu0
        %v3517 = vpop.f32.mrb[0].mxu0
        %v3518 = vadd.f32 %v3030, %v3517
        %v3519 = vpop.f32.mrb[0].mxu0
        %3520 = vmatprep.mubr.bf16.mxu0 0
        %3521 = vmatmul.mubr.bf16.gmra.mrb[0].mxu0 %v3013
        %v3522 = vpop.f32.mrb[0].mxu0
        %v3523 = vadd.f32 %v3030, %v3522
        %v3524 = vpop.f32.mrb[0].mxu0
        %v3525 = vpop.f32.mrb[0].mxu0
        %v3526 = vadd.f32 %v3030, %v3525
        %v3527 = vpop.f32.mrb[0].mxu0
        %3528 = vmatprep.mubr.bf16.mxu0 0
        %3529 = vmatmul.mubr.bf16.gmra.mrb[0].mxu0 %v3014
        %v3530 = vpop.f32.mrb[0].mxu0
        %v3531 = vadd.f32 %v3030, %v3530
        %v3532 = vpop.f32.mrb[0].mxu0
        %v3533 = vpop.f32.mrb[0].mxu0
        %v3534 = vadd.f32 %v3030, %v3533
        %v3535 = vpop.f32.mrb[0].mxu0
        %3536 = vmatprep.mubr.bf16.mxu0 0
        %3537 = vmatmul.mubr.bf16.gmra.mrb[0].mxu0 %v3015
        %v3538 = vpop.f32.mrb[0].mxu0
        %v3539 = vadd.f32 %v3030, %v3538
        %v3540 = vpop.f32.mrb[0].mxu0
        %v3541 = vpop.f32.mrb[0].mxu0
        %v3542 = vadd.f32 %v3030, %v3541
        %v3543 = vpop.f32.mrb[0].mxu0
        %3544 = vmatprep.mubr.bf16.mxu0 0
        %3545 = vmatmul.mubr.bf16.gmra.mrb[0].mxu0 %v3016
        %v3546 = vpop.f32.mrb[0].mxu0
        %v3547 = vadd.f32 %v3030, %v3546
        %v3548 = vpop.f32.mrb[0].mxu0
        %v3549 = vpop.f32.mrb[0].mxu0
        %v3550 = vadd.f32 %v3030, %v3549
        %v3551 = vpop.f32.mrb[0].mxu0
        %3552 = vmatprep.mubr.bf16.mxu0 0
        %3553 = vmatmul.mubr.bf16.gmra.mrb[0].mxu0 %v3017
        %v3554 = vpop.f32.mrb[0].mxu0
        %v3555 = vadd.f32 %v3030, %v3554
        %v3556 = vpop.f32.mrb[0].mxu0
        %v3557 = vpop.f32.mrb[0].mxu0
        %v3558 = vadd.f32 %v3030, %v3557
        %v3559 = vpop.f32.mrb[0].mxu0
        %3560 = vmatprep.mubr.bf16.mxu0 0
        %3561 = vmatmul.mubr.bf16.gmra.mrb[0].mxu0 %v3018
        %v3562 = vpop.f32.mrb[0].mxu0
        %v3563 = vadd.f32 %v3030, %v3562
        %v3564 = vpop.f32.mrb[0].mxu0
        %v3565 = vpop.f32.mrb[0].mxu0
        %v3566 = vadd.f32 %v3030, %v3565
        %v3567 = vpop.f32.mrb[0].mxu0
        %3568 = vmatprep.mubr.bf16.mxu0 0
        %3569 = vmatmul.mubr.bf16.gmra.mrb[0].mxu0 %v3019
        %v3570 = vpop.f32.mrb[0].mxu0
        %v3571 = vadd.f32 %v3030, %v3570
        %v3572 = vpop.f32.mrb[0].mxu0
        %v3573 = vpop.f32.mrb[0].mxu0
        %v3574 = vadd.f32 %v3030, %v3573
        %v3575 = vpop.f32.mrb[0].mxu0
        %3576 = vmatprep.mubr.bf16.mxu0 0
        %3577 = vmatmul.mubr.bf16.gmra.mrb[0].mxu0 %v3020
        %v3578 = vpop.f32.mrb[0].mxu0
        %v3579 = vadd.f32 %v3030, %v3578
        %v3580 = vpop.f32.mrb[0].mxu0
        %v3581 = vpop.f32.mrb[0].mxu0
        %v3582 = vadd.f32 %v3030, %v3581
        %v3583 = vpop.f32.mrb[0].mxu0
        %3584 = vmatprep.mubr.bf16.mxu0 0
        %3585 = vmatmul.mubr.bf16.gmra.mrb[0].mxu0 %v3021
        %v3586 = vpop.f32.mrb[0].mxu0
        %v3587 = vadd.f32 %v3030, %v3586
        %v3588 = vpop.f32.mrb[0].mxu0
        %v3589 = vpop.f32.mrb[0].mxu0
        %v3590 = vadd.f32 %v3030, %v3589
        %v3591 = vpop.f32.mrb[0].mxu0
        %3592 = vmatprep.mubr.bf16.mxu0 0
        %3593 = vmatmul.mubr.bf16.gmra.mrb[0].mxu0 %v3022
        %v3594 = vpop.f32.mrb[0].mxu0
        %v3595 = vadd.f32 %v3030, %v3594
        %v3596 = vpop.f32.mrb[0].mxu0
        %v3597 = vpop.f32.mrb[0].mxu0
        %v3598 = vadd.f32 %v3030, %v3597
        %v3599 = vpop.f32.mrb[0].mxu0
        %3600 = vmatprep.mubr.bf16.mxu0 0
        %3601 = vmatmul.mubr.bf16.gmra.mrb[0].mxu0 %v3023
        %v3602 = vpop.f32.mrb[0].mxu0
        %v3603 = vadd.f32 %v3030, %v3602
        %v3604 = vpop.f32.mrb[0].mxu0
        %v3605 = vpop.f32.mrb[0].mxu0
        %v3606 = vadd.f32 %v3030, %v3605
        %v3607 = vpop.f32.mrb[0].mxu0
        %3608 = vmatprep.mubr.bf16.mxu0 0
        %3609 = vmatmul.mubr.bf16.gmra.mrb[0].mxu0 %v3024
        %v3610 = vpop.f32.mrb[0].mxu0
        %v3611 = vadd.f32 %v3030, %v3610
        %v3612 = vpop.f32.mrb[0].mxu0
        %v3613 = vpop.f32.mrb[0].mxu0
        %v3614 = vadd.f32 %v3030, %v3613
        %v3615 = vpop.f32.mrb[0].mxu0
        %3616 = vmatprep.mubr.bf16.mxu0 0
        %3617 = vmatmul.mubr.bf16.gmra.mrb[0].mxu0 %v3025
        %v3618 = vpop.f32.mrb[0].mxu0
        %v3619 = vadd.f32 %v3030, %v3618
        %v3620 = vpop.f32.mrb[0].mxu0
        %v3621 = vpop.f32.mrb[0].mxu0
        %v3622 = vadd.f32 %v3030, %v3621
        %v3623 = vpop.f32.mrb[0].mxu0
        %3624 = vdwg.mxu0
        %v3625 = vld [vmem:[%s872] sm:$0xff]
        %v3626 = vld [vmem:[%s872 + $0x8] sm:$0xff]
        %v3627 = vld [vmem:[%s872 + $0x10] sm:$0xff]
        %v3628 = vld [vmem:[%s872 + $0x18] sm:$0xff]
        %v3629 = vld [vmem:[%s872 + $0x20] sm:$0xff]
        %v3630 = vld [vmem:[%s872 + $0x28] sm:$0xff]
        %v3631 = vld [vmem:[%s872 + $0x30] sm:$0xff]
        %v3632 = vld [vmem:[%s872 + $0x38] sm:$0xff]
        %v3633 = vld [vmem:[%s872 + $0x40] sm:$0xff]
        %v3634 = vld [vmem:[%s872 + $0x48] sm:$0xff]
        %v3635 = vld [vmem:[%s872 + $0x50] sm:$0xff]
        %v3636 = vld [vmem:[%s872 + $0x58] sm:$0xff]
        %v3637 = vld [vmem:[%s872 + $0x60] sm:$0xff]
        %v3638 = vld [vmem:[%s872 + $0x68] sm:$0xff]
        %v3639 = vld [vmem:[%s872 + $0x70] sm:$0xff]
        %v3640 = vld [vmem:[%s872 + $0x78] sm:$0xff]
        %v3641 = vld [vmem:[%s872 + $0x80] sm:$0xff]
        %v3642 = vld [vmem:[%s872 + $0x88] sm:$0xff]
        %v3643 = vld [vmem:[%s872 + $0x90] sm:$0xff]
        %v3644 = vld [vmem:[%s872 + $0x98] sm:$0xff]
        %v3645 = vld [vmem:[%s872 + $0xa0] sm:$0xff]
        %v3646 = vld [vmem:[%s872 + $0xa8] sm:$0xff]
        %v3647 = vld [vmem:[%s872 + $0xb0] sm:$0xff]
        %v3648 = vld [vmem:[%s872 + $0xb8] sm:$0xff]
        %v3649 = vld [vmem:[%s872 + $0xc0] sm:$0xff]
        %v3650 = vld [vmem:[%s872 + $0xc8] sm:$0xff]
        %v3651 = vld [vmem:[%s872 + $0xd0] sm:$0xff]
        %v3652 = vld [vmem:[%s872 + $0xd8] sm:$0xff]
        %v3653 = vld [vmem:[%s872 + $0xe0] sm:$0xff]
        %v3654 = vld [vmem:[%s872 + $0xe8] sm:$0xff]
        %v3655 = vld [vmem:[%s872 + $0xf0] sm:$0xff]
        %v3656 = vld [vmem:[%s872 + $0xf8] sm:$0xff]
        %3658 = vset.pattern.permute.xlu0 0
        %3659 = vperm.xlu0 %3658, %v3625
        %v3660 = vpop.permute.xlu0 %3659
        %3663 = vset.pattern.permute.xlu0 0
        %3664 = vperm.xlu0 %3663, %v3626
        %v3665 = vpop.permute.xlu0 %3664
        %3668 = vset.pattern.permute.xlu0 0
        %3669 = vperm.xlu0 %3668, %v3627
        %v3670 = vpop.permute.xlu0 %3669
        %3673 = vset.pattern.permute.xlu0 0
        %3674 = vperm.xlu0 %3673, %v3628
        %v3675 = vpop.permute.xlu0 %3674
        %3678 = vset.pattern.permute.xlu0 0
        %3679 = vperm.xlu0 %3678, %v3629
        %v3680 = vpop.permute.xlu0 %3679
        %3683 = vset.pattern.permute.xlu0 0
        %3684 = vperm.xlu0 %3683, %v3630
        %v3685 = vpop.permute.xlu0 %3684
        %3688 = vset.pattern.permute.xlu0 0
        %3689 = vperm.xlu0 %3688, %v3631
        %v3690 = vpop.permute.xlu0 %3689
        %3693 = vset.pattern.permute.xlu0 0
        %3694 = vperm.xlu0 %3693, %v3632
        %v3695 = vpop.permute.xlu0 %3694
        %3698 = vset.pattern.permute.xlu0 0
        %3699 = vperm.xlu0 %3698, %v3633
        %v3700 = vpop.permute.xlu0 %3699
        %3703 = vset.pattern.permute.xlu0 0
        %3704 = vperm.xlu0 %3703, %v3634
        %v3705 = vpop.permute.xlu0 %3704
        %3708 = vset.pattern.permute.xlu0 0
        %3709 = vperm.xlu0 %3708, %v3635
        %v3710 = vpop.permute.xlu0 %3709
        %3713 = vset.pattern.permute.xlu0 0
        %3714 = vperm.xlu0 %3713, %v3636
        %v3715 = vpop.permute.xlu0 %3714
        %3718 = vset.pattern.permute.xlu0 0
        %3719 = vperm.xlu0 %3718, %v3637
        %v3720 = vpop.permute.xlu0 %3719
        %3723 = vset.pattern.permute.xlu0 0
        %3724 = vperm.xlu0 %3723, %v3638
        %v3725 = vpop.permute.xlu0 %3724
        %3728 = vset.pattern.permute.xlu0 0
        %3729 = vperm.xlu0 %3728, %v3639
        %v3730 = vpop.permute.xlu0 %3729
        %3733 = vset.pattern.permute.xlu0 0
        %3734 = vperm.xlu0 %3733, %v3640
        %v3735 = vpop.permute.xlu0 %3734
        %3738 = vset.pattern.permute.xlu0 0
        %3739 = vperm.xlu0 %3738, %v3641
        %v3740 = vpop.permute.xlu0 %3739
        %3743 = vset.pattern.permute.xlu0 0
        %3744 = vperm.xlu0 %3743, %v3642
        %v3745 = vpop.permute.xlu0 %3744
        %3748 = vset.pattern.permute.xlu0 0
        %3749 = vperm.xlu0 %3748, %v3643
        %v3750 = vpop.permute.xlu0 %3749
        %3753 = vset.pattern.permute.xlu0 0
        %3754 = vperm.xlu0 %3753, %v3644
        %v3755 = vpop.permute.xlu0 %3754
        %3758 = vset.pattern.permute.xlu0 0
        %3759 = vperm.xlu0 %3758, %v3645
        %v3760 = vpop.permute.xlu0 %3759
        %3763 = vset.pattern.permute.xlu0 0
        %3764 = vperm.xlu0 %3763, %v3646
        %v3765 = vpop.permute.xlu0 %3764
        %3768 = vset.pattern.permute.xlu0 0
        %3769 = vperm.xlu0 %3768, %v3647
        %v3770 = vpop.permute.xlu0 %3769
        %3773 = vset.pattern.permute.xlu0 0
        %3774 = vperm.xlu0 %3773, %v3648
        %v3775 = vpop.permute.xlu0 %3774
        %3778 = vset.pattern.permute.xlu0 0
        %3779 = vperm.xlu0 %3778, %v3649
        %v3780 = vpop.permute.xlu0 %3779
        %3783 = vset.pattern.permute.xlu0 0
        %3784 = vperm.xlu0 %3783, %v3650
        %v3785 = vpop.permute.xlu0 %3784
        %3788 = vset.pattern.permute.xlu0 0
        %3789 = vperm.xlu0 %3788, %v3651
        %v3790 = vpop.permute.xlu0 %3789
        %3793 = vset.pattern.permute.xlu0 0
        %3794 = vperm.xlu0 %3793, %v3652
        %v3795 = vpop.permute.xlu0 %3794
        %3798 = vset.pattern.permute.xlu0 0
        %3799 = vperm.xlu0 %3798, %v3653
        %v3800 = vpop.permute.xlu0 %3799
        %3803 = vset.pattern.permute.xlu0 0
        %3804 = vperm.xlu0 %3803, %v3654
        %v3805 = vpop.permute.xlu0 %3804
        %3808 = vset.pattern.permute.xlu0 0
        %3809 = vperm.xlu0 %3808, %v3655
        %v3810 = vpop.permute.xlu0 %3809
        %3813 = vset.pattern.permute.xlu0 0
        %3814 = vperm.xlu0 %3813, %v3656
        %v3815 = vpop.permute.xlu0 %3814
        %v3817 = vmul.f32 %v3115, %v3660
        %v3818 = vmul.f32 %v3118, %v3665
        %v3819 = vmul.f32 %v3123, %v3670
        %v3820 = vmul.f32 %v3126, %v3675
        %v3821 = vmul.f32 %v3131, %v3680
        %v3822 = vmul.f32 %v3134, %v3685
        %v3823 = vmul.f32 %v3139, %v3690
        %v3824 = vmul.f32 %v3142, %v3695
        %v3825 = vmul.f32 %v3147, %v3700
        %v3826 = vmul.f32 %v3150, %v3705
        %v3827 = vmul.f32 %v3155, %v3710
        %v3828 = vmul.f32 %v3158, %v3715
        %v3829 = vmul.f32 %v3163, %v3720
        %v3830 = vmul.f32 %v3166, %v3725
        %v3831 = vmul.f32 %v3171, %v3730
        %v3832 = vmul.f32 %v3174, %v3735
        %v3833 = vmul.f32 %v3179, %v3740
        %v3834 = vmul.f32 %v3182, %v3745
        %v3835 = vmul.f32 %v3187, %v3750
        %v3836 = vmul.f32 %v3190, %v3755
        %v3837 = vmul.f32 %v3195, %v3760
        %v3838 = vmul.f32 %v3198, %v3765
        %v3839 = vmul.f32 %v3203, %v3770
        %v3840 = vmul.f32 %v3206, %v3775
        %v3841 = vmul.f32 %v3211, %v3780
        %v3842 = vmul.f32 %v3214, %v3785
        %v3843 = vmul.f32 %v3219, %v3790
        %v3844 = vmul.f32 %v3222, %v3795
        %v3845 = vmul.f32 %v3227, %v3800
        %v3846 = vmul.f32 %v3230, %v3805
        %v3847 = vmul.f32 %v3235, %v3810
        %v3848 = vmul.f32 %v3238, %v3815
        %3849 = vset.pattern.permute.xlu0 1
        %3850 = vperm.xlu0 %3849, %v3625
        %v3851 = vpop.permute.xlu0 %3850
        %3853 = vset.pattern.permute.xlu0 1
        %3854 = vperm.xlu0 %3853, %v3626
        %v3855 = vpop.permute.xlu0 %3854
        %3857 = vset.pattern.permute.xlu0 1
        %3858 = vperm.xlu0 %3857, %v3627
        %v3859 = vpop.permute.xlu0 %3858
        %3861 = vset.pattern.permute.xlu0 1
        %3862 = vperm.xlu0 %3861, %v3628
        %v3863 = vpop.permute.xlu0 %3862
        %3865 = vset.pattern.permute.xlu0 1
        %3866 = vperm.xlu0 %3865, %v3629
        %v3867 = vpop.permute.xlu0 %3866
        %3869 = vset.pattern.permute.xlu0 1
        %3870 = vperm.xlu0 %3869, %v3630
        %v3871 = vpop.permute.xlu0 %3870
        %3873 = vset.pattern.permute.xlu0 1
        %3874 = vperm.xlu0 %3873, %v3631
        %v3875 = vpop.permute.xlu0 %3874
        %3877 = vset.pattern.permute.xlu0 1
        %3878 = vperm.xlu0 %3877, %v3632
        %v3879 = vpop.permute.xlu0 %3878
        %3881 = vset.pattern.permute.xlu0 1
        %3882 = vperm.xlu0 %3881, %v3633
        %v3883 = vpop.permute.xlu0 %3882
        %3885 = vset.pattern.permute.xlu0 1
        %3886 = vperm.xlu0 %3885, %v3634
        %v3887 = vpop.permute.xlu0 %3886
        %3889 = vset.pattern.permute.xlu0 1
        %3890 = vperm.xlu0 %3889, %v3635
        %v3891 = vpop.permute.xlu0 %3890
        %3893 = vset.pattern.permute.xlu0 1
        %3894 = vperm.xlu0 %3893, %v3636
        %v3895 = vpop.permute.xlu0 %3894
        %3897 = vset.pattern.permute.xlu0 1
        %3898 = vperm.xlu0 %3897, %v3637
        %v3899 = vpop.permute.xlu0 %3898
        %3901 = vset.pattern.permute.xlu0 1
        %3902 = vperm.xlu0 %3901, %v3638
        %v3903 = vpop.permute.xlu0 %3902
        %3905 = vset.pattern.permute.xlu0 1
        %3906 = vperm.xlu0 %3905, %v3639
        %v3907 = vpop.permute.xlu0 %3906
        %3909 = vset.pattern.permute.xlu0 1
        %3910 = vperm.xlu0 %3909, %v3640
        %v3911 = vpop.permute.xlu0 %3910
        %3913 = vset.pattern.permute.xlu0 1
        %3914 = vperm.xlu0 %3913, %v3641
        %v3915 = vpop.permute.xlu0 %3914
        %3917 = vset.pattern.permute.xlu0 1
        %3918 = vperm.xlu0 %3917, %v3642
        %v3919 = vpop.permute.xlu0 %3918
        %3921 = vset.pattern.permute.xlu0 1
        %3922 = vperm.xlu0 %3921, %v3643
        %v3923 = vpop.permute.xlu0 %3922
        %3925 = vset.pattern.permute.xlu0 1
        %3926 = vperm.xlu0 %3925, %v3644
        %v3927 = vpop.permute.xlu0 %3926
        %3929 = vset.pattern.permute.xlu0 1
        %3930 = vperm.xlu0 %3929, %v3645
        %v3931 = vpop.permute.xlu0 %3930
        %3933 = vset.pattern.permute.xlu0 1
        %3934 = vperm.xlu0 %3933, %v3646
        %v3935 = vpop.permute.xlu0 %3934
        %3937 = vset.pattern.permute.xlu0 1
        %3938 = vperm.xlu0 %3937, %v3647
        %v3939 = vpop.permute.xlu0 %3938
        %3941 = vset.pattern.permute.xlu0 1
        %3942 = vperm.xlu0 %3941, %v3648
        %v3943 = vpop.permute.xlu0 %3942
        %3945 = vset.pattern.permute.xlu0 1
        %3946 = vperm.xlu0 %3945, %v3649
        %v3947 = vpop.permute.xlu0 %3946
        %3949 = vset.pattern.permute.xlu0 1
        %3950 = vperm.xlu0 %3949, %v3650
        %v3951 = vpop.permute.xlu0 %3950
        %3953 = vset.pattern.permute.xlu0 1
        %3954 = vperm.xlu0 %3953, %v3651
        %v3955 = vpop.permute.xlu0 %3954
        %3957 = vset.pattern.permute.xlu0 1
        %3958 = vperm.xlu0 %3957, %v3652
        %v3959 = vpop.permute.xlu0 %3958
        %3961 = vset.pattern.permute.xlu0 1
        %3962 = vperm.xlu0 %3961, %v3653
        %v3963 = vpop.permute.xlu0 %3962
        %3965 = vset.pattern.permute.xlu0 1
        %3966 = vperm.xlu0 %3965, %v3654
        %v3967 = vpop.permute.xlu0 %3966
        %3969 = vset.pattern.permute.xlu0 1
        %3970 = vperm.xlu0 %3969, %v3655
        %v3971 = vpop.permute.xlu0 %3970
        %3973 = vset.pattern.permute.xlu0 1
        %3974 = vperm.xlu0 %3973, %v3656
        %v3975 = vpop.permute.xlu0 %3974
        %v3977 = vmul.f32 %v3243, %v3851
        %v3978 = vmul.f32 %v3246, %v3855
        %v3979 = vmul.f32 %v3251, %v3859
        %v3980 = vmul.f32 %v3254, %v3863
        %v3981 = vmul.f32 %v3259, %v3867
        %v3982 = vmul.f32 %v3262, %v3871
        %v3983 = vmul.f32 %v3267, %v3875
        %v3984 = vmul.f32 %v3270, %v3879
        %v3985 = vmul.f32 %v3275, %v3883
        %v3986 = vmul.f32 %v3278, %v3887
        %v3987 = vmul.f32 %v3283, %v3891
        %v3988 = vmul.f32 %v3286, %v3895
        %v3989 = vmul.f32 %v3291, %v3899
        %v3990 = vmul.f32 %v3294, %v3903
        %v3991 = vmul.f32 %v3299, %v3907
        %v3992 = vmul.f32 %v3302, %v3911
        %v3993 = vmul.f32 %v3307, %v3915
        %v3994 = vmul.f32 %v3310, %v3919
        %v3995 = vmul.f32 %v3315, %v3923
        %v3996 = vmul.f32 %v3318, %v3927
        %v3997 = vmul.f32 %v3323, %v3931
        %v3998 = vmul.f32 %v3326, %v3935
        %v3999 = vmul.f32 %v3331, %v3939
        %v4000 = vmul.f32 %v3334, %v3943
        %v4001 = vmul.f32 %v3339, %v3947
        %v4002 = vmul.f32 %v3342, %v3951
        %v4003 = vmul.f32 %v3347, %v3955
        %v4004 = vmul.f32 %v3350, %v3959
        %v4005 = vmul.f32 %v3355, %v3963
        %v4006 = vmul.f32 %v3358, %v3967
        %v4007 = vmul.f32 %v3363, %v3971
        %v4008 = vmul.f32 %v3366, %v3975
        %v4009 = vadd.f32 %v3817, %v3977
        %v4010 = vadd.f32 %v3818, %v3978
        %v4011 = vadd.f32 %v3819, %v3979
        %v4012 = vadd.f32 %v3820, %v3980
        %v4013 = vadd.f32 %v3821, %v3981
        %v4014 = vadd.f32 %v3822, %v3982
        %v4015 = vadd.f32 %v3823, %v3983
        %v4016 = vadd.f32 %v3824, %v3984
        %v4017 = vadd.f32 %v3825, %v3985
        %v4018 = vadd.f32 %v3826, %v3986
        %v4019 = vadd.f32 %v3827, %v3987
        %v4020 = vadd.f32 %v3828, %v3988
        %v4021 = vadd.f32 %v3829, %v3989
        %v4022 = vadd.f32 %v3830, %v3990
        %v4023 = vadd.f32 %v3831, %v3991
        %v4024 = vadd.f32 %v3832, %v3992
        %v4025 = vadd.f32 %v3833, %v3993
        %v4026 = vadd.f32 %v3834, %v3994
        %v4027 = vadd.f32 %v3835, %v3995
        %v4028 = vadd.f32 %v3836, %v3996
        %v4029 = vadd.f32 %v3837, %v3997
        %v4030 = vadd.f32 %v3838, %v3998
        %v4031 = vadd.f32 %v3839, %v3999
        %v4032 = vadd.f32 %v3840, %v4000
        %v4033 = vadd.f32 %v3841, %v4001
        %v4034 = vadd.f32 %v3842, %v4002
        %v4035 = vadd.f32 %v3843, %v4003
        %v4036 = vadd.f32 %v3844, %v4004
        %v4037 = vadd.f32 %v3845, %v4005
        %v4038 = vadd.f32 %v3846, %v4006
        %v4039 = vadd.f32 %v3847, %v4007
        %v4040 = vadd.f32 %v3848, %v4008
        %4041 = vset.pattern.permute.xlu0 2
        %4042 = vperm.xlu0 %4041, %v3625
        %v4043 = vpop.permute.xlu0 %4042
        %4045 = vset.pattern.permute.xlu0 2
        %4046 = vperm.xlu0 %4045, %v3626
        %v4047 = vpop.permute.xlu0 %4046
        %4049 = vset.pattern.permute.xlu0 2
        %4050 = vperm.xlu0 %4049, %v3627
        %v4051 = vpop.permute.xlu0 %4050
        %4053 = vset.pattern.permute.xlu0 2
        %4054 = vperm.xlu0 %4053, %v3628
        %v4055 = vpop.permute.xlu0 %4054
        %4057 = vset.pattern.permute.xlu0 2
        %4058 = vperm.xlu0 %4057, %v3629
        %v4059 = vpop.permute.xlu0 %4058
        %4061 = vset.pattern.permute.xlu0 2
        %4062 = vperm.xlu0 %4061, %v3630
        %v4063 = vpop.permute.xlu0 %4062
        %4065 = vset.pattern.permute.xlu0 2
        %4066 = vperm.xlu0 %4065, %v3631
        %v4067 = vpop.permute.xlu0 %4066
        %4069 = vset.pattern.permute.xlu0 2
        %4070 = vperm.xlu0 %4069, %v3632
        %v4071 = vpop.permute.xlu0 %4070
        %4073 = vset.pattern.permute.xlu0 2
        %4074 = vperm.xlu0 %4073, %v3633
        %v4075 = vpop.permute.xlu0 %4074
        %4077 = vset.pattern.permute.xlu0 2
        %4078 = vperm.xlu0 %4077, %v3634
        %v4079 = vpop.permute.xlu0 %4078
        %4081 = vset.pattern.permute.xlu0 2
        %4082 = vperm.xlu0 %4081, %v3635
        %v4083 = vpop.permute.xlu0 %4082
        %4085 = vset.pattern.permute.xlu0 2
        %4086 = vperm.xlu0 %4085, %v3636
        %v4087 = vpop.permute.xlu0 %4086
        %4089 = vset.pattern.permute.xlu0 2
        %4090 = vperm.xlu0 %4089, %v3637
        %v4091 = vpop.permute.xlu0 %4090
        %4093 = vset.pattern.permute.xlu0 2
        %4094 = vperm.xlu0 %4093, %v3638
        %v4095 = vpop.permute.xlu0 %4094
        %4097 = vset.pattern.permute.xlu0 2
        %4098 = vperm.xlu0 %4097, %v3639
        %v4099 = vpop.permute.xlu0 %4098
        %4101 = vset.pattern.permute.xlu0 2
        %4102 = vperm.xlu0 %4101, %v3640
        %v4103 = vpop.permute.xlu0 %4102
        %4105 = vset.pattern.permute.xlu0 2
        %4106 = vperm.xlu0 %4105, %v3641
        %v4107 = vpop.permute.xlu0 %4106
        %4109 = vset.pattern.permute.xlu0 2
        %4110 = vperm.xlu0 %4109, %v3642
        %v4111 = vpop.permute.xlu0 %4110
        %4113 = vset.pattern.permute.xlu0 2
        %4114 = vperm.xlu0 %4113, %v3643
        %v4115 = vpop.permute.xlu0 %4114
        %4117 = vset.pattern.permute.xlu0 2
        %4118 = vperm.xlu0 %4117, %v3644
        %v4119 = vpop.permute.xlu0 %4118
        %4121 = vset.pattern.permute.xlu0 2
        %4122 = vperm.xlu0 %4121, %v3645
        %v4123 = vpop.permute.xlu0 %4122
        %4125 = vset.pattern.permute.xlu0 2
        %4126 = vperm.xlu0 %4125, %v3646
        %v4127 = vpop.permute.xlu0 %4126
        %4129 = vset.pattern.permute.xlu0 2
        %4130 = vperm.xlu0 %4129, %v3647
        %v4131 = vpop.permute.xlu0 %4130
        %4133 = vset.pattern.permute.xlu0 2
        %4134 = vperm.xlu0 %4133, %v3648
        %v4135 = vpop.permute.xlu0 %4134
        %4137 = vset.pattern.permute.xlu0 2
        %4138 = vperm.xlu0 %4137, %v3649
        %v4139 = vpop.permute.xlu0 %4138
        %4141 = vset.pattern.permute.xlu0 2
        %4142 = vperm.xlu0 %4141, %v3650
        %v4143 = vpop.permute.xlu0 %4142
        %4145 = vset.pattern.permute.xlu0 2
        %4146 = vperm.xlu0 %4145, %v3651
        %v4147 = vpop.permute.xlu0 %4146
        %4149 = vset.pattern.permute.xlu0 2
        %4150 = vperm.xlu0 %4149, %v3652
        %v4151 = vpop.permute.xlu0 %4150
        %4153 = vset.pattern.permute.xlu0 2
        %4154 = vperm.xlu0 %4153, %v3653
        %v4155 = vpop.permute.xlu0 %4154
        %4157 = vset.pattern.permute.xlu0 2
        %4158 = vperm.xlu0 %4157, %v3654
        %v4159 = vpop.permute.xlu0 %4158
        %4161 = vset.pattern.permute.xlu0 2
        %4162 = vperm.xlu0 %4161, %v3655
        %v4163 = vpop.permute.xlu0 %4162
        %4165 = vset.pattern.permute.xlu0 2
        %4166 = vperm.xlu0 %4165, %v3656
        %v4167 = vpop.permute.xlu0 %4166
        %v4169 = vmul.f32 %v3371, %v4043
        %v4170 = vmul.f32 %v3374, %v4047
        %v4171 = vmul.f32 %v3379, %v4051
        %v4172 = vmul.f32 %v3382, %v4055
        %v4173 = vmul.f32 %v3387, %v4059
        %v4174 = vmul.f32 %v3390, %v4063
        %v4175 = vmul.f32 %v3395, %v4067
        %v4176 = vmul.f32 %v3398, %v4071
        %v4177 = vmul.f32 %v3403, %v4075
        %v4178 = vmul.f32 %v3406, %v4079
        %v4179 = vmul.f32 %v3411, %v4083
        %v4180 = vmul.f32 %v3414, %v4087
        %v4181 = vmul.f32 %v3419, %v4091
        %v4182 = vmul.f32 %v3422, %v4095
        %v4183 = vmul.f32 %v3427, %v4099
        %v4184 = vmul.f32 %v3430, %v4103
        %v4185 = vmul.f32 %v3435, %v4107
        %v4186 = vmul.f32 %v3438, %v4111
        %v4187 = vmul.f32 %v3443, %v4115
        %v4188 = vmul.f32 %v3446, %v4119
        %v4189 = vmul.f32 %v3451, %v4123
        %v4190 = vmul.f32 %v3454, %v4127
        %v4191 = vmul.f32 %v3459, %v4131
        %v4192 = vmul.f32 %v3462, %v4135
        %v4193 = vmul.f32 %v3467, %v4139
        %v4194 = vmul.f32 %v3470, %v4143
        %v4195 = vmul.f32 %v3475, %v4147
        %v4196 = vmul.f32 %v3478, %v4151
        %v4197 = vmul.f32 %v3483, %v4155
        %v4198 = vmul.f32 %v3486, %v4159
        %v4199 = vmul.f32 %v3491, %v4163
        %v4200 = vmul.f32 %v3494, %v4167
        %v4201 = vadd.f32 %v4009, %v4169
        %v4202 = vadd.f32 %v4010, %v4170
        %v4203 = vadd.f32 %v4011, %v4171
        %v4204 = vadd.f32 %v4012, %v4172
        %v4205 = vadd.f32 %v4013, %v4173
        %v4206 = vadd.f32 %v4014, %v4174
        %v4207 = vadd.f32 %v4015, %v4175
        %v4208 = vadd.f32 %v4016, %v4176
        %v4209 = vadd.f32 %v4017, %v4177
        %v4210 = vadd.f32 %v4018, %v4178
        %v4211 = vadd.f32 %v4019, %v4179
        %v4212 = vadd.f32 %v4020, %v4180
        %v4213 = vadd.f32 %v4021, %v4181
        %v4214 = vadd.f32 %v4022, %v4182
        %v4215 = vadd.f32 %v4023, %v4183
        %v4216 = vadd.f32 %v4024, %v4184
        %v4217 = vadd.f32 %v4025, %v4185
        %v4218 = vadd.f32 %v4026, %v4186
        %v4219 = vadd.f32 %v4027, %v4187
        %v4220 = vadd.f32 %v4028, %v4188
        %v4221 = vadd.f32 %v4029, %v4189
        %v4222 = vadd.f32 %v4030, %v4190
        %v4223 = vadd.f32 %v4031, %v4191
        %v4224 = vadd.f32 %v4032, %v4192
        %v4225 = vadd.f32 %v4033, %v4193
        %v4226 = vadd.f32 %v4034, %v4194
        %v4227 = vadd.f32 %v4035, %v4195
        %v4228 = vadd.f32 %v4036, %v4196
        %v4229 = vadd.f32 %v4037, %v4197
        %v4230 = vadd.f32 %v4038, %v4198
        %v4231 = vadd.f32 %v4039, %v4199
        %v4232 = vadd.f32 %v4040, %v4200
        %4233 = vset.pattern.permute.xlu0 3
        %4234 = vperm.xlu0 %4233, %v3625
        %v4235 = vpop.permute.xlu0 %4234
        %4237 = vset.pattern.permute.xlu0 3
        %4238 = vperm.xlu0 %4237, %v3626
        %v4239 = vpop.permute.xlu0 %4238
        %4241 = vset.pattern.permute.xlu0 3
        %4242 = vperm.xlu0 %4241, %v3627
        %v4243 = vpop.permute.xlu0 %4242
        %4245 = vset.pattern.permute.xlu0 3
        %4246 = vperm.xlu0 %4245, %v3628
        %v4247 = vpop.permute.xlu0 %4246
        %4249 = vset.pattern.permute.xlu0 3
        %4250 = vperm.xlu0 %4249, %v3629
        %v4251 = vpop.permute.xlu0 %4250
        %4253 = vset.pattern.permute.xlu0 3
        %4254 = vperm.xlu0 %4253, %v3630
        %v4255 = vpop.permute.xlu0 %4254
        %4257 = vset.pattern.permute.xlu0 3
        %4258 = vperm.xlu0 %4257, %v3631
        %v4259 = vpop.permute.xlu0 %4258
        %4261 = vset.pattern.permute.xlu0 3
        %4262 = vperm.xlu0 %4261, %v3632
        %v4263 = vpop.permute.xlu0 %4262
        %4265 = vset.pattern.permute.xlu0 3
        %4266 = vperm.xlu0 %4265, %v3633
        %v4267 = vpop.permute.xlu0 %4266
        %4269 = vset.pattern.permute.xlu0 3
        %4270 = vperm.xlu0 %4269, %v3634
        %v4271 = vpop.permute.xlu0 %4270
        %4273 = vset.pattern.permute.xlu0 3
        %4274 = vperm.xlu0 %4273, %v3635
        %v4275 = vpop.permute.xlu0 %4274
        %4277 = vset.pattern.permute.xlu0 3
        %4278 = vperm.xlu0 %4277, %v3636
        %v4279 = vpop.permute.xlu0 %4278
        %4281 = vset.pattern.permute.xlu0 3
        %4282 = vperm.xlu0 %4281, %v3637
        %v4283 = vpop.permute.xlu0 %4282
        %4285 = vset.pattern.permute.xlu0 3
        %4286 = vperm.xlu0 %4285, %v3638
        %v4287 = vpop.permute.xlu0 %4286
        %4289 = vset.pattern.permute.xlu0 3
        %4290 = vperm.xlu0 %4289, %v3639
        %v4291 = vpop.permute.xlu0 %4290
        %4293 = vset.pattern.permute.xlu0 3
        %4294 = vperm.xlu0 %4293, %v3640
        %v4295 = vpop.permute.xlu0 %4294
        %4297 = vset.pattern.permute.xlu0 3
        %4298 = vperm.xlu0 %4297, %v3641
        %v4299 = vpop.permute.xlu0 %4298
        %4301 = vset.pattern.permute.xlu0 3
        %4302 = vperm.xlu0 %4301, %v3642
        %v4303 = vpop.permute.xlu0 %4302
        %4305 = vset.pattern.permute.xlu0 3
        %4306 = vperm.xlu0 %4305, %v3643
        %v4307 = vpop.permute.xlu0 %4306
        %4309 = vset.pattern.permute.xlu0 3
        %4310 = vperm.xlu0 %4309, %v3644
        %v4311 = vpop.permute.xlu0 %4310
        %4313 = vset.pattern.permute.xlu0 3
        %4314 = vperm.xlu0 %4313, %v3645
        %v4315 = vpop.permute.xlu0 %4314
        %4317 = vset.pattern.permute.xlu0 3
        %4318 = vperm.xlu0 %4317, %v3646
        %v4319 = vpop.permute.xlu0 %4318
        %4321 = vset.pattern.permute.xlu0 3
        %4322 = vperm.xlu0 %4321, %v3647
        %v4323 = vpop.permute.xlu0 %4322
        %4325 = vset.pattern.permute.xlu0 3
        %4326 = vperm.xlu0 %4325, %v3648
        %v4327 = vpop.permute.xlu0 %4326
        %4329 = vset.pattern.permute.xlu0 3
        %4330 = vperm.xlu0 %4329, %v3649
        %v4331 = vpop.permute.xlu0 %4330
        %4333 = vset.pattern.permute.xlu0 3
        %4334 = vperm.xlu0 %4333, %v3650
        %v4335 = vpop.permute.xlu0 %4334
        %4337 = vset.pattern.permute.xlu0 3
        %4338 = vperm.xlu0 %4337, %v3651
        %v4339 = vpop.permute.xlu0 %4338
        %4341 = vset.pattern.permute.xlu0 3
        %4342 = vperm.xlu0 %4341, %v3652
        %v4343 = vpop.permute.xlu0 %4342
        %4345 = vset.pattern.permute.xlu0 3
        %4346 = vperm.xlu0 %4345, %v3653
        %v4347 = vpop.permute.xlu0 %4346
        %4349 = vset.pattern.permute.xlu0 3
        %4350 = vperm.xlu0 %4349, %v3654
        %v4351 = vpop.permute.xlu0 %4350
        %4353 = vset.pattern.permute.xlu0 3
        %4354 = vperm.xlu0 %4353, %v3655
        %v4355 = vpop.permute.xlu0 %4354
        %4357 = vset.pattern.permute.xlu0 3
        %4358 = vperm.xlu0 %4357, %v3656
        %v4359 = vpop.permute.xlu0 %4358
        %v4361 = vmul.f32 %v3499, %v4235
        %v4362 = vmul.f32 %v3502, %v4239
        %v4363 = vmul.f32 %v3507, %v4243
        %v4364 = vmul.f32 %v3510, %v4247
        %v4365 = vmul.f32 %v3515, %v4251
        %v4366 = vmul.f32 %v3518, %v4255
        %v4367 = vmul.f32 %v3523, %v4259
        %v4368 = vmul.f32 %v3526, %v4263
        %v4369 = vmul.f32 %v3531, %v4267
        %v4370 = vmul.f32 %v3534, %v4271
        %v4371 = vmul.f32 %v3539, %v4275
        %v4372 = vmul.f32 %v3542, %v4279
        %v4373 = vmul.f32 %v3547, %v4283
        %v4374 = vmul.f32 %v3550, %v4287
        %v4375 = vmul.f32 %v3555, %v4291
        %v4376 = vmul.f32 %v3558, %v4295
        %v4377 = vmul.f32 %v3563, %v4299
        %v4378 = vmul.f32 %v3566, %v4303
        %v4379 = vmul.f32 %v3571, %v4307
        %v4380 = vmul.f32 %v3574, %v4311
        %v4381 = vmul.f32 %v3579, %v4315
        %v4382 = vmul.f32 %v3582, %v4319
        %v4383 = vmul.f32 %v3587, %v4323
        %v4384 = vmul.f32 %v3590, %v4327
        %v4385 = vmul.f32 %v3595, %v4331
        %v4386 = vmul.f32 %v3598, %v4335
        %v4387 = vmul.f32 %v3603, %v4339
        %v4388 = vmul.f32 %v3606, %v4343
        %v4389 = vmul.f32 %v3611, %v4347
        %v4390 = vmul.f32 %v3614, %v4351
        %v4391 = vmul.f32 %v3619, %v4355
        %v4392 = vmul.f32 %v3622, %v4359
        %v4393 = vadd.f32 %v4201, %v4361
        %v4394 = vadd.f32 %v4202, %v4362
        %v4395 = vadd.f32 %v4203, %v4363
        %v4396 = vadd.f32 %v4204, %v4364
        %v4397 = vadd.f32 %v4205, %v4365
        %v4398 = vadd.f32 %v4206, %v4366
        %v4399 = vadd.f32 %v4207, %v4367
        %v4400 = vadd.f32 %v4208, %v4368
        %v4401 = vadd.f32 %v4209, %v4369
        %v4402 = vadd.f32 %v4210, %v4370
        %v4403 = vadd.f32 %v4211, %v4371
        %v4404 = vadd.f32 %v4212, %v4372
        %v4405 = vadd.f32 %v4213, %v4373
        %v4406 = vadd.f32 %v4214, %v4374
        %v4407 = vadd.f32 %v4215, %v4375
        %v4408 = vadd.f32 %v4216, %v4376
        %v4409 = vadd.f32 %v4217, %v4377
        %v4410 = vadd.f32 %v4218, %v4378
        %v4411 = vadd.f32 %v4219, %v4379
        %v4412 = vadd.f32 %v4220, %v4380
        %v4413 = vadd.f32 %v4221, %v4381
        %v4414 = vadd.f32 %v4222, %v4382
        %v4415 = vadd.f32 %v4223, %v4383
        %v4416 = vadd.f32 %v4224, %v4384
        %v4417 = vadd.f32 %v4225, %v4385
        %v4418 = vadd.f32 %v4226, %v4386
        %v4419 = vadd.f32 %v4227, %v4387
        %v4420 = vadd.f32 %v4228, %v4388
        %v4421 = vadd.f32 %v4229, %v4389
        %v4422 = vadd.f32 %v4230, %v4390
        %v4423 = vadd.f32 %v4231, %v4391
        %v4424 = vadd.f32 %v4232, %v4392
        %4425 = vst [vmem:[%s878] sm:$0xff] %v4393
        %4426 = vst [vmem:[%s878 + $0x8] sm:$0xff] %v4394
        %4427 = vst [vmem:[%s878 + $0x10] sm:$0xff] %v4395
        %4428 = vst [vmem:[%s878 + $0x18] sm:$0xff] %v4396
        %4429 = vst [vmem:[%s878 + $0x20] sm:$0xff] %v4397
        %4430 = vst [vmem:[%s878 + $0x28] sm:$0xff] %v4398
        %4431 = vst [vmem:[%s878 + $0x30] sm:$0xff] %v4399
        %4432 = vst [vmem:[%s878 + $0x38] sm:$0xff] %v4400
        %4433 = vst [vmem:[%s878 + $0x40] sm:$0xff] %v4401
        %4434 = vst [vmem:[%s878 + $0x48] sm:$0xff] %v4402
        %4435 = vst [vmem:[%s878 + $0x50] sm:$0xff] %v4403
        %4436 = vst [vmem:[%s878 + $0x58] sm:$0xff] %v4404
        %4437 = vst [vmem:[%s878 + $0x60] sm:$0xff] %v4405
        %4438 = vst [vmem:[%s878 + $0x68] sm:$0xff] %v4406
        %4439 = vst [vmem:[%s878 + $0x70] sm:$0xff] %v4407
        %4440 = vst [vmem:[%s878 + $0x78] sm:$0xff] %v4408
        %4441 = vst [vmem:[%s878 + $0x80] sm:$0xff] %v4409
        %4442 = vst [vmem:[%s878 + $0x88] sm:$0xff] %v4410
        %4443 = vst [vmem:[%s878 + $0x90] sm:$0xff] %v4411
        %4444 = vst [vmem:[%s878 + $0x98] sm:$0xff] %v4412
        %4445 = vst [vmem:[%s878 + $0xa0] sm:$0xff] %v4413
        %4446 = vst [vmem:[%s878 + $0xa8] sm:$0xff] %v4414
        %4447 = vst [vmem:[%s878 + $0xb0] sm:$0xff] %v4415
        %4448 = vst [vmem:[%s878 + $0xb8] sm:$0xff] %v4416
        %4449 = vst [vmem:[%s878 + $0xc0] sm:$0xff] %v4417
        %4450 = vst [vmem:[%s878 + $0xc8] sm:$0xff] %v4418
        %4451 = vst [vmem:[%s878 + $0xd0] sm:$0xff] %v4419
        %4452 = vst [vmem:[%s878 + $0xd8] sm:$0xff] %v4420
        %4453 = vst [vmem:[%s878 + $0xe0] sm:$0xff] %v4421
        %4454 = vst [vmem:[%s878 + $0xe8] sm:$0xff] %v4422
        %4455 = vst [vmem:[%s878 + $0xf0] sm:$0xff] %v4423
        %4456 = vst [vmem:[%s878 + $0xf8] sm:$0xff] %v4424
        %s4457 = smul.u32 32, %s19
        %p4458 = scmp.lt.s32.totalorder %s4457, 63
        %s4459 = scalar_select %p4458, %s4457, 63
        %s4460 = smul.addr %s4459, 8
        %s4461 = scalar_lea.vmem %s8, %s4460
        // Predicated region
        $region94: #{liif_forward.13} parent=88 // pred_check
          %p4462 = pneg %p215
        $region95: #{liif_forward.13} parent=88 // pred_check_branch
          %4464 = sbr.rel (%p4462) target = $region97
        $region96: #{liif_forward.13} parent=88 // pred_region
          %s4465 = smul.u32 32, %s19
        $region97: #{liif_forward.13} parent=88 // pred_fallthru
          _
      $region89: #{liif_forward.13} parent=5 // pred_fallthru
        _
      %p4466 = scmp.le.s32.totalorder 2, %s14
      // Predicated region
      $region98: #{liif_forward.13} parent=5 // pred_check
        %p4467 = pneg %p4466
      $region99: #{liif_forward.13} parent=5 // pred_check_branch
        %4469 = sbr.rel (%p4467) target = $region101
      $region100: #{liif_forward.13} parent=5 // pred_region
        %s4470 = ssub.s32 %s14, 2
        // Predicated region
        $region102: #{liif_forward.13} parent=100 // pred_check
          %p4471 = pneg %p221
        $region103: #{liif_forward.13} parent=100 // pred_check_branch
          %4473 = sbr.rel (%p4471) target = $region105
        $region104: #{liif_forward.13} parent=100 // pred_region
          %s4474 = smul.u32 32, %s20
          %p4475 = scmp.lt.s32.totalorder %s4474, 63
          %s4476 = scalar_select %p4475, %s4474, 63
          %s4477 = smul.addr %s4476, 8
          %s4478 = scalar_lea.vmem %s8, %s4477
        $region105: #{liif_forward.13} parent=100 // pred_fallthru
          _
      $region101: #{liif_forward.13} parent=5 // pred_fallthru
        _
    $region6: #{liif_forward.13} parent=1 // loop_footer
      %s18 = sadd.s32 1, %s14
    $region7: #{liif_forward.13} parent=1 // loop_footer_branch
      %13 = sbr.rel target = $region3
    $region8: #{liif_forward.13} parent=1 // loop_exit
      _

</llo_original>
